<compile_context>
chip_gen: v5e
topology: v5e:2x2
jax: 0.10.0
libtpu: 0.0.40
codegen_flags: <defaults>
</compile_context>

<pallas_src>
import functools
import math

import jax
import jax.numpy as jnp
import numpy as np
from jax import lax
from jax.experimental import pallas as pl
from jax.experimental.pallas import tpu as pltpu

LN_EPS = 1e-5
GELU_C = math.sqrt(2.0 / math.pi)


def _layer_norm(h, g, b):
    mu = jnp.mean(h, axis=-1, keepdims=True)
    var = jnp.mean((h - mu) ** 2, axis=-1, keepdims=True)
    return (h - mu) * lax.rsqrt(var + LN_EPS) * g + b


def _pick_vmem_limit():
    """Generation-dependent VMEM limit (v5e/v6e: 128 MiB physical, v7x: 64 MiB)."""
    cap = None
    try:
        cap = getattr(pltpu.get_tpu_info(), "vmem_capacity_bytes", None)
    except Exception:
        cap = None
    if cap is None:
        cap = 64 * 1024 * 1024  # conservative default (v7x-sized)
    if cap >= 128 * 1024 * 1024:
        return 100 * 1024 * 1024
    return 48 * 1024 * 1024


def decoder_stack_kernel(num_heads, head_dim,
                         x_hbm, ln1_g, ln1_b, w_qkv, b_qkv, wo, bo,
                         ln2_g, ln2_b, w1, b1, w2, b2,
                         out_ref, carry_ref):
    """Grid = (batch_block, layer); carry_ref (VMEM scratch) is the resident residual stream."""
    b_idx = pl.program_id(0)
    layer = pl.program_id(1)

    Bt, S, E = carry_ref.shape
    H, D = num_heads, head_dim
    HD = H * D
    N = Bt * H

    # Layer 0: seed the carried activation straight from HBM (x is only needed once per block).
    @pl.when(layer == 0)
    def _():
        pltpu.sync_copy(x_hbm.at[pl.ds(b_idx * Bt, Bt)], carry_ref)

    x = carry_ref[...].reshape(Bt * S, E)                          # (Bt*S, E) f32 residual stream

    # ---- LN1 + fused QKV projection (bf16 MXU, f32 accumulation; Wq/bq pre-scaled) ----
    h = _layer_norm(x, ln1_g[0], ln1_b[0])
    qkv = jnp.dot(h.astype(jnp.bfloat16), w_qkv[0],
                  preferred_element_type=jnp.float32) + b_qkv[0]   # (Bt*S, 3*H*D)
    qkv = qkv.astype(jnp.bfloat16).reshape(Bt, S, 3 * HD)          # cast BEFORE relayout

    # Relayout to per-(batch,head) matrices using only batched minor-two transposes
    # plus sublane-aligned (free) reshapes.
    qkv_t = jnp.transpose(qkv, (0, 2, 1)).reshape(Bt, 3 * H, D, S)           # (Bt, 3H, D, S)
    q = jnp.transpose(qkv_t[:, :H], (0, 1, 3, 2)).reshape(N, S, D)           # (N, S, D)
    k_t = qkv_t[:, H:2 * H].reshape(N, D, S)                                 # (N, D, S)
    v = jnp.transpose(qkv_t[:, 2 * H:], (0, 1, 3, 2)).reshape(N, S, D)       # (N, S, D)

    # ---- attention: (batch*head)-batched MXU einsums, softmax in f32 ----
    s = jnp.einsum('nqd,ndk->nqk', q, k_t,
                   preferred_element_type=jnp.float32)             # (N, S, S)
    s = s - jnp.max(s, axis=-1, keepdims=True)
    p = jnp.exp(s)
    denom = jnp.sum(p, axis=-1, keepdims=True)                     # (N, S, 1)
    ctx = jnp.einsum('nqk,nkd->nqd', p.astype(jnp.bfloat16), v,
                     preferred_element_type=jnp.float32)           # (N, S, D)
    # Normalize after the PV matmul (H*S*D multiplies instead of H*S*S).
    ctx = ctx * pl.reciprocal(denom, approx=True)

    # ---- output projection: single (Bt*S, HD) @ (HD, E) matmul (head sum inside the MXU) ----
    ctx_t = jnp.transpose(ctx.astype(jnp.bfloat16), (0, 2, 1)).reshape(Bt, HD, S)  # (Bt, HD, S)
    ctx_sd = jnp.transpose(ctx_t, (0, 2, 1)).reshape(Bt * S, HD)                   # (Bt*S, HD)
    attn = jnp.dot(ctx_sd, wo[0], preferred_element_type=jnp.float32) + bo[0]      # (Bt*S, E)

    hidden = attn + x                                              # residual 1 (dropout = identity)

    # ---- LN2 + feed-forward with GoogleGELU ----
    g = _layer_norm(hidden, ln2_g[0], ln2_b[0])
    ff = jnp.dot(g.astype(jnp.bfloat16), w1[0],
                 preferred_element_type=jnp.float32) + b1[0]       # (Bt*S, F)
    ff = 0.5 * ff * (1.0 + jnp.tanh(GELU_C * (ff + 0.044715 * ff * ff * ff)))
    ff = jnp.dot(ff.astype(jnp.bfloat16), w2[0],
                 preferred_element_type=jnp.float32) + b2[0]       # (Bt*S, E)

    new_h = (ff + hidden).reshape(Bt, S, E)                        # residual 2 -> carry
    carry_ref[...] = new_h

    @pl.when(layer == pl.num_programs(1) - 1)
    def _():
        out_ref[...] = new_h.astype(out_ref.dtype)


@functools.partial(jax.jit, static_argnames=("num_heads", "head_dim", "batch_block"))
def transformer_decoder(x, layer_params, num_heads, head_dim, batch_block=None):
    """Runs the whole decoder stack in one fused pallas_call; returns last_hidden_state."""
    B, S, E = x.shape
    L = len(layer_params)
    scale = 1.0 / math.sqrt(head_dim)

    bt = B if batch_block is None else batch_block
    assert B % bt == 0, "batch_block must divide batch"
    nb = B // bt

    def stack(name):
        return jnp.stack([p[name] for p in layer_params], axis=0)

    # Pack at trace time: fuse QKV, fold 1/sqrt(D) into Wq/bq, cast MXU weights to bf16.
    w_qkv = jnp.concatenate([stack("wq") * scale, stack("wk"), stack("wv")],
                            axis=-1).astype(jnp.bfloat16)                      # (L, E, 3HD)
    b_qkv = jnp.concatenate([stack("bq") * scale, stack("bk"), stack("bv")],
                            axis=-1)                                           # (L, 1, 3HD) f32
    wo = stack("wo").astype(jnp.bfloat16)                                      # (L, HD, E)
    w1 = stack("w1").astype(jnp.bfloat16)                                      # (L, E, F)
    w2 = stack("w2").astype(jnp.bfloat16)                                      # (L, F, E)
    params = [stack("ln1_g"), stack("ln1_b"), w_qkv, b_qkv, wo, stack("bo"),
              stack("ln2_g"), stack("ln2_b"), w1, stack("b1"), w2, stack("b2")]

    def layer_spec(arr):
        nd = arr.ndim
        return pl.BlockSpec((1,) + arr.shape[1:],
                            lambda b, l, _n=nd: (l,) + (0,) * (_n - 1))

    in_specs = ([pl.BlockSpec(memory_space=pl.ANY)]        # x stays in HBM; DMA'd once at layer 0
                + [layer_spec(a) for a in params])
    out_spec = pl.BlockSpec((bt, S, E), lambda b, l: (b, 0, 0))

    kernel = functools.partial(decoder_stack_kernel, num_heads, head_dim)
    return pl.pallas_call(
        kernel,
        out_shape=jax.ShapeDtypeStruct((B, S, E), x.dtype),
        grid=(nb, L),                        # layers innermost: carry stays resident per batch block
        in_specs=in_specs,
        out_specs=out_spec,
        scratch_shapes=[pltpu.VMEM((bt, S, E), jnp.float32)],   # residual-stream carry
        compiler_params=pltpu.CompilerParams(
            dimension_semantics=("parallel", "arbitrary"),
            vmem_limit_bytes=_pick_vmem_limit(),
        ),
    )(x, *params)


# ---------------- deterministic parameter init ----------------
def init_layer_params(key, embedding_dim, dim_feedforward, num_heads, head_dim):
    E, F, HD = embedding_dim, dim_feedforward, num_heads * head_dim
    ks = jax.random.split(key, 8)
    s = 0.02
    return {
        "ln1_g": jnp.ones((1, E), jnp.float32),
        "ln1_b": jnp.zeros((1, E), jnp.float32),
        "wq": s * jax.random.normal(ks[0], (E, HD), jnp.float32),
        "bq": s * jax.random.normal(ks[1], (1, HD), jnp.float32),
        "wk": s * jax.random.normal(ks[2], (E, HD), jnp.float32),
        "bk": jnp.zeros((1, HD), jnp.float32),
        "wv": s * jax.random.normal(ks[3], (E, HD), jnp.float32),
        "bv": jnp.zeros((1, HD), jnp.float32),
        "wo": s * jax.random.normal(ks[4], (HD, E), jnp.float32),
        "bo": jnp.zeros((1, E), jnp.float32),
        "ln2_g": jnp.ones((1, E), jnp.float32),
        "ln2_b": jnp.zeros((1, E), jnp.float32),
        "w1": s * jax.random.normal(ks[5], (E, F), jnp.float32),
        "b1": s * jax.random.normal(ks[6], (1, F), jnp.float32),
        "w2": s * jax.random.normal(ks[7], (F, E), jnp.float32),
        "b2": jnp.zeros((1, E), jnp.float32),
    }


# ---------------- pure-JAX f32 reference (for correctness check) ----------------
def ref_block(x, p, num_heads, head_dim):
    def ln(h, g, b):
        mu = h.mean(-1, keepdims=True)
        var = ((h - mu) ** 2).mean(-1, keepdims=True)
        return (h - mu) * lax.rsqrt(var + LN_EPS) * g + b

    B, S, E = x.shape
    h = ln(x, p["ln1_g"], p["ln1_b"])
    q = (h @ p["wq"] + p["bq"]).reshape(B, S, num_heads, head_dim)
    k = (h @ p["wk"] + p["bk"]).reshape(B, S, num_heads, head_dim)
    v = (h @ p["wv"] + p["bv"]).reshape(B, S, num_heads, head_dim)
    s = jnp.einsum("bqhd,bkhd->bhqk", q, k) / math.sqrt(head_dim)
    a = jax.nn.softmax(s, axis=-1)
    o = jnp.einsum("bhqk,bkhd->bqhd", a, v).reshape(B, S, -1)
    hidden = o @ p["wo"] + p["bo"] + x
    g = ln(hidden, p["ln2_g"], p["ln2_b"])
    ff = g @ p["w1"] + p["b1"]
    ff = 0.5 * ff * (1.0 + jnp.tanh(GELU_C * (ff + 0.044715 * ff ** 3)))
    return ff @ p["w2"] + p["b2"] + hidden


if __name__ == "__main__":
    # Small but lane-aligned shapes (E, H*D, head_dim, F are multiples of 128):
    # batch=2, seq=128, embedding=128, dim_feedforward=256, num_heads=2, head_dim=128, layers=2
    B, S, E, F, H, D, L = 2, 128, 128, 256, 2, 128, 2

    key = jax.random.PRNGKey(0)
    kx, kp = jax.random.split(key)
    x = jax.random.normal(kx, (B, S, E), jnp.float32)
    layer_keys = jax.random.split(kp, L)
    layers = [init_layer_params(k, E, F, H, D) for k in layer_keys]

    out = jax.block_until_ready(transformer_decoder(x, layers, num_heads=H, head_dim=D))

    ref = x
    for p in layers:
        ref = ref_block(ref, p, H, D)
    # bf16 matmuls (f32 accumulation) + approx reciprocal vs the f32 reference -> looser tolerance
    np.testing.assert_allclose(np.asarray(out), np.asarray(ref), rtol=2e-2, atol=2e-2)

    print("KERNEL_OK")
</pallas_src>

<mosaic_0001>
module attributes {stable_mosaic.version = 11 : i64} {
  func.func @decoder_stack_kernel(%arg0: i32, %arg1: i32, %arg2: memref<2x128x128xf32, #tpu.memory_space<any>>, %arg3: memref<1x1x128xf32, #tpu.memory_space<vmem>>, %arg4: memref<1x1x128xf32, #tpu.memory_space<vmem>>, %arg5: memref<1x128x768xbf16, #tpu.memory_space<vmem>>, %arg6: memref<1x1x768xf32, #tpu.memory_space<vmem>>, %arg7: memref<1x256x128xbf16, #tpu.memory_space<vmem>>, %arg8: memref<1x1x128xf32, #tpu.memory_space<vmem>>, %arg9: memref<1x1x128xf32, #tpu.memory_space<vmem>>, %arg10: memref<1x1x128xf32, #tpu.memory_space<vmem>>, %arg11: memref<1x128x256xbf16, #tpu.memory_space<vmem>>, %arg12: memref<1x1x256xf32, #tpu.memory_space<vmem>>, %arg13: memref<1x256x128xbf16, #tpu.memory_space<vmem>>, %arg14: memref<1x1x128xf32, #tpu.memory_space<vmem>>, %arg15: memref<2x128x128xf32, #tpu.memory_space<vmem>>, %arg16: memref<2x128x128xf32, #tpu.memory_space<vmem>>) attributes {dimension_semantics = [#tpu.dimension_semantics<parallel>, #tpu.dimension_semantics<arbitrary>], iteration_bounds = array<i64: 1, 2>, scalar_prefetch = 0 : i64, scratch_operands = 1 : i64, tpu.core_type = #tpu.core_type<tc>, window_params = [{}, {transform_indices = @transform_1, window_bounds = array<i64: 1, 1, 128>}, {transform_indices = @transform_2, window_bounds = array<i64: 1, 1, 128>}, {transform_indices = @transform_3, window_bounds = array<i64: 1, 128, 768>}, {transform_indices = @transform_4, window_bounds = array<i64: 1, 1, 768>}, {transform_indices = @transform_5, window_bounds = array<i64: 1, 256, 128>}, {transform_indices = @transform_6, window_bounds = array<i64: 1, 1, 128>}, {transform_indices = @transform_7, window_bounds = array<i64: 1, 1, 128>}, {transform_indices = @transform_8, window_bounds = array<i64: 1, 1, 128>}, {transform_indices = @transform_9, window_bounds = array<i64: 1, 128, 256>}, {transform_indices = @transform_10, window_bounds = array<i64: 1, 1, 256>}, {transform_indices = @transform_11, window_bounds = array<i64: 1, 256, 128>}, {transform_indices = @transform_12, window_bounds = array<i64: 1, 1, 128>}, {transform_indices = @transform_13, window_bounds = array<i64: 2, 128, 128>}]} {
    %c0_i32 = arith.constant 0 : i32
    %0 = arith.cmpi eq, %arg1, %c0_i32 : i32
    %1 = arith.extui %0 : i1 to i32
    %c0_i32_0 = arith.constant 0 : i32
    %2 = arith.cmpi ne, %1, %c0_i32_0 : i32
    scf.if %2 {
      %c2_i32 = arith.constant 2 : i32
      %138 = arith.muli %arg0, %c2_i32 : i32
      "tpu.region"() ({
        %139 = tpu.sem_alloc : memref<!tpu.dma_semaphore, #tpu.memory_space<semaphore_mem>>
        %c0_i32_64 = arith.constant 0 : i32
        %c0_i32_65 = arith.constant 0 : i32
        %140 = tpu.memref_slice %arg2[%138, %c0_i32_64, %c0_i32_65] : memref<2x128x128xf32, #tpu.memory_space<any>> -> memref<2x128x128xf32, #tpu.memory_space<any>>
        tpu.enqueue_dma source(%140 : memref<2x128x128xf32, #tpu.memory_space<any>>) target(%arg16 : memref<2x128x128xf32, #tpu.memory_space<vmem>>) target_semaphore(%139 : memref<!tpu.dma_semaphore, #tpu.memory_space<semaphore_mem>>)
        %c0_i32_66 = arith.constant 0 : i32
        %c0_i32_67 = arith.constant 0 : i32
        %141 = tpu.memref_slice %arg2[%138, %c0_i32_66, %c0_i32_67] : memref<2x128x128xf32, #tpu.memory_space<any>> -> memref<2x128x128xf32, #tpu.memory_space<any>>
        tpu.wait_dma2 semaphore(%139 : memref<!tpu.dma_semaphore, #tpu.memory_space<semaphore_mem>>) src(%141 : memref<2x128x128xf32, #tpu.memory_space<any>>) dst(%arg16 : memref<2x128x128xf32, #tpu.memory_space<vmem>>)
        tpu.yield
      }) : () -> ()
    } else {
    }
    %c0 = arith.constant 0 : index
    %c0_1 = arith.constant 0 : index
    %c0_2 = arith.constant 0 : index
    %3 = vector.load %arg16[%c0, %c0_1, %c0_2] : memref<2x128x128xf32, #tpu.memory_space<vmem>>, vector<2x128x128xf32>
    %4 = vector.shape_cast %3 : vector<2x128x128xf32> to vector<256x128xf32>
    %c0_3 = arith.constant 0 : index
    %c0_4 = arith.constant 0 : index
    %c0_5 = arith.constant 0 : index
    %5 = vector.load %arg3[%c0_3, %c0_4, %c0_5] : memref<1x1x128xf32, #tpu.memory_space<vmem>>, vector<1x1x128xf32>
    %6 = vector.shape_cast %5 : vector<1x1x128xf32> to vector<1x128xf32>
    %c0_6 = arith.constant 0 : index
    %c0_7 = arith.constant 0 : index
    %c0_8 = arith.constant 0 : index
    %7 = vector.load %arg4[%c0_6, %c0_7, %c0_8] : memref<1x1x128xf32, #tpu.memory_space<vmem>>, vector<1x1x128xf32>
    %8 = vector.shape_cast %7 : vector<1x1x128xf32> to vector<1x128xf32>
    %cst = arith.constant dense<0.000000e+00> : vector<256xf32>
    %9 = vector.multi_reduction <add>, %4, %cst [1] : vector<256x128xf32> to vector<256xf32>
    %10 = vector.shape_cast %9 : vector<256xf32> to vector<256x1xf32>
    %cst_9 = arith.constant 1.280000e+02 : f32
    %11 = vector.broadcast %cst_9 : f32 to vector<256x1xf32>
    %12 = arith.divf %10, %11 : vector<256x1xf32>
    %13 = vector.broadcast %12 : vector<256x1xf32> to vector<256x128xf32>
    %14 = arith.subf %4, %13 : vector<256x128xf32>
    %15 = arith.mulf %14, %14 : vector<256x128xf32>
    %cst_10 = arith.constant dense<0.000000e+00> : vector<256xf32>
    %16 = vector.multi_reduction <add>, %15, %cst_10 [1] : vector<256x128xf32> to vector<256xf32>
    %17 = vector.shape_cast %16 : vector<256xf32> to vector<256x1xf32>
    %cst_11 = arith.constant 1.280000e+02 : f32
    %18 = vector.broadcast %cst_11 : f32 to vector<256x1xf32>
    %19 = arith.divf %17, %18 : vector<256x1xf32>
    %20 = vector.broadcast %12 : vector<256x1xf32> to vector<256x128xf32>
    %21 = arith.subf %4, %20 : vector<256x128xf32>
    %cst_12 = arith.constant 9.99999974E-6 : f32
    %22 = vector.broadcast %cst_12 : f32 to vector<256x1xf32>
    %23 = arith.addf %19, %22 : vector<256x1xf32>
    %24 = math.rsqrt %23 : vector<256x1xf32>
    %25 = vector.broadcast %24 : vector<256x1xf32> to vector<256x128xf32>
    %26 = arith.mulf %21, %25 : vector<256x128xf32>
    %27 = vector.broadcast %6 : vector<1x128xf32> to vector<256x128xf32>
    %28 = arith.mulf %26, %27 : vector<256x128xf32>
    %29 = vector.broadcast %8 : vector<1x128xf32> to vector<256x128xf32>
    %30 = arith.addf %28, %29 : vector<256x128xf32>
    %31 = arith.truncf %30 : vector<256x128xf32> to vector<256x128xbf16>
    %c0_13 = arith.constant 0 : index
    %c0_14 = arith.constant 0 : index
    %c0_15 = arith.constant 0 : index
    %32 = vector.load %arg5[%c0_13, %c0_14, %c0_15] : memref<1x128x768xbf16, #tpu.memory_space<vmem>>, vector<1x128x768xbf16>
    %33 = vector.shape_cast %32 : vector<1x128x768xbf16> to vector<128x768xbf16>
    %cst_16 = arith.constant dense<0.000000e+00> : vector<256x768xf32>
    %34 = tpu.matmul %31, %33, %cst_16 {dimension_numbers = #tpu.dot_dimension_numbers<[1], [0], [0], [1], [0, 0, 1, 1], [], []>} : vector<256x128xbf16>, vector<128x768xbf16>, vector<256x768xf32> -> vector<256x768xf32>
    %c0_17 = arith.constant 0 : index
    %c0_18 = arith.constant 0 : index
    %c0_19 = arith.constant 0 : index
    %35 = vector.load %arg6[%c0_17, %c0_18, %c0_19] : memref<1x1x768xf32, #tpu.memory_space<vmem>>, vector<1x1x768xf32>
    %36 = vector.shape_cast %35 : vector<1x1x768xf32> to vector<1x768xf32>
    %37 = vector.broadcast %36 : vector<1x768xf32> to vector<256x768xf32>
    %38 = arith.addf %34, %37 : vector<256x768xf32>
    %39 = arith.truncf %38 : vector<256x768xf32> to vector<256x768xbf16>
    %40 = vector.shape_cast %39 : vector<256x768xbf16> to vector<2x128x768xbf16>
    %41 = tpu.transpose %40, [0, 2, 1] : vector<2x128x768xbf16> -> vector<2x768x128xbf16>
    %42 = vector.shape_cast %41 : vector<2x768x128xbf16> to vector<2x6x128x128xbf16>
    %43 = vector.extract_strided_slice %42 {offsets = [0, 0, 0, 0], sizes = [2, 2, 128, 128], strides = [1, 1, 1, 1]} : vector<2x6x128x128xbf16> to vector<2x2x128x128xbf16>
    %44 = tpu.transpose %43, [0, 1, 3, 2] : vector<2x2x128x128xbf16> -> vector<2x2x128x128xbf16>
    %45 = vector.shape_cast %44 : vector<2x2x128x128xbf16> to vector<4x128x128xbf16>
    %46 = vector.extract_strided_slice %42 {offsets = [0, 2, 0, 0], sizes = [2, 2, 128, 128], strides = [1, 1, 1, 1]} : vector<2x6x128x128xbf16> to vector<2x2x128x128xbf16>
    %47 = vector.shape_cast %46 : vector<2x2x128x128xbf16> to vector<4x128x128xbf16>
    %48 = vector.extract_strided_slice %42 {offsets = [0, 4, 0, 0], sizes = [2, 2, 128, 128], strides = [1, 1, 1, 1]} : vector<2x6x128x128xbf16> to vector<2x2x128x128xbf16>
    %49 = tpu.transpose %48, [0, 1, 3, 2] : vector<2x2x128x128xbf16> -> vector<2x2x128x128xbf16>
    %50 = vector.shape_cast %49 : vector<2x2x128x128xbf16> to vector<4x128x128xbf16>
    "tpu.trace_start"() <{level = 10 : i32, message = "nqd,ndk->nqk"}> : () -> ()
    %cst_20 = arith.constant dense<0.000000e+00> : vector<4x128x128xf32>
    %51 = tpu.matmul %45, %47, %cst_20 {dimension_numbers = #tpu.dot_dimension_numbers<[2], [1], [1], [2], [0, 0, 0, 1, 1, 2], [0], [0]>} : vector<4x128x128xbf16>, vector<4x128x128xbf16>, vector<4x128x128xf32> -> vector<4x128x128xf32>
    "tpu.trace_stop"() : () -> ()
    %cst_21 = arith.constant dense<0xFF800000> : vector<4x128xf32>
    %52 = vector.multi_reduction <maximumf>, %51, %cst_21 [2] : vector<4x128x128xf32> to vector<4x128xf32>
    %53 = vector.shape_cast %52 : vector<4x128xf32> to vector<4x128x1xf32>
    %54 = vector.broadcast %53 : vector<4x128x1xf32> to vector<4x128x128xf32>
    %55 = arith.subf %51, %54 : vector<4x128x128xf32>
    %56 = math.exp %55 : vector<4x128x128xf32>
    %cst_22 = arith.constant dense<0.000000e+00> : vector<4x128xf32>
    %57 = vector.multi_reduction <add>, %56, %cst_22 [2] : vector<4x128x128xf32> to vector<4x128xf32>
    %58 = vector.shape_cast %57 : vector<4x128xf32> to vector<4x128x1xf32>
    %59 = arith.truncf %56 : vector<4x128x128xf32> to vector<4x128x128xbf16>
    "tpu.trace_start"() <{level = 10 : i32, message = "nqk,nkd->nqd"}> : () -> ()
    %cst_23 = arith.constant dense<0.000000e+00> : vector<4x128x128xf32>
    %60 = tpu.matmul %59, %50, %cst_23 {dimension_numbers = #tpu.dot_dimension_numbers<[2], [1], [1], [2], [0, 0, 0, 1, 1, 2], [0], [0]>} : vector<4x128x128xbf16>, vector<4x128x128xbf16>, vector<4x128x128xf32> -> vector<4x128x128xf32>
    "tpu.trace_stop"() : () -> ()
    %61 = tpu.reciprocal %58 {approx = true} : vector<4x128x1xf32> -> vector<4x128x1xf32>
    %62 = vector.broadcast %61 : vector<4x128x1xf32> to vector<4x128x128xf32>
    %63 = arith.mulf %60, %62 : vector<4x128x128xf32>
    %64 = arith.truncf %63 : vector<4x128x128xf32> to vector<4x128x128xbf16>
    %65 = tpu.transpose %64, [0, 2, 1] : vector<4x128x128xbf16> -> vector<4x128x128xbf16>
    %66 = vector.shape_cast %65 : vector<4x128x128xbf16> to vector<2x256x128xbf16>
    %67 = tpu.transpose %66, [0, 2, 1] : vector<2x256x128xbf16> -> vector<2x128x256xbf16>
    %68 = vector.shape_cast %67 : vector<2x128x256xbf16> to vector<256x256xbf16>
    %c0_24 = arith.constant 0 : index
    %c0_25 = arith.constant 0 : index
    %c0_26 = arith.constant 0 : index
    %69 = vector.load %arg7[%c0_24, %c0_25, %c0_26] : memref<1x256x128xbf16, #tpu.memory_space<vmem>>, vector<1x256x128xbf16>
    %70 = vector.shape_cast %69 : vector<1x256x128xbf16> to vector<256x128xbf16>
    %cst_27 = arith.constant dense<0.000000e+00> : vector<256x128xf32>
    %71 = tpu.matmul %68, %70, %cst_27 {dimension_numbers = #tpu.dot_dimension_numbers<[1], [0], [0], [1], [0, 0, 1, 1], [], []>} : vector<256x256xbf16>, vector<256x128xbf16>, vector<256x128xf32> -> vector<256x128xf32>
    %c0_28 = arith.constant 0 : index
    %c0_29 = arith.constant 0 : index
    %c0_30 = arith.constant 0 : index
    %72 = vector.load %arg8[%c0_28, %c0_29, %c0_30] : memref<1x1x128xf32, #tpu.memory_space<vmem>>, vector<1x1x128xf32>
    %73 = vector.shape_cast %72 : vector<1x1x128xf32> to vector<1x128xf32>
    %74 = vector.broadcast %73 : vector<1x128xf32> to vector<256x128xf32>
    %75 = arith.addf %71, %74 : vector<256x128xf32>
    %76 = arith.addf %75, %4 : vector<256x128xf32>
    %c0_31 = arith.constant 0 : index
    %c0_32 = arith.constant 0 : index
    %c0_33 = arith.constant 0 : index
    %77 = vector.load %arg9[%c0_31, %c0_32, %c0_33] : memref<1x1x128xf32, #tpu.memory_space<vmem>>, vector<1x1x128xf32>
    %78 = vector.shape_cast %77 : vector<1x1x128xf32> to vector<1x128xf32>
    %c0_34 = arith.constant 0 : index
    %c0_35 = arith.constant 0 : index
    %c0_36 = arith.constant 0 : index
    %79 = vector.load %arg10[%c0_34, %c0_35, %c0_36] : memref<1x1x128xf32, #tpu.memory_space<vmem>>, vector<1x1x128xf32>
    %80 = vector.shape_cast %79 : vector<1x1x128xf32> to vector<1x128xf32>
    %cst_37 = arith.constant dense<0.000000e+00> : vector<256xf32>
    %81 = vector.multi_reduction <add>, %76, %cst_37 [1] : vector<256x128xf32> to vector<256xf32>
    %82 = vector.shape_cast %81 : vector<256xf32> to vector<256x1xf32>
    %cst_38 = arith.constant 1.280000e+02 : f32
    %83 = vector.broadcast %cst_38 : f32 to vector<256x1xf32>
    %84 = arith.divf %82, %83 : vector<256x1xf32>
    %85 = vector.broadcast %84 : vector<256x1xf32> to vector<256x128xf32>
    %86 = arith.subf %76, %85 : vector<256x128xf32>
    %87 = arith.mulf %86, %86 : vector<256x128xf32>
    %cst_39 = arith.constant dense<0.000000e+00> : vector<256xf32>
    %88 = vector.multi_reduction <add>, %87, %cst_39 [1] : vector<256x128xf32> to vector<256xf32>
    %89 = vector.shape_cast %88 : vector<256xf32> to vector<256x1xf32>
    %cst_40 = arith.constant 1.280000e+02 : f32
    %90 = vector.broadcast %cst_40 : f32 to vector<256x1xf32>
    %91 = arith.divf %89, %90 : vector<256x1xf32>
    %92 = vector.broadcast %84 : vector<256x1xf32> to vector<256x128xf32>
    %93 = arith.subf %76, %92 : vector<256x128xf32>
    %cst_41 = arith.constant 9.99999974E-6 : f32
    %94 = vector.broadcast %cst_41 : f32 to vector<256x1xf32>
    %95 = arith.addf %91, %94 : vector<256x1xf32>
    %96 = math.rsqrt %95 : vector<256x1xf32>
    %97 = vector.broadcast %96 : vector<256x1xf32> to vector<256x128xf32>
    %98 = arith.mulf %93, %97 : vector<256x128xf32>
    %99 = vector.broadcast %78 : vector<1x128xf32> to vector<256x128xf32>
    %100 = arith.mulf %98, %99 : vector<256x128xf32>
    %101 = vector.broadcast %80 : vector<1x128xf32> to vector<256x128xf32>
    %102 = arith.addf %100, %101 : vector<256x128xf32>
    %103 = arith.truncf %102 : vector<256x128xf32> to vector<256x128xbf16>
    %c0_42 = arith.constant 0 : index
    %c0_43 = arith.constant 0 : index
    %c0_44 = arith.constant 0 : index
    %104 = vector.load %arg11[%c0_42, %c0_43, %c0_44] : memref<1x128x256xbf16, #tpu.memory_space<vmem>>, vector<1x128x256xbf16>
    %105 = vector.shape_cast %104 : vector<1x128x256xbf16> to vector<128x256xbf16>
    %cst_45 = arith.constant dense<0.000000e+00> : vector<256x256xf32>
    %106 = tpu.matmul %103, %105, %cst_45 {dimension_numbers = #tpu.dot_dimension_numbers<[1], [0], [0], [1], [0, 0, 1, 1], [], []>} : vector<256x128xbf16>, vector<128x256xbf16>, vector<256x256xf32> -> vector<256x256xf32>
    %c0_46 = arith.constant 0 : index
    %c0_47 = arith.constant 0 : index
    %c0_48 = arith.constant 0 : index
    %107 = vector.load %arg12[%c0_46, %c0_47, %c0_48] : memref<1x1x256xf32, #tpu.memory_space<vmem>>, vector<1x1x256xf32>
    %108 = vector.shape_cast %107 : vector<1x1x256xf32> to vector<1x256xf32>
    %109 = vector.broadcast %108 : vector<1x256xf32> to vector<256x256xf32>
    %110 = arith.addf %106, %109 : vector<256x256xf32>
    %cst_49 = arith.constant 5.000000e-01 : f32
    %111 = vector.broadcast %cst_49 : f32 to vector<256x256xf32>
    %112 = arith.mulf %111, %110 : vector<256x256xf32>
    %cst_50 = arith.constant 4.471500e-02 : f32
    %113 = vector.broadcast %cst_50 : f32 to vector<256x256xf32>
    %114 = arith.mulf %113, %110 : vector<256x256xf32>
    %115 = arith.mulf %114, %110 : vector<256x256xf32>
    %116 = arith.mulf %115, %110 : vector<256x256xf32>
    %117 = arith.addf %110, %116 : vector<256x256xf32>
    %cst_51 = arith.constant 0.797884583 : f32
    %118 = vector.broadcast %cst_51 : f32 to vector<256x256xf32>
    %119 = arith.mulf %118, %117 : vector<256x256xf32>
    %120 = math.tanh %119 : vector<256x256xf32>
    %cst_52 = arith.constant 1.000000e+00 : f32
    %121 = vector.broadcast %cst_52 : f32 to vector<256x256xf32>
    %122 = arith.addf %121, %120 : vector<256x256xf32>
    %123 = arith.mulf %112, %122 : vector<256x256xf32>
    %124 = arith.truncf %123 : vector<256x256xf32> to vector<256x256xbf16>
    %c0_53 = arith.constant 0 : index
    %c0_54 = arith.constant 0 : index
    %c0_55 = arith.constant 0 : index
    %125 = vector.load %arg13[%c0_53, %c0_54, %c0_55] : memref<1x256x128xbf16, #tpu.memory_space<vmem>>, vector<1x256x128xbf16>
    %126 = vector.shape_cast %125 : vector<1x256x128xbf16> to vector<256x128xbf16>
    %cst_56 = arith.constant dense<0.000000e+00> : vector<256x128xf32>
    %127 = tpu.matmul %124, %126, %cst_56 {dimension_numbers = #tpu.dot_dimension_numbers<[1], [0], [0], [1], [0, 0, 1, 1], [], []>} : vector<256x256xbf16>, vector<256x128xbf16>, vector<256x128xf32> -> vector<256x128xf32>
    %c0_57 = arith.constant 0 : index
    %c0_58 = arith.constant 0 : index
    %c0_59 = arith.constant 0 : index
    %128 = vector.load %arg14[%c0_57, %c0_58, %c0_59] : memref<1x1x128xf32, #tpu.memory_space<vmem>>, vector<1x1x128xf32>
    %129 = vector.shape_cast %128 : vector<1x1x128xf32> to vector<1x128xf32>
    %130 = vector.broadcast %129 : vector<1x128xf32> to vector<256x128xf32>
    %131 = arith.addf %127, %130 : vector<256x128xf32>
    %132 = arith.addf %131, %76 : vector<256x128xf32>
    %133 = vector.shape_cast %132 : vector<256x128xf32> to vector<2x128x128xf32>
    %c0_60 = arith.constant 0 : index
    %c0_61 = arith.constant 0 : index
    %c0_62 = arith.constant 0 : index
    %134 = vector.load %arg16[%c0_60, %c0_61, %c0_62] : memref<2x128x128xf32, #tpu.memory_space<vmem>>, vector<2x128x128xf32>
    tpu.vector_store %arg16[%c0_60, %c0_61, %c0_62], %133 {strides = array<i32>} : memref<2x128x128xf32, #tpu.memory_space<vmem>>, vector<2x128x128xf32>,
    %c1_i32 = arith.constant 1 : i32
    %135 = arith.cmpi eq, %arg1, %c1_i32 : i32
    %136 = arith.extui %135 : i1 to i32
    %c0_i32_63 = arith.constant 0 : i32
    %137 = arith.cmpi ne, %136, %c0_i32_63 : i32
    scf.if %137 {
      %c0_64 = arith.constant 0 : index
      %c0_65 = arith.constant 0 : index
      %c0_66 = arith.constant 0 : index
      %138 = vector.load %arg15[%c0_64, %c0_65, %c0_66] : memref<2x128x128xf32, #tpu.memory_space<vmem>>, vector<2x128x128xf32>
      tpu.vector_store %arg15[%c0_64, %c0_65, %c0_66], %133 {strides = array<i32>} : memref<2x128x128xf32, #tpu.memory_space<vmem>>, vector<2x128x128xf32>,
    } else {
    }
    return
  }
  func.func @transform_1(%arg0: i32, %arg1: i32) -> (i32, i32, i32) {
    %c0_i32 = arith.constant 0 : i32
    %c0_i32_0 = arith.constant 0 : i32
    %c0_i32_1 = arith.constant 0 : i32
    return %arg1, %c0_i32, %c0_i32_0 : i32, i32, i32
  }
  func.func @transform_2(%arg0: i32, %arg1: i32) -> (i32, i32, i32) {
    %c0_i32 = arith.constant 0 : i32
    %c0_i32_0 = arith.constant 0 : i32
    %c0_i32_1 = arith.constant 0 : i32
    return %arg1, %c0_i32, %c0_i32_0 : i32, i32, i32
  }
  func.func @transform_3(%arg0: i32, %arg1: i32) -> (i32, i32, i32) {
    %c0_i32 = arith.constant 0 : i32
    %c0_i32_0 = arith.constant 0 : i32
    %c0_i32_1 = arith.constant 0 : i32
    return %arg1, %c0_i32, %c0_i32_0 : i32, i32, i32
  }
  func.func @transform_4(%arg0: i32, %arg1: i32) -> (i32, i32, i32) {
    %c0_i32 = arith.constant 0 : i32
    %c0_i32_0 = arith.constant 0 : i32
    %c0_i32_1 = arith.constant 0 : i32
    return %arg1, %c0_i32, %c0_i32_0 : i32, i32, i32
  }
  func.func @transform_5(%arg0: i32, %arg1: i32) -> (i32, i32, i32) {
    %c0_i32 = arith.constant 0 : i32
    %c0_i32_0 = arith.constant 0 : i32
    %c0_i32_1 = arith.constant 0 : i32
    return %arg1, %c0_i32, %c0_i32_0 : i32, i32, i32
  }
  func.func @transform_6(%arg0: i32, %arg1: i32) -> (i32, i32, i32) {
    %c0_i32 = arith.constant 0 : i32
    %c0_i32_0 = arith.constant 0 : i32
    %c0_i32_1 = arith.constant 0 : i32
    return %arg1, %c0_i32, %c0_i32_0 : i32, i32, i32
  }
  func.func @transform_7(%arg0: i32, %arg1: i32) -> (i32, i32, i32) {
    %c0_i32 = arith.constant 0 : i32
    %c0_i32_0 = arith.constant 0 : i32
    %c0_i32_1 = arith.constant 0 : i32
    return %arg1, %c0_i32, %c0_i32_0 : i32, i32, i32
  }
  func.func @transform_8(%arg0: i32, %arg1: i32) -> (i32, i32, i32) {
    %c0_i32 = arith.constant 0 : i32
    %c0_i32_0 = arith.constant 0 : i32
    %c0_i32_1 = arith.constant 0 : i32
    return %arg1, %c0_i32, %c0_i32_0 : i32, i32, i32
  }
  func.func @transform_9(%arg0: i32, %arg1: i32) -> (i32, i32, i32) {
    %c0_i32 = arith.constant 0 : i32
    %c0_i32_0 = arith.constant 0 : i32
    %c0_i32_1 = arith.constant 0 : i32
    return %arg1, %c0_i32, %c0_i32_0 : i32, i32, i32
  }
  func.func @transform_10(%arg0: i32, %arg1: i32) -> (i32, i32, i32) {
    %c0_i32 = arith.constant 0 : i32
    %c0_i32_0 = arith.constant 0 : i32
    %c0_i32_1 = arith.constant 0 : i32
    return %arg1, %c0_i32, %c0_i32_0 : i32, i32, i32
  }
  func.func @transform_11(%arg0: i32, %arg1: i32) -> (i32, i32, i32) {
    %c0_i32 = arith.constant 0 : i32
    %c0_i32_0 = arith.constant 0 : i32
    %c0_i32_1 = arith.constant 0 : i32
    return %arg1, %c0_i32, %c0_i32_0 : i32, i32, i32
  }
  func.func @transform_12(%arg0: i32, %arg1: i32) -> (i32, i32, i32) {
    %c0_i32 = arith.constant 0 : i32
    %c0_i32_0 = arith.constant 0 : i32
    %c0_i32_1 = arith.constant 0 : i32
    return %arg1, %c0_i32, %c0_i32_0 : i32, i32, i32
  }
  func.func @transform_13(%arg0: i32, %arg1: i32) -> (i32, i32, i32) {
    %c0_i32 = arith.constant 0 : i32
    %c0_i32_0 = arith.constant 0 : i32
    %c0_i32_1 = arith.constant 0 : i32
    return %arg0, %c0_i32, %c0_i32_0 : i32, i32, i32
  }
}

</mosaic_0001>

<llo_original>
// kernel: transformer_decoder.1
$region0: #{transformer_decoder.1}
  #allocation0 [shape = 'u32[]', space=smem, size = 0x4, offset = 0x4, fixed_abs, tag = 'smem constant byte address 0x4 - core index']
  #allocation1 [shape = 'u32[72,128]{1,0:T(1,128)}', space=vmem, size = 0x9000, scoped, tag = 'internal scratch']
  #allocation2 [shape = 'f32[2,128,128]{2,1,0:T(8,128)}', space=vmem, size = 0x20000, scoped, tag = 'scratch operand']
  #allocation6 [shape = 's32[]', space=sflag, size = 0x4, offset = 0, fixed_abs, tag = 'sflag constant byte address 0x0 - dummy sync flag']
  %s0 = inlined_call_operand.vmem [shape: f32[2,128,128], index: 0, kind: input, shape index: {}]
  %s1 = inlined_call_operand.vmem [shape: f32[2,1,128], index: 1, kind: input, shape index: {}]
  %s2 = inlined_call_operand.vmem [shape: f32[2,1,128], index: 2, kind: input, shape index: {}]
  %s3 = inlined_call_operand.vmem [shape: bf16[2,128,768], index: 3, kind: input, shape index: {}]
  %s4 = inlined_call_operand.vmem [shape: f32[2,1,768], index: 4, kind: input, shape index: {}]
  %s5 = inlined_call_operand.vmem [shape: bf16[2,256,128], index: 5, kind: input, shape index: {}]
  %s6 = inlined_call_operand.vmem [shape: f32[2,1,128], index: 6, kind: input, shape index: {}]
  %s7 = inlined_call_operand.vmem [shape: f32[2,1,128], index: 7, kind: input, shape index: {}]
  %s8 = inlined_call_operand.vmem [shape: f32[2,1,128], index: 8, kind: input, shape index: {}]
  %s9 = inlined_call_operand.vmem [shape: bf16[2,128,256], index: 9, kind: input, shape index: {}]
  %s10 = inlined_call_operand.vmem [shape: f32[2,1,256], index: 10, kind: input, shape index: {}]
  %s11 = inlined_call_operand.vmem [shape: bf16[2,256,128], index: 11, kind: input, shape index: {}]
  %s12 = inlined_call_operand.vmem [shape: f32[2,1,128], index: 12, kind: input, shape index: {}]
  %s13 = inlined_call_operand.hbm [shape: f32[2,128,128], index: 13, kind: output, shape index: {}]
  %s14 = sld [smem:[#allocation0]]
  $region109: #{transformer_decoder.1} parent=0
    _
  %s16 = ssub.s32 1, %s14
  %s17 = scalar_select 0, %s16, %s14
  $region1: #{transformer_decoder.1} parent=0
    #allocation3 [shape = 'u8[131072]{0}', space=vmem, size = 0x20000, scoped, tag = 'output window, operand 0, single buffered']
    #allocation4 [shape = 's32[2]{0}', space=sflag, size = 0x8, scoped, tag = 'scoped memory for transformer_decoder.1']
    %18 = vsyncpa [#allocation4], 0
    loop: start=0, step=1, limit=4
    $region2: #{transformer_decoder.1} parent=1 // loop_pre_header
      _
    $region3: #{transformer_decoder.1} parent=1 // loop_header
      %s20 = sphi 0, %s24
      %p21 = scmp.ge.s32.totalorder %s20, 4
      %s27 = sphi 0, %s39
      %s28 = sphi 0, %s35
      %s29 = sphi 0, %s27
      %s30 = sphi 0, %s28
      %s31 = sphi 0, %s29
      %s32 = sphi 0, %s30
      %s42 = sphi 0, %s44
      %s45 = sphi 0, %s42
      %s46 = sphi 0, %s45
      %s62 = sphi 0, %s46
      %s68 = sphi 0, %s70
      %s71 = sphi 0, %s68
      %s72 = sphi 0, %s71
      %s88 = sphi 0, %s72
      %s94 = sphi 0, %s96
      %s97 = sphi 0, %s94
      %s98 = sphi 0, %s97
      %s114 = sphi 0, %s98
      %s120 = sphi 0, %s122
      %s123 = sphi 0, %s120
      %s124 = sphi 0, %s123
      %s140 = sphi 0, %s124
      %s146 = sphi 0, %s148
      %s149 = sphi 0, %s146
      %s150 = sphi 0, %s149
      %s166 = sphi 0, %s150
      %s172 = sphi 0, %s174
      %s175 = sphi 0, %s172
      %s176 = sphi 0, %s175
      %s192 = sphi 0, %s176
      %s198 = sphi 0, %s200
      %s201 = sphi 0, %s198
      %s202 = sphi 0, %s201
      %s218 = sphi 0, %s202
      %s224 = sphi 0, %s226
      %s227 = sphi 0, %s224
      %s228 = sphi 0, %s227
      %s244 = sphi 0, %s228
      %s250 = sphi 0, %s252
      %s253 = sphi 0, %s250
      %s254 = sphi 0, %s253
      %s270 = sphi 0, %s254
      %s276 = sphi 0, %s278
      %s279 = sphi 0, %s276
      %s280 = sphi 0, %s279
      %s296 = sphi 0, %s280
      %s302 = sphi 0, %s304
      %s305 = sphi 0, %s302
      %s306 = sphi 0, %s305
      %s322 = sphi 0, %s306
      %s328 = sphi 0, %s330
      %s331 = sphi 0, %s328
      %s332 = sphi 0, %s331
      %s348 = sphi 0, %s332
      %s354 = sphi 0, %s356
      %s357 = sphi 0, %s354
      %s358 = sphi 0, %s357
      %s374 = sphi 0, %s358
    $region4: #{transformer_decoder.1} parent=1 // loop_header_branch
      %23 = sbr.rel (%p21) target = $region8
    $region5: #{transformer_decoder.1} parent=1 // loop_body
      %s25 = ssub.s32 %s20, 1
      %s26 = ssub.s32 %s20, 2
      %s33 = sadd.s32 1, %s28
      %p34 = scmp.ge.s32.totalorder %s33, 2
      %s35 = scalar_select %p34, 0, %s33
      %s36 = sadd.s32 1, %s27
      %s37 = scalar_select %p34, %s36, %s27
      %p38 = scmp.ge.s32.totalorder %s37, 1
      %s39 = scalar_select %p38, 0, %s37
      %s40 = ssub.s32 %s28, %s35
      %p41 = scmp.eq.s32.totalorder %s40, 0
      %s43 = sadd.s32 %s42, 1
      %s44 = scalar_select %p41, %s42, %s43
      %p47 = pneg %p41
      %p48 = scmp.eq.s32.totalorder %s20, 1
      %p49 = por %p47, %p48
      %p50 = scmp.ne.s32.totalorder %s42, %s45
      %p51 = scmp.eq.s32.totalorder %s20, 0
      %p52 = por %p50, %p51
      %p53 = scmp.ne.s32.totalorder %s42, %s45
      %p54 = scmp.eq.s32.totalorder %s25, 1
      %p55 = por %p53, %p54
      %p56 = scmp.ne.s32.totalorder %s45, %s46
      %p57 = scmp.eq.s32.totalorder %s25, 0
      %p58 = por %p56, %p57
      %p59 = scmp.ne.s32.totalorder %s45, %s46
      %p60 = scmp.eq.s32.totalorder %s26, 1
      %p61 = por %p59, %p60
      %p63 = scmp.ne.s32.totalorder %s46, %s62
      %p64 = scmp.eq.s32.totalorder %s26, 0
      %p65 = por %p63, %p64
      %s66 = ssub.s32 %s28, %s35
      %p67 = scmp.eq.s32.totalorder %s66, 0
      %s69 = sadd.s32 %s68, 1
      %s70 = scalar_select %p67, %s68, %s69
      %p73 = pneg %p67
      %p74 = scmp.eq.s32.totalorder %s20, 1
      %p75 = por %p73, %p74
      %p76 = scmp.ne.s32.totalorder %s68, %s71
      %p77 = scmp.eq.s32.totalorder %s20, 0
      %p78 = por %p76, %p77
      %p79 = scmp.ne.s32.totalorder %s68, %s71
      %p80 = scmp.eq.s32.totalorder %s25, 1
      %p81 = por %p79, %p80
      %p82 = scmp.ne.s32.totalorder %s71, %s72
      %p83 = scmp.eq.s32.totalorder %s25, 0
      %p84 = por %p82, %p83
      %p85 = scmp.ne.s32.totalorder %s71, %s72
      %p86 = scmp.eq.s32.totalorder %s26, 1
      %p87 = por %p85, %p86
      %p89 = scmp.ne.s32.totalorder %s72, %s88
      %p90 = scmp.eq.s32.totalorder %s26, 0
      %p91 = por %p89, %p90
      %s92 = ssub.s32 %s28, %s35
      %p93 = scmp.eq.s32.totalorder %s92, 0
      %s95 = sadd.s32 %s94, 1
      %s96 = scalar_select %p93, %s94, %s95
      %p99 = pneg %p93
      %p100 = scmp.eq.s32.totalorder %s20, 1
      %p101 = por %p99, %p100
      %p102 = scmp.ne.s32.totalorder %s94, %s97
      %p103 = scmp.eq.s32.totalorder %s20, 0
      %p104 = por %p102, %p103
      %p105 = scmp.ne.s32.totalorder %s94, %s97
      %p106 = scmp.eq.s32.totalorder %s25, 1
      %p107 = por %p105, %p106
      %p108 = scmp.ne.s32.totalorder %s97, %s98
      %p109 = scmp.eq.s32.totalorder %s25, 0
      %p110 = por %p108, %p109
      %p111 = scmp.ne.s32.totalorder %s97, %s98
      %p112 = scmp.eq.s32.totalorder %s26, 1
      %p113 = por %p111, %p112
      %p115 = scmp.ne.s32.totalorder %s98, %s114
      %p116 = scmp.eq.s32.totalorder %s26, 0
      %p117 = por %p115, %p116
      %s118 = ssub.s32 %s28, %s35
      %p119 = scmp.eq.s32.totalorder %s118, 0
      %s121 = sadd.s32 %s120, 1
      %s122 = scalar_select %p119, %s120, %s121
      %p125 = pneg %p119
      %p126 = scmp.eq.s32.totalorder %s20, 1
      %p127 = por %p125, %p126
      %p128 = scmp.ne.s32.totalorder %s120, %s123
      %p129 = scmp.eq.s32.totalorder %s20, 0
      %p130 = por %p128, %p129
      %p131 = scmp.ne.s32.totalorder %s120, %s123
      %p132 = scmp.eq.s32.totalorder %s25, 1
      %p133 = por %p131, %p132
      %p134 = scmp.ne.s32.totalorder %s123, %s124
      %p135 = scmp.eq.s32.totalorder %s25, 0
      %p136 = por %p134, %p135
      %p137 = scmp.ne.s32.totalorder %s123, %s124
      %p138 = scmp.eq.s32.totalorder %s26, 1
      %p139 = por %p137, %p138
      %p141 = scmp.ne.s32.totalorder %s124, %s140
      %p142 = scmp.eq.s32.totalorder %s26, 0
      %p143 = por %p141, %p142
      %s144 = ssub.s32 %s28, %s35
      %p145 = scmp.eq.s32.totalorder %s144, 0
      %s147 = sadd.s32 %s146, 1
      %s148 = scalar_select %p145, %s146, %s147
      %p151 = pneg %p145
      %p152 = scmp.eq.s32.totalorder %s20, 1
      %p153 = por %p151, %p152
      %p154 = scmp.ne.s32.totalorder %s146, %s149
      %p155 = scmp.eq.s32.totalorder %s20, 0
      %p156 = por %p154, %p155
      %p157 = scmp.ne.s32.totalorder %s146, %s149
      %p158 = scmp.eq.s32.totalorder %s25, 1
      %p159 = por %p157, %p158
      %p160 = scmp.ne.s32.totalorder %s149, %s150
      %p161 = scmp.eq.s32.totalorder %s25, 0
      %p162 = por %p160, %p161
      %p163 = scmp.ne.s32.totalorder %s149, %s150
      %p164 = scmp.eq.s32.totalorder %s26, 1
      %p165 = por %p163, %p164
      %p167 = scmp.ne.s32.totalorder %s150, %s166
      %p168 = scmp.eq.s32.totalorder %s26, 0
      %p169 = por %p167, %p168
      %s170 = ssub.s32 %s28, %s35
      %p171 = scmp.eq.s32.totalorder %s170, 0
      %s173 = sadd.s32 %s172, 1
      %s174 = scalar_select %p171, %s172, %s173
      %p177 = pneg %p171
      %p178 = scmp.eq.s32.totalorder %s20, 1
      %p179 = por %p177, %p178
      %p180 = scmp.ne.s32.totalorder %s172, %s175
      %p181 = scmp.eq.s32.totalorder %s20, 0
      %p182 = por %p180, %p181
      %p183 = scmp.ne.s32.totalorder %s172, %s175
      %p184 = scmp.eq.s32.totalorder %s25, 1
      %p185 = por %p183, %p184
      %p186 = scmp.ne.s32.totalorder %s175, %s176
      %p187 = scmp.eq.s32.totalorder %s25, 0
      %p188 = por %p186, %p187
      %p189 = scmp.ne.s32.totalorder %s175, %s176
      %p190 = scmp.eq.s32.totalorder %s26, 1
      %p191 = por %p189, %p190
      %p193 = scmp.ne.s32.totalorder %s176, %s192
      %p194 = scmp.eq.s32.totalorder %s26, 0
      %p195 = por %p193, %p194
      %s196 = ssub.s32 %s28, %s35
      %p197 = scmp.eq.s32.totalorder %s196, 0
      %s199 = sadd.s32 %s198, 1
      %s200 = scalar_select %p197, %s198, %s199
      %p203 = pneg %p197
      %p204 = scmp.eq.s32.totalorder %s20, 1
      %p205 = por %p203, %p204
      %p206 = scmp.ne.s32.totalorder %s198, %s201
      %p207 = scmp.eq.s32.totalorder %s20, 0
      %p208 = por %p206, %p207
      %p209 = scmp.ne.s32.totalorder %s198, %s201
      %p210 = scmp.eq.s32.totalorder %s25, 1
      %p211 = por %p209, %p210
      %p212 = scmp.ne.s32.totalorder %s201, %s202
      %p213 = scmp.eq.s32.totalorder %s25, 0
      %p214 = por %p212, %p213
      %p215 = scmp.ne.s32.totalorder %s201, %s202
      %p216 = scmp.eq.s32.totalorder %s26, 1
      %p217 = por %p215, %p216
      %p219 = scmp.ne.s32.totalorder %s202, %s218
      %p220 = scmp.eq.s32.totalorder %s26, 0
      %p221 = por %p219, %p220
      %s222 = ssub.s32 %s28, %s35
      %p223 = scmp.eq.s32.totalorder %s222, 0
      %s225 = sadd.s32 %s224, 1
      %s226 = scalar_select %p223, %s224, %s225
      %p229 = pneg %p223
      %p230 = scmp.eq.s32.totalorder %s20, 1
      %p231 = por %p229, %p230
      %p232 = scmp.ne.s32.totalorder %s224, %s227
      %p233 = scmp.eq.s32.totalorder %s20, 0
      %p234 = por %p232, %p233
      %p235 = scmp.ne.s32.totalorder %s224, %s227
      %p236 = scmp.eq.s32.totalorder %s25, 1
      %p237 = por %p235, %p236
      %p238 = scmp.ne.s32.totalorder %s227, %s228
      %p239 = scmp.eq.s32.totalorder %s25, 0
      %p240 = por %p238, %p239
      %p241 = scmp.ne.s32.totalorder %s227, %s228
      %p242 = scmp.eq.s32.totalorder %s26, 1
      %p243 = por %p241, %p242
      %p245 = scmp.ne.s32.totalorder %s228, %s244
      %p246 = scmp.eq.s32.totalorder %s26, 0
      %p247 = por %p245, %p246
      %s248 = ssub.s32 %s28, %s35
      %p249 = scmp.eq.s32.totalorder %s248, 0
      %s251 = sadd.s32 %s250, 1
      %s252 = scalar_select %p249, %s250, %s251
      %p255 = pneg %p249
      %p256 = scmp.eq.s32.totalorder %s20, 1
      %p257 = por %p255, %p256
      %p258 = scmp.ne.s32.totalorder %s250, %s253
      %p259 = scmp.eq.s32.totalorder %s20, 0
      %p260 = por %p258, %p259
      %p261 = scmp.ne.s32.totalorder %s250, %s253
      %p262 = scmp.eq.s32.totalorder %s25, 1
      %p263 = por %p261, %p262
      %p264 = scmp.ne.s32.totalorder %s253, %s254
      %p265 = scmp.eq.s32.totalorder %s25, 0
      %p266 = por %p264, %p265
      %p267 = scmp.ne.s32.totalorder %s253, %s254
      %p268 = scmp.eq.s32.totalorder %s26, 1
      %p269 = por %p267, %p268
      %p271 = scmp.ne.s32.totalorder %s254, %s270
      %p272 = scmp.eq.s32.totalorder %s26, 0
      %p273 = por %p271, %p272
      %s274 = ssub.s32 %s28, %s35
      %p275 = scmp.eq.s32.totalorder %s274, 0
      %s277 = sadd.s32 %s276, 1
      %s278 = scalar_select %p275, %s276, %s277
      %p281 = pneg %p275
      %p282 = scmp.eq.s32.totalorder %s20, 1
      %p283 = por %p281, %p282
      %p284 = scmp.ne.s32.totalorder %s276, %s279
      %p285 = scmp.eq.s32.totalorder %s20, 0
      %p286 = por %p284, %p285
      %p287 = scmp.ne.s32.totalorder %s276, %s279
      %p288 = scmp.eq.s32.totalorder %s25, 1
      %p289 = por %p287, %p288
      %p290 = scmp.ne.s32.totalorder %s279, %s280
      %p291 = scmp.eq.s32.totalorder %s25, 0
      %p292 = por %p290, %p291
      %p293 = scmp.ne.s32.totalorder %s279, %s280
      %p294 = scmp.eq.s32.totalorder %s26, 1
      %p295 = por %p293, %p294
      %p297 = scmp.ne.s32.totalorder %s280, %s296
      %p298 = scmp.eq.s32.totalorder %s26, 0
      %p299 = por %p297, %p298
      %s300 = ssub.s32 %s28, %s35
      %p301 = scmp.eq.s32.totalorder %s300, 0
      %s303 = sadd.s32 %s302, 1
      %s304 = scalar_select %p301, %s302, %s303
      %p307 = pneg %p301
      %p308 = scmp.eq.s32.totalorder %s20, 1
      %p309 = por %p307, %p308
      %p310 = scmp.ne.s32.totalorder %s302, %s305
      %p311 = scmp.eq.s32.totalorder %s20, 0
      %p312 = por %p310, %p311
      %p313 = scmp.ne.s32.totalorder %s302, %s305
      %p314 = scmp.eq.s32.totalorder %s25, 1
      %p315 = por %p313, %p314
      %p316 = scmp.ne.s32.totalorder %s305, %s306
      %p317 = scmp.eq.s32.totalorder %s25, 0
      %p318 = por %p316, %p317
      %p319 = scmp.ne.s32.totalorder %s305, %s306
      %p320 = scmp.eq.s32.totalorder %s26, 1
      %p321 = por %p319, %p320
      %p323 = scmp.ne.s32.totalorder %s306, %s322
      %p324 = scmp.eq.s32.totalorder %s26, 0
      %p325 = por %p323, %p324
      %s326 = ssub.s32 %s28, %s35
      %p327 = scmp.eq.s32.totalorder %s326, 0
      %s329 = sadd.s32 %s328, 1
      %s330 = scalar_select %p327, %s328, %s329
      %p333 = pneg %p327
      %p334 = scmp.eq.s32.totalorder %s20, 1
      %p335 = por %p333, %p334
      %p336 = scmp.ne.s32.totalorder %s328, %s331
      %p337 = scmp.eq.s32.totalorder %s20, 0
      %p338 = por %p336, %p337
      %p339 = scmp.ne.s32.totalorder %s328, %s331
      %p340 = scmp.eq.s32.totalorder %s25, 1
      %p341 = por %p339, %p340
      %p342 = scmp.ne.s32.totalorder %s331, %s332
      %p343 = scmp.eq.s32.totalorder %s25, 0
      %p344 = por %p342, %p343
      %p345 = scmp.ne.s32.totalorder %s331, %s332
      %p346 = scmp.eq.s32.totalorder %s26, 1
      %p347 = por %p345, %p346
      %p349 = scmp.ne.s32.totalorder %s332, %s348
      %p350 = scmp.eq.s32.totalorder %s26, 0
      %p351 = por %p349, %p350
      %s352 = ssub.s32 %s27, %s39
      %p353 = scmp.eq.s32.totalorder %s352, 0
      %s355 = sadd.s32 %s354, 1
      %s356 = scalar_select %p353, %s354, %s355
      %p359 = pneg %p353
      %p360 = scmp.eq.s32.totalorder %s20, 1
      %p361 = por %p359, %p360
      %p362 = scmp.ne.s32.totalorder %s354, %s357
      %p363 = scmp.eq.s32.totalorder %s20, 0
      %p364 = por %p362, %p363
      %p365 = scmp.ne.s32.totalorder %s354, %s357
      %p366 = scmp.eq.s32.totalorder %s25, 1
      %p367 = por %p365, %p366
      %p368 = scmp.ne.s32.totalorder %s357, %s358
      %p369 = scmp.eq.s32.totalorder %s25, 0
      %p370 = por %p368, %p369
      %p371 = scmp.ne.s32.totalorder %s357, %s358
      %p372 = scmp.eq.s32.totalorder %s26, 1
      %p373 = por %p371, %p372
      %p375 = scmp.ne.s32.totalorder %s358, %s374
      %p376 = scmp.eq.s32.totalorder %s26, 0
      %p377 = por %p375, %p376
      %p378 = scmp.le.s32.totalorder 1, %s20
      %p379 = scmp.lt.s32.totalorder %s20, 3
      %p380 = pnand %p378, %p379
      %p381 = pneg %p380
      // Predicated region
      $region9: #{transformer_decoder.1} parent=5 // pred_check
        _
      $region10: #{transformer_decoder.1} parent=5 // pred_check_branch
        %383 = sbr.rel (%p380) target = $region12
      $region11: #{transformer_decoder.1} parent=5 // pred_region
        %s384 = ssub.s32 %s20, 1
      $region12: #{transformer_decoder.1} parent=5 // pred_fallthru
        _
      %p385 = scmp.lt.s32.totalorder %s20, 2
      // Predicated region
      $region13: #{transformer_decoder.1} parent=5 // pred_check
        %p386 = pneg %p385
      $region14: #{transformer_decoder.1} parent=5 // pred_check_branch
        %388 = sbr.rel (%p386) target = $region16
      $region15: #{transformer_decoder.1} parent=5 // pred_region
        // Predicated region
        $region17: #{transformer_decoder.1} parent=15 // pred_check
          %p389 = pneg %p52
        $region18: #{transformer_decoder.1} parent=15 // pred_check_branch
          %391 = sbr.rel (%p389) target = $region20
        $region19: #{transformer_decoder.1} parent=15 // pred_region
          %p392 = scmp.lt.s32.totalorder %s28, 1
          %s393 = scalar_select %p392, %s28, 1
          %s394 = scalar_lea.vmem %s1, %s393
        $region20: #{transformer_decoder.1} parent=15 // pred_fallthru
          _
        // Predicated region
        $region21: #{transformer_decoder.1} parent=15 // pred_check
          %p395 = pneg %p78
        $region22: #{transformer_decoder.1} parent=15 // pred_check_branch
          %397 = sbr.rel (%p395) target = $region24
        $region23: #{transformer_decoder.1} parent=15 // pred_region
          %p398 = scmp.lt.s32.totalorder %s28, 1
          %s399 = scalar_select %p398, %s28, 1
          %s400 = scalar_lea.vmem %s2, %s399
        $region24: #{transformer_decoder.1} parent=15 // pred_fallthru
          _
        // Predicated region
        $region25: #{transformer_decoder.1} parent=15 // pred_check
          %p401 = pneg %p104
        $region26: #{transformer_decoder.1} parent=15 // pred_check_branch
          %403 = sbr.rel (%p401) target = $region28
        $region27: #{transformer_decoder.1} parent=15 // pred_region
          %p404 = scmp.lt.s32.totalorder %s28, 1
          %s405 = scalar_select %p404, %s28, 1
          %s406 = smul.addr %s405, 96
          %s407 = smul.addr %s406, 4
          %s408 = scalar_lea.vmem %s3, %s407
        $region28: #{transformer_decoder.1} parent=15 // pred_fallthru
          _
        // Predicated region
        $region29: #{transformer_decoder.1} parent=15 // pred_check
          %p409 = pneg %p130
        $region30: #{transformer_decoder.1} parent=15 // pred_check_branch
          %411 = sbr.rel (%p409) target = $region32
        $region31: #{transformer_decoder.1} parent=15 // pred_region
          %p412 = scmp.lt.s32.totalorder %s28, 1
          %s413 = scalar_select %p412, %s28, 1
          %s414 = smul.addr %s413, 6
          %s415 = scalar_lea.vmem %s4, %s414
        $region32: #{transformer_decoder.1} parent=15 // pred_fallthru
          _
        // Predicated region
        $region33: #{transformer_decoder.1} parent=15 // pred_check
          %p416 = pneg %p156
        $region34: #{transformer_decoder.1} parent=15 // pred_check_branch
          %418 = sbr.rel (%p416) target = $region36
        $region35: #{transformer_decoder.1} parent=15 // pred_region
          %p419 = scmp.lt.s32.totalorder %s28, 1
          %s420 = scalar_select %p419, %s28, 1
          %s421 = smul.addr %s420, 32
          %s422 = smul.addr %s421, 4
          %s423 = scalar_lea.vmem %s5, %s422
        $region36: #{transformer_decoder.1} parent=15 // pred_fallthru
          _
        // Predicated region
        $region37: #{transformer_decoder.1} parent=15 // pred_check
          %p424 = pneg %p182
        $region38: #{transformer_decoder.1} parent=15 // pred_check_branch
          %426 = sbr.rel (%p424) target = $region40
        $region39: #{transformer_decoder.1} parent=15 // pred_region
          %p427 = scmp.lt.s32.totalorder %s28, 1
          %s428 = scalar_select %p427, %s28, 1
          %s429 = scalar_lea.vmem %s6, %s428
        $region40: #{transformer_decoder.1} parent=15 // pred_fallthru
          _
        // Predicated region
        $region41: #{transformer_decoder.1} parent=15 // pred_check
          %p430 = pneg %p208
        $region42: #{transformer_decoder.1} parent=15 // pred_check_branch
          %432 = sbr.rel (%p430) target = $region44
        $region43: #{transformer_decoder.1} parent=15 // pred_region
          %p433 = scmp.lt.s32.totalorder %s28, 1
          %s434 = scalar_select %p433, %s28, 1
          %s435 = scalar_lea.vmem %s7, %s434
        $region44: #{transformer_decoder.1} parent=15 // pred_fallthru
          _
        // Predicated region
        $region45: #{transformer_decoder.1} parent=15 // pred_check
          %p436 = pneg %p234
        $region46: #{transformer_decoder.1} parent=15 // pred_check_branch
          %438 = sbr.rel (%p436) target = $region48
        $region47: #{transformer_decoder.1} parent=15 // pred_region
          %p439 = scmp.lt.s32.totalorder %s28, 1
          %s440 = scalar_select %p439, %s28, 1
          %s441 = scalar_lea.vmem %s8, %s440
        $region48: #{transformer_decoder.1} parent=15 // pred_fallthru
          _
        // Predicated region
        $region49: #{transformer_decoder.1} parent=15 // pred_check
          %p442 = pneg %p260
        $region50: #{transformer_decoder.1} parent=15 // pred_check_branch
          %444 = sbr.rel (%p442) target = $region52
        $region51: #{transformer_decoder.1} parent=15 // pred_region
          %p445 = scmp.lt.s32.totalorder %s28, 1
          %s446 = scalar_select %p445, %s28, 1
          %s447 = smul.addr %s446, 32
          %s448 = smul.addr %s447, 4
          %s449 = scalar_lea.vmem %s9, %s448
        $region52: #{transformer_decoder.1} parent=15 // pred_fallthru
          _
        // Predicated region
        $region53: #{transformer_decoder.1} parent=15 // pred_check
          %p450 = pneg %p286
        $region54: #{transformer_decoder.1} parent=15 // pred_check_branch
          %452 = sbr.rel (%p450) target = $region56
        $region55: #{transformer_decoder.1} parent=15 // pred_region
          %p453 = scmp.lt.s32.totalorder %s28, 1
          %s454 = scalar_select %p453, %s28, 1
          %s455 = smul.addr %s454, 2
          %s456 = scalar_lea.vmem %s10, %s455
        $region56: #{transformer_decoder.1} parent=15 // pred_fallthru
          _
        // Predicated region
        $region57: #{transformer_decoder.1} parent=15 // pred_check
          %p457 = pneg %p312
        $region58: #{transformer_decoder.1} parent=15 // pred_check_branch
          %459 = sbr.rel (%p457) target = $region60
        $region59: #{transformer_decoder.1} parent=15 // pred_region
          %p460 = scmp.lt.s32.totalorder %s28, 1
          %s461 = scalar_select %p460, %s28, 1
          %s462 = smul.addr %s461, 32
          %s463 = smul.addr %s462, 4
          %s464 = scalar_lea.vmem %s11, %s463
        $region60: #{transformer_decoder.1} parent=15 // pred_fallthru
          _
        // Predicated region
        $region61: #{transformer_decoder.1} parent=15 // pred_check
          %p465 = pneg %p338
        $region62: #{transformer_decoder.1} parent=15 // pred_check_branch
          %467 = sbr.rel (%p465) target = $region64
        $region63: #{transformer_decoder.1} parent=15 // pred_region
          %p468 = scmp.lt.s32.totalorder %s28, 1
          %s469 = scalar_select %p468, %s28, 1
          %s470 = scalar_lea.vmem %s12, %s469
        $region64: #{transformer_decoder.1} parent=15 // pred_fallthru
          _
      $region16: #{transformer_decoder.1} parent=5 // pred_fallthru
        _
      %p471 = scmp.le.s32.totalorder 1, %s20
      %p472 = scmp.lt.s32.totalorder %s20, 3
      %p473 = pnand %p471, %p472
      %p474 = pneg %p473
      // Predicated region
      $region65: #{transformer_decoder.1} parent=5 // pred_check
        _
      $region66: #{transformer_decoder.1} parent=5 // pred_check_branch
        %476 = sbr.rel (%p473) target = $region68
      $region67: #{transformer_decoder.1} parent=5 // pred_region
        %s477 = ssub.s32 %s20, 1
        %p478 = scmp.lt.s32.totalorder %s30, 1
        %s479 = scalar_select %p478, %s30, 1
        %s480 = scalar_lea.vmem %s1, %s479
        %p481 = pneg %p58
        %p482 = pneg %p55
        %p483 = scmp.lt.s32.totalorder %s30, 1
        %s484 = scalar_select %p483, %s30, 1
        %s485 = scalar_lea.vmem %s2, %s484
        %p486 = pneg %p84
        %p487 = pneg %p81
        %p488 = scmp.lt.s32.totalorder %s30, 1
        %s489 = scalar_select %p488, %s30, 1
        %s490 = smul.addr %s489, 96
        %s491 = smul.addr %s490, 4
        %s492 = scalar_lea.vmem %s3, %s491
        %p493 = pneg %p110
        %p494 = pneg %p107
        %p495 = scmp.lt.s32.totalorder %s30, 1
        %s496 = scalar_select %p495, %s30, 1
        %s497 = smul.addr %s496, 6
        %s498 = scalar_lea.vmem %s4, %s497
        %p499 = pneg %p136
        %p500 = pneg %p133
        %p501 = scmp.lt.s32.totalorder %s30, 1
        %s502 = scalar_select %p501, %s30, 1
        %s503 = smul.addr %s502, 32
        %s504 = smul.addr %s503, 4
        %s505 = scalar_lea.vmem %s5, %s504
        %p506 = pneg %p162
        %p507 = pneg %p159
        %p508 = scmp.lt.s32.totalorder %s30, 1
        %s509 = scalar_select %p508, %s30, 1
        %s510 = scalar_lea.vmem %s6, %s509
        %p511 = pneg %p188
        %p512 = pneg %p185
        %p513 = scmp.lt.s32.totalorder %s30, 1
        %s514 = scalar_select %p513, %s30, 1
        %s515 = scalar_lea.vmem %s7, %s514
        %p516 = pneg %p214
        %p517 = pneg %p211
        %p518 = scmp.lt.s32.totalorder %s30, 1
        %s519 = scalar_select %p518, %s30, 1
        %s520 = scalar_lea.vmem %s8, %s519
        %p521 = pneg %p240
        %p522 = pneg %p237
        %p523 = scmp.lt.s32.totalorder %s30, 1
        %s524 = scalar_select %p523, %s30, 1
        %s525 = smul.addr %s524, 32
        %s526 = smul.addr %s525, 4
        %s527 = scalar_lea.vmem %s9, %s526
        %p528 = pneg %p266
        %p529 = pneg %p263
        %p530 = scmp.lt.s32.totalorder %s30, 1
        %s531 = scalar_select %p530, %s30, 1
        %s532 = smul.addr %s531, 2
        %s533 = scalar_lea.vmem %s10, %s532
        %p534 = pneg %p292
        %p535 = pneg %p289
        %p536 = scmp.lt.s32.totalorder %s30, 1
        %s537 = scalar_select %p536, %s30, 1
        %s538 = smul.addr %s537, 32
        %s539 = smul.addr %s538, 4
        %s540 = scalar_lea.vmem %s11, %s539
        %p541 = pneg %p318
        %p542 = pneg %p315
        %p543 = scmp.lt.s32.totalorder %s30, 1
        %s544 = scalar_select %p543, %s30, 1
        %s545 = scalar_lea.vmem %s12, %s544
        %p546 = pneg %p344
        %p547 = pneg %p341
        %p548 = pneg %p370
        %p549 = pneg %p367
        %p550 = scmp.lt.s32.totalorder %s30, 1
        %s551 = scalar_select %p550, %s30, 1
        %s552 = scalar_lea.vmem %s1, %s551
        %p553 = scmp.lt.s32.totalorder %s30, 1
        %s554 = scalar_select %p553, %s30, 1
        %s555 = scalar_lea.vmem %s2, %s554
        %p556 = scmp.lt.s32.totalorder %s30, 1
        %s557 = scalar_select %p556, %s30, 1
        %s558 = smul.addr %s557, 96
        %s559 = smul.addr %s558, 4
        %s560 = scalar_lea.vmem %s3, %s559
        %p561 = scmp.lt.s32.totalorder %s30, 1
        %s562 = scalar_select %p561, %s30, 1
        %s563 = smul.addr %s562, 6
        %s564 = scalar_lea.vmem %s4, %s563
        %p565 = scmp.lt.s32.totalorder %s30, 1
        %s566 = scalar_select %p565, %s30, 1
        %s567 = smul.addr %s566, 32
        %s568 = smul.addr %s567, 4
        %s569 = scalar_lea.vmem %s5, %s568
        %p570 = scmp.lt.s32.totalorder %s30, 1
        %s571 = scalar_select %p570, %s30, 1
        %s572 = scalar_lea.vmem %s6, %s571
        %p573 = scmp.lt.s32.totalorder %s30, 1
        %s574 = scalar_select %p573, %s30, 1
        %s575 = scalar_lea.vmem %s7, %s574
        %p576 = scmp.lt.s32.totalorder %s30, 1
        %s577 = scalar_select %p576, %s30, 1
        %s578 = scalar_lea.vmem %s8, %s577
        %p579 = scmp.lt.s32.totalorder %s30, 1
        %s580 = scalar_select %p579, %s30, 1
        %s581 = smul.addr %s580, 32
        %s582 = smul.addr %s581, 4
        %s583 = scalar_lea.vmem %s9, %s582
        %p584 = scmp.lt.s32.totalorder %s30, 1
        %s585 = scalar_select %p584, %s30, 1
        %s586 = smul.addr %s585, 2
        %s587 = scalar_lea.vmem %s10, %s586
        %p588 = scmp.lt.s32.totalorder %s30, 1
        %s589 = scalar_select %p588, %s30, 1
        %s590 = smul.addr %s589, 32
        %s591 = smul.addr %s590, 4
        %s592 = scalar_lea.vmem %s11, %s591
        %p593 = scmp.lt.s32.totalorder %s30, 1
        %s594 = scalar_select %p593, %s30, 1
        %s595 = scalar_lea.vmem %s12, %s594
        %s596 = smul.u32 2, %s29
        %p597 = scmp.eq.s32.totalorder %s30, 0
        // Predicated region
        $region69: #{transformer_decoder.1} parent=67 // pred_check
          %p598 = pneg %p597
        $region70: #{transformer_decoder.1} parent=67 // pred_check_branch
          %600 = sbr.rel (%p598) target = $region72
        $region71: #{transformer_decoder.1} parent=67 // pred_region
          %s601 = smul.u32 %s29, 2
          $region73: #{transformer_decoder.1} parent=71
            #allocation5 [shape = 's32[1]{0}', space=sflag, size = 0x4, scoped, tag = 'scoped memory for transformer_decoder.1']
            %s602 = smul.u32 %s601, 128
            %s603 = scalar_lea.vmem %s0, %s602
            // Predicated region
            $region74: #{transformer_decoder.1} parent=73 // pred_check
              _
            $region75: #{transformer_decoder.1} parent=73 // pred_check_branch
              %605 = sbr.rel (0) target = $region77
            $region76: #{transformer_decoder.1} parent=73 // pred_region
              loop: start=0, step=1, limit=1
              $region78: #{transformer_decoder.1} parent=76 // loop_pre_header
                _
              $region79: #{transformer_decoder.1} parent=76 // loop_header
                %s607 = sphi 0, %s611
                %p608 = scmp.ge.s32.totalorder %s607, 1
                %s612 = sphi %s603, %s603
                %s613 = sphi [#allocation2], [#allocation2]
              $region80: #{transformer_decoder.1} parent=76 // loop_header_branch
                %610 = sbr.rel (%p608) target = $region84
              $region81: #{transformer_decoder.1} parent=76 // loop_body
                %v614 = vld [vmem:[%s612] sm:$0xff]
                %615 = vst [vmem:[%s613] sm:$0xff] %v614
                %v616 = vld [vmem:[%s612 + $0x8] sm:$0xff]
                %617 = vst [vmem:[%s613 + $0x8] sm:$0xff] %v616
                %v618 = vld [vmem:[%s612 + $0x10] sm:$0xff]
                %619 = vst [vmem:[%s613 + $0x10] sm:$0xff] %v618
                %v620 = vld [vmem:[%s612 + $0x18] sm:$0xff]
                %621 = vst [vmem:[%s613 + $0x18] sm:$0xff] %v620
                %v622 = vld [vmem:[%s612 + $0x20] sm:$0xff]
                %623 = vst [vmem:[%s613 + $0x20] sm:$0xff] %v622
                %v624 = vld [vmem:[%s612 + $0x28] sm:$0xff]
                %625 = vst [vmem:[%s613 + $0x28] sm:$0xff] %v624
                %v626 = vld [vmem:[%s612 + $0x30] sm:$0xff]
                %627 = vst [vmem:[%s613 + $0x30] sm:$0xff] %v626
                %v628 = vld [vmem:[%s612 + $0x38] sm:$0xff]
                %629 = vst [vmem:[%s613 + $0x38] sm:$0xff] %v628
                %v630 = vld [vmem:[%s612 + $0x40] sm:$0xff]
                %631 = vst [vmem:[%s613 + $0x40] sm:$0xff] %v630
                %v632 = vld [vmem:[%s612 + $0x48] sm:$0xff]
                %633 = vst [vmem:[%s613 + $0x48] sm:$0xff] %v632
                %v634 = vld [vmem:[%s612 + $0x50] sm:$0xff]
                %635 = vst [vmem:[%s613 + $0x50] sm:$0xff] %v634
                %v636 = vld [vmem:[%s612 + $0x58] sm:$0xff]
                %637 = vst [vmem:[%s613 + $0x58] sm:$0xff] %v636
                %v638 = vld [vmem:[%s612 + $0x60] sm:$0xff]
                %639 = vst [vmem:[%s613 + $0x60] sm:$0xff] %v638
                %v640 = vld [vmem:[%s612 + $0x68] sm:$0xff]
                %641 = vst [vmem:[%s613 + $0x68] sm:$0xff] %v640
                %v642 = vld [vmem:[%s612 + $0x70] sm:$0xff]
                %643 = vst [vmem:[%s613 + $0x70] sm:$0xff] %v642
                %v644 = vld [vmem:[%s612 + $0x78] sm:$0xff]
                %645 = vst [vmem:[%s613 + $0x78] sm:$0xff] %v644
                %v646 = vld [vmem:[%s612 + $0x80] sm:$0xff]
                %647 = vst [vmem:[%s613 + $0x80] sm:$0xff] %v646
                %v648 = vld [vmem:[%s612 + $0x88] sm:$0xff]
                %649 = vst [vmem:[%s613 + $0x88] sm:$0xff] %v648
                %v650 = vld [vmem:[%s612 + $0x90] sm:$0xff]
                %651 = vst [vmem:[%s613 + $0x90] sm:$0xff] %v650
                %v652 = vld [vmem:[%s612 + $0x98] sm:$0xff]
                %653 = vst [vmem:[%s613 + $0x98] sm:$0xff] %v652
                %v654 = vld [vmem:[%s612 + $0xa0] sm:$0xff]
                %655 = vst [vmem:[%s613 + $0xa0] sm:$0xff] %v654
                %v656 = vld [vmem:[%s612 + $0xa8] sm:$0xff]
                %657 = vst [vmem:[%s613 + $0xa8] sm:$0xff] %v656
                %v658 = vld [vmem:[%s612 + $0xb0] sm:$0xff]
                %659 = vst [vmem:[%s613 + $0xb0] sm:$0xff] %v658
                %v660 = vld [vmem:[%s612 + $0xb8] sm:$0xff]
                %661 = vst [vmem:[%s613 + $0xb8] sm:$0xff] %v660
                %v662 = vld [vmem:[%s612 + $0xc0] sm:$0xff]
                %663 = vst [vmem:[%s613 + $0xc0] sm:$0xff] %v662
                %v664 = vld [vmem:[%s612 + $0xc8] sm:$0xff]
                %665 = vst [vmem:[%s613 + $0xc8] sm:$0xff] %v664
                %v666 = vld [vmem:[%s612 + $0xd0] sm:$0xff]
                %667 = vst [vmem:[%s613 + $0xd0] sm:$0xff] %v666
                %v668 = vld [vmem:[%s612 + $0xd8] sm:$0xff]
                %669 = vst [vmem:[%s613 + $0xd8] sm:$0xff] %v668
                %v670 = vld [vmem:[%s612 + $0xe0] sm:$0xff]
                %671 = vst [vmem:[%s613 + $0xe0] sm:$0xff] %v670
                %v672 = vld [vmem:[%s612 + $0xe8] sm:$0xff]
                %673 = vst [vmem:[%s613 + $0xe8] sm:$0xff] %v672
                %v674 = vld [vmem:[%s612 + $0xf0] sm:$0xff]
                %675 = vst [vmem:[%s613 + $0xf0] sm:$0xff] %v674
                %v676 = vld [vmem:[%s612 + $0xf8] sm:$0xff]
                %677 = vst [vmem:[%s613 + $0xf8] sm:$0xff] %v676
              $region82: #{transformer_decoder.1} parent=76 // loop_footer
                %s611 = sadd.s32 1, %s607
              $region83: #{transformer_decoder.1} parent=76 // loop_footer_branch
                %606 = sbr.rel target = $region79
              $region84: #{transformer_decoder.1} parent=76 // loop_exit
                _
            $region77: #{transformer_decoder.1} parent=73 // pred_fallthru
              _
            // Predicated region
            $region85: #{transformer_decoder.1} parent=73 // pred_check
              _
            $region86: #{transformer_decoder.1} parent=73 // pred_check_branch
              %679 = sbr.rel target = $region88
            $region87: #{transformer_decoder.1} parent=73 // pred_region
              _
            $region88: #{transformer_decoder.1} parent=73 // pred_fallthru
              _
            // Predicated region
            $region89: #{transformer_decoder.1} parent=73 // pred_check
              _
            $region90: #{transformer_decoder.1} parent=73 // pred_check_branch
              %682 = sbr.rel (0) target = $region92
            $region91: #{transformer_decoder.1} parent=73 // pred_region
              %683 = vsyncadd [#allocation5], 4096
            $region92: #{transformer_decoder.1} parent=73 // pred_fallthru
              _
            %s684 = smul.u32 2, 128
            %s685 = smul.u32 %s684, 1
            %s686 = sshll.u32 %s685, 4
            %687 = dma.done [#allocation5], %s686
        $region72: #{transformer_decoder.1} parent=67 // pred_fallthru
          _
        %v688 = vld [vmem:[#allocation2] sm:$0xff]
        %v689 = vld [vmem:[#allocation2 + $0x8] sm:$0xff]
        %v690 = vld [vmem:[#allocation2 + $0x10] sm:$0xff]
        %v691 = vld [vmem:[#allocation2 + $0x18] sm:$0xff]
        %v692 = vld [vmem:[#allocation2 + $0x20] sm:$0xff]
        %v693 = vld [vmem:[#allocation2 + $0x28] sm:$0xff]
        %v694 = vld [vmem:[#allocation2 + $0x30] sm:$0xff]
        %v695 = vld [vmem:[#allocation2 + $0x38] sm:$0xff]
        %v696 = vld [vmem:[#allocation2 + $0x40] sm:$0xff]
        %v697 = vld [vmem:[#allocation2 + $0x48] sm:$0xff]
        %v698 = vld [vmem:[#allocation2 + $0x50] sm:$0xff]
        %v699 = vld [vmem:[#allocation2 + $0x58] sm:$0xff]
        %v700 = vld [vmem:[#allocation2 + $0x60] sm:$0xff]
        %v701 = vld [vmem:[#allocation2 + $0x68] sm:$0xff]
        %v702 = vld [vmem:[#allocation2 + $0x70] sm:$0xff]
        %v703 = vld [vmem:[#allocation2 + $0x78] sm:$0xff]
        %v704 = vld [vmem:[#allocation2 + $0x80] sm:$0xff]
        %v705 = vld [vmem:[#allocation2 + $0x88] sm:$0xff]
        %v706 = vld [vmem:[#allocation2 + $0x90] sm:$0xff]
        %v707 = vld [vmem:[#allocation2 + $0x98] sm:$0xff]
        %v708 = vld [vmem:[#allocation2 + $0xa0] sm:$0xff]
        %v709 = vld [vmem:[#allocation2 + $0xa8] sm:$0xff]
        %v710 = vld [vmem:[#allocation2 + $0xb0] sm:$0xff]
        %v711 = vld [vmem:[#allocation2 + $0xb8] sm:$0xff]
        %v712 = vld [vmem:[#allocation2 + $0xc0] sm:$0xff]
        %v713 = vld [vmem:[#allocation2 + $0xc8] sm:$0xff]
        %v714 = vld [vmem:[#allocation2 + $0xd0] sm:$0xff]
        %v715 = vld [vmem:[#allocation2 + $0xd8] sm:$0xff]
        %v716 = vld [vmem:[#allocation2 + $0xe0] sm:$0xff]
        %v717 = vld [vmem:[#allocation2 + $0xe8] sm:$0xff]
        %v718 = vld [vmem:[#allocation2 + $0xf0] sm:$0xff]
        %v719 = vld [vmem:[#allocation2 + $0xf8] sm:$0xff]
        %v720 = vld [vmem:[%s552] sm:$0x1]
        %v721 = vld [vmem:[%s555] sm:$0x1]
        %722 = vadd.xlane.f32.xlu0 %v688
        %v723 = vpop.xlane.xlu0 %722
        %724 = vadd.xlane.f32.xlu0 %v689
        %v725 = vpop.xlane.xlu0 %724
        %726 = vadd.xlane.f32.xlu0 %v690
        %v727 = vpop.xlane.xlu0 %726
        %728 = vadd.xlane.f32.xlu0 %v691
        %v729 = vpop.xlane.xlu0 %728
        %730 = vadd.xlane.f32.xlu0 %v692
        %v731 = vpop.xlane.xlu0 %730
        %732 = vadd.xlane.f32.xlu0 %v693
        %v733 = vpop.xlane.xlu0 %732
        %734 = vadd.xlane.f32.xlu0 %v694
        %v735 = vpop.xlane.xlu0 %734
        %736 = vadd.xlane.f32.xlu0 %v695
        %v737 = vpop.xlane.xlu0 %736
        %738 = vadd.xlane.f32.xlu0 %v696
        %v739 = vpop.xlane.xlu0 %738
        %740 = vadd.xlane.f32.xlu0 %v697
        %v741 = vpop.xlane.xlu0 %740
        %742 = vadd.xlane.f32.xlu0 %v698
        %v743 = vpop.xlane.xlu0 %742
        %744 = vadd.xlane.f32.xlu0 %v699
        %v745 = vpop.xlane.xlu0 %744
        %746 = vadd.xlane.f32.xlu0 %v700
        %v747 = vpop.xlane.xlu0 %746
        %748 = vadd.xlane.f32.xlu0 %v701
        %v749 = vpop.xlane.xlu0 %748
        %750 = vadd.xlane.f32.xlu0 %v702
        %v751 = vpop.xlane.xlu0 %750
        %752 = vadd.xlane.f32.xlu0 %v703
        %v753 = vpop.xlane.xlu0 %752
        %754 = vadd.xlane.f32.xlu0 %v704
        %v755 = vpop.xlane.xlu0 %754
        %756 = vadd.xlane.f32.xlu0 %v705
        %v757 = vpop.xlane.xlu0 %756
        %758 = vadd.xlane.f32.xlu0 %v706
        %v759 = vpop.xlane.xlu0 %758
        %760 = vadd.xlane.f32.xlu0 %v707
        %v761 = vpop.xlane.xlu0 %760
        %762 = vadd.xlane.f32.xlu0 %v708
        %v763 = vpop.xlane.xlu0 %762
        %764 = vadd.xlane.f32.xlu0 %v709
        %v765 = vpop.xlane.xlu0 %764
        %766 = vadd.xlane.f32.xlu0 %v710
        %v767 = vpop.xlane.xlu0 %766
        %768 = vadd.xlane.f32.xlu0 %v711
        %v769 = vpop.xlane.xlu0 %768
        %770 = vadd.xlane.f32.xlu0 %v712
        %v771 = vpop.xlane.xlu0 %770
        %772 = vadd.xlane.f32.xlu0 %v713
        %v773 = vpop.xlane.xlu0 %772
        %774 = vadd.xlane.f32.xlu0 %v714
        %v775 = vpop.xlane.xlu0 %774
        %776 = vadd.xlane.f32.xlu0 %v715
        %v777 = vpop.xlane.xlu0 %776
        %778 = vadd.xlane.f32.xlu0 %v716
        %v779 = vpop.xlane.xlu0 %778
        %780 = vadd.xlane.f32.xlu0 %v717
        %v781 = vpop.xlane.xlu0 %780
        %782 = vadd.xlane.f32.xlu0 %v718
        %v783 = vpop.xlane.xlu0 %782
        %784 = vadd.xlane.f32.xlu0 %v719
        %v785 = vpop.xlane.xlu0 %784
        %v786 = vrcp.pop 128.0
        %v787 = vmul.f32 128.0, %v786
        %v788 = vsub.f32 1.0, %v787
        %v789 = vmul.f32 %v786, %v788
        %v790 = vadd.f32 %v786, %v789
        %vm791 = vweird.f32 %v786
        %v792 = vsel %vm791, %v786, %v790
        %v793 = vmul.f32 %v723, %v792
        %v794 = vmul.f32 %v725, %v792
        %v795 = vmul.f32 %v727, %v792
        %v796 = vmul.f32 %v729, %v792
        %v797 = vmul.f32 %v731, %v792
        %v798 = vmul.f32 %v733, %v792
        %v799 = vmul.f32 %v735, %v792
        %v800 = vmul.f32 %v737, %v792
        %v801 = vmul.f32 %v739, %v792
        %v802 = vmul.f32 %v741, %v792
        %v803 = vmul.f32 %v743, %v792
        %v804 = vmul.f32 %v745, %v792
        %v805 = vmul.f32 %v747, %v792
        %v806 = vmul.f32 %v749, %v792
        %v807 = vmul.f32 %v751, %v792
        %v808 = vmul.f32 %v753, %v792
        %v809 = vmul.f32 %v755, %v792
        %v810 = vmul.f32 %v757, %v792
        %v811 = vmul.f32 %v759, %v792
        %v812 = vmul.f32 %v761, %v792
        %v813 = vmul.f32 %v763, %v792
        %v814 = vmul.f32 %v765, %v792
        %v815 = vmul.f32 %v767, %v792
        %v816 = vmul.f32 %v769, %v792
        %v817 = vmul.f32 %v771, %v792
        %v818 = vmul.f32 %v773, %v792
        %v819 = vmul.f32 %v775, %v792
        %v820 = vmul.f32 %v777, %v792
        %v821 = vmul.f32 %v779, %v792
        %v822 = vmul.f32 %v781, %v792
        %v823 = vmul.f32 %v783, %v792
        %v824 = vmul.f32 %v785, %v792
        %v825 = vsub.f32 %v688, %v793
        %v826 = vsub.f32 %v689, %v794
        %v827 = vsub.f32 %v690, %v795
        %v828 = vsub.f32 %v691, %v796
        %v829 = vsub.f32 %v692, %v797
        %v830 = vsub.f32 %v693, %v798
        %v831 = vsub.f32 %v694, %v799
        %v832 = vsub.f32 %v695, %v800
        %v833 = vsub.f32 %v696, %v801
        %v834 = vsub.f32 %v697, %v802
        %v835 = vsub.f32 %v698, %v803
        %v836 = vsub.f32 %v699, %v804
        %v837 = vsub.f32 %v700, %v805
        %v838 = vsub.f32 %v701, %v806
        %v839 = vsub.f32 %v702, %v807
        %v840 = vsub.f32 %v703, %v808
        %v841 = vsub.f32 %v704, %v809
        %v842 = vsub.f32 %v705, %v810
        %v843 = vsub.f32 %v706, %v811
        %v844 = vsub.f32 %v707, %v812
        %v845 = vsub.f32 %v708, %v813
        %v846 = vsub.f32 %v709, %v814
        %v847 = vsub.f32 %v710, %v815
        %v848 = vsub.f32 %v711, %v816
        %v849 = vsub.f32 %v712, %v817
        %v850 = vsub.f32 %v713, %v818
        %v851 = vsub.f32 %v714, %v819
        %v852 = vsub.f32 %v715, %v820
        %v853 = vsub.f32 %v716, %v821
        %v854 = vsub.f32 %v717, %v822
        %v855 = vsub.f32 %v718, %v823
        %v856 = vsub.f32 %v719, %v824
        %v857 = vmul.f32 %v825, %v825
        %v858 = vmul.f32 %v826, %v826
        %v859 = vmul.f32 %v827, %v827
        %v860 = vmul.f32 %v828, %v828
        %v861 = vmul.f32 %v829, %v829
        %v862 = vmul.f32 %v830, %v830
        %v863 = vmul.f32 %v831, %v831
        %v864 = vmul.f32 %v832, %v832
        %v865 = vmul.f32 %v833, %v833
        %v866 = vmul.f32 %v834, %v834
        %v867 = vmul.f32 %v835, %v835
        %v868 = vmul.f32 %v836, %v836
        %v869 = vmul.f32 %v837, %v837
        %v870 = vmul.f32 %v838, %v838
        %v871 = vmul.f32 %v839, %v839
        %v872 = vmul.f32 %v840, %v840
        %v873 = vmul.f32 %v841, %v841
        %v874 = vmul.f32 %v842, %v842
        %v875 = vmul.f32 %v843, %v843
        %v876 = vmul.f32 %v844, %v844
        %v877 = vmul.f32 %v845, %v845
        %v878 = vmul.f32 %v846, %v846
        %v879 = vmul.f32 %v847, %v847
        %v880 = vmul.f32 %v848, %v848
        %v881 = vmul.f32 %v849, %v849
        %v882 = vmul.f32 %v850, %v850
        %v883 = vmul.f32 %v851, %v851
        %v884 = vmul.f32 %v852, %v852
        %v885 = vmul.f32 %v853, %v853
        %v886 = vmul.f32 %v854, %v854
        %v887 = vmul.f32 %v855, %v855
        %v888 = vmul.f32 %v856, %v856
        %889 = vadd.xlane.f32.xlu0 %v857
        %v890 = vpop.xlane.xlu0 %889
        %891 = vadd.xlane.f32.xlu0 %v858
        %v892 = vpop.xlane.xlu0 %891
        %893 = vadd.xlane.f32.xlu0 %v859
        %v894 = vpop.xlane.xlu0 %893
        %895 = vadd.xlane.f32.xlu0 %v860
        %v896 = vpop.xlane.xlu0 %895
        %897 = vadd.xlane.f32.xlu0 %v861
        %v898 = vpop.xlane.xlu0 %897
        %899 = vadd.xlane.f32.xlu0 %v862
        %v900 = vpop.xlane.xlu0 %899
        %901 = vadd.xlane.f32.xlu0 %v863
        %v902 = vpop.xlane.xlu0 %901
        %903 = vadd.xlane.f32.xlu0 %v864
        %v904 = vpop.xlane.xlu0 %903
        %905 = vadd.xlane.f32.xlu0 %v865
        %v906 = vpop.xlane.xlu0 %905
        %907 = vadd.xlane.f32.xlu0 %v866
        %v908 = vpop.xlane.xlu0 %907
        %909 = vadd.xlane.f32.xlu0 %v867
        %v910 = vpop.xlane.xlu0 %909
        %911 = vadd.xlane.f32.xlu0 %v868
        %v912 = vpop.xlane.xlu0 %911
        %913 = vadd.xlane.f32.xlu0 %v869
        %v914 = vpop.xlane.xlu0 %913
        %915 = vadd.xlane.f32.xlu0 %v870
        %v916 = vpop.xlane.xlu0 %915
        %917 = vadd.xlane.f32.xlu0 %v871
        %v918 = vpop.xlane.xlu0 %917
        %919 = vadd.xlane.f32.xlu0 %v872
        %v920 = vpop.xlane.xlu0 %919
        %921 = vadd.xlane.f32.xlu0 %v873
        %v922 = vpop.xlane.xlu0 %921
        %923 = vadd.xlane.f32.xlu0 %v874
        %v924 = vpop.xlane.xlu0 %923
        %925 = vadd.xlane.f32.xlu0 %v875
        %v926 = vpop.xlane.xlu0 %925
        %927 = vadd.xlane.f32.xlu0 %v876
        %v928 = vpop.xlane.xlu0 %927
        %929 = vadd.xlane.f32.xlu0 %v877
        %v930 = vpop.xlane.xlu0 %929
        %931 = vadd.xlane.f32.xlu0 %v878
        %v932 = vpop.xlane.xlu0 %931
        %933 = vadd.xlane.f32.xlu0 %v879
        %v934 = vpop.xlane.xlu0 %933
        %935 = vadd.xlane.f32.xlu0 %v880
        %v936 = vpop.xlane.xlu0 %935
        %937 = vadd.xlane.f32.xlu0 %v881
        %v938 = vpop.xlane.xlu0 %937
        %939 = vadd.xlane.f32.xlu0 %v882
        %v940 = vpop.xlane.xlu0 %939
        %941 = vadd.xlane.f32.xlu0 %v883
        %v942 = vpop.xlane.xlu0 %941
        %943 = vadd.xlane.f32.xlu0 %v884
        %v944 = vpop.xlane.xlu0 %943
        %945 = vadd.xlane.f32.xlu0 %v885
        %v946 = vpop.xlane.xlu0 %945
        %947 = vadd.xlane.f32.xlu0 %v886
        %v948 = vpop.xlane.xlu0 %947
        %949 = vadd.xlane.f32.xlu0 %v887
        %v950 = vpop.xlane.xlu0 %949
        %951 = vadd.xlane.f32.xlu0 %v888
        %v952 = vpop.xlane.xlu0 %951
        %v953 = vmul.f32 %v890, %v792
        %v954 = vmul.f32 %v892, %v792
        %v955 = vmul.f32 %v894, %v792
        %v956 = vmul.f32 %v896, %v792
        %v957 = vmul.f32 %v898, %v792
        %v958 = vmul.f32 %v900, %v792
        %v959 = vmul.f32 %v902, %v792
        %v960 = vmul.f32 %v904, %v792
        %v961 = vmul.f32 %v906, %v792
        %v962 = vmul.f32 %v908, %v792
        %v963 = vmul.f32 %v910, %v792
        %v964 = vmul.f32 %v912, %v792
        %v965 = vmul.f32 %v914, %v792
        %v966 = vmul.f32 %v916, %v792
        %v967 = vmul.f32 %v918, %v792
        %v968 = vmul.f32 %v920, %v792
        %v969 = vmul.f32 %v922, %v792
        %v970 = vmul.f32 %v924, %v792
        %v971 = vmul.f32 %v926, %v792
        %v972 = vmul.f32 %v928, %v792
        %v973 = vmul.f32 %v930, %v792
        %v974 = vmul.f32 %v932, %v792
        %v975 = vmul.f32 %v934, %v792
        %v976 = vmul.f32 %v936, %v792
        %v977 = vmul.f32 %v938, %v792
        %v978 = vmul.f32 %v940, %v792
        %v979 = vmul.f32 %v942, %v792
        %v980 = vmul.f32 %v944, %v792
        %v981 = vmul.f32 %v946, %v792
        %v982 = vmul.f32 %v948, %v792
        %v983 = vmul.f32 %v950, %v792
        %v984 = vmul.f32 %v952, %v792
        %v985 = vadd.f32 %v953, 1e-05
        %v986 = vadd.f32 %v954, 1e-05
        %v987 = vadd.f32 %v955, 1e-05
        %v988 = vadd.f32 %v956, 1e-05
        %v989 = vadd.f32 %v957, 1e-05
        %v990 = vadd.f32 %v958, 1e-05
        %v991 = vadd.f32 %v959, 1e-05
        %v992 = vadd.f32 %v960, 1e-05
        %v993 = vadd.f32 %v961, 1e-05
        %v994 = vadd.f32 %v962, 1e-05
        %v995 = vadd.f32 %v963, 1e-05
        %v996 = vadd.f32 %v964, 1e-05
        %v997 = vadd.f32 %v965, 1e-05
        %v998 = vadd.f32 %v966, 1e-05
        %v999 = vadd.f32 %v967, 1e-05
        %v1000 = vadd.f32 %v968, 1e-05
        %v1001 = vadd.f32 %v969, 1e-05
        %v1002 = vadd.f32 %v970, 1e-05
        %v1003 = vadd.f32 %v971, 1e-05
        %v1004 = vadd.f32 %v972, 1e-05
        %v1005 = vadd.f32 %v973, 1e-05
        %v1006 = vadd.f32 %v974, 1e-05
        %v1007 = vadd.f32 %v975, 1e-05
        %v1008 = vadd.f32 %v976, 1e-05
        %v1009 = vadd.f32 %v977, 1e-05
        %v1010 = vadd.f32 %v978, 1e-05
        %v1011 = vadd.f32 %v979, 1e-05
        %v1012 = vadd.f32 %v980, 1e-05
        %v1013 = vadd.f32 %v981, 1e-05
        %v1014 = vadd.f32 %v982, 1e-05
        %v1015 = vadd.f32 %v983, 1e-05
        %v1016 = vadd.f32 %v984, 1e-05
        %v1017 = vrsqrt.pop %v985
        %v1018 = vmul.f32 %v1017, %v985
        %v1019 = vmul.f32 %v1018, %v1017
        %v1020 = vmul.f32 0.5, %v1019
        %v1021 = vsub.f32 1.5, %v1020
        %v1022 = vmul.f32 %v1017, %v1021
        %vm1023 = vweird.f32 %v985
        %vm1024 = vweird.f32 %v1017
        %vm1025 = vmor %vm1023, %vm1024
        %v1026 = vsel %vm1025, %v1017, %v1022
        %v1027 = vrsqrt.pop %v986
        %v1028 = vmul.f32 %v1027, %v986
        %v1029 = vmul.f32 %v1028, %v1027
        %v1030 = vmul.f32 0.5, %v1029
        %v1031 = vsub.f32 1.5, %v1030
        %v1032 = vmul.f32 %v1027, %v1031
        %vm1033 = vweird.f32 %v986
        %vm1034 = vweird.f32 %v1027
        %vm1035 = vmor %vm1033, %vm1034
        %v1036 = vsel %vm1035, %v1027, %v1032
        %v1037 = vrsqrt.pop %v987
        %v1038 = vmul.f32 %v1037, %v987
        %v1039 = vmul.f32 %v1038, %v1037
        %v1040 = vmul.f32 0.5, %v1039
        %v1041 = vsub.f32 1.5, %v1040
        %v1042 = vmul.f32 %v1037, %v1041
        %vm1043 = vweird.f32 %v987
        %vm1044 = vweird.f32 %v1037
        %vm1045 = vmor %vm1043, %vm1044
        %v1046 = vsel %vm1045, %v1037, %v1042
        %v1047 = vrsqrt.pop %v988
        %v1048 = vmul.f32 %v1047, %v988
        %v1049 = vmul.f32 %v1048, %v1047
        %v1050 = vmul.f32 0.5, %v1049
        %v1051 = vsub.f32 1.5, %v1050
        %v1052 = vmul.f32 %v1047, %v1051
        %vm1053 = vweird.f32 %v988
        %vm1054 = vweird.f32 %v1047
        %vm1055 = vmor %vm1053, %vm1054
        %v1056 = vsel %vm1055, %v1047, %v1052
        %v1057 = vrsqrt.pop %v989
        %v1058 = vmul.f32 %v1057, %v989
        %v1059 = vmul.f32 %v1058, %v1057
        %v1060 = vmul.f32 0.5, %v1059
        %v1061 = vsub.f32 1.5, %v1060
        %v1062 = vmul.f32 %v1057, %v1061
        %vm1063 = vweird.f32 %v989
        %vm1064 = vweird.f32 %v1057
        %vm1065 = vmor %vm1063, %vm1064
        %v1066 = vsel %vm1065, %v1057, %v1062
        %v1067 = vrsqrt.pop %v990
        %v1068 = vmul.f32 %v1067, %v990
        %v1069 = vmul.f32 %v1068, %v1067
        %v1070 = vmul.f32 0.5, %v1069
        %v1071 = vsub.f32 1.5, %v1070
        %v1072 = vmul.f32 %v1067, %v1071
        %vm1073 = vweird.f32 %v990
        %vm1074 = vweird.f32 %v1067
        %vm1075 = vmor %vm1073, %vm1074
        %v1076 = vsel %vm1075, %v1067, %v1072
        %v1077 = vrsqrt.pop %v991
        %v1078 = vmul.f32 %v1077, %v991
        %v1079 = vmul.f32 %v1078, %v1077
        %v1080 = vmul.f32 0.5, %v1079
        %v1081 = vsub.f32 1.5, %v1080
        %v1082 = vmul.f32 %v1077, %v1081
        %vm1083 = vweird.f32 %v991
        %vm1084 = vweird.f32 %v1077
        %vm1085 = vmor %vm1083, %vm1084
        %v1086 = vsel %vm1085, %v1077, %v1082
        %v1087 = vrsqrt.pop %v992
        %v1088 = vmul.f32 %v1087, %v992
        %v1089 = vmul.f32 %v1088, %v1087
        %v1090 = vmul.f32 0.5, %v1089
        %v1091 = vsub.f32 1.5, %v1090
        %v1092 = vmul.f32 %v1087, %v1091
        %vm1093 = vweird.f32 %v992
        %vm1094 = vweird.f32 %v1087
        %vm1095 = vmor %vm1093, %vm1094
        %v1096 = vsel %vm1095, %v1087, %v1092
        %v1097 = vrsqrt.pop %v993
        %v1098 = vmul.f32 %v1097, %v993
        %v1099 = vmul.f32 %v1098, %v1097
        %v1100 = vmul.f32 0.5, %v1099
        %v1101 = vsub.f32 1.5, %v1100
        %v1102 = vmul.f32 %v1097, %v1101
        %vm1103 = vweird.f32 %v993
        %vm1104 = vweird.f32 %v1097
        %vm1105 = vmor %vm1103, %vm1104
        %v1106 = vsel %vm1105, %v1097, %v1102
        %v1107 = vrsqrt.pop %v994
        %v1108 = vmul.f32 %v1107, %v994
        %v1109 = vmul.f32 %v1108, %v1107
        %v1110 = vmul.f32 0.5, %v1109
        %v1111 = vsub.f32 1.5, %v1110
        %v1112 = vmul.f32 %v1107, %v1111
        %vm1113 = vweird.f32 %v994
        %vm1114 = vweird.f32 %v1107
        %vm1115 = vmor %vm1113, %vm1114
        %v1116 = vsel %vm1115, %v1107, %v1112
        %v1117 = vrsqrt.pop %v995
        %v1118 = vmul.f32 %v1117, %v995
        %v1119 = vmul.f32 %v1118, %v1117
        %v1120 = vmul.f32 0.5, %v1119
        %v1121 = vsub.f32 1.5, %v1120
        %v1122 = vmul.f32 %v1117, %v1121
        %vm1123 = vweird.f32 %v995
        %vm1124 = vweird.f32 %v1117
        %vm1125 = vmor %vm1123, %vm1124
        %v1126 = vsel %vm1125, %v1117, %v1122
        %v1127 = vrsqrt.pop %v996
        %v1128 = vmul.f32 %v1127, %v996
        %v1129 = vmul.f32 %v1128, %v1127
        %v1130 = vmul.f32 0.5, %v1129
        %v1131 = vsub.f32 1.5, %v1130
        %v1132 = vmul.f32 %v1127, %v1131
        %vm1133 = vweird.f32 %v996
        %vm1134 = vweird.f32 %v1127
        %vm1135 = vmor %vm1133, %vm1134
        %v1136 = vsel %vm1135, %v1127, %v1132
        %v1137 = vrsqrt.pop %v997
        %v1138 = vmul.f32 %v1137, %v997
        %v1139 = vmul.f32 %v1138, %v1137
        %v1140 = vmul.f32 0.5, %v1139
        %v1141 = vsub.f32 1.5, %v1140
        %v1142 = vmul.f32 %v1137, %v1141
        %vm1143 = vweird.f32 %v997
        %vm1144 = vweird.f32 %v1137
        %vm1145 = vmor %vm1143, %vm1144
        %v1146 = vsel %vm1145, %v1137, %v1142
        %v1147 = vrsqrt.pop %v998
        %v1148 = vmul.f32 %v1147, %v998
        %v1149 = vmul.f32 %v1148, %v1147
        %v1150 = vmul.f32 0.5, %v1149
        %v1151 = vsub.f32 1.5, %v1150
        %v1152 = vmul.f32 %v1147, %v1151
        %vm1153 = vweird.f32 %v998
        %vm1154 = vweird.f32 %v1147
        %vm1155 = vmor %vm1153, %vm1154
        %v1156 = vsel %vm1155, %v1147, %v1152
        %v1157 = vrsqrt.pop %v999
        %v1158 = vmul.f32 %v1157, %v999
        %v1159 = vmul.f32 %v1158, %v1157
        %v1160 = vmul.f32 0.5, %v1159
        %v1161 = vsub.f32 1.5, %v1160
        %v1162 = vmul.f32 %v1157, %v1161
        %vm1163 = vweird.f32 %v999
        %vm1164 = vweird.f32 %v1157
        %vm1165 = vmor %vm1163, %vm1164
        %v1166 = vsel %vm1165, %v1157, %v1162
        %v1167 = vrsqrt.pop %v1000
        %v1168 = vmul.f32 %v1167, %v1000
        %v1169 = vmul.f32 %v1168, %v1167
        %v1170 = vmul.f32 0.5, %v1169
        %v1171 = vsub.f32 1.5, %v1170
        %v1172 = vmul.f32 %v1167, %v1171
        %vm1173 = vweird.f32 %v1000
        %vm1174 = vweird.f32 %v1167
        %vm1175 = vmor %vm1173, %vm1174
        %v1176 = vsel %vm1175, %v1167, %v1172
        %v1177 = vrsqrt.pop %v1001
        %v1178 = vmul.f32 %v1177, %v1001
        %v1179 = vmul.f32 %v1178, %v1177
        %v1180 = vmul.f32 0.5, %v1179
        %v1181 = vsub.f32 1.5, %v1180
        %v1182 = vmul.f32 %v1177, %v1181
        %vm1183 = vweird.f32 %v1001
        %vm1184 = vweird.f32 %v1177
        %vm1185 = vmor %vm1183, %vm1184
        %v1186 = vsel %vm1185, %v1177, %v1182
        %v1187 = vrsqrt.pop %v1002
        %v1188 = vmul.f32 %v1187, %v1002
        %v1189 = vmul.f32 %v1188, %v1187
        %v1190 = vmul.f32 0.5, %v1189
        %v1191 = vsub.f32 1.5, %v1190
        %v1192 = vmul.f32 %v1187, %v1191
        %vm1193 = vweird.f32 %v1002
        %vm1194 = vweird.f32 %v1187
        %vm1195 = vmor %vm1193, %vm1194
        %v1196 = vsel %vm1195, %v1187, %v1192
        %v1197 = vrsqrt.pop %v1003
        %v1198 = vmul.f32 %v1197, %v1003
        %v1199 = vmul.f32 %v1198, %v1197
        %v1200 = vmul.f32 0.5, %v1199
        %v1201 = vsub.f32 1.5, %v1200
        %v1202 = vmul.f32 %v1197, %v1201
        %vm1203 = vweird.f32 %v1003
        %vm1204 = vweird.f32 %v1197
        %vm1205 = vmor %vm1203, %vm1204
        %v1206 = vsel %vm1205, %v1197, %v1202
        %v1207 = vrsqrt.pop %v1004
        %v1208 = vmul.f32 %v1207, %v1004
        %v1209 = vmul.f32 %v1208, %v1207
        %v1210 = vmul.f32 0.5, %v1209
        %v1211 = vsub.f32 1.5, %v1210
        %v1212 = vmul.f32 %v1207, %v1211
        %vm1213 = vweird.f32 %v1004
        %vm1214 = vweird.f32 %v1207
        %vm1215 = vmor %vm1213, %vm1214
        %v1216 = vsel %vm1215, %v1207, %v1212
        %v1217 = vrsqrt.pop %v1005
        %v1218 = vmul.f32 %v1217, %v1005
        %v1219 = vmul.f32 %v1218, %v1217
        %v1220 = vmul.f32 0.5, %v1219
        %v1221 = vsub.f32 1.5, %v1220
        %v1222 = vmul.f32 %v1217, %v1221
        %vm1223 = vweird.f32 %v1005
        %vm1224 = vweird.f32 %v1217
        %vm1225 = vmor %vm1223, %vm1224
        %v1226 = vsel %vm1225, %v1217, %v1222
        %v1227 = vrsqrt.pop %v1006
        %v1228 = vmul.f32 %v1227, %v1006
        %v1229 = vmul.f32 %v1228, %v1227
        %v1230 = vmul.f32 0.5, %v1229
        %v1231 = vsub.f32 1.5, %v1230
        %v1232 = vmul.f32 %v1227, %v1231
        %vm1233 = vweird.f32 %v1006
        %vm1234 = vweird.f32 %v1227
        %vm1235 = vmor %vm1233, %vm1234
        %v1236 = vsel %vm1235, %v1227, %v1232
        %v1237 = vrsqrt.pop %v1007
        %v1238 = vmul.f32 %v1237, %v1007
        %v1239 = vmul.f32 %v1238, %v1237
        %v1240 = vmul.f32 0.5, %v1239
        %v1241 = vsub.f32 1.5, %v1240
        %v1242 = vmul.f32 %v1237, %v1241
        %vm1243 = vweird.f32 %v1007
        %vm1244 = vweird.f32 %v1237
        %vm1245 = vmor %vm1243, %vm1244
        %v1246 = vsel %vm1245, %v1237, %v1242
        %v1247 = vrsqrt.pop %v1008
        %v1248 = vmul.f32 %v1247, %v1008
        %v1249 = vmul.f32 %v1248, %v1247
        %v1250 = vmul.f32 0.5, %v1249
        %v1251 = vsub.f32 1.5, %v1250
        %v1252 = vmul.f32 %v1247, %v1251
        %vm1253 = vweird.f32 %v1008
        %vm1254 = vweird.f32 %v1247
        %vm1255 = vmor %vm1253, %vm1254
        %v1256 = vsel %vm1255, %v1247, %v1252
        %v1257 = vrsqrt.pop %v1009
        %v1258 = vmul.f32 %v1257, %v1009
        %v1259 = vmul.f32 %v1258, %v1257
        %v1260 = vmul.f32 0.5, %v1259
        %v1261 = vsub.f32 1.5, %v1260
        %v1262 = vmul.f32 %v1257, %v1261
        %vm1263 = vweird.f32 %v1009
        %vm1264 = vweird.f32 %v1257
        %vm1265 = vmor %vm1263, %vm1264
        %v1266 = vsel %vm1265, %v1257, %v1262
        %v1267 = vrsqrt.pop %v1010
        %v1268 = vmul.f32 %v1267, %v1010
        %v1269 = vmul.f32 %v1268, %v1267
        %v1270 = vmul.f32 0.5, %v1269
        %v1271 = vsub.f32 1.5, %v1270
        %v1272 = vmul.f32 %v1267, %v1271
        %vm1273 = vweird.f32 %v1010
        %vm1274 = vweird.f32 %v1267
        %vm1275 = vmor %vm1273, %vm1274
        %v1276 = vsel %vm1275, %v1267, %v1272
        %v1277 = vrsqrt.pop %v1011
        %v1278 = vmul.f32 %v1277, %v1011
        %v1279 = vmul.f32 %v1278, %v1277
        %v1280 = vmul.f32 0.5, %v1279
        %v1281 = vsub.f32 1.5, %v1280
        %v1282 = vmul.f32 %v1277, %v1281
        %vm1283 = vweird.f32 %v1011
        %vm1284 = vweird.f32 %v1277
        %vm1285 = vmor %vm1283, %vm1284
        %v1286 = vsel %vm1285, %v1277, %v1282
        %v1287 = vrsqrt.pop %v1012
        %v1288 = vmul.f32 %v1287, %v1012
        %v1289 = vmul.f32 %v1288, %v1287
        %v1290 = vmul.f32 0.5, %v1289
        %v1291 = vsub.f32 1.5, %v1290
        %v1292 = vmul.f32 %v1287, %v1291
        %vm1293 = vweird.f32 %v1012
        %vm1294 = vweird.f32 %v1287
        %vm1295 = vmor %vm1293, %vm1294
        %v1296 = vsel %vm1295, %v1287, %v1292
        %v1297 = vrsqrt.pop %v1013
        %v1298 = vmul.f32 %v1297, %v1013
        %v1299 = vmul.f32 %v1298, %v1297
        %v1300 = vmul.f32 0.5, %v1299
        %v1301 = vsub.f32 1.5, %v1300
        %v1302 = vmul.f32 %v1297, %v1301
        %vm1303 = vweird.f32 %v1013
        %vm1304 = vweird.f32 %v1297
        %vm1305 = vmor %vm1303, %vm1304
        %v1306 = vsel %vm1305, %v1297, %v1302
        %v1307 = vrsqrt.pop %v1014
        %v1308 = vmul.f32 %v1307, %v1014
        %v1309 = vmul.f32 %v1308, %v1307
        %v1310 = vmul.f32 0.5, %v1309
        %v1311 = vsub.f32 1.5, %v1310
        %v1312 = vmul.f32 %v1307, %v1311
        %vm1313 = vweird.f32 %v1014
        %vm1314 = vweird.f32 %v1307
        %vm1315 = vmor %vm1313, %vm1314
        %v1316 = vsel %vm1315, %v1307, %v1312
        %v1317 = vrsqrt.pop %v1015
        %v1318 = vmul.f32 %v1317, %v1015
        %v1319 = vmul.f32 %v1318, %v1317
        %v1320 = vmul.f32 0.5, %v1319
        %v1321 = vsub.f32 1.5, %v1320
        %v1322 = vmul.f32 %v1317, %v1321
        %vm1323 = vweird.f32 %v1015
        %vm1324 = vweird.f32 %v1317
        %vm1325 = vmor %vm1323, %vm1324
        %v1326 = vsel %vm1325, %v1317, %v1322
        %v1327 = vrsqrt.pop %v1016
        %v1328 = vmul.f32 %v1327, %v1016
        %v1329 = vmul.f32 %v1328, %v1327
        %v1330 = vmul.f32 0.5, %v1329
        %v1331 = vsub.f32 1.5, %v1330
        %v1332 = vmul.f32 %v1327, %v1331
        %vm1333 = vweird.f32 %v1016
        %vm1334 = vweird.f32 %v1327
        %vm1335 = vmor %vm1333, %vm1334
        %v1336 = vsel %vm1335, %v1327, %v1332
        %v1337 = vmul.f32 %v825, %v1026
        %v1338 = vmul.f32 %v826, %v1036
        %v1339 = vmul.f32 %v827, %v1046
        %v1340 = vmul.f32 %v828, %v1056
        %v1341 = vmul.f32 %v829, %v1066
        %v1342 = vmul.f32 %v830, %v1076
        %v1343 = vmul.f32 %v831, %v1086
        %v1344 = vmul.f32 %v832, %v1096
        %v1345 = vmul.f32 %v833, %v1106
        %v1346 = vmul.f32 %v834, %v1116
        %v1347 = vmul.f32 %v835, %v1126
        %v1348 = vmul.f32 %v836, %v1136
        %v1349 = vmul.f32 %v837, %v1146
        %v1350 = vmul.f32 %v838, %v1156
        %v1351 = vmul.f32 %v839, %v1166
        %v1352 = vmul.f32 %v840, %v1176
        %v1353 = vmul.f32 %v841, %v1186
        %v1354 = vmul.f32 %v842, %v1196
        %v1355 = vmul.f32 %v843, %v1206
        %v1356 = vmul.f32 %v844, %v1216
        %v1357 = vmul.f32 %v845, %v1226
        %v1358 = vmul.f32 %v846, %v1236
        %v1359 = vmul.f32 %v847, %v1246
        %v1360 = vmul.f32 %v848, %v1256
        %v1361 = vmul.f32 %v849, %v1266
        %v1362 = vmul.f32 %v850, %v1276
        %v1363 = vmul.f32 %v851, %v1286
        %v1364 = vmul.f32 %v852, %v1296
        %v1365 = vmul.f32 %v853, %v1306
        %v1366 = vmul.f32 %v854, %v1316
        %v1367 = vmul.f32 %v855, %v1326
        %v1368 = vmul.f32 %v856, %v1336
        %v1370 = vperm.slane %v720, 0
        %v1372 = vmul.f32 %v1337, %v1370
        %v1373 = vmul.f32 %v1338, %v1370
        %v1374 = vmul.f32 %v1339, %v1370
        %v1375 = vmul.f32 %v1340, %v1370
        %v1376 = vmul.f32 %v1341, %v1370
        %v1377 = vmul.f32 %v1342, %v1370
        %v1378 = vmul.f32 %v1343, %v1370
        %v1379 = vmul.f32 %v1344, %v1370
        %v1380 = vmul.f32 %v1345, %v1370
        %v1381 = vmul.f32 %v1346, %v1370
        %v1382 = vmul.f32 %v1347, %v1370
        %v1383 = vmul.f32 %v1348, %v1370
        %v1384 = vmul.f32 %v1349, %v1370
        %v1385 = vmul.f32 %v1350, %v1370
        %v1386 = vmul.f32 %v1351, %v1370
        %v1387 = vmul.f32 %v1352, %v1370
        %v1388 = vmul.f32 %v1353, %v1370
        %v1389 = vmul.f32 %v1354, %v1370
        %v1390 = vmul.f32 %v1355, %v1370
        %v1391 = vmul.f32 %v1356, %v1370
        %v1392 = vmul.f32 %v1357, %v1370
        %v1393 = vmul.f32 %v1358, %v1370
        %v1394 = vmul.f32 %v1359, %v1370
        %v1395 = vmul.f32 %v1360, %v1370
        %v1396 = vmul.f32 %v1361, %v1370
        %v1397 = vmul.f32 %v1362, %v1370
        %v1398 = vmul.f32 %v1363, %v1370
        %v1399 = vmul.f32 %v1364, %v1370
        %v1400 = vmul.f32 %v1365, %v1370
        %v1401 = vmul.f32 %v1366, %v1370
        %v1402 = vmul.f32 %v1367, %v1370
        %v1403 = vmul.f32 %v1368, %v1370
        %v1405 = vperm.slane %v721, 0
        %v1407 = vadd.f32 %v1372, %v1405
        %v1408 = vadd.f32 %v1373, %v1405
        %v1409 = vadd.f32 %v1374, %v1405
        %v1410 = vadd.f32 %v1375, %v1405
        %v1411 = vadd.f32 %v1376, %v1405
        %v1412 = vadd.f32 %v1377, %v1405
        %v1413 = vadd.f32 %v1378, %v1405
        %v1414 = vadd.f32 %v1379, %v1405
        %v1415 = vadd.f32 %v1380, %v1405
        %v1416 = vadd.f32 %v1381, %v1405
        %v1417 = vadd.f32 %v1382, %v1405
        %v1418 = vadd.f32 %v1383, %v1405
        %v1419 = vadd.f32 %v1384, %v1405
        %v1420 = vadd.f32 %v1385, %v1405
        %v1421 = vadd.f32 %v1386, %v1405
        %v1422 = vadd.f32 %v1387, %v1405
        %v1423 = vadd.f32 %v1388, %v1405
        %v1424 = vadd.f32 %v1389, %v1405
        %v1425 = vadd.f32 %v1390, %v1405
        %v1426 = vadd.f32 %v1391, %v1405
        %v1427 = vadd.f32 %v1392, %v1405
        %v1428 = vadd.f32 %v1393, %v1405
        %v1429 = vadd.f32 %v1394, %v1405
        %v1430 = vadd.f32 %v1395, %v1405
        %v1431 = vadd.f32 %v1396, %v1405
        %v1432 = vadd.f32 %v1397, %v1405
        %v1433 = vadd.f32 %v1398, %v1405
        %v1434 = vadd.f32 %v1399, %v1405
        %v1435 = vadd.f32 %v1400, %v1405
        %v1436 = vadd.f32 %v1401, %v1405
        %v1437 = vadd.f32 %v1402, %v1405
        %v1438 = vadd.f32 %v1403, %v1405
        %v1439 = vpack.c.bf16 %v1408, %v1407
        %v1440 = vpack.c.bf16 %v1410, %v1409
        %v1441 = vpack.c.bf16 %v1412, %v1411
        %v1442 = vpack.c.bf16 %v1414, %v1413
        %v1443 = vpack.c.bf16 %v1416, %v1415
        %v1444 = vpack.c.bf16 %v1418, %v1417
        %v1445 = vpack.c.bf16 %v1420, %v1419
        %v1446 = vpack.c.bf16 %v1422, %v1421
        %v1447 = vpack.c.bf16 %v1424, %v1423
        %v1448 = vpack.c.bf16 %v1426, %v1425
        %v1449 = vpack.c.bf16 %v1428, %v1427
        %v1450 = vpack.c.bf16 %v1430, %v1429
        %v1451 = vpack.c.bf16 %v1432, %v1431
        %v1452 = vpack.c.bf16 %v1434, %v1433
        %v1453 = vpack.c.bf16 %v1436, %v1435
        %v1454 = vpack.c.bf16 %v1438, %v1437
        %v1455 = vld [vmem:[%s560] sm:$0xff]
        %v1456 = vld [vmem:[%s560 + $0x8] sm:$0xff]
        %v1457 = vld [vmem:[%s560 + $0x10] sm:$0xff]
        %v1458 = vld [vmem:[%s560 + $0x18] sm:$0xff]
        %v1459 = vld [vmem:[%s560 + $0x20] sm:$0xff]
        %v1460 = vld [vmem:[%s560 + $0x28] sm:$0xff]
        %v1461 = vld [vmem:[%s560 + $0x30] sm:$0xff]
        %v1462 = vld [vmem:[%s560 + $0x38] sm:$0xff]
        %v1463 = vld [vmem:[%s560 + $0x40] sm:$0xff]
        %v1464 = vld [vmem:[%s560 + $0x48] sm:$0xff]
        %v1465 = vld [vmem:[%s560 + $0x50] sm:$0xff]
        %v1466 = vld [vmem:[%s560 + $0x58] sm:$0xff]
        %v1467 = vld [vmem:[%s560 + $0x60] sm:$0xff]
        %v1468 = vld [vmem:[%s560 + $0x68] sm:$0xff]
        %v1469 = vld [vmem:[%s560 + $0x70] sm:$0xff]
        %v1470 = vld [vmem:[%s560 + $0x78] sm:$0xff]
        %v1471 = vld [vmem:[%s560 + $0x80] sm:$0xff]
        %v1472 = vld [vmem:[%s560 + $0x88] sm:$0xff]
        %v1473 = vld [vmem:[%s560 + $0x90] sm:$0xff]
        %v1474 = vld [vmem:[%s560 + $0x98] sm:$0xff]
        %v1475 = vld [vmem:[%s560 + $0xa0] sm:$0xff]
        %v1476 = vld [vmem:[%s560 + $0xa8] sm:$0xff]
        %v1477 = vld [vmem:[%s560 + $0xb0] sm:$0xff]
        %v1478 = vld [vmem:[%s560 + $0xb8] sm:$0xff]
        %v1479 = vld [vmem:[%s560 + $0xc0] sm:$0xff]
        %v1480 = vld [vmem:[%s560 + $0xc8] sm:$0xff]
        %v1481 = vld [vmem:[%s560 + $0xd0] sm:$0xff]
        %v1482 = vld [vmem:[%s560 + $0xd8] sm:$0xff]
        %v1483 = vld [vmem:[%s560 + $0xe0] sm:$0xff]
        %v1484 = vld [vmem:[%s560 + $0xe8] sm:$0xff]
        %v1485 = vld [vmem:[%s560 + $0xf0] sm:$0xff]
        %v1486 = vld [vmem:[%s560 + $0xf8] sm:$0xff]
        %v1487 = vld [vmem:[%s560 + $0x100] sm:$0xff]
        %v1488 = vld [vmem:[%s560 + $0x108] sm:$0xff]
        %v1489 = vld [vmem:[%s560 + $0x110] sm:$0xff]
        %v1490 = vld [vmem:[%s560 + $0x118] sm:$0xff]
        %v1491 = vld [vmem:[%s560 + $0x120] sm:$0xff]
        %v1492 = vld [vmem:[%s560 + $0x128] sm:$0xff]
        %v1493 = vld [vmem:[%s560 + $0x130] sm:$0xff]
        %v1494 = vld [vmem:[%s560 + $0x138] sm:$0xff]
        %v1495 = vld [vmem:[%s560 + $0x140] sm:$0xff]
        %v1496 = vld [vmem:[%s560 + $0x148] sm:$0xff]
        %v1497 = vld [vmem:[%s560 + $0x150] sm:$0xff]
        %v1498 = vld [vmem:[%s560 + $0x158] sm:$0xff]
        %v1499 = vld [vmem:[%s560 + $0x160] sm:$0xff]
        %v1500 = vld [vmem:[%s560 + $0x168] sm:$0xff]
        %v1501 = vld [vmem:[%s560 + $0x170] sm:$0xff]
        %v1502 = vld [vmem:[%s560 + $0x178] sm:$0xff]
        %v1503 = vld [vmem:[%s564] sm:$0x3f]
        %v1505 = vperm.slane %v1503, 0
        %v1506 = vperm.slane %v1503, 1
        %v1507 = vperm.slane %v1503, 2
        %v1508 = vperm.slane %v1503, 3
        %v1509 = vperm.slane %v1503, 4
        %v1510 = vperm.slane %v1503, 5
        %v1565 = vunpack.c.l.b16 %v1455
        %v1566 = vunpack.c.h.b16 %v1455
        %v1567 = vunpack.c.l.b16 %v1456
        %v1568 = vunpack.c.h.b16 %v1456
        %v1569 = vunpack.c.l.b16 %v1457
        %v1570 = vunpack.c.h.b16 %v1457
        %v1571 = vunpack.c.l.b16 %v1458
        %v1572 = vunpack.c.h.b16 %v1458
        %v1573 = vunpack.c.l.b16 %v1459
        %v1574 = vunpack.c.h.b16 %v1459
        %v1575 = vunpack.c.l.b16 %v1460
        %v1576 = vunpack.c.h.b16 %v1460
        %v1577 = vunpack.c.l.b16 %v1461
        %v1578 = vunpack.c.h.b16 %v1461
        %v1579 = vunpack.c.l.b16 %v1462
        %v1580 = vunpack.c.h.b16 %v1462
        %v1581 = vunpack.c.l.b16 %v1463
        %v1582 = vunpack.c.h.b16 %v1463
        %v1583 = vunpack.c.l.b16 %v1464
        %v1584 = vunpack.c.h.b16 %v1464
        %v1585 = vunpack.c.l.b16 %v1465
        %v1586 = vunpack.c.h.b16 %v1465
        %v1587 = vunpack.c.l.b16 %v1466
        %v1588 = vunpack.c.h.b16 %v1466
        %v1589 = vunpack.c.l.b16 %v1467
        %v1590 = vunpack.c.h.b16 %v1467
        %v1591 = vunpack.c.l.b16 %v1468
        %v1592 = vunpack.c.h.b16 %v1468
        %v1593 = vunpack.c.l.b16 %v1469
        %v1594 = vunpack.c.h.b16 %v1469
        %v1595 = vunpack.c.l.b16 %v1470
        %v1596 = vunpack.c.h.b16 %v1470
        %v1597 = vunpack.c.l.b16 %v1471
        %v1598 = vunpack.c.h.b16 %v1471
        %v1599 = vunpack.c.l.b16 %v1472
        %v1600 = vunpack.c.h.b16 %v1472
        %v1601 = vunpack.c.l.b16 %v1473
        %v1602 = vunpack.c.h.b16 %v1473
        %v1603 = vunpack.c.l.b16 %v1474
        %v1604 = vunpack.c.h.b16 %v1474
        %v1605 = vunpack.c.l.b16 %v1475
        %v1606 = vunpack.c.h.b16 %v1475
        %v1607 = vunpack.c.l.b16 %v1476
        %v1608 = vunpack.c.h.b16 %v1476
        %v1609 = vunpack.c.l.b16 %v1477
        %v1610 = vunpack.c.h.b16 %v1477
        %v1611 = vunpack.c.l.b16 %v1478
        %v1612 = vunpack.c.h.b16 %v1478
        %v1613 = vunpack.c.l.b16 %v1479
        %v1614 = vunpack.c.h.b16 %v1479
        %v1615 = vunpack.c.l.b16 %v1480
        %v1616 = vunpack.c.h.b16 %v1480
        %v1617 = vunpack.c.l.b16 %v1481
        %v1618 = vunpack.c.h.b16 %v1481
        %v1619 = vunpack.c.l.b16 %v1482
        %v1620 = vunpack.c.h.b16 %v1482
        %v1621 = vunpack.c.l.b16 %v1483
        %v1622 = vunpack.c.h.b16 %v1483
        %v1623 = vunpack.c.l.b16 %v1484
        %v1624 = vunpack.c.h.b16 %v1484
        %v1625 = vunpack.c.l.b16 %v1485
        %v1626 = vunpack.c.h.b16 %v1485
        %v1627 = vunpack.c.l.b16 %v1486
        %v1628 = vunpack.c.h.b16 %v1486
        %v1629 = vunpack.c.l.b16 %v1487
        %v1630 = vunpack.c.h.b16 %v1487
        %v1631 = vunpack.c.l.b16 %v1488
        %v1632 = vunpack.c.h.b16 %v1488
        %v1633 = vunpack.c.l.b16 %v1489
        %v1634 = vunpack.c.h.b16 %v1489
        %v1635 = vunpack.c.l.b16 %v1490
        %v1636 = vunpack.c.h.b16 %v1490
        %v1637 = vunpack.c.l.b16 %v1491
        %v1638 = vunpack.c.h.b16 %v1491
        %v1639 = vunpack.c.l.b16 %v1492
        %v1640 = vunpack.c.h.b16 %v1492
        %v1641 = vunpack.c.l.b16 %v1493
        %v1642 = vunpack.c.h.b16 %v1493
        %v1643 = vunpack.c.l.b16 %v1494
        %v1644 = vunpack.c.h.b16 %v1494
        %v1645 = vunpack.c.l.b16 %v1495
        %v1646 = vunpack.c.h.b16 %v1495
        %v1647 = vunpack.c.l.b16 %v1496
        %v1648 = vunpack.c.h.b16 %v1496
        %v1649 = vunpack.c.l.b16 %v1497
        %v1650 = vunpack.c.h.b16 %v1497
        %v1651 = vunpack.c.l.b16 %v1498
        %v1652 = vunpack.c.h.b16 %v1498
        %v1653 = vunpack.c.l.b16 %v1499
        %v1654 = vunpack.c.h.b16 %v1499
        %v1655 = vunpack.c.l.b16 %v1500
        %v1656 = vunpack.c.h.b16 %v1500
        %v1657 = vunpack.c.l.b16 %v1501
        %v1658 = vunpack.c.h.b16 %v1501
        %v1659 = vunpack.c.l.b16 %v1502
        %v1660 = vunpack.c.h.b16 %v1502
        %v1661 = vpack.c.b16 %v1571, %v1565
        %v1662 = vpack.c.b16 %v1572, %v1566
        %v1663 = vpack.c.b16 %v1573, %v1567
        %v1664 = vpack.c.b16 %v1574, %v1568
        %v1665 = vpack.c.b16 %v1575, %v1569
        %v1666 = vpack.c.b16 %v1576, %v1570
        %v1667 = vpack.c.b16 %v1583, %v1577
        %v1668 = vpack.c.b16 %v1584, %v1578
        %v1669 = vpack.c.b16 %v1585, %v1579
        %v1670 = vpack.c.b16 %v1586, %v1580
        %v1671 = vpack.c.b16 %v1587, %v1581
        %v1672 = vpack.c.b16 %v1588, %v1582
        %v1673 = vpack.c.b16 %v1595, %v1589
        %v1674 = vpack.c.b16 %v1596, %v1590
        %v1675 = vpack.c.b16 %v1597, %v1591
        %v1676 = vpack.c.b16 %v1598, %v1592
        %v1677 = vpack.c.b16 %v1599, %v1593
        %v1678 = vpack.c.b16 %v1600, %v1594
        %v1679 = vpack.c.b16 %v1607, %v1601
        %v1680 = vpack.c.b16 %v1608, %v1602
        %v1681 = vpack.c.b16 %v1609, %v1603
        %v1682 = vpack.c.b16 %v1610, %v1604
        %v1683 = vpack.c.b16 %v1611, %v1605
        %v1684 = vpack.c.b16 %v1612, %v1606
        %v1685 = vpack.c.b16 %v1619, %v1613
        %v1686 = vpack.c.b16 %v1620, %v1614
        %v1687 = vpack.c.b16 %v1621, %v1615
        %v1688 = vpack.c.b16 %v1622, %v1616
        %v1689 = vpack.c.b16 %v1623, %v1617
        %v1690 = vpack.c.b16 %v1624, %v1618
        %v1691 = vpack.c.b16 %v1631, %v1625
        %v1692 = vpack.c.b16 %v1632, %v1626
        %v1693 = vpack.c.b16 %v1633, %v1627
        %v1694 = vpack.c.b16 %v1634, %v1628
        %v1695 = vpack.c.b16 %v1635, %v1629
        %v1696 = vpack.c.b16 %v1636, %v1630
        %v1697 = vpack.c.b16 %v1643, %v1637
        %v1698 = vpack.c.b16 %v1644, %v1638
        %v1699 = vpack.c.b16 %v1645, %v1639
        %v1700 = vpack.c.b16 %v1646, %v1640
        %v1701 = vpack.c.b16 %v1647, %v1641
        %v1702 = vpack.c.b16 %v1648, %v1642
        %v1703 = vpack.c.b16 %v1655, %v1649
        %v1704 = vpack.c.b16 %v1656, %v1650
        %v1705 = vpack.c.b16 %v1657, %v1651
        %v1706 = vpack.c.b16 %v1658, %v1652
        %v1707 = vpack.c.b16 %v1659, %v1653
        %v1708 = vpack.c.b16 %v1660, %v1654
        %1757 = vmatpush.bf16.msra.mxu0 %v1703
        %1758 = vmatpush.bf16.msra.mxu0 %v1697
        %1759 = vmatpush.bf16.msra.mxu0 %v1691
        %1760 = vmatpush.bf16.msra.mxu0 %v1685
        %1761 = vmatpush.bf16.msra.mxu0 %v1679
        %1762 = vmatpush.bf16.msra.mxu0 %v1673
        %1763 = vmatpush.bf16.msra.mxu0 %v1667
        %1764 = vmatpush.bf16.msra.mxu0 %v1661
        %1765 = vmatmul.bf16.gmra.mxu0 %v1439
        %v1766 = vpop.f32.mrf.mxu0
        %v1767 = vadd.f32 %v1505, %v1766
        %v1768 = vpop.f32.mrf.mxu0
        %v1769 = vadd.f32 %v1505, %v1768
        %1770 = vmatmul.bf16.gmra.mxu0 %v1440
        %v1771 = vpop.f32.mrf.mxu0
        %v1772 = vadd.f32 %v1505, %v1771
        %v1773 = vpop.f32.mrf.mxu0
        %v1774 = vadd.f32 %v1505, %v1773
        %1775 = vmatmul.bf16.gmra.mxu0 %v1441
        %v1776 = vpop.f32.mrf.mxu0
        %v1777 = vadd.f32 %v1505, %v1776
        %v1778 = vpop.f32.mrf.mxu0
        %v1779 = vadd.f32 %v1505, %v1778
        %1780 = vmatmul.bf16.gmra.mxu0 %v1442
        %v1781 = vpop.f32.mrf.mxu0
        %v1782 = vadd.f32 %v1505, %v1781
        %v1783 = vpop.f32.mrf.mxu0
        %v1784 = vadd.f32 %v1505, %v1783
        %1785 = vmatmul.bf16.gmra.mxu0 %v1443
        %v1786 = vpop.f32.mrf.mxu0
        %v1787 = vadd.f32 %v1505, %v1786
        %v1788 = vpop.f32.mrf.mxu0
        %v1789 = vadd.f32 %v1505, %v1788
        %1790 = vmatmul.bf16.gmra.mxu0 %v1444
        %v1791 = vpop.f32.mrf.mxu0
        %v1792 = vadd.f32 %v1505, %v1791
        %v1793 = vpop.f32.mrf.mxu0
        %v1794 = vadd.f32 %v1505, %v1793
        %1795 = vmatmul.bf16.gmra.mxu0 %v1445
        %v1796 = vpop.f32.mrf.mxu0
        %v1797 = vadd.f32 %v1505, %v1796
        %v1798 = vpop.f32.mrf.mxu0
        %v1799 = vadd.f32 %v1505, %v1798
        %1800 = vmatmul.bf16.gmra.mxu0 %v1446
        %v1801 = vpop.f32.mrf.mxu0
        %v1802 = vadd.f32 %v1505, %v1801
        %v1803 = vpop.f32.mrf.mxu0
        %v1804 = vadd.f32 %v1505, %v1803
        %1805 = vmatmul.bf16.gmra.mxu0 %v1447
        %v1806 = vpop.f32.mrf.mxu0
        %v1807 = vadd.f32 %v1505, %v1806
        %v1808 = vpop.f32.mrf.mxu0
        %v1809 = vadd.f32 %v1505, %v1808
        %1810 = vmatmul.bf16.gmra.mxu0 %v1448
        %v1811 = vpop.f32.mrf.mxu0
        %v1812 = vadd.f32 %v1505, %v1811
        %v1813 = vpop.f32.mrf.mxu0
        %v1814 = vadd.f32 %v1505, %v1813
        %1815 = vmatmul.bf16.gmra.mxu0 %v1449
        %v1816 = vpop.f32.mrf.mxu0
        %v1817 = vadd.f32 %v1505, %v1816
        %v1818 = vpop.f32.mrf.mxu0
        %v1819 = vadd.f32 %v1505, %v1818
        %1820 = vmatmul.bf16.gmra.mxu0 %v1450
        %v1821 = vpop.f32.mrf.mxu0
        %v1822 = vadd.f32 %v1505, %v1821
        %v1823 = vpop.f32.mrf.mxu0
        %v1824 = vadd.f32 %v1505, %v1823
        %1825 = vmatmul.bf16.gmra.mxu0 %v1451
        %v1826 = vpop.f32.mrf.mxu0
        %v1827 = vadd.f32 %v1505, %v1826
        %v1828 = vpop.f32.mrf.mxu0
        %v1829 = vadd.f32 %v1505, %v1828
        %1830 = vmatmul.bf16.gmra.mxu0 %v1452
        %v1831 = vpop.f32.mrf.mxu0
        %v1832 = vadd.f32 %v1505, %v1831
        %v1833 = vpop.f32.mrf.mxu0
        %v1834 = vadd.f32 %v1505, %v1833
        %1835 = vmatmul.bf16.gmra.mxu0 %v1453
        %v1836 = vpop.f32.mrf.mxu0
        %v1837 = vadd.f32 %v1505, %v1836
        %v1838 = vpop.f32.mrf.mxu0
        %v1839 = vadd.f32 %v1505, %v1838
        %1840 = vmatmul.bf16.gmra.mxu0 %v1454
        %v1841 = vpop.f32.mrf.mxu0
        %v1842 = vadd.f32 %v1505, %v1841
        %v1843 = vpop.f32.mrf.mxu0
        %v1844 = vadd.f32 %v1505, %v1843
        %1845 = vdwg.mxu0
        %1846 = vmatpush.bf16.msra.mxu0 %v1704
        %1847 = vmatpush.bf16.msra.mxu0 %v1698
        %1848 = vmatpush.bf16.msra.mxu0 %v1692
        %1849 = vmatpush.bf16.msra.mxu0 %v1686
        %1850 = vmatpush.bf16.msra.mxu0 %v1680
        %1851 = vmatpush.bf16.msra.mxu0 %v1674
        %1852 = vmatpush.bf16.msra.mxu0 %v1668
        %1853 = vmatpush.bf16.msra.mxu0 %v1662
        %1854 = vmatmul.bf16.gmra.mxu0 %v1439
        %v1855 = vpop.f32.mrf.mxu0
        %v1856 = vadd.f32 %v1506, %v1855
        %v1857 = vpop.f32.mrf.mxu0
        %v1858 = vadd.f32 %v1506, %v1857
        %1859 = vmatmul.bf16.gmra.mxu0 %v1440
        %v1860 = vpop.f32.mrf.mxu0
        %v1861 = vadd.f32 %v1506, %v1860
        %v1862 = vpop.f32.mrf.mxu0
        %v1863 = vadd.f32 %v1506, %v1862
        %1864 = vmatmul.bf16.gmra.mxu0 %v1441
        %v1865 = vpop.f32.mrf.mxu0
        %v1866 = vadd.f32 %v1506, %v1865
        %v1867 = vpop.f32.mrf.mxu0
        %v1868 = vadd.f32 %v1506, %v1867
        %1869 = vmatmul.bf16.gmra.mxu0 %v1442
        %v1870 = vpop.f32.mrf.mxu0
        %v1871 = vadd.f32 %v1506, %v1870
        %v1872 = vpop.f32.mrf.mxu0
        %v1873 = vadd.f32 %v1506, %v1872
        %1874 = vmatmul.bf16.gmra.mxu0 %v1443
        %v1875 = vpop.f32.mrf.mxu0
        %v1876 = vadd.f32 %v1506, %v1875
        %v1877 = vpop.f32.mrf.mxu0
        %v1878 = vadd.f32 %v1506, %v1877
        %1879 = vmatmul.bf16.gmra.mxu0 %v1444
        %v1880 = vpop.f32.mrf.mxu0
        %v1881 = vadd.f32 %v1506, %v1880
        %v1882 = vpop.f32.mrf.mxu0
        %v1883 = vadd.f32 %v1506, %v1882
        %1884 = vmatmul.bf16.gmra.mxu0 %v1445
        %v1885 = vpop.f32.mrf.mxu0
        %v1886 = vadd.f32 %v1506, %v1885
        %v1887 = vpop.f32.mrf.mxu0
        %v1888 = vadd.f32 %v1506, %v1887
        %1889 = vmatmul.bf16.gmra.mxu0 %v1446
        %v1890 = vpop.f32.mrf.mxu0
        %v1891 = vadd.f32 %v1506, %v1890
        %v1892 = vpop.f32.mrf.mxu0
        %v1893 = vadd.f32 %v1506, %v1892
        %1894 = vmatmul.bf16.gmra.mxu0 %v1447
        %v1895 = vpop.f32.mrf.mxu0
        %v1896 = vadd.f32 %v1506, %v1895
        %v1897 = vpop.f32.mrf.mxu0
        %v1898 = vadd.f32 %v1506, %v1897
        %1899 = vmatmul.bf16.gmra.mxu0 %v1448
        %v1900 = vpop.f32.mrf.mxu0
        %v1901 = vadd.f32 %v1506, %v1900
        %v1902 = vpop.f32.mrf.mxu0
        %v1903 = vadd.f32 %v1506, %v1902
        %1904 = vmatmul.bf16.gmra.mxu0 %v1449
        %v1905 = vpop.f32.mrf.mxu0
        %v1906 = vadd.f32 %v1506, %v1905
        %v1907 = vpop.f32.mrf.mxu0
        %v1908 = vadd.f32 %v1506, %v1907
        %1909 = vmatmul.bf16.gmra.mxu0 %v1450
        %v1910 = vpop.f32.mrf.mxu0
        %v1911 = vadd.f32 %v1506, %v1910
        %v1912 = vpop.f32.mrf.mxu0
        %v1913 = vadd.f32 %v1506, %v1912
        %1914 = vmatmul.bf16.gmra.mxu0 %v1451
        %v1915 = vpop.f32.mrf.mxu0
        %v1916 = vadd.f32 %v1506, %v1915
        %v1917 = vpop.f32.mrf.mxu0
        %v1918 = vadd.f32 %v1506, %v1917
        %1919 = vmatmul.bf16.gmra.mxu0 %v1452
        %v1920 = vpop.f32.mrf.mxu0
        %v1921 = vadd.f32 %v1506, %v1920
        %v1922 = vpop.f32.mrf.mxu0
        %v1923 = vadd.f32 %v1506, %v1922
        %1924 = vmatmul.bf16.gmra.mxu0 %v1453
        %v1925 = vpop.f32.mrf.mxu0
        %v1926 = vadd.f32 %v1506, %v1925
        %v1927 = vpop.f32.mrf.mxu0
        %v1928 = vadd.f32 %v1506, %v1927
        %1929 = vmatmul.bf16.gmra.mxu0 %v1454
        %v1930 = vpop.f32.mrf.mxu0
        %v1931 = vadd.f32 %v1506, %v1930
        %v1932 = vpop.f32.mrf.mxu0
        %v1933 = vadd.f32 %v1506, %v1932
        %1934 = vdwg.mxu0
        %1935 = vmatpush.bf16.msra.mxu0 %v1705
        %1936 = vmatpush.bf16.msra.mxu0 %v1699
        %1937 = vmatpush.bf16.msra.mxu0 %v1693
        %1938 = vmatpush.bf16.msra.mxu0 %v1687
        %1939 = vmatpush.bf16.msra.mxu0 %v1681
        %1940 = vmatpush.bf16.msra.mxu0 %v1675
        %1941 = vmatpush.bf16.msra.mxu0 %v1669
        %1942 = vmatpush.bf16.msra.mxu0 %v1663
        %1943 = vmatmul.bf16.gmra.mxu0 %v1439
        %v1944 = vpop.f32.mrf.mxu0
        %v1945 = vadd.f32 %v1507, %v1944
        %v1946 = vpop.f32.mrf.mxu0
        %v1947 = vadd.f32 %v1507, %v1946
        %1948 = vmatmul.bf16.gmra.mxu0 %v1440
        %v1949 = vpop.f32.mrf.mxu0
        %v1950 = vadd.f32 %v1507, %v1949
        %v1951 = vpop.f32.mrf.mxu0
        %v1952 = vadd.f32 %v1507, %v1951
        %1953 = vmatmul.bf16.gmra.mxu0 %v1441
        %v1954 = vpop.f32.mrf.mxu0
        %v1955 = vadd.f32 %v1507, %v1954
        %v1956 = vpop.f32.mrf.mxu0
        %v1957 = vadd.f32 %v1507, %v1956
        %1958 = vmatmul.bf16.gmra.mxu0 %v1442
        %v1959 = vpop.f32.mrf.mxu0
        %v1960 = vadd.f32 %v1507, %v1959
        %v1961 = vpop.f32.mrf.mxu0
        %v1962 = vadd.f32 %v1507, %v1961
        %1963 = vmatmul.bf16.gmra.mxu0 %v1443
        %v1964 = vpop.f32.mrf.mxu0
        %v1965 = vadd.f32 %v1507, %v1964
        %v1966 = vpop.f32.mrf.mxu0
        %v1967 = vadd.f32 %v1507, %v1966
        %1968 = vmatmul.bf16.gmra.mxu0 %v1444
        %v1969 = vpop.f32.mrf.mxu0
        %v1970 = vadd.f32 %v1507, %v1969
        %v1971 = vpop.f32.mrf.mxu0
        %v1972 = vadd.f32 %v1507, %v1971
        %1973 = vmatmul.bf16.gmra.mxu0 %v1445
        %v1974 = vpop.f32.mrf.mxu0
        %v1975 = vadd.f32 %v1507, %v1974
        %v1976 = vpop.f32.mrf.mxu0
        %v1977 = vadd.f32 %v1507, %v1976
        %1978 = vmatmul.bf16.gmra.mxu0 %v1446
        %v1979 = vpop.f32.mrf.mxu0
        %v1980 = vadd.f32 %v1507, %v1979
        %v1981 = vpop.f32.mrf.mxu0
        %v1982 = vadd.f32 %v1507, %v1981
        %1983 = vmatmul.bf16.gmra.mxu0 %v1447
        %v1984 = vpop.f32.mrf.mxu0
        %v1985 = vadd.f32 %v1507, %v1984
        %v1986 = vpop.f32.mrf.mxu0
        %v1987 = vadd.f32 %v1507, %v1986
        %1988 = vmatmul.bf16.gmra.mxu0 %v1448
        %v1989 = vpop.f32.mrf.mxu0
        %v1990 = vadd.f32 %v1507, %v1989
        %v1991 = vpop.f32.mrf.mxu0
        %v1992 = vadd.f32 %v1507, %v1991
        %1993 = vmatmul.bf16.gmra.mxu0 %v1449
        %v1994 = vpop.f32.mrf.mxu0
        %v1995 = vadd.f32 %v1507, %v1994
        %v1996 = vpop.f32.mrf.mxu0
        %v1997 = vadd.f32 %v1507, %v1996
        %1998 = vmatmul.bf16.gmra.mxu0 %v1450
        %v1999 = vpop.f32.mrf.mxu0
        %v2000 = vadd.f32 %v1507, %v1999
        %v2001 = vpop.f32.mrf.mxu0
        %v2002 = vadd.f32 %v1507, %v2001
        %2003 = vmatmul.bf16.gmra.mxu0 %v1451
        %v2004 = vpop.f32.mrf.mxu0
        %v2005 = vadd.f32 %v1507, %v2004
        %v2006 = vpop.f32.mrf.mxu0
        %v2007 = vadd.f32 %v1507, %v2006
        %2008 = vmatmul.bf16.gmra.mxu0 %v1452
        %v2009 = vpop.f32.mrf.mxu0
        %v2010 = vadd.f32 %v1507, %v2009
        %v2011 = vpop.f32.mrf.mxu0
        %v2012 = vadd.f32 %v1507, %v2011
        %2013 = vmatmul.bf16.gmra.mxu0 %v1453
        %v2014 = vpop.f32.mrf.mxu0
        %v2015 = vadd.f32 %v1507, %v2014
        %v2016 = vpop.f32.mrf.mxu0
        %v2017 = vadd.f32 %v1507, %v2016
        %2018 = vmatmul.bf16.gmra.mxu0 %v1454
        %v2019 = vpop.f32.mrf.mxu0
        %v2020 = vadd.f32 %v1507, %v2019
        %v2021 = vpop.f32.mrf.mxu0
        %v2022 = vadd.f32 %v1507, %v2021
        %2023 = vdwg.mxu0
        %2024 = vmatpush.bf16.msra.mxu0 %v1706
        %2025 = vmatpush.bf16.msra.mxu0 %v1700
        %2026 = vmatpush.bf16.msra.mxu0 %v1694
        %2027 = vmatpush.bf16.msra.mxu0 %v1688
        %2028 = vmatpush.bf16.msra.mxu0 %v1682
        %2029 = vmatpush.bf16.msra.mxu0 %v1676
        %2030 = vmatpush.bf16.msra.mxu0 %v1670
        %2031 = vmatpush.bf16.msra.mxu0 %v1664
        %2032 = vmatmul.bf16.gmra.mxu0 %v1439
        %v2033 = vpop.f32.mrf.mxu0
        %v2034 = vadd.f32 %v1508, %v2033
        %v2035 = vpop.f32.mrf.mxu0
        %v2036 = vadd.f32 %v1508, %v2035
        %2037 = vmatmul.bf16.gmra.mxu0 %v1440
        %v2038 = vpop.f32.mrf.mxu0
        %v2039 = vadd.f32 %v1508, %v2038
        %v2040 = vpop.f32.mrf.mxu0
        %v2041 = vadd.f32 %v1508, %v2040
        %2042 = vmatmul.bf16.gmra.mxu0 %v1441
        %v2043 = vpop.f32.mrf.mxu0
        %v2044 = vadd.f32 %v1508, %v2043
        %v2045 = vpop.f32.mrf.mxu0
        %v2046 = vadd.f32 %v1508, %v2045
        %2047 = vmatmul.bf16.gmra.mxu0 %v1442
        %v2048 = vpop.f32.mrf.mxu0
        %v2049 = vadd.f32 %v1508, %v2048
        %v2050 = vpop.f32.mrf.mxu0
        %v2051 = vadd.f32 %v1508, %v2050
        %2052 = vmatmul.bf16.gmra.mxu0 %v1443
        %v2053 = vpop.f32.mrf.mxu0
        %v2054 = vadd.f32 %v1508, %v2053
        %v2055 = vpop.f32.mrf.mxu0
        %v2056 = vadd.f32 %v1508, %v2055
        %2057 = vmatmul.bf16.gmra.mxu0 %v1444
        %v2058 = vpop.f32.mrf.mxu0
        %v2059 = vadd.f32 %v1508, %v2058
        %v2060 = vpop.f32.mrf.mxu0
        %v2061 = vadd.f32 %v1508, %v2060
        %2062 = vmatmul.bf16.gmra.mxu0 %v1445
        %v2063 = vpop.f32.mrf.mxu0
        %v2064 = vadd.f32 %v1508, %v2063
        %v2065 = vpop.f32.mrf.mxu0
        %v2066 = vadd.f32 %v1508, %v2065
        %2067 = vmatmul.bf16.gmra.mxu0 %v1446
        %v2068 = vpop.f32.mrf.mxu0
        %v2069 = vadd.f32 %v1508, %v2068
        %v2070 = vpop.f32.mrf.mxu0
        %v2071 = vadd.f32 %v1508, %v2070
        %2072 = vmatmul.bf16.gmra.mxu0 %v1447
        %v2073 = vpop.f32.mrf.mxu0
        %v2074 = vadd.f32 %v1508, %v2073
        %v2075 = vpop.f32.mrf.mxu0
        %v2076 = vadd.f32 %v1508, %v2075
        %2077 = vmatmul.bf16.gmra.mxu0 %v1448
        %v2078 = vpop.f32.mrf.mxu0
        %v2079 = vadd.f32 %v1508, %v2078
        %v2080 = vpop.f32.mrf.mxu0
        %v2081 = vadd.f32 %v1508, %v2080
        %2082 = vmatmul.bf16.gmra.mxu0 %v1449
        %v2083 = vpop.f32.mrf.mxu0
        %v2084 = vadd.f32 %v1508, %v2083
        %v2085 = vpop.f32.mrf.mxu0
        %v2086 = vadd.f32 %v1508, %v2085
        %2087 = vmatmul.bf16.gmra.mxu0 %v1450
        %v2088 = vpop.f32.mrf.mxu0
        %v2089 = vadd.f32 %v1508, %v2088
        %v2090 = vpop.f32.mrf.mxu0
        %v2091 = vadd.f32 %v1508, %v2090
        %2092 = vmatmul.bf16.gmra.mxu0 %v1451
        %v2093 = vpop.f32.mrf.mxu0
        %v2094 = vadd.f32 %v1508, %v2093
        %v2095 = vpop.f32.mrf.mxu0
        %v2096 = vadd.f32 %v1508, %v2095
        %2097 = vmatmul.bf16.gmra.mxu0 %v1452
        %v2098 = vpop.f32.mrf.mxu0
        %v2099 = vadd.f32 %v1508, %v2098
        %v2100 = vpop.f32.mrf.mxu0
        %v2101 = vadd.f32 %v1508, %v2100
        %2102 = vmatmul.bf16.gmra.mxu0 %v1453
        %v2103 = vpop.f32.mrf.mxu0
        %v2104 = vadd.f32 %v1508, %v2103
        %v2105 = vpop.f32.mrf.mxu0
        %v2106 = vadd.f32 %v1508, %v2105
        %2107 = vmatmul.bf16.gmra.mxu0 %v1454
        %v2108 = vpop.f32.mrf.mxu0
        %v2109 = vadd.f32 %v1508, %v2108
        %v2110 = vpop.f32.mrf.mxu0
        %v2111 = vadd.f32 %v1508, %v2110
        %2112 = vdwg.mxu0
        %2113 = vmatpush.bf16.msra.mxu0 %v1707
        %2114 = vmatpush.bf16.msra.mxu0 %v1701
        %2115 = vmatpush.bf16.msra.mxu0 %v1695
        %2116 = vmatpush.bf16.msra.mxu0 %v1689
        %2117 = vmatpush.bf16.msra.mxu0 %v1683
        %2118 = vmatpush.bf16.msra.mxu0 %v1677
        %2119 = vmatpush.bf16.msra.mxu0 %v1671
        %2120 = vmatpush.bf16.msra.mxu0 %v1665
        %2121 = vmatmul.bf16.gmra.mxu0 %v1439
        %v2122 = vpop.f32.mrf.mxu0
        %v2123 = vadd.f32 %v1509, %v2122
        %v2124 = vpop.f32.mrf.mxu0
        %v2125 = vadd.f32 %v1509, %v2124
        %2126 = vmatmul.bf16.gmra.mxu0 %v1440
        %v2127 = vpop.f32.mrf.mxu0
        %v2128 = vadd.f32 %v1509, %v2127
        %v2129 = vpop.f32.mrf.mxu0
        %v2130 = vadd.f32 %v1509, %v2129
        %2131 = vmatmul.bf16.gmra.mxu0 %v1441
        %v2132 = vpop.f32.mrf.mxu0
        %v2133 = vadd.f32 %v1509, %v2132
        %v2134 = vpop.f32.mrf.mxu0
        %v2135 = vadd.f32 %v1509, %v2134
        %2136 = vmatmul.bf16.gmra.mxu0 %v1442
        %v2137 = vpop.f32.mrf.mxu0
        %v2138 = vadd.f32 %v1509, %v2137
        %v2139 = vpop.f32.mrf.mxu0
        %v2140 = vadd.f32 %v1509, %v2139
        %2141 = vmatmul.bf16.gmra.mxu0 %v1443
        %v2142 = vpop.f32.mrf.mxu0
        %v2143 = vadd.f32 %v1509, %v2142
        %v2144 = vpop.f32.mrf.mxu0
        %v2145 = vadd.f32 %v1509, %v2144
        %2146 = vmatmul.bf16.gmra.mxu0 %v1444
        %v2147 = vpop.f32.mrf.mxu0
        %v2148 = vadd.f32 %v1509, %v2147
        %v2149 = vpop.f32.mrf.mxu0
        %v2150 = vadd.f32 %v1509, %v2149
        %2151 = vmatmul.bf16.gmra.mxu0 %v1445
        %v2152 = vpop.f32.mrf.mxu0
        %v2153 = vadd.f32 %v1509, %v2152
        %v2154 = vpop.f32.mrf.mxu0
        %v2155 = vadd.f32 %v1509, %v2154
        %2156 = vmatmul.bf16.gmra.mxu0 %v1446
        %v2157 = vpop.f32.mrf.mxu0
        %v2158 = vadd.f32 %v1509, %v2157
        %v2159 = vpop.f32.mrf.mxu0
        %v2160 = vadd.f32 %v1509, %v2159
        %2161 = vmatmul.bf16.gmra.mxu0 %v1447
        %v2162 = vpop.f32.mrf.mxu0
        %v2163 = vadd.f32 %v1509, %v2162
        %v2164 = vpop.f32.mrf.mxu0
        %v2165 = vadd.f32 %v1509, %v2164
        %2166 = vmatmul.bf16.gmra.mxu0 %v1448
        %v2167 = vpop.f32.mrf.mxu0
        %v2168 = vadd.f32 %v1509, %v2167
        %v2169 = vpop.f32.mrf.mxu0
        %v2170 = vadd.f32 %v1509, %v2169
        %2171 = vmatmul.bf16.gmra.mxu0 %v1449
        %v2172 = vpop.f32.mrf.mxu0
        %v2173 = vadd.f32 %v1509, %v2172
        %v2174 = vpop.f32.mrf.mxu0
        %v2175 = vadd.f32 %v1509, %v2174
        %2176 = vmatmul.bf16.gmra.mxu0 %v1450
        %v2177 = vpop.f32.mrf.mxu0
        %v2178 = vadd.f32 %v1509, %v2177
        %v2179 = vpop.f32.mrf.mxu0
        %v2180 = vadd.f32 %v1509, %v2179
        %2181 = vmatmul.bf16.gmra.mxu0 %v1451
        %v2182 = vpop.f32.mrf.mxu0
        %v2183 = vadd.f32 %v1509, %v2182
        %v2184 = vpop.f32.mrf.mxu0
        %v2185 = vadd.f32 %v1509, %v2184
        %2186 = vmatmul.bf16.gmra.mxu0 %v1452
        %v2187 = vpop.f32.mrf.mxu0
        %v2188 = vadd.f32 %v1509, %v2187
        %v2189 = vpop.f32.mrf.mxu0
        %v2190 = vadd.f32 %v1509, %v2189
        %2191 = vmatmul.bf16.gmra.mxu0 %v1453
        %v2192 = vpop.f32.mrf.mxu0
        %v2193 = vadd.f32 %v1509, %v2192
        %v2194 = vpop.f32.mrf.mxu0
        %v2195 = vadd.f32 %v1509, %v2194
        %2196 = vmatmul.bf16.gmra.mxu0 %v1454
        %v2197 = vpop.f32.mrf.mxu0
        %v2198 = vadd.f32 %v1509, %v2197
        %v2199 = vpop.f32.mrf.mxu0
        %v2200 = vadd.f32 %v1509, %v2199
        %2201 = vdwg.mxu0
        %2202 = vmatpush.bf16.msra.mxu0 %v1708
        %2203 = vmatpush.bf16.msra.mxu0 %v1702
        %2204 = vmatpush.bf16.msra.mxu0 %v1696
        %2205 = vmatpush.bf16.msra.mxu0 %v1690
        %2206 = vmatpush.bf16.msra.mxu0 %v1684
        %2207 = vmatpush.bf16.msra.mxu0 %v1678
        %2208 = vmatpush.bf16.msra.mxu0 %v1672
        %2209 = vmatpush.bf16.msra.mxu0 %v1666
        %2210 = vmatmul.bf16.gmra.mxu0 %v1439
        %v2211 = vpop.f32.mrf.mxu0
        %v2212 = vadd.f32 %v1510, %v2211
        %v2213 = vpop.f32.mrf.mxu0
        %v2214 = vadd.f32 %v1510, %v2213
        %2215 = vmatmul.bf16.gmra.mxu0 %v1440
        %v2216 = vpop.f32.mrf.mxu0
        %v2217 = vadd.f32 %v1510, %v2216
        %v2218 = vpop.f32.mrf.mxu0
        %v2219 = vadd.f32 %v1510, %v2218
        %2220 = vmatmul.bf16.gmra.mxu0 %v1441
        %v2221 = vpop.f32.mrf.mxu0
        %v2222 = vadd.f32 %v1510, %v2221
        %v2223 = vpop.f32.mrf.mxu0
        %v2224 = vadd.f32 %v1510, %v2223
        %2225 = vmatmul.bf16.gmra.mxu0 %v1442
        %v2226 = vpop.f32.mrf.mxu0
        %v2227 = vadd.f32 %v1510, %v2226
        %v2228 = vpop.f32.mrf.mxu0
        %v2229 = vadd.f32 %v1510, %v2228
        %2230 = vmatmul.bf16.gmra.mxu0 %v1443
        %v2231 = vpop.f32.mrf.mxu0
        %v2232 = vadd.f32 %v1510, %v2231
        %v2233 = vpop.f32.mrf.mxu0
        %v2234 = vadd.f32 %v1510, %v2233
        %2235 = vmatmul.bf16.gmra.mxu0 %v1444
        %v2236 = vpop.f32.mrf.mxu0
        %v2237 = vadd.f32 %v1510, %v2236
        %v2238 = vpop.f32.mrf.mxu0
        %v2239 = vadd.f32 %v1510, %v2238
        %2240 = vmatmul.bf16.gmra.mxu0 %v1445
        %v2241 = vpop.f32.mrf.mxu0
        %v2242 = vadd.f32 %v1510, %v2241
        %v2243 = vpop.f32.mrf.mxu0
        %v2244 = vadd.f32 %v1510, %v2243
        %2245 = vmatmul.bf16.gmra.mxu0 %v1446
        %v2246 = vpop.f32.mrf.mxu0
        %v2247 = vadd.f32 %v1510, %v2246
        %v2248 = vpop.f32.mrf.mxu0
        %v2249 = vadd.f32 %v1510, %v2248
        %2250 = vmatmul.bf16.gmra.mxu0 %v1447
        %v2251 = vpop.f32.mrf.mxu0
        %v2252 = vadd.f32 %v1510, %v2251
        %v2253 = vpop.f32.mrf.mxu0
        %v2254 = vadd.f32 %v1510, %v2253
        %2255 = vmatmul.bf16.gmra.mxu0 %v1448
        %v2256 = vpop.f32.mrf.mxu0
        %v2257 = vadd.f32 %v1510, %v2256
        %v2258 = vpop.f32.mrf.mxu0
        %v2259 = vadd.f32 %v1510, %v2258
        %2260 = vmatmul.bf16.gmra.mxu0 %v1449
        %v2261 = vpop.f32.mrf.mxu0
        %v2262 = vadd.f32 %v1510, %v2261
        %v2263 = vpop.f32.mrf.mxu0
        %v2264 = vadd.f32 %v1510, %v2263
        %2265 = vmatmul.bf16.gmra.mxu0 %v1450
        %v2266 = vpop.f32.mrf.mxu0
        %v2267 = vadd.f32 %v1510, %v2266
        %v2268 = vpop.f32.mrf.mxu0
        %v2269 = vadd.f32 %v1510, %v2268
        %2270 = vmatmul.bf16.gmra.mxu0 %v1451
        %v2271 = vpop.f32.mrf.mxu0
        %v2272 = vadd.f32 %v1510, %v2271
        %v2273 = vpop.f32.mrf.mxu0
        %v2274 = vadd.f32 %v1510, %v2273
        %2275 = vmatmul.bf16.gmra.mxu0 %v1452
        %v2276 = vpop.f32.mrf.mxu0
        %v2277 = vadd.f32 %v1510, %v2276
        %v2278 = vpop.f32.mrf.mxu0
        %v2279 = vadd.f32 %v1510, %v2278
        %2280 = vmatmul.bf16.gmra.mxu0 %v1453
        %v2281 = vpop.f32.mrf.mxu0
        %v2282 = vadd.f32 %v1510, %v2281
        %v2283 = vpop.f32.mrf.mxu0
        %v2284 = vadd.f32 %v1510, %v2283
        %2285 = vmatmul.bf16.gmra.mxu0 %v1454
        %v2286 = vpop.f32.mrf.mxu0
        %v2287 = vadd.f32 %v1510, %v2286
        %v2288 = vpop.f32.mrf.mxu0
        %v2289 = vadd.f32 %v1510, %v2288
        %2290 = vdwg.mxu0
        %v2291 = vpack.c.bf16 %v1856, %v1767
        %v2292 = vpack.c.bf16 %v2034, %v1945
        %v2293 = vpack.c.bf16 %v2212, %v2123
        %v2294 = vpack.c.bf16 %v1858, %v1769
        %v2295 = vpack.c.bf16 %v2036, %v1947
        %v2296 = vpack.c.bf16 %v2214, %v2125
        %v2297 = vpack.c.bf16 %v1861, %v1772
        %v2298 = vpack.c.bf16 %v2039, %v1950
        %v2299 = vpack.c.bf16 %v2217, %v2128
        %v2300 = vpack.c.bf16 %v1863, %v1774
        %v2301 = vpack.c.bf16 %v2041, %v1952
        %v2302 = vpack.c.bf16 %v2219, %v2130
        %v2303 = vpack.c.bf16 %v1866, %v1777
        %v2304 = vpack.c.bf16 %v2044, %v1955
        %v2305 = vpack.c.bf16 %v2222, %v2133
        %v2306 = vpack.c.bf16 %v1868, %v1779
        %v2307 = vpack.c.bf16 %v2046, %v1957
        %v2308 = vpack.c.bf16 %v2224, %v2135
        %v2309 = vpack.c.bf16 %v1871, %v1782
        %v2310 = vpack.c.bf16 %v2049, %v1960
        %v2311 = vpack.c.bf16 %v2227, %v2138
        %v2312 = vpack.c.bf16 %v1873, %v1784
        %v2313 = vpack.c.bf16 %v2051, %v1962
        %v2314 = vpack.c.bf16 %v2229, %v2140
        %v2315 = vpack.c.bf16 %v1876, %v1787
        %v2316 = vpack.c.bf16 %v2054, %v1965
        %v2317 = vpack.c.bf16 %v2232, %v2143
        %v2318 = vpack.c.bf16 %v1878, %v1789
        %v2319 = vpack.c.bf16 %v2056, %v1967
        %v2320 = vpack.c.bf16 %v2234, %v2145
        %v2321 = vpack.c.bf16 %v1881, %v1792
        %v2322 = vpack.c.bf16 %v2059, %v1970
        %v2323 = vpack.c.bf16 %v2237, %v2148
        %v2324 = vpack.c.bf16 %v1883, %v1794
        %v2325 = vpack.c.bf16 %v2061, %v1972
        %v2326 = vpack.c.bf16 %v2239, %v2150
        %v2327 = vpack.c.bf16 %v1886, %v1797
        %v2328 = vpack.c.bf16 %v2064, %v1975
        %v2329 = vpack.c.bf16 %v2242, %v2153
        %v2330 = vpack.c.bf16 %v1888, %v1799
        %v2331 = vpack.c.bf16 %v2066, %v1977
        %v2332 = vpack.c.bf16 %v2244, %v2155
        %v2333 = vpack.c.bf16 %v1891, %v1802
        %v2334 = vpack.c.bf16 %v2069, %v1980
        %v2335 = vpack.c.bf16 %v2247, %v2158
        %v2336 = vpack.c.bf16 %v1893, %v1804
        %v2337 = vpack.c.bf16 %v2071, %v1982
        %v2338 = vpack.c.bf16 %v2249, %v2160
        %v2339 = vpack.c.bf16 %v1896, %v1807
        %v2340 = vpack.c.bf16 %v2074, %v1985
        %v2341 = vpack.c.bf16 %v2252, %v2163
        %v2342 = vpack.c.bf16 %v1898, %v1809
        %v2343 = vpack.c.bf16 %v2076, %v1987
        %v2344 = vpack.c.bf16 %v2254, %v2165
        %v2345 = vpack.c.bf16 %v1901, %v1812
        %v2346 = vpack.c.bf16 %v2079, %v1990
        %v2347 = vpack.c.bf16 %v2257, %v2168
        %v2348 = vpack.c.bf16 %v1903, %v1814
        %v2349 = vpack.c.bf16 %v2081, %v1992
        %v2350 = vpack.c.bf16 %v2259, %v2170
        %v2351 = vpack.c.bf16 %v1906, %v1817
        %v2352 = vpack.c.bf16 %v2084, %v1995
        %v2353 = vpack.c.bf16 %v2262, %v2173
        %v2354 = vpack.c.bf16 %v1908, %v1819
        %v2355 = vpack.c.bf16 %v2086, %v1997
        %v2356 = vpack.c.bf16 %v2264, %v2175
        %v2357 = vpack.c.bf16 %v1911, %v1822
        %v2358 = vpack.c.bf16 %v2089, %v2000
        %v2359 = vpack.c.bf16 %v2267, %v2178
        %v2360 = vpack.c.bf16 %v1913, %v1824
        %v2361 = vpack.c.bf16 %v2091, %v2002
        %v2362 = vpack.c.bf16 %v2269, %v2180
        %v2363 = vpack.c.bf16 %v1916, %v1827
        %v2364 = vpack.c.bf16 %v2094, %v2005
        %v2365 = vpack.c.bf16 %v2272, %v2183
        %v2366 = vpack.c.bf16 %v1918, %v1829
        %v2367 = vpack.c.bf16 %v2096, %v2007
        %v2368 = vpack.c.bf16 %v2274, %v2185
        %v2369 = vpack.c.bf16 %v1921, %v1832
        %v2370 = vpack.c.bf16 %v2099, %v2010
        %v2371 = vpack.c.bf16 %v2277, %v2188
        %v2372 = vpack.c.bf16 %v1923, %v1834
        %v2373 = vpack.c.bf16 %v2101, %v2012
        %v2374 = vpack.c.bf16 %v2279, %v2190
        %v2375 = vpack.c.bf16 %v1926, %v1837
        %v2376 = vpack.c.bf16 %v2104, %v2015
        %v2377 = vpack.c.bf16 %v2282, %v2193
        %v2378 = vpack.c.bf16 %v1928, %v1839
        %v2379 = vpack.c.bf16 %v2106, %v2017
        %v2380 = vpack.c.bf16 %v2284, %v2195
        %v2381 = vpack.c.bf16 %v1931, %v1842
        %v2382 = vpack.c.bf16 %v2109, %v2020
        %v2383 = vpack.c.bf16 %v2287, %v2198
        %v2384 = vpack.c.bf16 %v1933, %v1844
        %v2385 = vpack.c.bf16 %v2111, %v2022
        %v2386 = vpack.c.bf16 %v2289, %v2200
        %v2483 = vunpack.c.l.b16 %v2291
        %v2484 = vunpack.c.h.b16 %v2291
        %v2485 = vunpack.c.l.b16 %v2292
        %v2486 = vunpack.c.h.b16 %v2292
        %v2487 = vunpack.c.l.b16 %v2293
        %v2488 = vunpack.c.h.b16 %v2293
        %v2489 = vunpack.c.l.b16 %v2294
        %v2490 = vunpack.c.h.b16 %v2294
        %v2491 = vunpack.c.l.b16 %v2295
        %v2492 = vunpack.c.h.b16 %v2295
        %v2493 = vunpack.c.l.b16 %v2296
        %v2494 = vunpack.c.h.b16 %v2296
        %v2495 = vunpack.c.l.b16 %v2297
        %v2496 = vunpack.c.h.b16 %v2297
        %v2497 = vunpack.c.l.b16 %v2298
        %v2498 = vunpack.c.h.b16 %v2298
        %v2499 = vunpack.c.l.b16 %v2299
        %v2500 = vunpack.c.h.b16 %v2299
        %v2501 = vunpack.c.l.b16 %v2300
        %v2502 = vunpack.c.h.b16 %v2300
        %v2503 = vunpack.c.l.b16 %v2301
        %v2504 = vunpack.c.h.b16 %v2301
        %v2505 = vunpack.c.l.b16 %v2302
        %v2506 = vunpack.c.h.b16 %v2302
        %v2507 = vunpack.c.l.b16 %v2303
        %v2508 = vunpack.c.h.b16 %v2303
        %v2509 = vunpack.c.l.b16 %v2304
        %v2510 = vunpack.c.h.b16 %v2304
        %v2511 = vunpack.c.l.b16 %v2305
        %v2512 = vunpack.c.h.b16 %v2305
        %v2513 = vunpack.c.l.b16 %v2306
        %v2514 = vunpack.c.h.b16 %v2306
        %v2515 = vunpack.c.l.b16 %v2307
        %v2516 = vunpack.c.h.b16 %v2307
        %v2517 = vunpack.c.l.b16 %v2308
        %v2518 = vunpack.c.h.b16 %v2308
        %v2519 = vunpack.c.l.b16 %v2309
        %v2520 = vunpack.c.h.b16 %v2309
        %v2521 = vunpack.c.l.b16 %v2310
        %v2522 = vunpack.c.h.b16 %v2310
        %v2523 = vunpack.c.l.b16 %v2311
        %v2524 = vunpack.c.h.b16 %v2311
        %v2525 = vunpack.c.l.b16 %v2312
        %v2526 = vunpack.c.h.b16 %v2312
        %v2527 = vunpack.c.l.b16 %v2313
        %v2528 = vunpack.c.h.b16 %v2313
        %v2529 = vunpack.c.l.b16 %v2314
        %v2530 = vunpack.c.h.b16 %v2314
        %v2531 = vunpack.c.l.b16 %v2315
        %v2532 = vunpack.c.h.b16 %v2315
        %v2533 = vunpack.c.l.b16 %v2316
        %v2534 = vunpack.c.h.b16 %v2316
        %v2535 = vunpack.c.l.b16 %v2317
        %v2536 = vunpack.c.h.b16 %v2317
        %v2537 = vunpack.c.l.b16 %v2318
        %v2538 = vunpack.c.h.b16 %v2318
        %v2539 = vunpack.c.l.b16 %v2319
        %v2540 = vunpack.c.h.b16 %v2319
        %v2541 = vunpack.c.l.b16 %v2320
        %v2542 = vunpack.c.h.b16 %v2320
        %v2543 = vunpack.c.l.b16 %v2321
        %v2544 = vunpack.c.h.b16 %v2321
        %v2545 = vunpack.c.l.b16 %v2322
        %v2546 = vunpack.c.h.b16 %v2322
        %v2547 = vunpack.c.l.b16 %v2323
        %v2548 = vunpack.c.h.b16 %v2323
        %v2549 = vunpack.c.l.b16 %v2324
        %v2550 = vunpack.c.h.b16 %v2324
        %v2551 = vunpack.c.l.b16 %v2325
        %v2552 = vunpack.c.h.b16 %v2325
        %v2553 = vunpack.c.l.b16 %v2326
        %v2554 = vunpack.c.h.b16 %v2326
        %v2555 = vunpack.c.l.b16 %v2327
        %v2556 = vunpack.c.h.b16 %v2327
        %v2557 = vunpack.c.l.b16 %v2328
        %v2558 = vunpack.c.h.b16 %v2328
        %v2559 = vunpack.c.l.b16 %v2329
        %v2560 = vunpack.c.h.b16 %v2329
        %v2561 = vunpack.c.l.b16 %v2330
        %v2562 = vunpack.c.h.b16 %v2330
        %v2563 = vunpack.c.l.b16 %v2331
        %v2564 = vunpack.c.h.b16 %v2331
        %v2565 = vunpack.c.l.b16 %v2332
        %v2566 = vunpack.c.h.b16 %v2332
        %v2567 = vunpack.c.l.b16 %v2333
        %v2568 = vunpack.c.h.b16 %v2333
        %v2569 = vunpack.c.l.b16 %v2334
        %v2570 = vunpack.c.h.b16 %v2334
        %v2571 = vunpack.c.l.b16 %v2335
        %v2572 = vunpack.c.h.b16 %v2335
        %v2573 = vunpack.c.l.b16 %v2336
        %v2574 = vunpack.c.h.b16 %v2336
        %v2575 = vunpack.c.l.b16 %v2337
        %v2576 = vunpack.c.h.b16 %v2337
        %v2577 = vunpack.c.l.b16 %v2338
        %v2578 = vunpack.c.h.b16 %v2338
        %v2579 = vunpack.c.l.b16 %v2339
        %v2580 = vunpack.c.h.b16 %v2339
        %v2581 = vunpack.c.l.b16 %v2340
        %v2582 = vunpack.c.h.b16 %v2340
        %v2583 = vunpack.c.l.b16 %v2341
        %v2584 = vunpack.c.h.b16 %v2341
        %v2585 = vunpack.c.l.b16 %v2342
        %v2586 = vunpack.c.h.b16 %v2342
        %v2587 = vunpack.c.l.b16 %v2343
        %v2588 = vunpack.c.h.b16 %v2343
        %v2589 = vunpack.c.l.b16 %v2344
        %v2590 = vunpack.c.h.b16 %v2344
        %v2591 = vunpack.c.l.b16 %v2345
        %v2592 = vunpack.c.h.b16 %v2345
        %v2593 = vunpack.c.l.b16 %v2346
        %v2594 = vunpack.c.h.b16 %v2346
        %v2595 = vunpack.c.l.b16 %v2347
        %v2596 = vunpack.c.h.b16 %v2347
        %v2597 = vunpack.c.l.b16 %v2348
        %v2598 = vunpack.c.h.b16 %v2348
        %v2599 = vunpack.c.l.b16 %v2349
        %v2600 = vunpack.c.h.b16 %v2349
        %v2601 = vunpack.c.l.b16 %v2350
        %v2602 = vunpack.c.h.b16 %v2350
        %v2603 = vunpack.c.l.b16 %v2351
        %v2604 = vunpack.c.h.b16 %v2351
        %v2605 = vunpack.c.l.b16 %v2352
        %v2606 = vunpack.c.h.b16 %v2352
        %v2607 = vunpack.c.l.b16 %v2353
        %v2608 = vunpack.c.h.b16 %v2353
        %v2609 = vunpack.c.l.b16 %v2354
        %v2610 = vunpack.c.h.b16 %v2354
        %v2611 = vunpack.c.l.b16 %v2355
        %v2612 = vunpack.c.h.b16 %v2355
        %v2613 = vunpack.c.l.b16 %v2356
        %v2614 = vunpack.c.h.b16 %v2356
        %v2615 = vunpack.c.l.b16 %v2357
        %v2616 = vunpack.c.h.b16 %v2357
        %v2617 = vunpack.c.l.b16 %v2358
        %v2618 = vunpack.c.h.b16 %v2358
        %v2619 = vunpack.c.l.b16 %v2359
        %v2620 = vunpack.c.h.b16 %v2359
        %v2621 = vunpack.c.l.b16 %v2360
        %v2622 = vunpack.c.h.b16 %v2360
        %v2623 = vunpack.c.l.b16 %v2361
        %v2624 = vunpack.c.h.b16 %v2361
        %v2625 = vunpack.c.l.b16 %v2362
        %v2626 = vunpack.c.h.b16 %v2362
        %v2627 = vunpack.c.l.b16 %v2363
        %v2628 = vunpack.c.h.b16 %v2363
        %v2629 = vunpack.c.l.b16 %v2364
        %v2630 = vunpack.c.h.b16 %v2364
        %v2631 = vunpack.c.l.b16 %v2365
        %v2632 = vunpack.c.h.b16 %v2365
        %v2633 = vunpack.c.l.b16 %v2366
        %v2634 = vunpack.c.h.b16 %v2366
        %v2635 = vunpack.c.l.b16 %v2367
        %v2636 = vunpack.c.h.b16 %v2367
        %v2637 = vunpack.c.l.b16 %v2368
        %v2638 = vunpack.c.h.b16 %v2368
        %v2639 = vunpack.c.l.b16 %v2369
        %v2640 = vunpack.c.h.b16 %v2369
        %v2641 = vunpack.c.l.b16 %v2370
        %v2642 = vunpack.c.h.b16 %v2370
        %v2643 = vunpack.c.l.b16 %v2371
        %v2644 = vunpack.c.h.b16 %v2371
        %v2645 = vunpack.c.l.b16 %v2372
        %v2646 = vunpack.c.h.b16 %v2372
        %v2647 = vunpack.c.l.b16 %v2373
        %v2648 = vunpack.c.h.b16 %v2373
        %v2649 = vunpack.c.l.b16 %v2374
        %v2650 = vunpack.c.h.b16 %v2374
        %v2651 = vunpack.c.l.b16 %v2375
        %v2652 = vunpack.c.h.b16 %v2375
        %v2653 = vunpack.c.l.b16 %v2376
        %v2654 = vunpack.c.h.b16 %v2376
        %v2655 = vunpack.c.l.b16 %v2377
        %v2656 = vunpack.c.h.b16 %v2377
        %v2657 = vunpack.c.l.b16 %v2378
        %v2658 = vunpack.c.h.b16 %v2378
        %v2659 = vunpack.c.l.b16 %v2379
        %v2660 = vunpack.c.h.b16 %v2379
        %v2661 = vunpack.c.l.b16 %v2380
        %v2662 = vunpack.c.h.b16 %v2380
        %v2663 = vunpack.c.l.b16 %v2381
        %v2664 = vunpack.c.h.b16 %v2381
        %v2665 = vunpack.c.l.b16 %v2382
        %v2666 = vunpack.c.h.b16 %v2382
        %v2667 = vunpack.c.l.b16 %v2383
        %v2668 = vunpack.c.h.b16 %v2383
        %v2669 = vunpack.c.l.b16 %v2384
        %v2670 = vunpack.c.h.b16 %v2384
        %v2671 = vunpack.c.l.b16 %v2385
        %v2672 = vunpack.c.h.b16 %v2385
        %v2673 = vunpack.c.l.b16 %v2386
        %v2674 = vunpack.c.h.b16 %v2386
        %v2675 = vpack.c.b16 %v2489, %v2483
        %v2676 = vpack.c.b16 %v2490, %v2484
        %v2677 = vpack.c.b16 %v2491, %v2485
        %v2678 = vpack.c.b16 %v2492, %v2486
        %v2679 = vpack.c.b16 %v2493, %v2487
        %v2680 = vpack.c.b16 %v2494, %v2488
        %v2681 = vpack.c.b16 %v2501, %v2495
        %v2682 = vpack.c.b16 %v2502, %v2496
        %v2683 = vpack.c.b16 %v2503, %v2497
        %v2684 = vpack.c.b16 %v2504, %v2498
        %v2685 = vpack.c.b16 %v2505, %v2499
        %v2686 = vpack.c.b16 %v2506, %v2500
        %v2687 = vpack.c.b16 %v2513, %v2507
        %v2688 = vpack.c.b16 %v2514, %v2508
        %v2689 = vpack.c.b16 %v2515, %v2509
        %v2690 = vpack.c.b16 %v2516, %v2510
        %v2691 = vpack.c.b16 %v2517, %v2511
        %v2692 = vpack.c.b16 %v2518, %v2512
        %v2693 = vpack.c.b16 %v2525, %v2519
        %v2694 = vpack.c.b16 %v2526, %v2520
        %v2695 = vpack.c.b16 %v2527, %v2521
        %v2696 = vpack.c.b16 %v2528, %v2522
        %v2697 = vpack.c.b16 %v2529, %v2523
        %v2698 = vpack.c.b16 %v2530, %v2524
        %v2699 = vpack.c.b16 %v2537, %v2531
        %v2700 = vpack.c.b16 %v2538, %v2532
        %v2701 = vpack.c.b16 %v2539, %v2533
        %v2702 = vpack.c.b16 %v2540, %v2534
        %v2703 = vpack.c.b16 %v2541, %v2535
        %v2704 = vpack.c.b16 %v2542, %v2536
        %v2705 = vpack.c.b16 %v2549, %v2543
        %v2706 = vpack.c.b16 %v2550, %v2544
        %v2707 = vpack.c.b16 %v2551, %v2545
        %v2708 = vpack.c.b16 %v2552, %v2546
        %v2709 = vpack.c.b16 %v2553, %v2547
        %v2710 = vpack.c.b16 %v2554, %v2548
        %v2711 = vpack.c.b16 %v2561, %v2555
        %v2712 = vpack.c.b16 %v2562, %v2556
        %v2713 = vpack.c.b16 %v2563, %v2557
        %v2714 = vpack.c.b16 %v2564, %v2558
        %v2715 = vpack.c.b16 %v2565, %v2559
        %v2716 = vpack.c.b16 %v2566, %v2560
        %v2717 = vpack.c.b16 %v2573, %v2567
        %v2718 = vpack.c.b16 %v2574, %v2568
        %v2719 = vpack.c.b16 %v2575, %v2569
        %v2720 = vpack.c.b16 %v2576, %v2570
        %v2721 = vpack.c.b16 %v2577, %v2571
        %v2722 = vpack.c.b16 %v2578, %v2572
        %v2723 = vpack.c.b16 %v2585, %v2579
        %v2724 = vpack.c.b16 %v2586, %v2580
        %v2725 = vpack.c.b16 %v2587, %v2581
        %v2726 = vpack.c.b16 %v2588, %v2582
        %v2727 = vpack.c.b16 %v2589, %v2583
        %v2728 = vpack.c.b16 %v2590, %v2584
        %v2729 = vpack.c.b16 %v2597, %v2591
        %v2730 = vpack.c.b16 %v2598, %v2592
        %v2731 = vpack.c.b16 %v2599, %v2593
        %v2732 = vpack.c.b16 %v2600, %v2594
        %v2733 = vpack.c.b16 %v2601, %v2595
        %v2734 = vpack.c.b16 %v2602, %v2596
        %v2735 = vpack.c.b16 %v2609, %v2603
        %v2736 = vpack.c.b16 %v2610, %v2604
        %v2737 = vpack.c.b16 %v2611, %v2605
        %v2738 = vpack.c.b16 %v2612, %v2606
        %v2739 = vpack.c.b16 %v2613, %v2607
        %v2740 = vpack.c.b16 %v2614, %v2608
        %v2741 = vpack.c.b16 %v2621, %v2615
        %v2742 = vpack.c.b16 %v2622, %v2616
        %v2743 = vpack.c.b16 %v2623, %v2617
        %v2744 = vpack.c.b16 %v2624, %v2618
        %v2745 = vpack.c.b16 %v2625, %v2619
        %v2746 = vpack.c.b16 %v2626, %v2620
        %v2747 = vpack.c.b16 %v2633, %v2627
        %v2748 = vpack.c.b16 %v2634, %v2628
        %v2749 = vpack.c.b16 %v2635, %v2629
        %v2750 = vpack.c.b16 %v2636, %v2630
        %v2751 = vpack.c.b16 %v2637, %v2631
        %v2752 = vpack.c.b16 %v2638, %v2632
        %v2753 = vpack.c.b16 %v2645, %v2639
        %v2754 = vpack.c.b16 %v2646, %v2640
        %v2755 = vpack.c.b16 %v2647, %v2641
        %v2756 = vpack.c.b16 %v2648, %v2642
        %v2757 = vpack.c.b16 %v2649, %v2643
        %v2758 = vpack.c.b16 %v2650, %v2644
        %v2759 = vpack.c.b16 %v2657, %v2651
        %v2760 = vpack.c.b16 %v2658, %v2652
        %v2761 = vpack.c.b16 %v2659, %v2653
        %v2762 = vpack.c.b16 %v2660, %v2654
        %v2763 = vpack.c.b16 %v2661, %v2655
        %v2764 = vpack.c.b16 %v2662, %v2656
        %v2765 = vpack.c.b16 %v2669, %v2663
        %v2766 = vpack.c.b16 %v2670, %v2664
        %v2767 = vpack.c.b16 %v2671, %v2665
        %v2768 = vpack.c.b16 %v2672, %v2666
        %v2769 = vpack.c.b16 %v2673, %v2667
        %v2770 = vpack.c.b16 %v2674, %v2668
        %2867 = vxpose.binary.xlu0.c.b16.start [1/16] %v2676, %v2675, 128
        %2868 = vxpose.binary.xlu0.c.b16.cont [2/16] %v2682, %v2681, 128
        %2869 = vxpose.binary.xlu0.c.b16.cont [3/16] %v2688, %v2687, 128
        %2870 = vxpose.binary.xlu0.c.b16.cont [4/16] %v2694, %v2693, 128
        %2871 = vxpose.binary.xlu0.c.b16.cont [5/16] %v2700, %v2699, 128
        %2872 = vxpose.binary.xlu0.c.b16.cont [6/16] %v2706, %v2705, 128
        %2873 = vxpose.binary.xlu0.c.b16.cont [7/16] %v2712, %v2711, 128
        %2874 = vxpose.binary.xlu0.c.b16.end [8/16] %v2718, %v2717, 128
        %v2875 = vpop.trf.xlu0
        %v2876 = vpop.trf.xlu0
        %v2877 = vpop.trf.xlu0
        %v2878 = vpop.trf.xlu0
        %v2879 = vpop.trf.xlu0
        %v2880 = vpop.trf.xlu0
        %v2881 = vpop.trf.xlu0
        %v2882 = vpop.trf.xlu0
        %v2883 = vpop.trf.xlu0
        %v2884 = vpop.trf.xlu0
        %v2885 = vpop.trf.xlu0
        %v2886 = vpop.trf.xlu0
        %v2887 = vpop.trf.xlu0
        %v2888 = vpop.trf.xlu0
        %v2889 = vpop.trf.xlu0
        %v2890 = vpop.trf.xlu0
        %2891 = vxpose.binary.xlu0.c.b16.start [1/16] %v2678, %v2677, 128
        %2892 = vxpose.binary.xlu0.c.b16.cont [2/16] %v2684, %v2683, 128
        %2893 = vxpose.binary.xlu0.c.b16.cont [3/16] %v2690, %v2689, 128
        %2894 = vxpose.binary.xlu0.c.b16.cont [4/16] %v2696, %v2695, 128
        %2895 = vxpose.binary.xlu0.c.b16.cont [5/16] %v2702, %v2701, 128
        %2896 = vxpose.binary.xlu0.c.b16.cont [6/16] %v2708, %v2707, 128
        %2897 = vxpose.binary.xlu0.c.b16.cont [7/16] %v2714, %v2713, 128
        %2898 = vxpose.binary.xlu0.c.b16.end [8/16] %v2720, %v2719, 128
        %v2899 = vpop.trf.xlu0
        %v2900 = vpop.trf.xlu0
        %v2901 = vpop.trf.xlu0
        %v2902 = vpop.trf.xlu0
        %v2903 = vpop.trf.xlu0
        %v2904 = vpop.trf.xlu0
        %v2905 = vpop.trf.xlu0
        %v2906 = vpop.trf.xlu0
        %v2907 = vpop.trf.xlu0
        %v2908 = vpop.trf.xlu0
        %v2909 = vpop.trf.xlu0
        %v2910 = vpop.trf.xlu0
        %v2911 = vpop.trf.xlu0
        %v2912 = vpop.trf.xlu0
        %v2913 = vpop.trf.xlu0
        %v2914 = vpop.trf.xlu0
        %2915 = vxpose.binary.xlu0.c.b16.start [1/16] %v2680, %v2679, 128
        %2916 = vxpose.binary.xlu0.c.b16.cont [2/16] %v2686, %v2685, 128
        %2917 = vxpose.binary.xlu0.c.b16.cont [3/16] %v2692, %v2691, 128
        %2918 = vxpose.binary.xlu0.c.b16.cont [4/16] %v2698, %v2697, 128
        %2919 = vxpose.binary.xlu0.c.b16.cont [5/16] %v2704, %v2703, 128
        %2920 = vxpose.binary.xlu0.c.b16.cont [6/16] %v2710, %v2709, 128
        %2921 = vxpose.binary.xlu0.c.b16.cont [7/16] %v2716, %v2715, 128
        %2922 = vxpose.binary.xlu0.c.b16.end [8/16] %v2722, %v2721, 128
        %v2923 = vpop.trf.xlu0
        %v2924 = vpop.trf.xlu0
        %v2925 = vpop.trf.xlu0
        %v2926 = vpop.trf.xlu0
        %v2927 = vpop.trf.xlu0
        %v2928 = vpop.trf.xlu0
        %v2929 = vpop.trf.xlu0
        %v2930 = vpop.trf.xlu0
        %v2931 = vpop.trf.xlu0
        %v2932 = vpop.trf.xlu0
        %v2933 = vpop.trf.xlu0
        %v2934 = vpop.trf.xlu0
        %v2935 = vpop.trf.xlu0
        %v2936 = vpop.trf.xlu0
        %v2937 = vpop.trf.xlu0
        %v2938 = vpop.trf.xlu0
        %2939 = vxpose.binary.xlu0.c.b16.start [1/16] %v2724, %v2723, 128
        %2940 = vxpose.binary.xlu0.c.b16.cont [2/16] %v2730, %v2729, 128
        %2941 = vxpose.binary.xlu0.c.b16.cont [3/16] %v2736, %v2735, 128
        %2942 = vxpose.binary.xlu0.c.b16.cont [4/16] %v2742, %v2741, 128
        %2943 = vxpose.binary.xlu0.c.b16.cont [5/16] %v2748, %v2747, 128
        %2944 = vxpose.binary.xlu0.c.b16.cont [6/16] %v2754, %v2753, 128
        %2945 = vxpose.binary.xlu0.c.b16.cont [7/16] %v2760, %v2759, 128
        %2946 = vxpose.binary.xlu0.c.b16.end [8/16] %v2766, %v2765, 128
        %v2947 = vpop.trf.xlu0
        %v2948 = vpop.trf.xlu0
        %v2949 = vpop.trf.xlu0
        %v2950 = vpop.trf.xlu0
        %v2951 = vpop.trf.xlu0
        %v2952 = vpop.trf.xlu0
        %v2953 = vpop.trf.xlu0
        %v2954 = vpop.trf.xlu0
        %v2955 = vpop.trf.xlu0
        %v2956 = vpop.trf.xlu0
        %v2957 = vpop.trf.xlu0
        %v2958 = vpop.trf.xlu0
        %v2959 = vpop.trf.xlu0
        %v2960 = vpop.trf.xlu0
        %v2961 = vpop.trf.xlu0
        %v2962 = vpop.trf.xlu0
        %2963 = vxpose.binary.xlu0.c.b16.start [1/16] %v2726, %v2725, 128
        %2964 = vxpose.binary.xlu0.c.b16.cont [2/16] %v2732, %v2731, 128
        %2965 = vxpose.binary.xlu0.c.b16.cont [3/16] %v2738, %v2737, 128
        %2966 = vxpose.binary.xlu0.c.b16.cont [4/16] %v2744, %v2743, 128
        %2967 = vxpose.binary.xlu0.c.b16.cont [5/16] %v2750, %v2749, 128
        %2968 = vxpose.binary.xlu0.c.b16.cont [6/16] %v2756, %v2755, 128
        %2969 = vxpose.binary.xlu0.c.b16.cont [7/16] %v2762, %v2761, 128
        %2970 = vxpose.binary.xlu0.c.b16.end [8/16] %v2768, %v2767, 128
        %v2971 = vpop.trf.xlu0
        %v2972 = vpop.trf.xlu0
        %v2973 = vpop.trf.xlu0
        %v2974 = vpop.trf.xlu0
        %v2975 = vpop.trf.xlu0
        %v2976 = vpop.trf.xlu0
        %v2977 = vpop.trf.xlu0
        %v2978 = vpop.trf.xlu0
        %v2979 = vpop.trf.xlu0
        %v2980 = vpop.trf.xlu0
        %v2981 = vpop.trf.xlu0
        %v2982 = vpop.trf.xlu0
        %v2983 = vpop.trf.xlu0
        %v2984 = vpop.trf.xlu0
        %v2985 = vpop.trf.xlu0
        %v2986 = vpop.trf.xlu0
        %2987 = vxpose.binary.xlu0.c.b16.start [1/16] %v2728, %v2727, 128
        %2988 = vxpose.binary.xlu0.c.b16.cont [2/16] %v2734, %v2733, 128
        %2989 = vxpose.binary.xlu0.c.b16.cont [3/16] %v2740, %v2739, 128
        %2990 = vxpose.binary.xlu0.c.b16.cont [4/16] %v2746, %v2745, 128
        %2991 = vxpose.binary.xlu0.c.b16.cont [5/16] %v2752, %v2751, 128
        %2992 = vxpose.binary.xlu0.c.b16.cont [6/16] %v2758, %v2757, 128
        %2993 = vxpose.binary.xlu0.c.b16.cont [7/16] %v2764, %v2763, 128
        %2994 = vxpose.binary.xlu0.c.b16.end [8/16] %v2770, %v2769, 128
        %v2995 = vpop.trf.xlu0
        %v2996 = vpop.trf.xlu0
        %v2997 = vpop.trf.xlu0
        %v2998 = vpop.trf.xlu0
        %v2999 = vpop.trf.xlu0
        %v3000 = vpop.trf.xlu0
        %v3001 = vpop.trf.xlu0
        %v3002 = vpop.trf.xlu0
        %v3003 = vpop.trf.xlu0
        %v3004 = vpop.trf.xlu0
        %v3005 = vpop.trf.xlu0
        %v3006 = vpop.trf.xlu0
        %v3007 = vpop.trf.xlu0
        %v3008 = vpop.trf.xlu0
        %v3009 = vpop.trf.xlu0
        %v3010 = vpop.trf.xlu0
        %3011 = vxpose.xlu0.c.b16.start [1/8] %v2875, 128
        %3012 = vxpose.xlu0.c.b16.cont [2/8] %v2877, 128
        %3013 = vxpose.xlu0.c.b16.cont [3/8] %v2879, 128
        %3014 = vxpose.xlu0.c.b16.cont [4/8] %v2881, 128
        %3015 = vxpose.xlu0.c.b16.cont [5/8] %v2883, 128
        %3016 = vxpose.xlu0.c.b16.cont [6/8] %v2885, 128
        %3017 = vxpose.xlu0.c.b16.cont [7/8] %v2887, 128
        %3018 = vxpose.xlu0.c.b16.end [8/8] %v2889, 128
        %v3019 = vpop.trf.xlu0
        %v3020 = vpop.trf.xlu0
        %v3021 = vpop.trf.xlu0
        %v3022 = vpop.trf.xlu0
        %v3023 = vpop.trf.xlu0
        %v3024 = vpop.trf.xlu0
        %v3025 = vpop.trf.xlu0
        %v3026 = vpop.trf.xlu0
        %3027 = vxpose.xlu0.c.b16.start [1/8] %v2876, 128
        %3028 = vxpose.xlu0.c.b16.cont [2/8] %v2878, 128
        %3029 = vxpose.xlu0.c.b16.cont [3/8] %v2880, 128
        %3030 = vxpose.xlu0.c.b16.cont [4/8] %v2882, 128
        %3031 = vxpose.xlu0.c.b16.cont [5/8] %v2884, 128
        %3032 = vxpose.xlu0.c.b16.cont [6/8] %v2886, 128
        %3033 = vxpose.xlu0.c.b16.cont [7/8] %v2888, 128
        %3034 = vxpose.xlu0.c.b16.end [8/8] %v2890, 128
        %v3035 = vpop.trf.xlu0
        %v3036 = vpop.trf.xlu0
        %v3037 = vpop.trf.xlu0
        %v3038 = vpop.trf.xlu0
        %v3039 = vpop.trf.xlu0
        %v3040 = vpop.trf.xlu0
        %v3041 = vpop.trf.xlu0
        %v3042 = vpop.trf.xlu0
        %3043 = vxpose.xlu0.c.b16.start [1/8] %v2947, 128
        %3044 = vxpose.xlu0.c.b16.cont [2/8] %v2949, 128
        %3045 = vxpose.xlu0.c.b16.cont [3/8] %v2951, 128
        %3046 = vxpose.xlu0.c.b16.cont [4/8] %v2953, 128
        %3047 = vxpose.xlu0.c.b16.cont [5/8] %v2955, 128
        %3048 = vxpose.xlu0.c.b16.cont [6/8] %v2957, 128
        %3049 = vxpose.xlu0.c.b16.cont [7/8] %v2959, 128
        %3050 = vxpose.xlu0.c.b16.end [8/8] %v2961, 128
        %v3051 = vpop.trf.xlu0
        %v3052 = vpop.trf.xlu0
        %v3053 = vpop.trf.xlu0
        %v3054 = vpop.trf.xlu0
        %v3055 = vpop.trf.xlu0
        %v3056 = vpop.trf.xlu0
        %v3057 = vpop.trf.xlu0
        %v3058 = vpop.trf.xlu0
        %3059 = vxpose.xlu0.c.b16.start [1/8] %v2948, 128
        %3060 = vxpose.xlu0.c.b16.cont [2/8] %v2950, 128
        %3061 = vxpose.xlu0.c.b16.cont [3/8] %v2952, 128
        %3062 = vxpose.xlu0.c.b16.cont [4/8] %v2954, 128
        %3063 = vxpose.xlu0.c.b16.cont [5/8] %v2956, 128
        %3064 = vxpose.xlu0.c.b16.cont [6/8] %v2958, 128
        %3065 = vxpose.xlu0.c.b16.cont [7/8] %v2960, 128
        %3066 = vxpose.xlu0.c.b16.end [8/8] %v2962, 128
        %v3067 = vpop.trf.xlu0
        %v3068 = vpop.trf.xlu0
        %v3069 = vpop.trf.xlu0
        %v3070 = vpop.trf.xlu0
        %v3071 = vpop.trf.xlu0
        %v3072 = vpop.trf.xlu0
        %v3073 = vpop.trf.xlu0
        %v3074 = vpop.trf.xlu0
        %3075 = vxpose.xlu0.c.b16.start [1/8] %v2923, 128
        %3076 = vxpose.xlu0.c.b16.cont [2/8] %v2925, 128
        %3077 = vxpose.xlu0.c.b16.cont [3/8] %v2927, 128
        %3078 = vxpose.xlu0.c.b16.cont [4/8] %v2929, 128
        %3079 = vxpose.xlu0.c.b16.cont [5/8] %v2931, 128
        %3080 = vxpose.xlu0.c.b16.cont [6/8] %v2933, 128
        %3081 = vxpose.xlu0.c.b16.cont [7/8] %v2935, 128
        %3082 = vxpose.xlu0.c.b16.end [8/8] %v2937, 128
        %v3083 = vpop.trf.xlu0
        %v3084 = vpop.trf.xlu0
        %v3085 = vpop.trf.xlu0
        %v3086 = vpop.trf.xlu0
        %v3087 = vpop.trf.xlu0
        %v3088 = vpop.trf.xlu0
        %v3089 = vpop.trf.xlu0
        %v3090 = vpop.trf.xlu0
        %3091 = vxpose.xlu0.c.b16.start [1/8] %v2924, 128
        %3092 = vxpose.xlu0.c.b16.cont [2/8] %v2926, 128
        %3093 = vxpose.xlu0.c.b16.cont [3/8] %v2928, 128
        %3094 = vxpose.xlu0.c.b16.cont [4/8] %v2930, 128
        %3095 = vxpose.xlu0.c.b16.cont [5/8] %v2932, 128
        %3096 = vxpose.xlu0.c.b16.cont [6/8] %v2934, 128
        %3097 = vxpose.xlu0.c.b16.cont [7/8] %v2936, 128
        %3098 = vxpose.xlu0.c.b16.end [8/8] %v2938, 128
        %v3099 = vpop.trf.xlu0
        %v3100 = vpop.trf.xlu0
        %v3101 = vpop.trf.xlu0
        %v3102 = vpop.trf.xlu0
        %v3103 = vpop.trf.xlu0
        %v3104 = vpop.trf.xlu0
        %v3105 = vpop.trf.xlu0
        %v3106 = vpop.trf.xlu0
        %3107 = vxpose.xlu0.c.b16.start [1/8] %v2995, 128
        %3108 = vxpose.xlu0.c.b16.cont [2/8] %v2997, 128
        %3109 = vxpose.xlu0.c.b16.cont [3/8] %v2999, 128
        %3110 = vxpose.xlu0.c.b16.cont [4/8] %v3001, 128
        %3111 = vxpose.xlu0.c.b16.cont [5/8] %v3003, 128
        %3112 = vxpose.xlu0.c.b16.cont [6/8] %v3005, 128
        %3113 = vxpose.xlu0.c.b16.cont [7/8] %v3007, 128
        %3114 = vxpose.xlu0.c.b16.end [8/8] %v3009, 128
        %v3115 = vpop.trf.xlu0
        %v3116 = vpop.trf.xlu0
        %v3117 = vpop.trf.xlu0
        %v3118 = vpop.trf.xlu0
        %v3119 = vpop.trf.xlu0
        %v3120 = vpop.trf.xlu0
        %v3121 = vpop.trf.xlu0
        %v3122 = vpop.trf.xlu0
        %3123 = vxpose.xlu0.c.b16.start [1/8] %v2996, 128
        %3124 = vxpose.xlu0.c.b16.cont [2/8] %v2998, 128
        %3125 = vxpose.xlu0.c.b16.cont [3/8] %v3000, 128
        %3126 = vxpose.xlu0.c.b16.cont [4/8] %v3002, 128
        %3127 = vxpose.xlu0.c.b16.cont [5/8] %v3004, 128
        %3128 = vxpose.xlu0.c.b16.cont [6/8] %v3006, 128
        %3129 = vxpose.xlu0.c.b16.cont [7/8] %v3008, 128
        %3130 = vxpose.xlu0.c.b16.end [8/8] %v3010, 128
        %v3131 = vpop.trf.xlu0
        %v3132 = vpop.trf.xlu0
        %v3133 = vpop.trf.xlu0
        %v3134 = vpop.trf.xlu0
        %v3135 = vpop.trf.xlu0
        %v3136 = vpop.trf.xlu0
        %v3137 = vpop.trf.xlu0
        %v3138 = vpop.trf.xlu0
        %3139 = vmatpush.bf16.msra.mxu0 %v2913
        %3140 = vmatpush.bf16.msra.mxu0 %v2911
        %3141 = vmatpush.bf16.msra.mxu0 %v2909
        %3142 = vmatpush.bf16.msra.mxu0 %v2907
        %3143 = vmatpush.bf16.msra.mxu0 %v2905
        %3144 = vmatpush.bf16.msra.mxu0 %v2903
        %3145 = vmatpush.bf16.msra.mxu0 %v2901
        %3146 = vmatpush.bf16.msra.mxu0 %v2899
        %3147 = vmatmul.bf16.gmra.mxu0 %v3019
        %v3148 = vpop.f32.mrf.mxu0
        %v3149 = vadd.f32 0.0, %v3148
        %v3150 = vpop.f32.mrf.mxu0
        %v3151 = vadd.f32 0.0, %v3150
        %3152 = vmatmul.bf16.gmra.mxu0 %v3020
        %v3153 = vpop.f32.mrf.mxu0
        %v3154 = vadd.f32 0.0, %v3153
        %v3155 = vpop.f32.mrf.mxu0
        %v3156 = vadd.f32 0.0, %v3155
        %3157 = vmatmul.bf16.gmra.mxu0 %v3021
        %v3158 = vpop.f32.mrf.mxu0
        %v3159 = vadd.f32 0.0, %v3158
        %v3160 = vpop.f32.mrf.mxu0
        %v3161 = vadd.f32 0.0, %v3160
        %3162 = vmatmul.bf16.gmra.mxu0 %v3022
        %v3163 = vpop.f32.mrf.mxu0
        %v3164 = vadd.f32 0.0, %v3163
        %v3165 = vpop.f32.mrf.mxu0
        %v3166 = vadd.f32 0.0, %v3165
        %3167 = vmatmul.bf16.gmra.mxu0 %v3023
        %v3168 = vpop.f32.mrf.mxu0
        %v3169 = vadd.f32 0.0, %v3168
        %v3170 = vpop.f32.mrf.mxu0
        %v3171 = vadd.f32 0.0, %v3170
        %3172 = vmatmul.bf16.gmra.mxu0 %v3024
        %v3173 = vpop.f32.mrf.mxu0
        %v3174 = vadd.f32 0.0, %v3173
        %v3175 = vpop.f32.mrf.mxu0
        %v3176 = vadd.f32 0.0, %v3175
        %3177 = vmatmul.bf16.gmra.mxu0 %v3025
        %v3178 = vpop.f32.mrf.mxu0
        %v3179 = vadd.f32 0.0, %v3178
        %v3180 = vpop.f32.mrf.mxu0
        %v3181 = vadd.f32 0.0, %v3180
        %3182 = vmatmul.bf16.gmra.mxu0 %v3026
        %v3183 = vpop.f32.mrf.mxu0
        %v3184 = vadd.f32 0.0, %v3183
        %v3185 = vpop.f32.mrf.mxu0
        %v3186 = vadd.f32 0.0, %v3185
        %3187 = vdwg.mxu0
        %3188 = vmatpush.bf16.msra.mxu0 %v2914
        %3189 = vmatpush.bf16.msra.mxu0 %v2912
        %3190 = vmatpush.bf16.msra.mxu0 %v2910
        %3191 = vmatpush.bf16.msra.mxu0 %v2908
        %3192 = vmatpush.bf16.msra.mxu0 %v2906
        %3193 = vmatpush.bf16.msra.mxu0 %v2904
        %3194 = vmatpush.bf16.msra.mxu0 %v2902
        %3195 = vmatpush.bf16.msra.mxu0 %v2900
        %3196 = vmatmul.bf16.gmra.mxu0 %v3035
        %v3197 = vpop.f32.mrf.mxu0
        %v3198 = vadd.f32 0.0, %v3197
        %v3199 = vpop.f32.mrf.mxu0
        %v3200 = vadd.f32 0.0, %v3199
        %3201 = vmatmul.bf16.gmra.mxu0 %v3036
        %v3202 = vpop.f32.mrf.mxu0
        %v3203 = vadd.f32 0.0, %v3202
        %v3204 = vpop.f32.mrf.mxu0
        %v3205 = vadd.f32 0.0, %v3204
        %3206 = vmatmul.bf16.gmra.mxu0 %v3037
        %v3207 = vpop.f32.mrf.mxu0
        %v3208 = vadd.f32 0.0, %v3207
        %v3209 = vpop.f32.mrf.mxu0
        %v3210 = vadd.f32 0.0, %v3209
        %3211 = vmatmul.bf16.gmra.mxu0 %v3038
        %v3212 = vpop.f32.mrf.mxu0
        %v3213 = vadd.f32 0.0, %v3212
        %v3214 = vpop.f32.mrf.mxu0
        %v3215 = vadd.f32 0.0, %v3214
        %3216 = vmatmul.bf16.gmra.mxu0 %v3039
        %v3217 = vpop.f32.mrf.mxu0
        %v3218 = vadd.f32 0.0, %v3217
        %v3219 = vpop.f32.mrf.mxu0
        %v3220 = vadd.f32 0.0, %v3219
        %3221 = vmatmul.bf16.gmra.mxu0 %v3040
        %v3222 = vpop.f32.mrf.mxu0
        %v3223 = vadd.f32 0.0, %v3222
        %v3224 = vpop.f32.mrf.mxu0
        %v3225 = vadd.f32 0.0, %v3224
        %3226 = vmatmul.bf16.gmra.mxu0 %v3041
        %v3227 = vpop.f32.mrf.mxu0
        %v3228 = vadd.f32 0.0, %v3227
        %v3229 = vpop.f32.mrf.mxu0
        %v3230 = vadd.f32 0.0, %v3229
        %3231 = vmatmul.bf16.gmra.mxu0 %v3042
        %v3232 = vpop.f32.mrf.mxu0
        %v3233 = vadd.f32 0.0, %v3232
        %v3234 = vpop.f32.mrf.mxu0
        %v3235 = vadd.f32 0.0, %v3234
        %3236 = vdwg.mxu0
        %3237 = vmatpush.bf16.msra.mxu0 %v2985
        %3238 = vmatpush.bf16.msra.mxu0 %v2983
        %3239 = vmatpush.bf16.msra.mxu0 %v2981
        %3240 = vmatpush.bf16.msra.mxu0 %v2979
        %3241 = vmatpush.bf16.msra.mxu0 %v2977
        %3242 = vmatpush.bf16.msra.mxu0 %v2975
        %3243 = vmatpush.bf16.msra.mxu0 %v2973
        %3244 = vmatpush.bf16.msra.mxu0 %v2971
        %3245 = vmatmul.bf16.gmra.mxu0 %v3051
        %v3246 = vpop.f32.mrf.mxu0
        %v3247 = vadd.f32 0.0, %v3246
        %v3248 = vpop.f32.mrf.mxu0
        %v3249 = vadd.f32 0.0, %v3248
        %3250 = vmatmul.bf16.gmra.mxu0 %v3052
        %v3251 = vpop.f32.mrf.mxu0
        %v3252 = vadd.f32 0.0, %v3251
        %v3253 = vpop.f32.mrf.mxu0
        %v3254 = vadd.f32 0.0, %v3253
        %3255 = vmatmul.bf16.gmra.mxu0 %v3053
        %v3256 = vpop.f32.mrf.mxu0
        %v3257 = vadd.f32 0.0, %v3256
        %v3258 = vpop.f32.mrf.mxu0
        %v3259 = vadd.f32 0.0, %v3258
        %3260 = vmatmul.bf16.gmra.mxu0 %v3054
        %v3261 = vpop.f32.mrf.mxu0
        %v3262 = vadd.f32 0.0, %v3261
        %v3263 = vpop.f32.mrf.mxu0
        %v3264 = vadd.f32 0.0, %v3263
        %3265 = vmatmul.bf16.gmra.mxu0 %v3055
        %v3266 = vpop.f32.mrf.mxu0
        %v3267 = vadd.f32 0.0, %v3266
        %v3268 = vpop.f32.mrf.mxu0
        %v3269 = vadd.f32 0.0, %v3268
        %3270 = vmatmul.bf16.gmra.mxu0 %v3056
        %v3271 = vpop.f32.mrf.mxu0
        %v3272 = vadd.f32 0.0, %v3271
        %v3273 = vpop.f32.mrf.mxu0
        %v3274 = vadd.f32 0.0, %v3273
        %3275 = vmatmul.bf16.gmra.mxu0 %v3057
        %v3276 = vpop.f32.mrf.mxu0
        %v3277 = vadd.f32 0.0, %v3276
        %v3278 = vpop.f32.mrf.mxu0
        %v3279 = vadd.f32 0.0, %v3278
        %3280 = vmatmul.bf16.gmra.mxu0 %v3058
        %v3281 = vpop.f32.mrf.mxu0
        %v3282 = vadd.f32 0.0, %v3281
        %v3283 = vpop.f32.mrf.mxu0
        %v3284 = vadd.f32 0.0, %v3283
        %3285 = vdwg.mxu0
        %3286 = vmatpush.bf16.msra.mxu0 %v2986
        %3287 = vmatpush.bf16.msra.mxu0 %v2984
        %3288 = vmatpush.bf16.msra.mxu0 %v2982
        %3289 = vmatpush.bf16.msra.mxu0 %v2980
        %3290 = vmatpush.bf16.msra.mxu0 %v2978
        %3291 = vmatpush.bf16.msra.mxu0 %v2976
        %3292 = vmatpush.bf16.msra.mxu0 %v2974
        %3293 = vmatpush.bf16.msra.mxu0 %v2972
        %3294 = vmatmul.bf16.gmra.mxu0 %v3067
        %v3295 = vpop.f32.mrf.mxu0
        %v3296 = vadd.f32 0.0, %v3295
        %v3297 = vpop.f32.mrf.mxu0
        %v3298 = vadd.f32 0.0, %v3297
        %3299 = vmatmul.bf16.gmra.mxu0 %v3068
        %v3300 = vpop.f32.mrf.mxu0
        %v3301 = vadd.f32 0.0, %v3300
        %v3302 = vpop.f32.mrf.mxu0
        %v3303 = vadd.f32 0.0, %v3302
        %3304 = vmatmul.bf16.gmra.mxu0 %v3069
        %v3305 = vpop.f32.mrf.mxu0
        %v3306 = vadd.f32 0.0, %v3305
        %v3307 = vpop.f32.mrf.mxu0
        %v3308 = vadd.f32 0.0, %v3307
        %3309 = vmatmul.bf16.gmra.mxu0 %v3070
        %v3310 = vpop.f32.mrf.mxu0
        %v3311 = vadd.f32 0.0, %v3310
        %v3312 = vpop.f32.mrf.mxu0
        %v3313 = vadd.f32 0.0, %v3312
        %3314 = vmatmul.bf16.gmra.mxu0 %v3071
        %v3315 = vpop.f32.mrf.mxu0
        %v3316 = vadd.f32 0.0, %v3315
        %v3317 = vpop.f32.mrf.mxu0
        %v3318 = vadd.f32 0.0, %v3317
        %3319 = vmatmul.bf16.gmra.mxu0 %v3072
        %v3320 = vpop.f32.mrf.mxu0
        %v3321 = vadd.f32 0.0, %v3320
        %v3322 = vpop.f32.mrf.mxu0
        %v3323 = vadd.f32 0.0, %v3322
        %3324 = vmatmul.bf16.gmra.mxu0 %v3073
        %v3325 = vpop.f32.mrf.mxu0
        %v3326 = vadd.f32 0.0, %v3325
        %v3327 = vpop.f32.mrf.mxu0
        %v3328 = vadd.f32 0.0, %v3327
        %3329 = vmatmul.bf16.gmra.mxu0 %v3074
        %v3330 = vpop.f32.mrf.mxu0
        %v3331 = vadd.f32 0.0, %v3330
        %v3332 = vpop.f32.mrf.mxu0
        %v3333 = vadd.f32 0.0, %v3332
        %3334 = vdwg.mxu0
        %3335 = vmax.xlane.f32.xlu0 %v3149
        %v3336 = vpop.xlane.xlu0 %3335
        %3337 = vmax.xlane.f32.xlu0 %v3151
        %v3338 = vpop.xlane.xlu0 %3337
        %3339 = vmax.xlane.f32.xlu0 %v3154
        %v3340 = vpop.xlane.xlu0 %3339
        %3341 = vmax.xlane.f32.xlu0 %v3156
        %v3342 = vpop.xlane.xlu0 %3341
        %3343 = vmax.xlane.f32.xlu0 %v3159
        %v3344 = vpop.xlane.xlu0 %3343
        %3345 = vmax.xlane.f32.xlu0 %v3161
        %v3346 = vpop.xlane.xlu0 %3345
        %3347 = vmax.xlane.f32.xlu0 %v3164
        %v3348 = vpop.xlane.xlu0 %3347
        %3349 = vmax.xlane.f32.xlu0 %v3166
        %v3350 = vpop.xlane.xlu0 %3349
        %3351 = vmax.xlane.f32.xlu0 %v3169
        %v3352 = vpop.xlane.xlu0 %3351
        %3353 = vmax.xlane.f32.xlu0 %v3171
        %v3354 = vpop.xlane.xlu0 %3353
        %3355 = vmax.xlane.f32.xlu0 %v3174
        %v3356 = vpop.xlane.xlu0 %3355
        %3357 = vmax.xlane.f32.xlu0 %v3176
        %v3358 = vpop.xlane.xlu0 %3357
        %3359 = vmax.xlane.f32.xlu0 %v3179
        %v3360 = vpop.xlane.xlu0 %3359
        %3361 = vmax.xlane.f32.xlu0 %v3181
        %v3362 = vpop.xlane.xlu0 %3361
        %3363 = vmax.xlane.f32.xlu0 %v3184
        %v3364 = vpop.xlane.xlu0 %3363
        %3365 = vmax.xlane.f32.xlu0 %v3186
        %v3366 = vpop.xlane.xlu0 %3365
        %3367 = vmax.xlane.f32.xlu0 %v3198
        %v3368 = vpop.xlane.xlu0 %3367
        %3369 = vmax.xlane.f32.xlu0 %v3200
        %v3370 = vpop.xlane.xlu0 %3369
        %3371 = vmax.xlane.f32.xlu0 %v3203
        %v3372 = vpop.xlane.xlu0 %3371
        %3373 = vmax.xlane.f32.xlu0 %v3205
        %v3374 = vpop.xlane.xlu0 %3373
        %3375 = vmax.xlane.f32.xlu0 %v3208
        %v3376 = vpop.xlane.xlu0 %3375
        %3377 = vmax.xlane.f32.xlu0 %v3210
        %v3378 = vpop.xlane.xlu0 %3377
        %3379 = vmax.xlane.f32.xlu0 %v3213
        %v3380 = vpop.xlane.xlu0 %3379
        %3381 = vmax.xlane.f32.xlu0 %v3215
        %v3382 = vpop.xlane.xlu0 %3381
        %3383 = vmax.xlane.f32.xlu0 %v3218
        %v3384 = vpop.xlane.xlu0 %3383
        %3385 = vmax.xlane.f32.xlu0 %v3220
        %v3386 = vpop.xlane.xlu0 %3385
        %3387 = vmax.xlane.f32.xlu0 %v3223
        %v3388 = vpop.xlane.xlu0 %3387
        %3389 = vmax.xlane.f32.xlu0 %v3225
        %v3390 = vpop.xlane.xlu0 %3389
        %3391 = vmax.xlane.f32.xlu0 %v3228
        %v3392 = vpop.xlane.xlu0 %3391
        %3393 = vmax.xlane.f32.xlu0 %v3230
        %v3394 = vpop.xlane.xlu0 %3393
        %3395 = vmax.xlane.f32.xlu0 %v3233
        %v3396 = vpop.xlane.xlu0 %3395
        %3397 = vmax.xlane.f32.xlu0 %v3235
        %v3398 = vpop.xlane.xlu0 %3397
        %3399 = vmax.xlane.f32.xlu0 %v3247
        %v3400 = vpop.xlane.xlu0 %3399
        %3401 = vmax.xlane.f32.xlu0 %v3249
        %v3402 = vpop.xlane.xlu0 %3401
        %3403 = vmax.xlane.f32.xlu0 %v3252
        %v3404 = vpop.xlane.xlu0 %3403
        %3405 = vmax.xlane.f32.xlu0 %v3254
        %v3406 = vpop.xlane.xlu0 %3405
        %3407 = vmax.xlane.f32.xlu0 %v3257
        %v3408 = vpop.xlane.xlu0 %3407
        %3409 = vmax.xlane.f32.xlu0 %v3259
        %v3410 = vpop.xlane.xlu0 %3409
        %3411 = vmax.xlane.f32.xlu0 %v3262
        %v3412 = vpop.xlane.xlu0 %3411
        %3413 = vmax.xlane.f32.xlu0 %v3264
        %v3414 = vpop.xlane.xlu0 %3413
        %3415 = vmax.xlane.f32.xlu0 %v3267
        %v3416 = vpop.xlane.xlu0 %3415
        %3417 = vmax.xlane.f32.xlu0 %v3269
        %v3418 = vpop.xlane.xlu0 %3417
        %3419 = vmax.xlane.f32.xlu0 %v3272
        %v3420 = vpop.xlane.xlu0 %3419
        %3421 = vmax.xlane.f32.xlu0 %v3274
        %v3422 = vpop.xlane.xlu0 %3421
        %3423 = vmax.xlane.f32.xlu0 %v3277
        %v3424 = vpop.xlane.xlu0 %3423
        %3425 = vmax.xlane.f32.xlu0 %v3279
        %v3426 = vpop.xlane.xlu0 %3425
        %3427 = vmax.xlane.f32.xlu0 %v3282
        %v3428 = vpop.xlane.xlu0 %3427
        %3429 = vmax.xlane.f32.xlu0 %v3284
        %v3430 = vpop.xlane.xlu0 %3429
        %3431 = vmax.xlane.f32.xlu0 %v3296
        %v3432 = vpop.xlane.xlu0 %3431
        %3433 = vmax.xlane.f32.xlu0 %v3298
        %v3434 = vpop.xlane.xlu0 %3433
        %3435 = vmax.xlane.f32.xlu0 %v3301
        %v3436 = vpop.xlane.xlu0 %3435
        %3437 = vmax.xlane.f32.xlu0 %v3303
        %v3438 = vpop.xlane.xlu0 %3437
        %3439 = vmax.xlane.f32.xlu0 %v3306
        %v3440 = vpop.xlane.xlu0 %3439
        %3441 = vmax.xlane.f32.xlu0 %v3308
        %v3442 = vpop.xlane.xlu0 %3441
        %3443 = vmax.xlane.f32.xlu0 %v3311
        %v3444 = vpop.xlane.xlu0 %3443
        %3445 = vmax.xlane.f32.xlu0 %v3313
        %v3446 = vpop.xlane.xlu0 %3445
        %3447 = vmax.xlane.f32.xlu0 %v3316
        %v3448 = vpop.xlane.xlu0 %3447
        %3449 = vmax.xlane.f32.xlu0 %v3318
        %v3450 = vpop.xlane.xlu0 %3449
        %3451 = vmax.xlane.f32.xlu0 %v3321
        %v3452 = vpop.xlane.xlu0 %3451
        %3453 = vmax.xlane.f32.xlu0 %v3323
        %v3454 = vpop.xlane.xlu0 %3453
        %3455 = vmax.xlane.f32.xlu0 %v3326
        %v3456 = vpop.xlane.xlu0 %3455
        %3457 = vmax.xlane.f32.xlu0 %v3328
        %v3458 = vpop.xlane.xlu0 %3457
        %3459 = vmax.xlane.f32.xlu0 %v3331
        %v3460 = vpop.xlane.xlu0 %3459
        %3461 = vmax.xlane.f32.xlu0 %v3333
        %v3462 = vpop.xlane.xlu0 %3461
        %v3463 = vsub.f32 %v3149, %v3336
        %v3464 = vsub.f32 %v3151, %v3338
        %v3465 = vsub.f32 %v3154, %v3340
        %v3466 = vsub.f32 %v3156, %v3342
        %v3467 = vsub.f32 %v3159, %v3344
        %v3468 = vsub.f32 %v3161, %v3346
        %v3469 = vsub.f32 %v3164, %v3348
        %v3470 = vsub.f32 %v3166, %v3350
        %v3471 = vsub.f32 %v3169, %v3352
        %v3472 = vsub.f32 %v3171, %v3354
        %v3473 = vsub.f32 %v3174, %v3356
        %v3474 = vsub.f32 %v3176, %v3358
        %v3475 = vsub.f32 %v3179, %v3360
        %v3476 = vsub.f32 %v3181, %v3362
        %v3477 = vsub.f32 %v3184, %v3364
        %v3478 = vsub.f32 %v3186, %v3366
        %v3479 = vsub.f32 %v3198, %v3368
        %v3480 = vsub.f32 %v3200, %v3370
        %v3481 = vsub.f32 %v3203, %v3372
        %v3482 = vsub.f32 %v3205, %v3374
        %v3483 = vsub.f32 %v3208, %v3376
        %v3484 = vsub.f32 %v3210, %v3378
        %v3485 = vsub.f32 %v3213, %v3380
        %v3486 = vsub.f32 %v3215, %v3382
        %v3487 = vsub.f32 %v3218, %v3384
        %v3488 = vsub.f32 %v3220, %v3386
        %v3489 = vsub.f32 %v3223, %v3388
        %v3490 = vsub.f32 %v3225, %v3390
        %v3491 = vsub.f32 %v3228, %v3392
        %v3492 = vsub.f32 %v3230, %v3394
        %v3493 = vsub.f32 %v3233, %v3396
        %v3494 = vsub.f32 %v3235, %v3398
        %v3495 = vsub.f32 %v3247, %v3400
        %v3496 = vsub.f32 %v3249, %v3402
        %v3497 = vsub.f32 %v3252, %v3404
        %v3498 = vsub.f32 %v3254, %v3406
        %v3499 = vsub.f32 %v3257, %v3408
        %v3500 = vsub.f32 %v3259, %v3410
        %v3501 = vsub.f32 %v3262, %v3412
        %v3502 = vsub.f32 %v3264, %v3414
        %v3503 = vsub.f32 %v3267, %v3416
        %v3504 = vsub.f32 %v3269, %v3418
        %v3505 = vsub.f32 %v3272, %v3420
        %v3506 = vsub.f32 %v3274, %v3422
        %v3507 = vsub.f32 %v3277, %v3424
        %v3508 = vsub.f32 %v3279, %v3426
        %v3509 = vsub.f32 %v3282, %v3428
        %v3510 = vsub.f32 %v3284, %v3430
        %v3511 = vsub.f32 %v3296, %v3432
        %v3512 = vsub.f32 %v3298, %v3434
        %v3513 = vsub.f32 %v3301, %v3436
        %v3514 = vsub.f32 %v3303, %v3438
        %v3515 = vsub.f32 %v3306, %v3440
        %v3516 = vsub.f32 %v3308, %v3442
        %v3517 = vsub.f32 %v3311, %v3444
        %v3518 = vsub.f32 %v3313, %v3446
        %v3519 = vsub.f32 %v3316, %v3448
        %v3520 = vsub.f32 %v3318, %v3450
        %v3521 = vsub.f32 %v3321, %v3452
        %v3522 = vsub.f32 %v3323, %v3454
        %v3523 = vsub.f32 %v3326, %v3456
        %v3524 = vsub.f32 %v3328, %v3458
        %v3525 = vsub.f32 %v3331, %v3460
        %v3526 = vsub.f32 %v3333, %v3462
        %v3527 = vmul.f32 %v3463, 1.442695
        %v3528 = vpow.pop %v3527
        %v3529 = vmul.f32 %v3464, 1.442695
        %v3530 = vpow.pop %v3529
        %v3531 = vmul.f32 %v3465, 1.442695
        %v3532 = vpow.pop %v3531
        %v3533 = vmul.f32 %v3466, 1.442695
        %v3534 = vpow.pop %v3533
        %v3535 = vmul.f32 %v3467, 1.442695
        %v3536 = vpow.pop %v3535
        %v3537 = vmul.f32 %v3468, 1.442695
        %v3538 = vpow.pop %v3537
        %v3539 = vmul.f32 %v3469, 1.442695
        %v3540 = vpow.pop %v3539
        %v3541 = vmul.f32 %v3470, 1.442695
        %v3542 = vpow.pop %v3541
        %v3543 = vmul.f32 %v3471, 1.442695
        %v3544 = vpow.pop %v3543
        %v3545 = vmul.f32 %v3472, 1.442695
        %v3546 = vpow.pop %v3545
        %v3547 = vmul.f32 %v3473, 1.442695
        %v3548 = vpow.pop %v3547
        %v3549 = vmul.f32 %v3474, 1.442695
        %v3550 = vpow.pop %v3549
        %v3551 = vmul.f32 %v3475, 1.442695
        %v3552 = vpow.pop %v3551
        %v3553 = vmul.f32 %v3476, 1.442695
        %v3554 = vpow.pop %v3553
        %v3555 = vmul.f32 %v3477, 1.442695
        %v3556 = vpow.pop %v3555
        %v3557 = vmul.f32 %v3478, 1.442695
        %v3558 = vpow.pop %v3557
        %v3559 = vmul.f32 %v3479, 1.442695
        %v3560 = vpow.pop %v3559
        %v3561 = vmul.f32 %v3480, 1.442695
        %v3562 = vpow.pop %v3561
        %v3563 = vmul.f32 %v3481, 1.442695
        %v3564 = vpow.pop %v3563
        %v3565 = vmul.f32 %v3482, 1.442695
        %v3566 = vpow.pop %v3565
        %v3567 = vmul.f32 %v3483, 1.442695
        %v3568 = vpow.pop %v3567
        %v3569 = vmul.f32 %v3484, 1.442695
        %v3570 = vpow.pop %v3569
        %v3571 = vmul.f32 %v3485, 1.442695
        %v3572 = vpow.pop %v3571
        %v3573 = vmul.f32 %v3486, 1.442695
        %v3574 = vpow.pop %v3573
        %v3575 = vmul.f32 %v3487, 1.442695
        %v3576 = vpow.pop %v3575
        %v3577 = vmul.f32 %v3488, 1.442695
        %v3578 = vpow.pop %v3577
        %v3579 = vmul.f32 %v3489, 1.442695
        %v3580 = vpow.pop %v3579
        %v3581 = vmul.f32 %v3490, 1.442695
        %v3582 = vpow.pop %v3581
        %v3583 = vmul.f32 %v3491, 1.442695
        %v3584 = vpow.pop %v3583
        %v3585 = vmul.f32 %v3492, 1.442695
        %v3586 = vpow.pop %v3585
        %v3587 = vmul.f32 %v3493, 1.442695
        %v3588 = vpow.pop %v3587
        %v3589 = vmul.f32 %v3494, 1.442695
        %v3590 = vpow.pop %v3589
        %v3591 = vmul.f32 %v3495, 1.442695
        %v3592 = vpow.pop %v3591
        %v3593 = vmul.f32 %v3496, 1.442695
        %v3594 = vpow.pop %v3593
        %v3595 = vmul.f32 %v3497, 1.442695
        %v3596 = vpow.pop %v3595
        %v3597 = vmul.f32 %v3498, 1.442695
        %v3598 = vpow.pop %v3597
        %v3599 = vmul.f32 %v3499, 1.442695
        %v3600 = vpow.pop %v3599
        %v3601 = vmul.f32 %v3500, 1.442695
        %v3602 = vpow.pop %v3601
        %v3603 = vmul.f32 %v3501, 1.442695
        %v3604 = vpow.pop %v3603
        %v3605 = vmul.f32 %v3502, 1.442695
        %v3606 = vpow.pop %v3605
        %v3607 = vmul.f32 %v3503, 1.442695
        %v3608 = vpow.pop %v3607
        %v3609 = vmul.f32 %v3504, 1.442695
        %v3610 = vpow.pop %v3609
        %v3611 = vmul.f32 %v3505, 1.442695
        %v3612 = vpow.pop %v3611
        %v3613 = vmul.f32 %v3506, 1.442695
        %v3614 = vpow.pop %v3613
        %v3615 = vmul.f32 %v3507, 1.442695
        %v3616 = vpow.pop %v3615
        %v3617 = vmul.f32 %v3508, 1.442695
        %v3618 = vpow.pop %v3617
        %v3619 = vmul.f32 %v3509, 1.442695
        %v3620 = vpow.pop %v3619
        %v3621 = vmul.f32 %v3510, 1.442695
        %v3622 = vpow.pop %v3621
        %v3623 = vmul.f32 %v3511, 1.442695
        %v3624 = vpow.pop %v3623
        %v3625 = vmul.f32 %v3512, 1.442695
        %v3626 = vpow.pop %v3625
        %v3627 = vmul.f32 %v3513, 1.442695
        %v3628 = vpow.pop %v3627
        %v3629 = vmul.f32 %v3514, 1.442695
        %v3630 = vpow.pop %v3629
        %v3631 = vmul.f32 %v3515, 1.442695
        %v3632 = vpow.pop %v3631
        %v3633 = vmul.f32 %v3516, 1.442695
        %v3634 = vpow.pop %v3633
        %v3635 = vmul.f32 %v3517, 1.442695
        %v3636 = vpow.pop %v3635
        %v3637 = vmul.f32 %v3518, 1.442695
        %v3638 = vpow.pop %v3637
        %v3639 = vmul.f32 %v3519, 1.442695
        %v3640 = vpow.pop %v3639
        %v3641 = vmul.f32 %v3520, 1.442695
        %v3642 = vpow.pop %v3641
        %v3643 = vmul.f32 %v3521, 1.442695
        %v3644 = vpow.pop %v3643
        %v3645 = vmul.f32 %v3522, 1.442695
        %v3646 = vpow.pop %v3645
        %v3647 = vmul.f32 %v3523, 1.442695
        %v3648 = vpow.pop %v3647
        %v3649 = vmul.f32 %v3524, 1.442695
        %v3650 = vpow.pop %v3649
        %v3651 = vmul.f32 %v3525, 1.442695
        %v3652 = vpow.pop %v3651
        %v3653 = vmul.f32 %v3526, 1.442695
        %v3654 = vpow.pop %v3653
        %3655 = vadd.xlane.f32.xlu0 %v3528
        %v3656 = vpop.xlane.xlu0 %3655
        %3657 = vadd.xlane.f32.xlu0 %v3530
        %v3658 = vpop.xlane.xlu0 %3657
        %3659 = vadd.xlane.f32.xlu0 %v3532
        %v3660 = vpop.xlane.xlu0 %3659
        %3661 = vadd.xlane.f32.xlu0 %v3534
        %v3662 = vpop.xlane.xlu0 %3661
        %3663 = vadd.xlane.f32.xlu0 %v3536
        %v3664 = vpop.xlane.xlu0 %3663
        %3665 = vadd.xlane.f32.xlu0 %v3538
        %v3666 = vpop.xlane.xlu0 %3665
        %3667 = vadd.xlane.f32.xlu0 %v3540
        %v3668 = vpop.xlane.xlu0 %3667
        %3669 = vadd.xlane.f32.xlu0 %v3542
        %v3670 = vpop.xlane.xlu0 %3669
        %3671 = vadd.xlane.f32.xlu0 %v3544
        %v3672 = vpop.xlane.xlu0 %3671
        %3673 = vadd.xlane.f32.xlu0 %v3546
        %v3674 = vpop.xlane.xlu0 %3673
        %3675 = vadd.xlane.f32.xlu0 %v3548
        %v3676 = vpop.xlane.xlu0 %3675
        %3677 = vadd.xlane.f32.xlu0 %v3550
        %v3678 = vpop.xlane.xlu0 %3677
        %3679 = vadd.xlane.f32.xlu0 %v3552
        %v3680 = vpop.xlane.xlu0 %3679
        %3681 = vadd.xlane.f32.xlu0 %v3554
        %v3682 = vpop.xlane.xlu0 %3681
        %3683 = vadd.xlane.f32.xlu0 %v3556
        %v3684 = vpop.xlane.xlu0 %3683
        %3685 = vadd.xlane.f32.xlu0 %v3558
        %v3686 = vpop.xlane.xlu0 %3685
        %3687 = vadd.xlane.f32.xlu0 %v3560
        %v3688 = vpop.xlane.xlu0 %3687
        %3689 = vadd.xlane.f32.xlu0 %v3562
        %v3690 = vpop.xlane.xlu0 %3689
        %3691 = vadd.xlane.f32.xlu0 %v3564
        %v3692 = vpop.xlane.xlu0 %3691
        %3693 = vadd.xlane.f32.xlu0 %v3566
        %v3694 = vpop.xlane.xlu0 %3693
        %3695 = vadd.xlane.f32.xlu0 %v3568
        %v3696 = vpop.xlane.xlu0 %3695
        %3697 = vadd.xlane.f32.xlu0 %v3570
        %v3698 = vpop.xlane.xlu0 %3697
        %3699 = vadd.xlane.f32.xlu0 %v3572
        %v3700 = vpop.xlane.xlu0 %3699
        %3701 = vadd.xlane.f32.xlu0 %v3574
        %v3702 = vpop.xlane.xlu0 %3701
        %3703 = vadd.xlane.f32.xlu0 %v3576
        %v3704 = vpop.xlane.xlu0 %3703
        %3705 = vadd.xlane.f32.xlu0 %v3578
        %v3706 = vpop.xlane.xlu0 %3705
        %3707 = vadd.xlane.f32.xlu0 %v3580
        %v3708 = vpop.xlane.xlu0 %3707
        %3709 = vadd.xlane.f32.xlu0 %v3582
        %v3710 = vpop.xlane.xlu0 %3709
        %3711 = vadd.xlane.f32.xlu0 %v3584
        %v3712 = vpop.xlane.xlu0 %3711
        %3713 = vadd.xlane.f32.xlu0 %v3586
        %v3714 = vpop.xlane.xlu0 %3713
        %3715 = vadd.xlane.f32.xlu0 %v3588
        %v3716 = vpop.xlane.xlu0 %3715
        %3717 = vadd.xlane.f32.xlu0 %v3590
        %v3718 = vpop.xlane.xlu0 %3717
        %3719 = vadd.xlane.f32.xlu0 %v3592
        %v3720 = vpop.xlane.xlu0 %3719
        %3721 = vadd.xlane.f32.xlu0 %v3594
        %v3722 = vpop.xlane.xlu0 %3721
        %3723 = vadd.xlane.f32.xlu0 %v3596
        %v3724 = vpop.xlane.xlu0 %3723
        %3725 = vadd.xlane.f32.xlu0 %v3598
        %v3726 = vpop.xlane.xlu0 %3725
        %3727 = vadd.xlane.f32.xlu0 %v3600
        %v3728 = vpop.xlane.xlu0 %3727
        %3729 = vadd.xlane.f32.xlu0 %v3602
        %v3730 = vpop.xlane.xlu0 %3729
        %3731 = vadd.xlane.f32.xlu0 %v3604
        %v3732 = vpop.xlane.xlu0 %3731
        %3733 = vadd.xlane.f32.xlu0 %v3606
        %v3734 = vpop.xlane.xlu0 %3733
        %3735 = vadd.xlane.f32.xlu0 %v3608
        %v3736 = vpop.xlane.xlu0 %3735
        %3737 = vadd.xlane.f32.xlu0 %v3610
        %v3738 = vpop.xlane.xlu0 %3737
        %3739 = vadd.xlane.f32.xlu0 %v3612
        %v3740 = vpop.xlane.xlu0 %3739
        %3741 = vadd.xlane.f32.xlu0 %v3614
        %v3742 = vpop.xlane.xlu0 %3741
        %3743 = vadd.xlane.f32.xlu0 %v3616
        %v3744 = vpop.xlane.xlu0 %3743
        %3745 = vadd.xlane.f32.xlu0 %v3618
        %v3746 = vpop.xlane.xlu0 %3745
        %3747 = vadd.xlane.f32.xlu0 %v3620
        %v3748 = vpop.xlane.xlu0 %3747
        %3749 = vadd.xlane.f32.xlu0 %v3622
        %v3750 = vpop.xlane.xlu0 %3749
        %3751 = vadd.xlane.f32.xlu0 %v3624
        %v3752 = vpop.xlane.xlu0 %3751
        %3753 = vadd.xlane.f32.xlu0 %v3626
        %v3754 = vpop.xlane.xlu0 %3753
        %3755 = vadd.xlane.f32.xlu0 %v3628
        %v3756 = vpop.xlane.xlu0 %3755
        %3757 = vadd.xlane.f32.xlu0 %v3630
        %v3758 = vpop.xlane.xlu0 %3757
        %3759 = vadd.xlane.f32.xlu0 %v3632
        %v3760 = vpop.xlane.xlu0 %3759
        %3761 = vadd.xlane.f32.xlu0 %v3634
        %v3762 = vpop.xlane.xlu0 %3761
        %3763 = vadd.xlane.f32.xlu0 %v3636
        %v3764 = vpop.xlane.xlu0 %3763
        %3765 = vadd.xlane.f32.xlu0 %v3638
        %v3766 = vpop.xlane.xlu0 %3765
        %3767 = vadd.xlane.f32.xlu0 %v3640
        %v3768 = vpop.xlane.xlu0 %3767
        %3769 = vadd.xlane.f32.xlu0 %v3642
        %v3770 = vpop.xlane.xlu0 %3769
        %3771 = vadd.xlane.f32.xlu0 %v3644
        %v3772 = vpop.xlane.xlu0 %3771
        %3773 = vadd.xlane.f32.xlu0 %v3646
        %v3774 = vpop.xlane.xlu0 %3773
        %3775 = vadd.xlane.f32.xlu0 %v3648
        %v3776 = vpop.xlane.xlu0 %3775
        %3777 = vadd.xlane.f32.xlu0 %v3650
        %v3778 = vpop.xlane.xlu0 %3777
        %3779 = vadd.xlane.f32.xlu0 %v3652
        %v3780 = vpop.xlane.xlu0 %3779
        %3781 = vadd.xlane.f32.xlu0 %v3654
        %v3782 = vpop.xlane.xlu0 %3781
        %v3783 = vpack.c.bf16 %v3528, %v3528
        %v3784 = vpack.c.bf16 %v3530, %v3530
        %v3785 = vpack.c.bf16 %v3532, %v3532
        %v3786 = vpack.c.bf16 %v3534, %v3534
        %v3787 = vpack.c.bf16 %v3536, %v3536
        %v3788 = vpack.c.bf16 %v3538, %v3538
        %v3789 = vpack.c.bf16 %v3540, %v3540
        %v3790 = vpack.c.bf16 %v3542, %v3542
        %v3791 = vpack.c.bf16 %v3544, %v3544
        %v3792 = vpack.c.bf16 %v3546, %v3546
        %v3793 = vpack.c.bf16 %v3548, %v3548
        %v3794 = vpack.c.bf16 %v3550, %v3550
        %v3795 = vpack.c.bf16 %v3552, %v3552
        %v3796 = vpack.c.bf16 %v3554, %v3554
        %v3797 = vpack.c.bf16 %v3556, %v3556
        %v3798 = vpack.c.bf16 %v3558, %v3558
        %v3799 = vpack.c.bf16 %v3560, %v3560
        %v3800 = vpack.c.bf16 %v3562, %v3562
        %v3801 = vpack.c.bf16 %v3564, %v3564
        %v3802 = vpack.c.bf16 %v3566, %v3566
        %v3803 = vpack.c.bf16 %v3568, %v3568
        %v3804 = vpack.c.bf16 %v3570, %v3570
        %v3805 = vpack.c.bf16 %v3572, %v3572
        %v3806 = vpack.c.bf16 %v3574, %v3574
        %v3807 = vpack.c.bf16 %v3576, %v3576
        %v3808 = vpack.c.bf16 %v3578, %v3578
        %v3809 = vpack.c.bf16 %v3580, %v3580
        %v3810 = vpack.c.bf16 %v3582, %v3582
        %v3811 = vpack.c.bf16 %v3584, %v3584
        %v3812 = vpack.c.bf16 %v3586, %v3586
        %v3813 = vpack.c.bf16 %v3588, %v3588
        %v3814 = vpack.c.bf16 %v3590, %v3590
        %v3815 = vpack.c.bf16 %v3592, %v3592
        %v3816 = vpack.c.bf16 %v3594, %v3594
        %v3817 = vpack.c.bf16 %v3596, %v3596
        %v3818 = vpack.c.bf16 %v3598, %v3598
        %v3819 = vpack.c.bf16 %v3600, %v3600
        %v3820 = vpack.c.bf16 %v3602, %v3602
        %v3821 = vpack.c.bf16 %v3604, %v3604
        %v3822 = vpack.c.bf16 %v3606, %v3606
        %v3823 = vpack.c.bf16 %v3608, %v3608
        %v3824 = vpack.c.bf16 %v3610, %v3610
        %v3825 = vpack.c.bf16 %v3612, %v3612
        %v3826 = vpack.c.bf16 %v3614, %v3614
        %v3827 = vpack.c.bf16 %v3616, %v3616
        %v3828 = vpack.c.bf16 %v3618, %v3618
        %v3829 = vpack.c.bf16 %v3620, %v3620
        %v3830 = vpack.c.bf16 %v3622, %v3622
        %v3831 = vpack.c.bf16 %v3624, %v3624
        %v3832 = vpack.c.bf16 %v3626, %v3626
        %v3833 = vpack.c.bf16 %v3628, %v3628
        %v3834 = vpack.c.bf16 %v3630, %v3630
        %v3835 = vpack.c.bf16 %v3632, %v3632
        %v3836 = vpack.c.bf16 %v3634, %v3634
        %v3837 = vpack.c.bf16 %v3636, %v3636
        %v3838 = vpack.c.bf16 %v3638, %v3638
        %v3839 = vpack.c.bf16 %v3640, %v3640
        %v3840 = vpack.c.bf16 %v3642, %v3642
        %v3841 = vpack.c.bf16 %v3644, %v3644
        %v3842 = vpack.c.bf16 %v3646, %v3646
        %v3843 = vpack.c.bf16 %v3648, %v3648
        %v3844 = vpack.c.bf16 %v3650, %v3650
        %v3845 = vpack.c.bf16 %v3652, %v3652
        %v3846 = vpack.c.bf16 %v3654, %v3654
        %v3863 = vunpack.c.l.b16 %v3783
        %v3864 = vunpack.c.l.b16 %v3784
        %v3865 = vunpack.c.l.b16 %v3785
        %v3866 = vunpack.c.l.b16 %v3786
        %v3867 = vunpack.c.l.b16 %v3787
        %v3868 = vunpack.c.l.b16 %v3788
        %v3869 = vunpack.c.l.b16 %v3789
        %v3870 = vunpack.c.l.b16 %v3790
        %v3871 = vunpack.c.l.b16 %v3791
        %v3872 = vunpack.c.l.b16 %v3792
        %v3873 = vunpack.c.l.b16 %v3793
        %v3874 = vunpack.c.l.b16 %v3794
        %v3875 = vunpack.c.l.b16 %v3795
        %v3876 = vunpack.c.l.b16 %v3796
        %v3877 = vunpack.c.l.b16 %v3797
        %v3878 = vunpack.c.l.b16 %v3798
        %v3879 = vpack.c.b16 %v3864, %v3863
        %v3880 = vpack.c.b16 %v3866, %v3865
        %v3881 = vpack.c.b16 %v3868, %v3867
        %v3882 = vpack.c.b16 %v3870, %v3869
        %v3883 = vpack.c.b16 %v3872, %v3871
        %v3884 = vpack.c.b16 %v3874, %v3873
        %v3885 = vpack.c.b16 %v3876, %v3875
        %v3886 = vpack.c.b16 %v3878, %v3877
        %3895 = vmatpush.bf16.msra.mxu0 %v3090
        %3896 = vmatpush.bf16.msra.mxu0 %v3089
        %3897 = vmatpush.bf16.msra.mxu0 %v3088
        %3898 = vmatpush.bf16.msra.mxu0 %v3087
        %3899 = vmatpush.bf16.msra.mxu0 %v3086
        %3900 = vmatpush.bf16.msra.mxu0 %v3085
        %3901 = vmatpush.bf16.msra.mxu0 %v3084
        %3902 = vmatpush.bf16.msra.mxu0 %v3083
        %3903 = vmatmul.bf16.gmra.mxu0 %v3879
        %v3904 = vpop.f32.mrf.mxu0
        %v3905 = vadd.f32 0.0, %v3904
        %v3906 = vpop.f32.mrf.mxu0
        %v3907 = vadd.f32 0.0, %v3906
        %3908 = vmatmul.bf16.gmra.mxu0 %v3880
        %v3909 = vpop.f32.mrf.mxu0
        %v3910 = vadd.f32 0.0, %v3909
        %v3911 = vpop.f32.mrf.mxu0
        %v3912 = vadd.f32 0.0, %v3911
        %3913 = vmatmul.bf16.gmra.mxu0 %v3881
        %v3914 = vpop.f32.mrf.mxu0
        %v3915 = vadd.f32 0.0, %v3914
        %v3916 = vpop.f32.mrf.mxu0
        %v3917 = vadd.f32 0.0, %v3916
        %3918 = vmatmul.bf16.gmra.mxu0 %v3882
        %v3919 = vpop.f32.mrf.mxu0
        %v3920 = vadd.f32 0.0, %v3919
        %v3921 = vpop.f32.mrf.mxu0
        %v3922 = vadd.f32 0.0, %v3921
        %3923 = vmatmul.bf16.gmra.mxu0 %v3883
        %v3924 = vpop.f32.mrf.mxu0
        %v3925 = vadd.f32 0.0, %v3924
        %v3926 = vpop.f32.mrf.mxu0
        %v3927 = vadd.f32 0.0, %v3926
        %3928 = vmatmul.bf16.gmra.mxu0 %v3884
        %v3929 = vpop.f32.mrf.mxu0
        %v3930 = vadd.f32 0.0, %v3929
        %v3931 = vpop.f32.mrf.mxu0
        %v3932 = vadd.f32 0.0, %v3931
        %3933 = vmatmul.bf16.gmra.mxu0 %v3885
        %v3934 = vpop.f32.mrf.mxu0
        %v3935 = vadd.f32 0.0, %v3934
        %v3936 = vpop.f32.mrf.mxu0
        %v3937 = vadd.f32 0.0, %v3936
        %3938 = vmatmul.bf16.gmra.mxu0 %v3886
        %v3939 = vpop.f32.mrf.mxu0
        %v3940 = vadd.f32 0.0, %v3939
        %v3941 = vpop.f32.mrf.mxu0
        %v3942 = vadd.f32 0.0, %v3941
        %3943 = vdwg.mxu0
        %v3960 = vunpack.c.l.b16 %v3799
        %v3961 = vunpack.c.l.b16 %v3800
        %v3962 = vunpack.c.l.b16 %v3801
        %v3963 = vunpack.c.l.b16 %v3802
        %v3964 = vunpack.c.l.b16 %v3803
        %v3965 = vunpack.c.l.b16 %v3804
        %v3966 = vunpack.c.l.b16 %v3805
        %v3967 = vunpack.c.l.b16 %v3806
        %v3968 = vunpack.c.l.b16 %v3807
        %v3969 = vunpack.c.l.b16 %v3808
        %v3970 = vunpack.c.l.b16 %v3809
        %v3971 = vunpack.c.l.b16 %v3810
        %v3972 = vunpack.c.l.b16 %v3811
        %v3973 = vunpack.c.l.b16 %v3812
        %v3974 = vunpack.c.l.b16 %v3813
        %v3975 = vunpack.c.l.b16 %v3814
        %v3976 = vpack.c.b16 %v3961, %v3960
        %v3977 = vpack.c.b16 %v3963, %v3962
        %v3978 = vpack.c.b16 %v3965, %v3964
        %v3979 = vpack.c.b16 %v3967, %v3966
        %v3980 = vpack.c.b16 %v3969, %v3968
        %v3981 = vpack.c.b16 %v3971, %v3970
        %v3982 = vpack.c.b16 %v3973, %v3972
        %v3983 = vpack.c.b16 %v3975, %v3974
        %3992 = vmatpush.bf16.msra.mxu0 %v3106
        %3993 = vmatpush.bf16.msra.mxu0 %v3105
        %3994 = vmatpush.bf16.msra.mxu0 %v3104
        %3995 = vmatpush.bf16.msra.mxu0 %v3103
        %3996 = vmatpush.bf16.msra.mxu0 %v3102
        %3997 = vmatpush.bf16.msra.mxu0 %v3101
        %3998 = vmatpush.bf16.msra.mxu0 %v3100
        %3999 = vmatpush.bf16.msra.mxu0 %v3099
        %4000 = vmatmul.bf16.gmra.mxu0 %v3976
        %v4001 = vpop.f32.mrf.mxu0
        %v4002 = vadd.f32 0.0, %v4001
        %v4003 = vpop.f32.mrf.mxu0
        %v4004 = vadd.f32 0.0, %v4003
        %4005 = vmatmul.bf16.gmra.mxu0 %v3977
        %v4006 = vpop.f32.mrf.mxu0
        %v4007 = vadd.f32 0.0, %v4006
        %v4008 = vpop.f32.mrf.mxu0
        %v4009 = vadd.f32 0.0, %v4008
        %4010 = vmatmul.bf16.gmra.mxu0 %v3978
        %v4011 = vpop.f32.mrf.mxu0
        %v4012 = vadd.f32 0.0, %v4011
        %v4013 = vpop.f32.mrf.mxu0
        %v4014 = vadd.f32 0.0, %v4013
        %4015 = vmatmul.bf16.gmra.mxu0 %v3979
        %v4016 = vpop.f32.mrf.mxu0
        %v4017 = vadd.f32 0.0, %v4016
        %v4018 = vpop.f32.mrf.mxu0
        %v4019 = vadd.f32 0.0, %v4018
        %4020 = vmatmul.bf16.gmra.mxu0 %v3980
        %v4021 = vpop.f32.mrf.mxu0
        %v4022 = vadd.f32 0.0, %v4021
        %v4023 = vpop.f32.mrf.mxu0
        %v4024 = vadd.f32 0.0, %v4023
        %4025 = vmatmul.bf16.gmra.mxu0 %v3981
        %v4026 = vpop.f32.mrf.mxu0
        %v4027 = vadd.f32 0.0, %v4026
        %v4028 = vpop.f32.mrf.mxu0
        %v4029 = vadd.f32 0.0, %v4028
        %4030 = vmatmul.bf16.gmra.mxu0 %v3982
        %v4031 = vpop.f32.mrf.mxu0
        %v4032 = vadd.f32 0.0, %v4031
        %v4033 = vpop.f32.mrf.mxu0
        %v4034 = vadd.f32 0.0, %v4033
        %4035 = vmatmul.bf16.gmra.mxu0 %v3983
        %v4036 = vpop.f32.mrf.mxu0
        %v4037 = vadd.f32 0.0, %v4036
        %v4038 = vpop.f32.mrf.mxu0
        %v4039 = vadd.f32 0.0, %v4038
        %4040 = vdwg.mxu0
        %v4057 = vunpack.c.l.b16 %v3815
        %v4058 = vunpack.c.l.b16 %v3816
        %v4059 = vunpack.c.l.b16 %v3817
        %v4060 = vunpack.c.l.b16 %v3818
        %v4061 = vunpack.c.l.b16 %v3819
        %v4062 = vunpack.c.l.b16 %v3820
        %v4063 = vunpack.c.l.b16 %v3821
        %v4064 = vunpack.c.l.b16 %v3822
        %v4065 = vunpack.c.l.b16 %v3823
        %v4066 = vunpack.c.l.b16 %v3824
        %v4067 = vunpack.c.l.b16 %v3825
        %v4068 = vunpack.c.l.b16 %v3826
        %v4069 = vunpack.c.l.b16 %v3827
        %v4070 = vunpack.c.l.b16 %v3828
        %v4071 = vunpack.c.l.b16 %v3829
        %v4072 = vunpack.c.l.b16 %v3830
        %v4073 = vpack.c.b16 %v4058, %v4057
        %v4074 = vpack.c.b16 %v4060, %v4059
        %v4075 = vpack.c.b16 %v4062, %v4061
        %v4076 = vpack.c.b16 %v4064, %v4063
        %v4077 = vpack.c.b16 %v4066, %v4065
        %v4078 = vpack.c.b16 %v4068, %v4067
        %v4079 = vpack.c.b16 %v4070, %v4069
        %v4080 = vpack.c.b16 %v4072, %v4071
        %4089 = vmatpush.bf16.msra.mxu0 %v3122
        %4090 = vmatpush.bf16.msra.mxu0 %v3121
        %4091 = vmatpush.bf16.msra.mxu0 %v3120
        %4092 = vmatpush.bf16.msra.mxu0 %v3119
        %4093 = vmatpush.bf16.msra.mxu0 %v3118
        %4094 = vmatpush.bf16.msra.mxu0 %v3117
        %4095 = vmatpush.bf16.msra.mxu0 %v3116
        %4096 = vmatpush.bf16.msra.mxu0 %v3115
        %4097 = vmatmul.bf16.gmra.mxu0 %v4073
        %v4098 = vpop.f32.mrf.mxu0
        %v4099 = vadd.f32 0.0, %v4098
        %v4100 = vpop.f32.mrf.mxu0
        %v4101 = vadd.f32 0.0, %v4100
        %4102 = vmatmul.bf16.gmra.mxu0 %v4074
        %v4103 = vpop.f32.mrf.mxu0
        %v4104 = vadd.f32 0.0, %v4103
        %v4105 = vpop.f32.mrf.mxu0
        %v4106 = vadd.f32 0.0, %v4105
        %4107 = vmatmul.bf16.gmra.mxu0 %v4075
        %v4108 = vpop.f32.mrf.mxu0
        %v4109 = vadd.f32 0.0, %v4108
        %v4110 = vpop.f32.mrf.mxu0
        %v4111 = vadd.f32 0.0, %v4110
        %4112 = vmatmul.bf16.gmra.mxu0 %v4076
        %v4113 = vpop.f32.mrf.mxu0
        %v4114 = vadd.f32 0.0, %v4113
        %v4115 = vpop.f32.mrf.mxu0
        %v4116 = vadd.f32 0.0, %v4115
        %4117 = vmatmul.bf16.gmra.mxu0 %v4077
        %v4118 = vpop.f32.mrf.mxu0
        %v4119 = vadd.f32 0.0, %v4118
        %v4120 = vpop.f32.mrf.mxu0
        %v4121 = vadd.f32 0.0, %v4120
        %4122 = vmatmul.bf16.gmra.mxu0 %v4078
        %v4123 = vpop.f32.mrf.mxu0
        %v4124 = vadd.f32 0.0, %v4123
        %v4125 = vpop.f32.mrf.mxu0
        %v4126 = vadd.f32 0.0, %v4125
        %4127 = vmatmul.bf16.gmra.mxu0 %v4079
        %v4128 = vpop.f32.mrf.mxu0
        %v4129 = vadd.f32 0.0, %v4128
        %v4130 = vpop.f32.mrf.mxu0
        %v4131 = vadd.f32 0.0, %v4130
        %4132 = vmatmul.bf16.gmra.mxu0 %v4080
        %v4133 = vpop.f32.mrf.mxu0
        %v4134 = vadd.f32 0.0, %v4133
        %v4135 = vpop.f32.mrf.mxu0
        %v4136 = vadd.f32 0.0, %v4135
        %4137 = vdwg.mxu0
        %v4154 = vunpack.c.l.b16 %v3831
        %v4155 = vunpack.c.l.b16 %v3832
        %v4156 = vunpack.c.l.b16 %v3833
        %v4157 = vunpack.c.l.b16 %v3834
        %v4158 = vunpack.c.l.b16 %v3835
        %v4159 = vunpack.c.l.b16 %v3836
        %v4160 = vunpack.c.l.b16 %v3837
        %v4161 = vunpack.c.l.b16 %v3838
        %v4162 = vunpack.c.l.b16 %v3839
        %v4163 = vunpack.c.l.b16 %v3840
        %v4164 = vunpack.c.l.b16 %v3841
        %v4165 = vunpack.c.l.b16 %v3842
        %v4166 = vunpack.c.l.b16 %v3843
        %v4167 = vunpack.c.l.b16 %v3844
        %v4168 = vunpack.c.l.b16 %v3845
        %v4169 = vunpack.c.l.b16 %v3846
        %v4170 = vpack.c.b16 %v4155, %v4154
        %v4171 = vpack.c.b16 %v4157, %v4156
        %v4172 = vpack.c.b16 %v4159, %v4158
        %v4173 = vpack.c.b16 %v4161, %v4160
        %v4174 = vpack.c.b16 %v4163, %v4162
        %v4175 = vpack.c.b16 %v4165, %v4164
        %v4176 = vpack.c.b16 %v4167, %v4166
        %v4177 = vpack.c.b16 %v4169, %v4168
        %4186 = vmatpush.bf16.msra.mxu0 %v3138
        %4187 = vmatpush.bf16.msra.mxu0 %v3137
        %4188 = vmatpush.bf16.msra.mxu0 %v3136
        %4189 = vmatpush.bf16.msra.mxu0 %v3135
        %4190 = vmatpush.bf16.msra.mxu0 %v3134
        %4191 = vmatpush.bf16.msra.mxu0 %v3133
        %4192 = vmatpush.bf16.msra.mxu0 %v3132
        %4193 = vmatpush.bf16.msra.mxu0 %v3131
        %4194 = vmatmul.bf16.gmra.mxu0 %v4170
        %v4195 = vpop.f32.mrf.mxu0
        %v4196 = vadd.f32 0.0, %v4195
        %v4197 = vpop.f32.mrf.mxu0
        %v4198 = vadd.f32 0.0, %v4197
        %4199 = vmatmul.bf16.gmra.mxu0 %v4171
        %v4200 = vpop.f32.mrf.mxu0
        %v4201 = vadd.f32 0.0, %v4200
        %v4202 = vpop.f32.mrf.mxu0
        %v4203 = vadd.f32 0.0, %v4202
        %4204 = vmatmul.bf16.gmra.mxu0 %v4172
        %v4205 = vpop.f32.mrf.mxu0
        %v4206 = vadd.f32 0.0, %v4205
        %v4207 = vpop.f32.mrf.mxu0
        %v4208 = vadd.f32 0.0, %v4207
        %4209 = vmatmul.bf16.gmra.mxu0 %v4173
        %v4210 = vpop.f32.mrf.mxu0
        %v4211 = vadd.f32 0.0, %v4210
        %v4212 = vpop.f32.mrf.mxu0
        %v4213 = vadd.f32 0.0, %v4212
        %4214 = vmatmul.bf16.gmra.mxu0 %v4174
        %v4215 = vpop.f32.mrf.mxu0
        %v4216 = vadd.f32 0.0, %v4215
        %v4217 = vpop.f32.mrf.mxu0
        %v4218 = vadd.f32 0.0, %v4217
        %4219 = vmatmul.bf16.gmra.mxu0 %v4175
        %v4220 = vpop.f32.mrf.mxu0
        %v4221 = vadd.f32 0.0, %v4220
        %v4222 = vpop.f32.mrf.mxu0
        %v4223 = vadd.f32 0.0, %v4222
        %4224 = vmatmul.bf16.gmra.mxu0 %v4176
        %v4225 = vpop.f32.mrf.mxu0
        %v4226 = vadd.f32 0.0, %v4225
        %v4227 = vpop.f32.mrf.mxu0
        %v4228 = vadd.f32 0.0, %v4227
        %4229 = vmatmul.bf16.gmra.mxu0 %v4177
        %v4230 = vpop.f32.mrf.mxu0
        %v4231 = vadd.f32 0.0, %v4230
        %v4232 = vpop.f32.mrf.mxu0
        %v4233 = vadd.f32 0.0, %v4232
        %4234 = vdwg.mxu0
        %v4235 = vrcp.pop %v3656
        %v4236 = vrcp.pop %v3658
        %v4237 = vrcp.pop %v3660
        %v4238 = vrcp.pop %v3662
        %v4239 = vrcp.pop %v3664
        %v4240 = vrcp.pop %v3666
        %v4241 = vrcp.pop %v3668
        %v4242 = vrcp.pop %v3670
        %v4243 = vrcp.pop %v3672
        %v4244 = vrcp.pop %v3674
        %v4245 = vrcp.pop %v3676
        %v4246 = vrcp.pop %v3678
        %v4247 = vrcp.pop %v3680
        %v4248 = vrcp.pop %v3682
        %v4249 = vrcp.pop %v3684
        %v4250 = vrcp.pop %v3686
        %v4251 = vrcp.pop %v3688
        %v4252 = vrcp.pop %v3690
        %v4253 = vrcp.pop %v3692
        %v4254 = vrcp.pop %v3694
        %v4255 = vrcp.pop %v3696
        %v4256 = vrcp.pop %v3698
        %v4257 = vrcp.pop %v3700
        %v4258 = vrcp.pop %v3702
        %v4259 = vrcp.pop %v3704
        %v4260 = vrcp.pop %v3706
        %v4261 = vrcp.pop %v3708
        %v4262 = vrcp.pop %v3710
        %v4263 = vrcp.pop %v3712
        %v4264 = vrcp.pop %v3714
        %v4265 = vrcp.pop %v3716
        %v4266 = vrcp.pop %v3718
        %v4267 = vrcp.pop %v3720
        %v4268 = vrcp.pop %v3722
        %v4269 = vrcp.pop %v3724
        %v4270 = vrcp.pop %v3726
        %v4271 = vrcp.pop %v3728
        %v4272 = vrcp.pop %v3730
        %v4273 = vrcp.pop %v3732
        %v4274 = vrcp.pop %v3734
        %v4275 = vrcp.pop %v3736
        %v4276 = vrcp.pop %v3738
        %v4277 = vrcp.pop %v3740
        %v4278 = vrcp.pop %v3742
        %v4279 = vrcp.pop %v3744
        %v4280 = vrcp.pop %v3746
        %v4281 = vrcp.pop %v3748
        %v4282 = vrcp.pop %v3750
        %v4283 = vrcp.pop %v3752
        %v4284 = vrcp.pop %v3754
        %v4285 = vrcp.pop %v3756
        %v4286 = vrcp.pop %v3758
        %v4287 = vrcp.pop %v3760
        %v4288 = vrcp.pop %v3762
        %v4289 = vrcp.pop %v3764
        %v4290 = vrcp.pop %v3766
        %v4291 = vrcp.pop %v3768
        %v4292 = vrcp.pop %v3770
        %v4293 = vrcp.pop %v3772
        %v4294 = vrcp.pop %v3774
        %v4295 = vrcp.pop %v3776
        %v4296 = vrcp.pop %v3778
        %v4297 = vrcp.pop %v3780
        %v4298 = vrcp.pop %v3782
        %v4299 = vmul.f32 %v3905, %v4235
        %v4300 = vmul.f32 %v3907, %v4236
        %v4301 = vmul.f32 %v3910, %v4237
        %v4302 = vmul.f32 %v3912, %v4238
        %v4303 = vmul.f32 %v3915, %v4239
        %v4304 = vmul.f32 %v3917, %v4240
        %v4305 = vmul.f32 %v3920, %v4241
        %v4306 = vmul.f32 %v3922, %v4242
        %v4307 = vmul.f32 %v3925, %v4243
        %v4308 = vmul.f32 %v3927, %v4244
        %v4309 = vmul.f32 %v3930, %v4245
        %v4310 = vmul.f32 %v3932, %v4246
        %v4311 = vmul.f32 %v3935, %v4247
        %v4312 = vmul.f32 %v3937, %v4248
        %v4313 = vmul.f32 %v3940, %v4249
        %v4314 = vmul.f32 %v3942, %v4250
        %v4315 = vmul.f32 %v4002, %v4251
        %v4316 = vmul.f32 %v4004, %v4252
        %v4317 = vmul.f32 %v4007, %v4253
        %v4318 = vmul.f32 %v4009, %v4254
        %v4319 = vmul.f32 %v4012, %v4255
        %v4320 = vmul.f32 %v4014, %v4256
        %v4321 = vmul.f32 %v4017, %v4257
        %v4322 = vmul.f32 %v4019, %v4258
        %v4323 = vmul.f32 %v4022, %v4259
        %v4324 = vmul.f32 %v4024, %v4260
        %v4325 = vmul.f32 %v4027, %v4261
        %v4326 = vmul.f32 %v4029, %v4262
        %v4327 = vmul.f32 %v4032, %v4263
        %v4328 = vmul.f32 %v4034, %v4264
        %v4329 = vmul.f32 %v4037, %v4265
        %v4330 = vmul.f32 %v4039, %v4266
        %v4331 = vmul.f32 %v4099, %v4267
        %v4332 = vmul.f32 %v4101, %v4268
        %v4333 = vmul.f32 %v4104, %v4269
        %v4334 = vmul.f32 %v4106, %v4270
        %v4335 = vmul.f32 %v4109, %v4271
        %v4336 = vmul.f32 %v4111, %v4272
        %v4337 = vmul.f32 %v4114, %v4273
        %v4338 = vmul.f32 %v4116, %v4274
        %v4339 = vmul.f32 %v4119, %v4275
        %v4340 = vmul.f32 %v4121, %v4276
        %v4341 = vmul.f32 %v4124, %v4277
        %v4342 = vmul.f32 %v4126, %v4278
        %v4343 = vmul.f32 %v4129, %v4279
        %v4344 = vmul.f32 %v4131, %v4280
        %v4345 = vmul.f32 %v4134, %v4281
        %v4346 = vmul.f32 %v4136, %v4282
        %v4347 = vmul.f32 %v4196, %v4283
        %v4348 = vmul.f32 %v4198, %v4284
        %v4349 = vmul.f32 %v4201, %v4285
        %v4350 = vmul.f32 %v4203, %v4286
        %v4351 = vmul.f32 %v4206, %v4287
        %v4352 = vmul.f32 %v4208, %v4288
        %v4353 = vmul.f32 %v4211, %v4289
        %v4354 = vmul.f32 %v4213, %v4290
        %v4355 = vmul.f32 %v4216, %v4291
        %v4356 = vmul.f32 %v4218, %v4292
        %v4357 = vmul.f32 %v4221, %v4293
        %v4358 = vmul.f32 %v4223, %v4294
        %v4359 = vmul.f32 %v4226, %v4295
        %v4360 = vmul.f32 %v4228, %v4296
        %v4361 = vmul.f32 %v4231, %v4297
        %v4362 = vmul.f32 %v4233, %v4298
        %v4363 = vpack.c.bf16 %v4300, %v4299
        %v4364 = vpack.c.bf16 %v4302, %v4301
        %v4365 = vpack.c.bf16 %v4304, %v4303
        %v4366 = vpack.c.bf16 %v4306, %v4305
        %v4367 = vpack.c.bf16 %v4308, %v4307
        %v4368 = vpack.c.bf16 %v4310, %v4309
        %v4369 = vpack.c.bf16 %v4312, %v4311
        %v4370 = vpack.c.bf16 %v4314, %v4313
        %v4371 = vpack.c.bf16 %v4316, %v4315
        %v4372 = vpack.c.bf16 %v4318, %v4317
        %v4373 = vpack.c.bf16 %v4320, %v4319
        %v4374 = vpack.c.bf16 %v4322, %v4321
        %v4375 = vpack.c.bf16 %v4324, %v4323
        %v4376 = vpack.c.bf16 %v4326, %v4325
        %v4377 = vpack.c.bf16 %v4328, %v4327
        %v4378 = vpack.c.bf16 %v4330, %v4329
        %v4379 = vpack.c.bf16 %v4332, %v4331
        %v4380 = vpack.c.bf16 %v4334, %v4333
        %v4381 = vpack.c.bf16 %v4336, %v4335
        %v4382 = vpack.c.bf16 %v4338, %v4337
        %v4383 = vpack.c.bf16 %v4340, %v4339
        %v4384 = vpack.c.bf16 %v4342, %v4341
        %v4385 = vpack.c.bf16 %v4344, %v4343
        %v4386 = vpack.c.bf16 %v4346, %v4345
        %v4387 = vpack.c.bf16 %v4348, %v4347
        %v4388 = vpack.c.bf16 %v4350, %v4349
        %v4389 = vpack.c.bf16 %v4352, %v4351
        %v4390 = vpack.c.bf16 %v4354, %v4353
        %v4391 = vpack.c.bf16 %v4356, %v4355
        %v4392 = vpack.c.bf16 %v4358, %v4357
        %v4393 = vpack.c.bf16 %v4360, %v4359
        %v4394 = vpack.c.bf16 %v4362, %v4361
        %4395 = vxpose.xlu0.c.b16.start [1/8] %v4363, 128
        %4396 = vxpose.xlu0.c.b16.cont [2/8] %v4364, 128
        %4397 = vxpose.xlu0.c.b16.cont [3/8] %v4365, 128
        %4398 = vxpose.xlu0.c.b16.cont [4/8] %v4366, 128
        %4399 = vxpose.xlu0.c.b16.cont [5/8] %v4367, 128
        %4400 = vxpose.xlu0.c.b16.cont [6/8] %v4368, 128
        %4401 = vxpose.xlu0.c.b16.cont [7/8] %v4369, 128
        %4402 = vxpose.xlu0.c.b16.end [8/8] %v4370, 128
        %v4403 = vpop.trf.xlu0
        %v4404 = vpop.trf.xlu0
        %v4405 = vpop.trf.xlu0
        %v4406 = vpop.trf.xlu0
        %v4407 = vpop.trf.xlu0
        %v4408 = vpop.trf.xlu0
        %v4409 = vpop.trf.xlu0
        %v4410 = vpop.trf.xlu0
        %4411 = vxpose.xlu0.c.b16.start [1/8] %v4371, 128
        %4412 = vxpose.xlu0.c.b16.cont [2/8] %v4372, 128
        %4413 = vxpose.xlu0.c.b16.cont [3/8] %v4373, 128
        %4414 = vxpose.xlu0.c.b16.cont [4/8] %v4374, 128
        %4415 = vxpose.xlu0.c.b16.cont [5/8] %v4375, 128
        %4416 = vxpose.xlu0.c.b16.cont [6/8] %v4376, 128
        %4417 = vxpose.xlu0.c.b16.cont [7/8] %v4377, 128
        %4418 = vxpose.xlu0.c.b16.end [8/8] %v4378, 128
        %v4419 = vpop.trf.xlu0
        %v4420 = vpop.trf.xlu0
        %v4421 = vpop.trf.xlu0
        %v4422 = vpop.trf.xlu0
        %v4423 = vpop.trf.xlu0
        %v4424 = vpop.trf.xlu0
        %v4425 = vpop.trf.xlu0
        %v4426 = vpop.trf.xlu0
        %4427 = vxpose.xlu0.c.b16.start [1/8] %v4379, 128
        %4428 = vxpose.xlu0.c.b16.cont [2/8] %v4380, 128
        %4429 = vxpose.xlu0.c.b16.cont [3/8] %v4381, 128
        %4430 = vxpose.xlu0.c.b16.cont [4/8] %v4382, 128
        %4431 = vxpose.xlu0.c.b16.cont [5/8] %v4383, 128
        %4432 = vxpose.xlu0.c.b16.cont [6/8] %v4384, 128
        %4433 = vxpose.xlu0.c.b16.cont [7/8] %v4385, 128
        %4434 = vxpose.xlu0.c.b16.end [8/8] %v4386, 128
        %v4435 = vpop.trf.xlu0
        %v4436 = vpop.trf.xlu0
        %v4437 = vpop.trf.xlu0
        %v4438 = vpop.trf.xlu0
        %v4439 = vpop.trf.xlu0
        %v4440 = vpop.trf.xlu0
        %v4441 = vpop.trf.xlu0
        %v4442 = vpop.trf.xlu0
        %4443 = vxpose.xlu0.c.b16.start [1/8] %v4387, 128
        %4444 = vxpose.xlu0.c.b16.cont [2/8] %v4388, 128
        %4445 = vxpose.xlu0.c.b16.cont [3/8] %v4389, 128
        %4446 = vxpose.xlu0.c.b16.cont [4/8] %v4390, 128
        %4447 = vxpose.xlu0.c.b16.cont [5/8] %v4391, 128
        %4448 = vxpose.xlu0.c.b16.cont [6/8] %v4392, 128
        %4449 = vxpose.xlu0.c.b16.cont [7/8] %v4393, 128
        %4450 = vxpose.xlu0.c.b16.end [8/8] %v4394, 128
        %v4451 = vpop.trf.xlu0
        %v4452 = vpop.trf.xlu0
        %v4453 = vpop.trf.xlu0
        %v4454 = vpop.trf.xlu0
        %v4455 = vpop.trf.xlu0
        %v4456 = vpop.trf.xlu0
        %v4457 = vpop.trf.xlu0
        %v4458 = vpop.trf.xlu0
        %4459 = vxpose.xlu0.c.b16.start [1/8] %v4403, 128
        %4460 = vxpose.xlu0.c.b16.cont [2/8] %v4404, 128
        %4461 = vxpose.xlu0.c.b16.cont [3/8] %v4405, 128
        %4462 = vxpose.xlu0.c.b16.cont [4/8] %v4406, 128
        %4463 = vxpose.xlu0.c.b16.cont [5/8] %v4407, 128
        %4464 = vxpose.xlu0.c.b16.cont [6/8] %v4408, 128
        %4465 = vxpose.xlu0.c.b16.cont [7/8] %v4409, 128
        %4466 = vxpose.xlu0.c.b16.end [8/8] %v4410, 128
        %v4467 = vpop.trf.xlu0
        %v4468 = vpop.trf.xlu0
        %v4469 = vpop.trf.xlu0
        %v4470 = vpop.trf.xlu0
        %v4471 = vpop.trf.xlu0
        %v4472 = vpop.trf.xlu0
        %v4473 = vpop.trf.xlu0
        %v4474 = vpop.trf.xlu0
        %4475 = vxpose.xlu0.c.b16.start [1/8] %v4419, 128
        %4476 = vxpose.xlu0.c.b16.cont [2/8] %v4420, 128
        %4477 = vxpose.xlu0.c.b16.cont [3/8] %v4421, 128
        %4478 = vxpose.xlu0.c.b16.cont [4/8] %v4422, 128
        %4479 = vxpose.xlu0.c.b16.cont [5/8] %v4423, 128
        %4480 = vxpose.xlu0.c.b16.cont [6/8] %v4424, 128
        %4481 = vxpose.xlu0.c.b16.cont [7/8] %v4425, 128
        %4482 = vxpose.xlu0.c.b16.end [8/8] %v4426, 128
        %v4483 = vpop.trf.xlu0
        %v4484 = vpop.trf.xlu0
        %v4485 = vpop.trf.xlu0
        %v4486 = vpop.trf.xlu0
        %v4487 = vpop.trf.xlu0
        %v4488 = vpop.trf.xlu0
        %v4489 = vpop.trf.xlu0
        %v4490 = vpop.trf.xlu0
        %4491 = vxpose.xlu0.c.b16.start [1/8] %v4435, 128
        %4492 = vxpose.xlu0.c.b16.cont [2/8] %v4436, 128
        %4493 = vxpose.xlu0.c.b16.cont [3/8] %v4437, 128
        %4494 = vxpose.xlu0.c.b16.cont [4/8] %v4438, 128
        %4495 = vxpose.xlu0.c.b16.cont [5/8] %v4439, 128
        %4496 = vxpose.xlu0.c.b16.cont [6/8] %v4440, 128
        %4497 = vxpose.xlu0.c.b16.cont [7/8] %v4441, 128
        %4498 = vxpose.xlu0.c.b16.end [8/8] %v4442, 128
        %v4499 = vpop.trf.xlu0
        %v4500 = vpop.trf.xlu0
        %v4501 = vpop.trf.xlu0
        %v4502 = vpop.trf.xlu0
        %v4503 = vpop.trf.xlu0
        %v4504 = vpop.trf.xlu0
        %v4505 = vpop.trf.xlu0
        %v4506 = vpop.trf.xlu0
        %4507 = vxpose.xlu0.c.b16.start [1/8] %v4451, 128
        %4508 = vxpose.xlu0.c.b16.cont [2/8] %v4452, 128
        %4509 = vxpose.xlu0.c.b16.cont [3/8] %v4453, 128
        %4510 = vxpose.xlu0.c.b16.cont [4/8] %v4454, 128
        %4511 = vxpose.xlu0.c.b16.cont [5/8] %v4455, 128
        %4512 = vxpose.xlu0.c.b16.cont [6/8] %v4456, 128
        %4513 = vxpose.xlu0.c.b16.cont [7/8] %v4457, 128
        %4514 = vxpose.xlu0.c.b16.end [8/8] %v4458, 128
        %v4515 = vpop.trf.xlu0
        %v4516 = vpop.trf.xlu0
        %v4517 = vpop.trf.xlu0
        %v4518 = vpop.trf.xlu0
        %v4519 = vpop.trf.xlu0
        %v4520 = vpop.trf.xlu0
        %v4521 = vpop.trf.xlu0
        %v4522 = vpop.trf.xlu0
        %v4523 = vld [vmem:[%s569] sm:$0xf]
        %v4524 = vld [vmem:[%s569 + $0x4] sm:$0xf]
        %v4525 = vld [vmem:[%s569 + $0x8] sm:$0xf]
        %v4526 = vld [vmem:[%s569 + $0xc] sm:$0xf]
        %v4527 = vld [vmem:[%s569 + $0x10] sm:$0xf]
        %v4528 = vld [vmem:[%s569 + $0x14] sm:$0xf]
        %v4529 = vld [vmem:[%s569 + $0x18] sm:$0xf]
        %v4530 = vld [vmem:[%s569 + $0x1c] sm:$0xf]
        %v4531 = vld [vmem:[%s569 + $0x20] sm:$0xf]
        %v4532 = vld [vmem:[%s569 + $0x24] sm:$0xf]
        %v4533 = vld [vmem:[%s569 + $0x28] sm:$0xf]
        %v4534 = vld [vmem:[%s569 + $0x2c] sm:$0xf]
        %v4535 = vld [vmem:[%s569 + $0x30] sm:$0xf]
        %v4536 = vld [vmem:[%s569 + $0x34] sm:$0xf]
        %v4537 = vld [vmem:[%s569 + $0x38] sm:$0xf]
        %v4538 = vld [vmem:[%s569 + $0x3c] sm:$0xf]
        %v4539 = vld [vmem:[%s569 + $0x40] sm:$0xf]
        %v4540 = vld [vmem:[%s569 + $0x44] sm:$0xf]
        %v4541 = vld [vmem:[%s569 + $0x48] sm:$0xf]
        %v4542 = vld [vmem:[%s569 + $0x4c] sm:$0xf]
        %v4543 = vld [vmem:[%s569 + $0x50] sm:$0xf]
        %v4544 = vld [vmem:[%s569 + $0x54] sm:$0xf]
        %v4545 = vld [vmem:[%s569 + $0x58] sm:$0xf]
        %v4546 = vld [vmem:[%s569 + $0x5c] sm:$0xf]
        %v4547 = vld [vmem:[%s569 + $0x60] sm:$0xf]
        %v4548 = vld [vmem:[%s569 + $0x64] sm:$0xf]
        %v4549 = vld [vmem:[%s569 + $0x68] sm:$0xf]
        %v4550 = vld [vmem:[%s569 + $0x6c] sm:$0xf]
        %v4551 = vld [vmem:[%s569 + $0x70] sm:$0xf]
        %v4552 = vld [vmem:[%s569 + $0x74] sm:$0xf]
        %v4553 = vld [vmem:[%s569 + $0x78] sm:$0xf]
        %v4554 = vld [vmem:[%s569 + $0x7c] sm:$0xf]
        %v4555 = vld [vmem:[%s572] sm:$0x1]
        %v4557 = vperm.slane %v4555, 0
        %v4591 = vunpack.c.l.b16 %v4523
        %v4592 = vunpack.c.l.b16 %v4524
        %v4593 = vunpack.c.l.b16 %v4525
        %v4594 = vunpack.c.l.b16 %v4526
        %v4595 = vunpack.c.l.b16 %v4527
        %v4596 = vunpack.c.l.b16 %v4528
        %v4597 = vunpack.c.l.b16 %v4529
        %v4598 = vunpack.c.l.b16 %v4530
        %v4599 = vunpack.c.l.b16 %v4531
        %v4600 = vunpack.c.l.b16 %v4532
        %v4601 = vunpack.c.l.b16 %v4533
        %v4602 = vunpack.c.l.b16 %v4534
        %v4603 = vunpack.c.l.b16 %v4535
        %v4604 = vunpack.c.l.b16 %v4536
        %v4605 = vunpack.c.l.b16 %v4537
        %v4606 = vunpack.c.l.b16 %v4538
        %v4607 = vunpack.c.l.b16 %v4539
        %v4608 = vunpack.c.l.b16 %v4540
        %v4609 = vunpack.c.l.b16 %v4541
        %v4610 = vunpack.c.l.b16 %v4542
        %v4611 = vunpack.c.l.b16 %v4543
        %v4612 = vunpack.c.l.b16 %v4544
        %v4613 = vunpack.c.l.b16 %v4545
        %v4614 = vunpack.c.l.b16 %v4546
        %v4615 = vunpack.c.l.b16 %v4547
        %v4616 = vunpack.c.l.b16 %v4548
        %v4617 = vunpack.c.l.b16 %v4549
        %v4618 = vunpack.c.l.b16 %v4550
        %v4619 = vunpack.c.l.b16 %v4551
        %v4620 = vunpack.c.l.b16 %v4552
        %v4621 = vunpack.c.l.b16 %v4553
        %v4622 = vunpack.c.l.b16 %v4554
        %v4623 = vpack.c.b16 %v4592, %v4591
        %v4624 = vpack.c.b16 %v4594, %v4593
        %v4625 = vpack.c.b16 %v4596, %v4595
        %v4626 = vpack.c.b16 %v4598, %v4597
        %v4627 = vpack.c.b16 %v4600, %v4599
        %v4628 = vpack.c.b16 %v4602, %v4601
        %v4629 = vpack.c.b16 %v4604, %v4603
        %v4630 = vpack.c.b16 %v4606, %v4605
        %v4631 = vpack.c.b16 %v4608, %v4607
        %v4632 = vpack.c.b16 %v4610, %v4609
        %v4633 = vpack.c.b16 %v4612, %v4611
        %v4634 = vpack.c.b16 %v4614, %v4613
        %v4635 = vpack.c.b16 %v4616, %v4615
        %v4636 = vpack.c.b16 %v4618, %v4617
        %v4637 = vpack.c.b16 %v4620, %v4619
        %v4638 = vpack.c.b16 %v4622, %v4621
        %4655 = vmatpush.bf16.msra.mxu0 %v4630
        %4656 = vmatpush.bf16.msra.mxu0 %v4629
        %4657 = vmatpush.bf16.msra.mxu0 %v4628
        %4658 = vmatpush.bf16.msra.mxu0 %v4627
        %4659 = vmatpush.bf16.msra.mxu0 %v4626
        %4660 = vmatpush.bf16.msra.mxu0 %v4625
        %4661 = vmatpush.bf16.msra.mxu0 %v4624
        %4662 = vmatpush.bf16.msra.mxu0 %v4623
        %4663 = vmatmul.bf16.gmra.mxu0 %v4467
        %v4664 = vpop.f32.mrf.mxu0
        %v4665 = vadd.f32 %v4557, %v4664
        %v4666 = vpop.f32.mrf.mxu0
        %v4667 = vadd.f32 %v4557, %v4666
        %4668 = vmatmul.bf16.gmra.mxu0 %v4468
        %v4669 = vpop.f32.mrf.mxu0
        %v4670 = vadd.f32 %v4557, %v4669
        %v4671 = vpop.f32.mrf.mxu0
        %v4672 = vadd.f32 %v4557, %v4671
        %4673 = vmatmul.bf16.gmra.mxu0 %v4469
        %v4674 = vpop.f32.mrf.mxu0
        %v4675 = vadd.f32 %v4557, %v4674
        %v4676 = vpop.f32.mrf.mxu0
        %v4677 = vadd.f32 %v4557, %v4676
        %4678 = vmatmul.bf16.gmra.mxu0 %v4470
        %v4679 = vpop.f32.mrf.mxu0
        %v4680 = vadd.f32 %v4557, %v4679
        %v4681 = vpop.f32.mrf.mxu0
        %v4682 = vadd.f32 %v4557, %v4681
        %4683 = vmatmul.bf16.gmra.mxu0 %v4471
        %v4684 = vpop.f32.mrf.mxu0
        %v4685 = vadd.f32 %v4557, %v4684
        %v4686 = vpop.f32.mrf.mxu0
        %v4687 = vadd.f32 %v4557, %v4686
        %4688 = vmatmul.bf16.gmra.mxu0 %v4472
        %v4689 = vpop.f32.mrf.mxu0
        %v4690 = vadd.f32 %v4557, %v4689
        %v4691 = vpop.f32.mrf.mxu0
        %v4692 = vadd.f32 %v4557, %v4691
        %4693 = vmatmul.bf16.gmra.mxu0 %v4473
        %v4694 = vpop.f32.mrf.mxu0
        %v4695 = vadd.f32 %v4557, %v4694
        %v4696 = vpop.f32.mrf.mxu0
        %v4697 = vadd.f32 %v4557, %v4696
        %4698 = vmatmul.bf16.gmra.mxu0 %v4474
        %v4699 = vpop.f32.mrf.mxu0
        %v4700 = vadd.f32 %v4557, %v4699
        %v4701 = vpop.f32.mrf.mxu0
        %v4702 = vadd.f32 %v4557, %v4701
        %4703 = vmatmul.bf16.gmra.mxu0 %v4499
        %v4704 = vpop.f32.mrf.mxu0
        %v4705 = vadd.f32 %v4557, %v4704
        %v4706 = vpop.f32.mrf.mxu0
        %v4707 = vadd.f32 %v4557, %v4706
        %4708 = vmatmul.bf16.gmra.mxu0 %v4500
        %v4709 = vpop.f32.mrf.mxu0
        %v4710 = vadd.f32 %v4557, %v4709
        %v4711 = vpop.f32.mrf.mxu0
        %v4712 = vadd.f32 %v4557, %v4711
        %4713 = vmatmul.bf16.gmra.mxu0 %v4501
        %v4714 = vpop.f32.mrf.mxu0
        %v4715 = vadd.f32 %v4557, %v4714
        %v4716 = vpop.f32.mrf.mxu0
        %v4717 = vadd.f32 %v4557, %v4716
        %4718 = vmatmul.bf16.gmra.mxu0 %v4502
        %v4719 = vpop.f32.mrf.mxu0
        %v4720 = vadd.f32 %v4557, %v4719
        %v4721 = vpop.f32.mrf.mxu0
        %v4722 = vadd.f32 %v4557, %v4721
        %4723 = vmatmul.bf16.gmra.mxu0 %v4503
        %v4724 = vpop.f32.mrf.mxu0
        %v4725 = vadd.f32 %v4557, %v4724
        %v4726 = vpop.f32.mrf.mxu0
        %v4727 = vadd.f32 %v4557, %v4726
        %4728 = vmatmul.bf16.gmra.mxu0 %v4504
        %v4729 = vpop.f32.mrf.mxu0
        %v4730 = vadd.f32 %v4557, %v4729
        %v4731 = vpop.f32.mrf.mxu0
        %v4732 = vadd.f32 %v4557, %v4731
        %4733 = vmatmul.bf16.gmra.mxu0 %v4505
        %v4734 = vpop.f32.mrf.mxu0
        %v4735 = vadd.f32 %v4557, %v4734
        %v4736 = vpop.f32.mrf.mxu0
        %v4737 = vadd.f32 %v4557, %v4736
        %4738 = vmatmul.bf16.gmra.mxu0 %v4506
        %v4739 = vpop.f32.mrf.mxu0
        %v4740 = vadd.f32 %v4557, %v4739
        %v4741 = vpop.f32.mrf.mxu0
        %v4742 = vadd.f32 %v4557, %v4741
        %4743 = vdwg.mxu0
        %4744 = vmatpush.bf16.msra.mxu0 %v4638
        %4745 = vmatpush.bf16.msra.mxu0 %v4637
        %4746 = vmatpush.bf16.msra.mxu0 %v4636
        %4747 = vmatpush.bf16.msra.mxu0 %v4635
        %4748 = vmatpush.bf16.msra.mxu0 %v4634
        %4749 = vmatpush.bf16.msra.mxu0 %v4633
        %4750 = vmatpush.bf16.msra.mxu0 %v4632
        %4751 = vmatpush.bf16.msra.mxu0 %v4631
        %4752 = vmatmul.bf16.gmra.mxu0 %v4483
        %v4753 = vpop.f32.mrf.mxu0
        %v4754 = vadd.f32 %v4665, %v4753
        %v4755 = vpop.f32.mrf.mxu0
        %v4756 = vadd.f32 %v4667, %v4755
        %4757 = vmatmul.bf16.gmra.mxu0 %v4484
        %v4758 = vpop.f32.mrf.mxu0
        %v4759 = vadd.f32 %v4670, %v4758
        %v4760 = vpop.f32.mrf.mxu0
        %v4761 = vadd.f32 %v4672, %v4760
        %4762 = vmatmul.bf16.gmra.mxu0 %v4485
        %v4763 = vpop.f32.mrf.mxu0
        %v4764 = vadd.f32 %v4675, %v4763
        %v4765 = vpop.f32.mrf.mxu0
        %v4766 = vadd.f32 %v4677, %v4765
        %4767 = vmatmul.bf16.gmra.mxu0 %v4486
        %v4768 = vpop.f32.mrf.mxu0
        %v4769 = vadd.f32 %v4680, %v4768
        %v4770 = vpop.f32.mrf.mxu0
        %v4771 = vadd.f32 %v4682, %v4770
        %4772 = vmatmul.bf16.gmra.mxu0 %v4487
        %v4773 = vpop.f32.mrf.mxu0
        %v4774 = vadd.f32 %v4685, %v4773
        %v4775 = vpop.f32.mrf.mxu0
        %v4776 = vadd.f32 %v4687, %v4775
        %4777 = vmatmul.bf16.gmra.mxu0 %v4488
        %v4778 = vpop.f32.mrf.mxu0
        %v4779 = vadd.f32 %v4690, %v4778
        %v4780 = vpop.f32.mrf.mxu0
        %v4781 = vadd.f32 %v4692, %v4780
        %4782 = vmatmul.bf16.gmra.mxu0 %v4489
        %v4783 = vpop.f32.mrf.mxu0
        %v4784 = vadd.f32 %v4695, %v4783
        %v4785 = vpop.f32.mrf.mxu0
        %v4786 = vadd.f32 %v4697, %v4785
        %4787 = vmatmul.bf16.gmra.mxu0 %v4490
        %v4788 = vpop.f32.mrf.mxu0
        %v4789 = vadd.f32 %v4700, %v4788
        %v4790 = vpop.f32.mrf.mxu0
        %v4791 = vadd.f32 %v4702, %v4790
        %4792 = vmatmul.bf16.gmra.mxu0 %v4515
        %v4793 = vpop.f32.mrf.mxu0
        %v4794 = vadd.f32 %v4705, %v4793
        %v4795 = vpop.f32.mrf.mxu0
        %v4796 = vadd.f32 %v4707, %v4795
        %4797 = vmatmul.bf16.gmra.mxu0 %v4516
        %v4798 = vpop.f32.mrf.mxu0
        %v4799 = vadd.f32 %v4710, %v4798
        %v4800 = vpop.f32.mrf.mxu0
        %v4801 = vadd.f32 %v4712, %v4800
        %4802 = vmatmul.bf16.gmra.mxu0 %v4517
        %v4803 = vpop.f32.mrf.mxu0
        %v4804 = vadd.f32 %v4715, %v4803
        %v4805 = vpop.f32.mrf.mxu0
        %v4806 = vadd.f32 %v4717, %v4805
        %4807 = vmatmul.bf16.gmra.mxu0 %v4518
        %v4808 = vpop.f32.mrf.mxu0
        %v4809 = vadd.f32 %v4720, %v4808
        %v4810 = vpop.f32.mrf.mxu0
        %v4811 = vadd.f32 %v4722, %v4810
        %4812 = vmatmul.bf16.gmra.mxu0 %v4519
        %v4813 = vpop.f32.mrf.mxu0
        %v4814 = vadd.f32 %v4725, %v4813
        %v4815 = vpop.f32.mrf.mxu0
        %v4816 = vadd.f32 %v4727, %v4815
        %4817 = vmatmul.bf16.gmra.mxu0 %v4520
        %v4818 = vpop.f32.mrf.mxu0
        %v4819 = vadd.f32 %v4730, %v4818
        %v4820 = vpop.f32.mrf.mxu0
        %v4821 = vadd.f32 %v4732, %v4820
        %4822 = vmatmul.bf16.gmra.mxu0 %v4521
        %v4823 = vpop.f32.mrf.mxu0
        %v4824 = vadd.f32 %v4735, %v4823
        %v4825 = vpop.f32.mrf.mxu0
        %v4826 = vadd.f32 %v4737, %v4825
        %4827 = vmatmul.bf16.gmra.mxu0 %v4522
        %v4828 = vpop.f32.mrf.mxu0
        %v4829 = vadd.f32 %v4740, %v4828
        %v4830 = vpop.f32.mrf.mxu0
        %v4831 = vadd.f32 %v4742, %v4830
        %4832 = vdwg.mxu0
        %v4833 = vadd.f32 %v4754, %v688
        %v4834 = vadd.f32 %v4756, %v689
        %v4835 = vadd.f32 %v4759, %v690
        %v4836 = vadd.f32 %v4761, %v691
        %v4837 = vadd.f32 %v4764, %v692
        %v4838 = vadd.f32 %v4766, %v693
        %v4839 = vadd.f32 %v4769, %v694
        %v4840 = vadd.f32 %v4771, %v695
        %v4841 = vadd.f32 %v4774, %v696
        %v4842 = vadd.f32 %v4776, %v697
        %v4843 = vadd.f32 %v4779, %v698
        %v4844 = vadd.f32 %v4781, %v699
        %v4845 = vadd.f32 %v4784, %v700
        %v4846 = vadd.f32 %v4786, %v701
        %v4847 = vadd.f32 %v4789, %v702
        %v4848 = vadd.f32 %v4791, %v703
        %v4849 = vadd.f32 %v4794, %v704
        %v4850 = vadd.f32 %v4796, %v705
        %v4851 = vadd.f32 %v4799, %v706
        %v4852 = vadd.f32 %v4801, %v707
        %v4853 = vadd.f32 %v4804, %v708
        %v4854 = vadd.f32 %v4806, %v709
        %v4855 = vadd.f32 %v4809, %v710
        %v4856 = vadd.f32 %v4811, %v711
        %v4857 = vadd.f32 %v4814, %v712
        %v4858 = vadd.f32 %v4816, %v713
        %v4859 = vadd.f32 %v4819, %v714
        %v4860 = vadd.f32 %v4821, %v715
        %v4861 = vadd.f32 %v4824, %v716
        %v4862 = vadd.f32 %v4826, %v717
        %v4863 = vadd.f32 %v4829, %v718
        %v4864 = vadd.f32 %v4831, %v719
        %v4865 = vld [vmem:[%s575] sm:$0x1]
        %v4866 = vld [vmem:[%s578] sm:$0x1]
        %4867 = vadd.xlane.f32.xlu0 %v4833
        %v4868 = vpop.xlane.xlu0 %4867
        %4869 = vadd.xlane.f32.xlu0 %v4834
        %v4870 = vpop.xlane.xlu0 %4869
        %4871 = vadd.xlane.f32.xlu0 %v4835
        %v4872 = vpop.xlane.xlu0 %4871
        %4873 = vadd.xlane.f32.xlu0 %v4836
        %v4874 = vpop.xlane.xlu0 %4873
        %4875 = vadd.xlane.f32.xlu0 %v4837
        %v4876 = vpop.xlane.xlu0 %4875
        %4877 = vadd.xlane.f32.xlu0 %v4838
        %v4878 = vpop.xlane.xlu0 %4877
        %4879 = vadd.xlane.f32.xlu0 %v4839
        %v4880 = vpop.xlane.xlu0 %4879
        %4881 = vadd.xlane.f32.xlu0 %v4840
        %v4882 = vpop.xlane.xlu0 %4881
        %4883 = vadd.xlane.f32.xlu0 %v4841
        %v4884 = vpop.xlane.xlu0 %4883
        %4885 = vadd.xlane.f32.xlu0 %v4842
        %v4886 = vpop.xlane.xlu0 %4885
        %4887 = vadd.xlane.f32.xlu0 %v4843
        %v4888 = vpop.xlane.xlu0 %4887
        %4889 = vadd.xlane.f32.xlu0 %v4844
        %v4890 = vpop.xlane.xlu0 %4889
        %4891 = vadd.xlane.f32.xlu0 %v4845
        %v4892 = vpop.xlane.xlu0 %4891
        %4893 = vadd.xlane.f32.xlu0 %v4846
        %v4894 = vpop.xlane.xlu0 %4893
        %4895 = vadd.xlane.f32.xlu0 %v4847
        %v4896 = vpop.xlane.xlu0 %4895
        %4897 = vadd.xlane.f32.xlu0 %v4848
        %v4898 = vpop.xlane.xlu0 %4897
        %4899 = vadd.xlane.f32.xlu0 %v4849
        %v4900 = vpop.xlane.xlu0 %4899
        %4901 = vadd.xlane.f32.xlu0 %v4850
        %v4902 = vpop.xlane.xlu0 %4901
        %4903 = vadd.xlane.f32.xlu0 %v4851
        %v4904 = vpop.xlane.xlu0 %4903
        %4905 = vadd.xlane.f32.xlu0 %v4852
        %v4906 = vpop.xlane.xlu0 %4905
        %4907 = vadd.xlane.f32.xlu0 %v4853
        %v4908 = vpop.xlane.xlu0 %4907
        %4909 = vadd.xlane.f32.xlu0 %v4854
        %v4910 = vpop.xlane.xlu0 %4909
        %4911 = vadd.xlane.f32.xlu0 %v4855
        %v4912 = vpop.xlane.xlu0 %4911
        %4913 = vadd.xlane.f32.xlu0 %v4856
        %v4914 = vpop.xlane.xlu0 %4913
        %4915 = vadd.xlane.f32.xlu0 %v4857
        %v4916 = vpop.xlane.xlu0 %4915
        %4917 = vadd.xlane.f32.xlu0 %v4858
        %v4918 = vpop.xlane.xlu0 %4917
        %4919 = vadd.xlane.f32.xlu0 %v4859
        %v4920 = vpop.xlane.xlu0 %4919
        %4921 = vadd.xlane.f32.xlu0 %v4860
        %v4922 = vpop.xlane.xlu0 %4921
        %4923 = vadd.xlane.f32.xlu0 %v4861
        %v4924 = vpop.xlane.xlu0 %4923
        %4925 = vadd.xlane.f32.xlu0 %v4862
        %v4926 = vpop.xlane.xlu0 %4925
        %4927 = vadd.xlane.f32.xlu0 %v4863
        %v4928 = vpop.xlane.xlu0 %4927
        %4929 = vadd.xlane.f32.xlu0 %v4864
        %v4930 = vpop.xlane.xlu0 %4929
        %v4931 = vmul.f32 %v4868, %v792
        %v4932 = vmul.f32 %v4870, %v792
        %v4933 = vmul.f32 %v4872, %v792
        %v4934 = vmul.f32 %v4874, %v792
        %v4935 = vmul.f32 %v4876, %v792
        %v4936 = vmul.f32 %v4878, %v792
        %v4937 = vmul.f32 %v4880, %v792
        %v4938 = vmul.f32 %v4882, %v792
        %v4939 = vmul.f32 %v4884, %v792
        %v4940 = vmul.f32 %v4886, %v792
        %v4941 = vmul.f32 %v4888, %v792
        %v4942 = vmul.f32 %v4890, %v792
        %v4943 = vmul.f32 %v4892, %v792
        %v4944 = vmul.f32 %v4894, %v792
        %v4945 = vmul.f32 %v4896, %v792
        %v4946 = vmul.f32 %v4898, %v792
        %v4947 = vmul.f32 %v4900, %v792
        %v4948 = vmul.f32 %v4902, %v792
        %v4949 = vmul.f32 %v4904, %v792
        %v4950 = vmul.f32 %v4906, %v792
        %v4951 = vmul.f32 %v4908, %v792
        %v4952 = vmul.f32 %v4910, %v792
        %v4953 = vmul.f32 %v4912, %v792
        %v4954 = vmul.f32 %v4914, %v792
        %v4955 = vmul.f32 %v4916, %v792
        %v4956 = vmul.f32 %v4918, %v792
        %v4957 = vmul.f32 %v4920, %v792
        %v4958 = vmul.f32 %v4922, %v792
        %v4959 = vmul.f32 %v4924, %v792
        %v4960 = vmul.f32 %v4926, %v792
        %v4961 = vmul.f32 %v4928, %v792
        %v4962 = vmul.f32 %v4930, %v792
        %v4963 = vsub.f32 %v4833, %v4931
        %v4964 = vsub.f32 %v4834, %v4932
        %v4965 = vsub.f32 %v4835, %v4933
        %v4966 = vsub.f32 %v4836, %v4934
        %v4967 = vsub.f32 %v4837, %v4935
        %v4968 = vsub.f32 %v4838, %v4936
        %v4969 = vsub.f32 %v4839, %v4937
        %v4970 = vsub.f32 %v4840, %v4938
        %v4971 = vsub.f32 %v4841, %v4939
        %v4972 = vsub.f32 %v4842, %v4940
        %v4973 = vsub.f32 %v4843, %v4941
        %v4974 = vsub.f32 %v4844, %v4942
        %v4975 = vsub.f32 %v4845, %v4943
        %v4976 = vsub.f32 %v4846, %v4944
        %v4977 = vsub.f32 %v4847, %v4945
        %v4978 = vsub.f32 %v4848, %v4946
        %v4979 = vsub.f32 %v4849, %v4947
        %v4980 = vsub.f32 %v4850, %v4948
        %v4981 = vsub.f32 %v4851, %v4949
        %v4982 = vsub.f32 %v4852, %v4950
        %v4983 = vsub.f32 %v4853, %v4951
        %v4984 = vsub.f32 %v4854, %v4952
        %v4985 = vsub.f32 %v4855, %v4953
        %v4986 = vsub.f32 %v4856, %v4954
        %v4987 = vsub.f32 %v4857, %v4955
        %v4988 = vsub.f32 %v4858, %v4956
        %v4989 = vsub.f32 %v4859, %v4957
        %v4990 = vsub.f32 %v4860, %v4958
        %v4991 = vsub.f32 %v4861, %v4959
        %v4992 = vsub.f32 %v4862, %v4960
        %v4993 = vsub.f32 %v4863, %v4961
        %v4994 = vsub.f32 %v4864, %v4962
        %v4995 = vmul.f32 %v4963, %v4963
        %v4996 = vmul.f32 %v4964, %v4964
        %v4997 = vmul.f32 %v4965, %v4965
        %v4998 = vmul.f32 %v4966, %v4966
        %v4999 = vmul.f32 %v4967, %v4967
        %v5000 = vmul.f32 %v4968, %v4968
        %v5001 = vmul.f32 %v4969, %v4969
        %v5002 = vmul.f32 %v4970, %v4970
        %v5003 = vmul.f32 %v4971, %v4971
        %v5004 = vmul.f32 %v4972, %v4972
        %v5005 = vmul.f32 %v4973, %v4973
        %v5006 = vmul.f32 %v4974, %v4974
        %v5007 = vmul.f32 %v4975, %v4975
        %v5008 = vmul.f32 %v4976, %v4976
        %v5009 = vmul.f32 %v4977, %v4977
        %v5010 = vmul.f32 %v4978, %v4978
        %v5011 = vmul.f32 %v4979, %v4979
        %v5012 = vmul.f32 %v4980, %v4980
        %v5013 = vmul.f32 %v4981, %v4981
        %v5014 = vmul.f32 %v4982, %v4982
        %v5015 = vmul.f32 %v4983, %v4983
        %v5016 = vmul.f32 %v4984, %v4984
        %v5017 = vmul.f32 %v4985, %v4985
        %v5018 = vmul.f32 %v4986, %v4986
        %v5019 = vmul.f32 %v4987, %v4987
        %v5020 = vmul.f32 %v4988, %v4988
        %v5021 = vmul.f32 %v4989, %v4989
        %v5022 = vmul.f32 %v4990, %v4990
        %v5023 = vmul.f32 %v4991, %v4991
        %v5024 = vmul.f32 %v4992, %v4992
        %v5025 = vmul.f32 %v4993, %v4993
        %v5026 = vmul.f32 %v4994, %v4994
        %5027 = vadd.xlane.f32.xlu0 %v4995
        %v5028 = vpop.xlane.xlu0 %5027
        %5029 = vadd.xlane.f32.xlu0 %v4996
        %v5030 = vpop.xlane.xlu0 %5029
        %5031 = vadd.xlane.f32.xlu0 %v4997
        %v5032 = vpop.xlane.xlu0 %5031
        %5033 = vadd.xlane.f32.xlu0 %v4998
        %v5034 = vpop.xlane.xlu0 %5033
        %5035 = vadd.xlane.f32.xlu0 %v4999
        %v5036 = vpop.xlane.xlu0 %5035
        %5037 = vadd.xlane.f32.xlu0 %v5000
        %v5038 = vpop.xlane.xlu0 %5037
        %5039 = vadd.xlane.f32.xlu0 %v5001
        %v5040 = vpop.xlane.xlu0 %5039
        %5041 = vadd.xlane.f32.xlu0 %v5002
        %v5042 = vpop.xlane.xlu0 %5041
        %5043 = vadd.xlane.f32.xlu0 %v5003
        %v5044 = vpop.xlane.xlu0 %5043
        %5045 = vadd.xlane.f32.xlu0 %v5004
        %v5046 = vpop.xlane.xlu0 %5045
        %5047 = vadd.xlane.f32.xlu0 %v5005
        %v5048 = vpop.xlane.xlu0 %5047
        %5049 = vadd.xlane.f32.xlu0 %v5006
        %v5050 = vpop.xlane.xlu0 %5049
        %5051 = vadd.xlane.f32.xlu0 %v5007
        %v5052 = vpop.xlane.xlu0 %5051
        %5053 = vadd.xlane.f32.xlu0 %v5008
        %v5054 = vpop.xlane.xlu0 %5053
        %5055 = vadd.xlane.f32.xlu0 %v5009
        %v5056 = vpop.xlane.xlu0 %5055
        %5057 = vadd.xlane.f32.xlu0 %v5010
        %v5058 = vpop.xlane.xlu0 %5057
        %5059 = vadd.xlane.f32.xlu0 %v5011
        %v5060 = vpop.xlane.xlu0 %5059
        %5061 = vadd.xlane.f32.xlu0 %v5012
        %v5062 = vpop.xlane.xlu0 %5061
        %5063 = vadd.xlane.f32.xlu0 %v5013
        %v5064 = vpop.xlane.xlu0 %5063
        %5065 = vadd.xlane.f32.xlu0 %v5014
        %v5066 = vpop.xlane.xlu0 %5065
        %5067 = vadd.xlane.f32.xlu0 %v5015
        %v5068 = vpop.xlane.xlu0 %5067
        %5069 = vadd.xlane.f32.xlu0 %v5016
        %v5070 = vpop.xlane.xlu0 %5069
        %5071 = vadd.xlane.f32.xlu0 %v5017
        %v5072 = vpop.xlane.xlu0 %5071
        %5073 = vadd.xlane.f32.xlu0 %v5018
        %v5074 = vpop.xlane.xlu0 %5073
        %5075 = vadd.xlane.f32.xlu0 %v5019
        %v5076 = vpop.xlane.xlu0 %5075
        %5077 = vadd.xlane.f32.xlu0 %v5020
        %v5078 = vpop.xlane.xlu0 %5077
        %5079 = vadd.xlane.f32.xlu0 %v5021
        %v5080 = vpop.xlane.xlu0 %5079
        %5081 = vadd.xlane.f32.xlu0 %v5022
        %v5082 = vpop.xlane.xlu0 %5081
        %5083 = vadd.xlane.f32.xlu0 %v5023
        %v5084 = vpop.xlane.xlu0 %5083
        %5085 = vadd.xlane.f32.xlu0 %v5024
        %v5086 = vpop.xlane.xlu0 %5085
        %5087 = vadd.xlane.f32.xlu0 %v5025
        %v5088 = vpop.xlane.xlu0 %5087
        %5089 = vadd.xlane.f32.xlu0 %v5026
        %v5090 = vpop.xlane.xlu0 %5089
        %v5091 = vmul.f32 %v5028, %v792
        %v5092 = vmul.f32 %v5030, %v792
        %v5093 = vmul.f32 %v5032, %v792
        %v5094 = vmul.f32 %v5034, %v792
        %v5095 = vmul.f32 %v5036, %v792
        %v5096 = vmul.f32 %v5038, %v792
        %v5097 = vmul.f32 %v5040, %v792
        %v5098 = vmul.f32 %v5042, %v792
        %v5099 = vmul.f32 %v5044, %v792
        %v5100 = vmul.f32 %v5046, %v792
        %v5101 = vmul.f32 %v5048, %v792
        %v5102 = vmul.f32 %v5050, %v792
        %v5103 = vmul.f32 %v5052, %v792
        %v5104 = vmul.f32 %v5054, %v792
        %v5105 = vmul.f32 %v5056, %v792
        %v5106 = vmul.f32 %v5058, %v792
        %v5107 = vmul.f32 %v5060, %v792
        %v5108 = vmul.f32 %v5062, %v792
        %v5109 = vmul.f32 %v5064, %v792
        %v5110 = vmul.f32 %v5066, %v792
        %v5111 = vmul.f32 %v5068, %v792
        %v5112 = vmul.f32 %v5070, %v792
        %v5113 = vmul.f32 %v5072, %v792
        %v5114 = vmul.f32 %v5074, %v792
        %v5115 = vmul.f32 %v5076, %v792
        %v5116 = vmul.f32 %v5078, %v792
        %v5117 = vmul.f32 %v5080, %v792
        %v5118 = vmul.f32 %v5082, %v792
        %v5119 = vmul.f32 %v5084, %v792
        %v5120 = vmul.f32 %v5086, %v792
        %v5121 = vmul.f32 %v5088, %v792
        %v5122 = vmul.f32 %v5090, %v792
        %v5123 = vadd.f32 %v5091, 1e-05
        %v5124 = vadd.f32 %v5092, 1e-05
        %v5125 = vadd.f32 %v5093, 1e-05
        %v5126 = vadd.f32 %v5094, 1e-05
        %v5127 = vadd.f32 %v5095, 1e-05
        %v5128 = vadd.f32 %v5096, 1e-05
        %v5129 = vadd.f32 %v5097, 1e-05
        %v5130 = vadd.f32 %v5098, 1e-05
        %v5131 = vadd.f32 %v5099, 1e-05
        %v5132 = vadd.f32 %v5100, 1e-05
        %v5133 = vadd.f32 %v5101, 1e-05
        %v5134 = vadd.f32 %v5102, 1e-05
        %v5135 = vadd.f32 %v5103, 1e-05
        %v5136 = vadd.f32 %v5104, 1e-05
        %v5137 = vadd.f32 %v5105, 1e-05
        %v5138 = vadd.f32 %v5106, 1e-05
        %v5139 = vadd.f32 %v5107, 1e-05
        %v5140 = vadd.f32 %v5108, 1e-05
        %v5141 = vadd.f32 %v5109, 1e-05
        %v5142 = vadd.f32 %v5110, 1e-05
        %v5143 = vadd.f32 %v5111, 1e-05
        %v5144 = vadd.f32 %v5112, 1e-05
        %v5145 = vadd.f32 %v5113, 1e-05
        %v5146 = vadd.f32 %v5114, 1e-05
        %v5147 = vadd.f32 %v5115, 1e-05
        %v5148 = vadd.f32 %v5116, 1e-05
        %v5149 = vadd.f32 %v5117, 1e-05
        %v5150 = vadd.f32 %v5118, 1e-05
        %v5151 = vadd.f32 %v5119, 1e-05
        %v5152 = vadd.f32 %v5120, 1e-05
        %v5153 = vadd.f32 %v5121, 1e-05
        %v5154 = vadd.f32 %v5122, 1e-05
        %v5155 = vrsqrt.pop %v5123
        %v5156 = vmul.f32 %v5155, %v5123
        %v5157 = vmul.f32 %v5156, %v5155
        %v5158 = vmul.f32 0.5, %v5157
        %v5159 = vsub.f32 1.5, %v5158
        %v5160 = vmul.f32 %v5155, %v5159
        %vm5161 = vweird.f32 %v5123
        %vm5162 = vweird.f32 %v5155
        %vm5163 = vmor %vm5161, %vm5162
        %v5164 = vsel %vm5163, %v5155, %v5160
        %v5165 = vrsqrt.pop %v5124
        %v5166 = vmul.f32 %v5165, %v5124
        %v5167 = vmul.f32 %v5166, %v5165
        %v5168 = vmul.f32 0.5, %v5167
        %v5169 = vsub.f32 1.5, %v5168
        %v5170 = vmul.f32 %v5165, %v5169
        %vm5171 = vweird.f32 %v5124
        %vm5172 = vweird.f32 %v5165
        %vm5173 = vmor %vm5171, %vm5172
        %v5174 = vsel %vm5173, %v5165, %v5170
        %v5175 = vrsqrt.pop %v5125
        %v5176 = vmul.f32 %v5175, %v5125
        %v5177 = vmul.f32 %v5176, %v5175
        %v5178 = vmul.f32 0.5, %v5177
        %v5179 = vsub.f32 1.5, %v5178
        %v5180 = vmul.f32 %v5175, %v5179
        %vm5181 = vweird.f32 %v5125
        %vm5182 = vweird.f32 %v5175
        %vm5183 = vmor %vm5181, %vm5182
        %v5184 = vsel %vm5183, %v5175, %v5180
        %v5185 = vrsqrt.pop %v5126
        %v5186 = vmul.f32 %v5185, %v5126
        %v5187 = vmul.f32 %v5186, %v5185
        %v5188 = vmul.f32 0.5, %v5187
        %v5189 = vsub.f32 1.5, %v5188
        %v5190 = vmul.f32 %v5185, %v5189
        %vm5191 = vweird.f32 %v5126
        %vm5192 = vweird.f32 %v5185
        %vm5193 = vmor %vm5191, %vm5192
        %v5194 = vsel %vm5193, %v5185, %v5190
        %v5195 = vrsqrt.pop %v5127
        %v5196 = vmul.f32 %v5195, %v5127
        %v5197 = vmul.f32 %v5196, %v5195
        %v5198 = vmul.f32 0.5, %v5197
        %v5199 = vsub.f32 1.5, %v5198
        %v5200 = vmul.f32 %v5195, %v5199
        %vm5201 = vweird.f32 %v5127
        %vm5202 = vweird.f32 %v5195
        %vm5203 = vmor %vm5201, %vm5202
        %v5204 = vsel %vm5203, %v5195, %v5200
        %v5205 = vrsqrt.pop %v5128
        %v5206 = vmul.f32 %v5205, %v5128
        %v5207 = vmul.f32 %v5206, %v5205
        %v5208 = vmul.f32 0.5, %v5207
        %v5209 = vsub.f32 1.5, %v5208
        %v5210 = vmul.f32 %v5205, %v5209
        %vm5211 = vweird.f32 %v5128
        %vm5212 = vweird.f32 %v5205
        %vm5213 = vmor %vm5211, %vm5212
        %v5214 = vsel %vm5213, %v5205, %v5210
        %v5215 = vrsqrt.pop %v5129
        %v5216 = vmul.f32 %v5215, %v5129
        %v5217 = vmul.f32 %v5216, %v5215
        %v5218 = vmul.f32 0.5, %v5217
        %v5219 = vsub.f32 1.5, %v5218
        %v5220 = vmul.f32 %v5215, %v5219
        %vm5221 = vweird.f32 %v5129
        %vm5222 = vweird.f32 %v5215
        %vm5223 = vmor %vm5221, %vm5222
        %v5224 = vsel %vm5223, %v5215, %v5220
        %v5225 = vrsqrt.pop %v5130
        %v5226 = vmul.f32 %v5225, %v5130
        %v5227 = vmul.f32 %v5226, %v5225
        %v5228 = vmul.f32 0.5, %v5227
        %v5229 = vsub.f32 1.5, %v5228
        %v5230 = vmul.f32 %v5225, %v5229
        %vm5231 = vweird.f32 %v5130
        %vm5232 = vweird.f32 %v5225
        %vm5233 = vmor %vm5231, %vm5232
        %v5234 = vsel %vm5233, %v5225, %v5230
        %v5235 = vrsqrt.pop %v5131
        %v5236 = vmul.f32 %v5235, %v5131
        %v5237 = vmul.f32 %v5236, %v5235
        %v5238 = vmul.f32 0.5, %v5237
        %v5239 = vsub.f32 1.5, %v5238
        %v5240 = vmul.f32 %v5235, %v5239
        %vm5241 = vweird.f32 %v5131
        %vm5242 = vweird.f32 %v5235
        %vm5243 = vmor %vm5241, %vm5242
        %v5244 = vsel %vm5243, %v5235, %v5240
        %v5245 = vrsqrt.pop %v5132
        %v5246 = vmul.f32 %v5245, %v5132
        %v5247 = vmul.f32 %v5246, %v5245
        %v5248 = vmul.f32 0.5, %v5247
        %v5249 = vsub.f32 1.5, %v5248
        %v5250 = vmul.f32 %v5245, %v5249
        %vm5251 = vweird.f32 %v5132
        %vm5252 = vweird.f32 %v5245
        %vm5253 = vmor %vm5251, %vm5252
        %v5254 = vsel %vm5253, %v5245, %v5250
        %v5255 = vrsqrt.pop %v5133
        %v5256 = vmul.f32 %v5255, %v5133
        %v5257 = vmul.f32 %v5256, %v5255
        %v5258 = vmul.f32 0.5, %v5257
        %v5259 = vsub.f32 1.5, %v5258
        %v5260 = vmul.f32 %v5255, %v5259
        %vm5261 = vweird.f32 %v5133
        %vm5262 = vweird.f32 %v5255
        %vm5263 = vmor %vm5261, %vm5262
        %v5264 = vsel %vm5263, %v5255, %v5260
        %v5265 = vrsqrt.pop %v5134
        %v5266 = vmul.f32 %v5265, %v5134
        %v5267 = vmul.f32 %v5266, %v5265
        %v5268 = vmul.f32 0.5, %v5267
        %v5269 = vsub.f32 1.5, %v5268
        %v5270 = vmul.f32 %v5265, %v5269
        %vm5271 = vweird.f32 %v5134
        %vm5272 = vweird.f32 %v5265
        %vm5273 = vmor %vm5271, %vm5272
        %v5274 = vsel %vm5273, %v5265, %v5270
        %v5275 = vrsqrt.pop %v5135
        %v5276 = vmul.f32 %v5275, %v5135
        %v5277 = vmul.f32 %v5276, %v5275
        %v5278 = vmul.f32 0.5, %v5277
        %v5279 = vsub.f32 1.5, %v5278
        %v5280 = vmul.f32 %v5275, %v5279
        %vm5281 = vweird.f32 %v5135
        %vm5282 = vweird.f32 %v5275
        %vm5283 = vmor %vm5281, %vm5282
        %v5284 = vsel %vm5283, %v5275, %v5280
        %v5285 = vrsqrt.pop %v5136
        %v5286 = vmul.f32 %v5285, %v5136
        %v5287 = vmul.f32 %v5286, %v5285
        %v5288 = vmul.f32 0.5, %v5287
        %v5289 = vsub.f32 1.5, %v5288
        %v5290 = vmul.f32 %v5285, %v5289
        %vm5291 = vweird.f32 %v5136
        %vm5292 = vweird.f32 %v5285
        %vm5293 = vmor %vm5291, %vm5292
        %v5294 = vsel %vm5293, %v5285, %v5290
        %v5295 = vrsqrt.pop %v5137
        %v5296 = vmul.f32 %v5295, %v5137
        %v5297 = vmul.f32 %v5296, %v5295
        %v5298 = vmul.f32 0.5, %v5297
        %v5299 = vsub.f32 1.5, %v5298
        %v5300 = vmul.f32 %v5295, %v5299
        %vm5301 = vweird.f32 %v5137
        %vm5302 = vweird.f32 %v5295
        %vm5303 = vmor %vm5301, %vm5302
        %v5304 = vsel %vm5303, %v5295, %v5300
        %v5305 = vrsqrt.pop %v5138
        %v5306 = vmul.f32 %v5305, %v5138
        %v5307 = vmul.f32 %v5306, %v5305
        %v5308 = vmul.f32 0.5, %v5307
        %v5309 = vsub.f32 1.5, %v5308
        %v5310 = vmul.f32 %v5305, %v5309
        %vm5311 = vweird.f32 %v5138
        %vm5312 = vweird.f32 %v5305
        %vm5313 = vmor %vm5311, %vm5312
        %v5314 = vsel %vm5313, %v5305, %v5310
        %v5315 = vrsqrt.pop %v5139
        %v5316 = vmul.f32 %v5315, %v5139
        %v5317 = vmul.f32 %v5316, %v5315
        %v5318 = vmul.f32 0.5, %v5317
        %v5319 = vsub.f32 1.5, %v5318
        %v5320 = vmul.f32 %v5315, %v5319
        %vm5321 = vweird.f32 %v5139
        %vm5322 = vweird.f32 %v5315
        %vm5323 = vmor %vm5321, %vm5322
        %v5324 = vsel %vm5323, %v5315, %v5320
        %v5325 = vrsqrt.pop %v5140
        %v5326 = vmul.f32 %v5325, %v5140
        %v5327 = vmul.f32 %v5326, %v5325
        %v5328 = vmul.f32 0.5, %v5327
        %v5329 = vsub.f32 1.5, %v5328
        %v5330 = vmul.f32 %v5325, %v5329
        %vm5331 = vweird.f32 %v5140
        %vm5332 = vweird.f32 %v5325
        %vm5333 = vmor %vm5331, %vm5332
        %v5334 = vsel %vm5333, %v5325, %v5330
        %v5335 = vrsqrt.pop %v5141
        %v5336 = vmul.f32 %v5335, %v5141
        %v5337 = vmul.f32 %v5336, %v5335
        %v5338 = vmul.f32 0.5, %v5337
        %v5339 = vsub.f32 1.5, %v5338
        %v5340 = vmul.f32 %v5335, %v5339
        %vm5341 = vweird.f32 %v5141
        %vm5342 = vweird.f32 %v5335
        %vm5343 = vmor %vm5341, %vm5342
        %v5344 = vsel %vm5343, %v5335, %v5340
        %v5345 = vrsqrt.pop %v5142
        %v5346 = vmul.f32 %v5345, %v5142
        %v5347 = vmul.f32 %v5346, %v5345
        %v5348 = vmul.f32 0.5, %v5347
        %v5349 = vsub.f32 1.5, %v5348
        %v5350 = vmul.f32 %v5345, %v5349
        %vm5351 = vweird.f32 %v5142
        %vm5352 = vweird.f32 %v5345
        %vm5353 = vmor %vm5351, %vm5352
        %v5354 = vsel %vm5353, %v5345, %v5350
        %v5355 = vrsqrt.pop %v5143
        %v5356 = vmul.f32 %v5355, %v5143
        %v5357 = vmul.f32 %v5356, %v5355
        %v5358 = vmul.f32 0.5, %v5357
        %v5359 = vsub.f32 1.5, %v5358
        %v5360 = vmul.f32 %v5355, %v5359
        %vm5361 = vweird.f32 %v5143
        %vm5362 = vweird.f32 %v5355
        %vm5363 = vmor %vm5361, %vm5362
        %v5364 = vsel %vm5363, %v5355, %v5360
        %v5365 = vrsqrt.pop %v5144
        %v5366 = vmul.f32 %v5365, %v5144
        %v5367 = vmul.f32 %v5366, %v5365
        %v5368 = vmul.f32 0.5, %v5367
        %v5369 = vsub.f32 1.5, %v5368
        %v5370 = vmul.f32 %v5365, %v5369
        %vm5371 = vweird.f32 %v5144
        %vm5372 = vweird.f32 %v5365
        %vm5373 = vmor %vm5371, %vm5372
        %v5374 = vsel %vm5373, %v5365, %v5370
        %v5375 = vrsqrt.pop %v5145
        %v5376 = vmul.f32 %v5375, %v5145
        %v5377 = vmul.f32 %v5376, %v5375
        %v5378 = vmul.f32 0.5, %v5377
        %v5379 = vsub.f32 1.5, %v5378
        %v5380 = vmul.f32 %v5375, %v5379
        %vm5381 = vweird.f32 %v5145
        %vm5382 = vweird.f32 %v5375
        %vm5383 = vmor %vm5381, %vm5382
        %v5384 = vsel %vm5383, %v5375, %v5380
        %v5385 = vrsqrt.pop %v5146
        %v5386 = vmul.f32 %v5385, %v5146
        %v5387 = vmul.f32 %v5386, %v5385
        %v5388 = vmul.f32 0.5, %v5387
        %v5389 = vsub.f32 1.5, %v5388
        %v5390 = vmul.f32 %v5385, %v5389
        %vm5391 = vweird.f32 %v5146
        %vm5392 = vweird.f32 %v5385
        %vm5393 = vmor %vm5391, %vm5392
        %v5394 = vsel %vm5393, %v5385, %v5390
        %v5395 = vrsqrt.pop %v5147
        %v5396 = vmul.f32 %v5395, %v5147
        %v5397 = vmul.f32 %v5396, %v5395
        %v5398 = vmul.f32 0.5, %v5397
        %v5399 = vsub.f32 1.5, %v5398
        %v5400 = vmul.f32 %v5395, %v5399
        %vm5401 = vweird.f32 %v5147
        %vm5402 = vweird.f32 %v5395
        %vm5403 = vmor %vm5401, %vm5402
        %v5404 = vsel %vm5403, %v5395, %v5400
        %v5405 = vrsqrt.pop %v5148
        %v5406 = vmul.f32 %v5405, %v5148
        %v5407 = vmul.f32 %v5406, %v5405
        %v5408 = vmul.f32 0.5, %v5407
        %v5409 = vsub.f32 1.5, %v5408
        %v5410 = vmul.f32 %v5405, %v5409
        %vm5411 = vweird.f32 %v5148
        %vm5412 = vweird.f32 %v5405
        %vm5413 = vmor %vm5411, %vm5412
        %v5414 = vsel %vm5413, %v5405, %v5410
        %v5415 = vrsqrt.pop %v5149
        %v5416 = vmul.f32 %v5415, %v5149
        %v5417 = vmul.f32 %v5416, %v5415
        %v5418 = vmul.f32 0.5, %v5417
        %v5419 = vsub.f32 1.5, %v5418
        %v5420 = vmul.f32 %v5415, %v5419
        %vm5421 = vweird.f32 %v5149
        %vm5422 = vweird.f32 %v5415
        %vm5423 = vmor %vm5421, %vm5422
        %v5424 = vsel %vm5423, %v5415, %v5420
        %v5425 = vrsqrt.pop %v5150
        %v5426 = vmul.f32 %v5425, %v5150
        %v5427 = vmul.f32 %v5426, %v5425
        %v5428 = vmul.f32 0.5, %v5427
        %v5429 = vsub.f32 1.5, %v5428
        %v5430 = vmul.f32 %v5425, %v5429
        %vm5431 = vweird.f32 %v5150
        %vm5432 = vweird.f32 %v5425
        %vm5433 = vmor %vm5431, %vm5432
        %v5434 = vsel %vm5433, %v5425, %v5430
        %v5435 = vrsqrt.pop %v5151
        %v5436 = vmul.f32 %v5435, %v5151
        %v5437 = vmul.f32 %v5436, %v5435
        %v5438 = vmul.f32 0.5, %v5437
        %v5439 = vsub.f32 1.5, %v5438
        %v5440 = vmul.f32 %v5435, %v5439
        %vm5441 = vweird.f32 %v5151
        %vm5442 = vweird.f32 %v5435
        %vm5443 = vmor %vm5441, %vm5442
        %v5444 = vsel %vm5443, %v5435, %v5440
        %v5445 = vrsqrt.pop %v5152
        %v5446 = vmul.f32 %v5445, %v5152
        %v5447 = vmul.f32 %v5446, %v5445
        %v5448 = vmul.f32 0.5, %v5447
        %v5449 = vsub.f32 1.5, %v5448
        %v5450 = vmul.f32 %v5445, %v5449
        %vm5451 = vweird.f32 %v5152
        %vm5452 = vweird.f32 %v5445
        %vm5453 = vmor %vm5451, %vm5452
        %v5454 = vsel %vm5453, %v5445, %v5450
        %v5455 = vrsqrt.pop %v5153
        %v5456 = vmul.f32 %v5455, %v5153
        %v5457 = vmul.f32 %v5456, %v5455
        %v5458 = vmul.f32 0.5, %v5457
        %v5459 = vsub.f32 1.5, %v5458
        %v5460 = vmul.f32 %v5455, %v5459
        %vm5461 = vweird.f32 %v5153
        %vm5462 = vweird.f32 %v5455
        %vm5463 = vmor %vm5461, %vm5462
        %v5464 = vsel %vm5463, %v5455, %v5460
        %v5465 = vrsqrt.pop %v5154
        %v5466 = vmul.f32 %v5465, %v5154
        %v5467 = vmul.f32 %v5466, %v5465
        %v5468 = vmul.f32 0.5, %v5467
        %v5469 = vsub.f32 1.5, %v5468
        %v5470 = vmul.f32 %v5465, %v5469
        %vm5471 = vweird.f32 %v5154
        %vm5472 = vweird.f32 %v5465
        %vm5473 = vmor %vm5471, %vm5472
        %v5474 = vsel %vm5473, %v5465, %v5470
        %v5475 = vmul.f32 %v4963, %v5164
        %v5476 = vmul.f32 %v4964, %v5174
        %v5477 = vmul.f32 %v4965, %v5184
        %v5478 = vmul.f32 %v4966, %v5194
        %v5479 = vmul.f32 %v4967, %v5204
        %v5480 = vmul.f32 %v4968, %v5214
        %v5481 = vmul.f32 %v4969, %v5224
        %v5482 = vmul.f32 %v4970, %v5234
        %v5483 = vmul.f32 %v4971, %v5244
        %v5484 = vmul.f32 %v4972, %v5254
        %v5485 = vmul.f32 %v4973, %v5264
        %v5486 = vmul.f32 %v4974, %v5274
        %v5487 = vmul.f32 %v4975, %v5284
        %v5488 = vmul.f32 %v4976, %v5294
        %v5489 = vmul.f32 %v4977, %v5304
        %v5490 = vmul.f32 %v4978, %v5314
        %v5491 = vmul.f32 %v4979, %v5324
        %v5492 = vmul.f32 %v4980, %v5334
        %v5493 = vmul.f32 %v4981, %v5344
        %v5494 = vmul.f32 %v4982, %v5354
        %v5495 = vmul.f32 %v4983, %v5364
        %v5496 = vmul.f32 %v4984, %v5374
        %v5497 = vmul.f32 %v4985, %v5384
        %v5498 = vmul.f32 %v4986, %v5394
        %v5499 = vmul.f32 %v4987, %v5404
        %v5500 = vmul.f32 %v4988, %v5414
        %v5501 = vmul.f32 %v4989, %v5424
        %v5502 = vmul.f32 %v4990, %v5434
        %v5503 = vmul.f32 %v4991, %v5444
        %v5504 = vmul.f32 %v4992, %v5454
        %v5505 = vmul.f32 %v4993, %v5464
        %v5506 = vmul.f32 %v4994, %v5474
        %v5508 = vperm.slane %v4865, 0
        %v5510 = vmul.f32 %v5475, %v5508
        %v5511 = vmul.f32 %v5476, %v5508
        %v5512 = vmul.f32 %v5477, %v5508
        %v5513 = vmul.f32 %v5478, %v5508
        %v5514 = vmul.f32 %v5479, %v5508
        %v5515 = vmul.f32 %v5480, %v5508
        %v5516 = vmul.f32 %v5481, %v5508
        %v5517 = vmul.f32 %v5482, %v5508
        %v5518 = vmul.f32 %v5483, %v5508
        %v5519 = vmul.f32 %v5484, %v5508
        %v5520 = vmul.f32 %v5485, %v5508
        %v5521 = vmul.f32 %v5486, %v5508
        %v5522 = vmul.f32 %v5487, %v5508
        %v5523 = vmul.f32 %v5488, %v5508
        %v5524 = vmul.f32 %v5489, %v5508
        %v5525 = vmul.f32 %v5490, %v5508
        %v5526 = vmul.f32 %v5491, %v5508
        %v5527 = vmul.f32 %v5492, %v5508
        %v5528 = vmul.f32 %v5493, %v5508
        %v5529 = vmul.f32 %v5494, %v5508
        %v5530 = vmul.f32 %v5495, %v5508
        %v5531 = vmul.f32 %v5496, %v5508
        %v5532 = vmul.f32 %v5497, %v5508
        %v5533 = vmul.f32 %v5498, %v5508
        %v5534 = vmul.f32 %v5499, %v5508
        %v5535 = vmul.f32 %v5500, %v5508
        %v5536 = vmul.f32 %v5501, %v5508
        %v5537 = vmul.f32 %v5502, %v5508
        %v5538 = vmul.f32 %v5503, %v5508
        %v5539 = vmul.f32 %v5504, %v5508
        %v5540 = vmul.f32 %v5505, %v5508
        %v5541 = vmul.f32 %v5506, %v5508
        %v5543 = vperm.slane %v4866, 0
        %v5545 = vadd.f32 %v5510, %v5543
        %v5546 = vadd.f32 %v5511, %v5543
        %v5547 = vadd.f32 %v5512, %v5543
        %v5548 = vadd.f32 %v5513, %v5543
        %v5549 = vadd.f32 %v5514, %v5543
        %v5550 = vadd.f32 %v5515, %v5543
        %v5551 = vadd.f32 %v5516, %v5543
        %v5552 = vadd.f32 %v5517, %v5543
        %v5553 = vadd.f32 %v5518, %v5543
        %v5554 = vadd.f32 %v5519, %v5543
        %v5555 = vadd.f32 %v5520, %v5543
        %v5556 = vadd.f32 %v5521, %v5543
        %v5557 = vadd.f32 %v5522, %v5543
        %v5558 = vadd.f32 %v5523, %v5543
        %v5559 = vadd.f32 %v5524, %v5543
        %v5560 = vadd.f32 %v5525, %v5543
        %v5561 = vadd.f32 %v5526, %v5543
        %v5562 = vadd.f32 %v5527, %v5543
        %v5563 = vadd.f32 %v5528, %v5543
        %v5564 = vadd.f32 %v5529, %v5543
        %v5565 = vadd.f32 %v5530, %v5543
        %v5566 = vadd.f32 %v5531, %v5543
        %v5567 = vadd.f32 %v5532, %v5543
        %v5568 = vadd.f32 %v5533, %v5543
        %v5569 = vadd.f32 %v5534, %v5543
        %v5570 = vadd.f32 %v5535, %v5543
        %v5571 = vadd.f32 %v5536, %v5543
        %v5572 = vadd.f32 %v5537, %v5543
        %v5573 = vadd.f32 %v5538, %v5543
        %v5574 = vadd.f32 %v5539, %v5543
        %v5575 = vadd.f32 %v5540, %v5543
        %v5576 = vadd.f32 %v5541, %v5543
        %v5577 = vpack.c.bf16 %v5546, %v5545
        %v5578 = vpack.c.bf16 %v5548, %v5547
        %v5579 = vpack.c.bf16 %v5550, %v5549
        %v5580 = vpack.c.bf16 %v5552, %v5551
        %v5581 = vpack.c.bf16 %v5554, %v5553
        %v5582 = vpack.c.bf16 %v5556, %v5555
        %v5583 = vpack.c.bf16 %v5558, %v5557
        %v5584 = vpack.c.bf16 %v5560, %v5559
        %v5585 = vpack.c.bf16 %v5562, %v5561
        %v5586 = vpack.c.bf16 %v5564, %v5563
        %v5587 = vpack.c.bf16 %v5566, %v5565
        %v5588 = vpack.c.bf16 %v5568, %v5567
        %v5589 = vpack.c.bf16 %v5570, %v5569
        %v5590 = vpack.c.bf16 %v5572, %v5571
        %v5591 = vpack.c.bf16 %v5574, %v5573
        %v5592 = vpack.c.bf16 %v5576, %v5575
        %v5593 = vld [vmem:[%s583] sm:$0xff]
        %v5594 = vld [vmem:[%s583 + $0x8] sm:$0xff]
        %v5595 = vld [vmem:[%s583 + $0x10] sm:$0xff]
        %v5596 = vld [vmem:[%s583 + $0x18] sm:$0xff]
        %v5597 = vld [vmem:[%s583 + $0x20] sm:$0xff]
        %v5598 = vld [vmem:[%s583 + $0x28] sm:$0xff]
        %v5599 = vld [vmem:[%s583 + $0x30] sm:$0xff]
        %v5600 = vld [vmem:[%s583 + $0x38] sm:$0xff]
        %v5601 = vld [vmem:[%s583 + $0x40] sm:$0xff]
        %v5602 = vld [vmem:[%s583 + $0x48] sm:$0xff]
        %v5603 = vld [vmem:[%s583 + $0x50] sm:$0xff]
        %v5604 = vld [vmem:[%s583 + $0x58] sm:$0xff]
        %v5605 = vld [vmem:[%s583 + $0x60] sm:$0xff]
        %v5606 = vld [vmem:[%s583 + $0x68] sm:$0xff]
        %v5607 = vld [vmem:[%s583 + $0x70] sm:$0xff]
        %v5608 = vld [vmem:[%s583 + $0x78] sm:$0xff]
        %v5609 = vld [vmem:[%s587] sm:$0x3]
        %v5611 = vperm.slane %v5609, 0
        %v5612 = vperm.slane %v5609, 1
        %v5631 = vunpack.c.l.b16 %v5593
        %v5632 = vunpack.c.h.b16 %v5593
        %v5633 = vunpack.c.l.b16 %v5594
        %v5634 = vunpack.c.h.b16 %v5594
        %v5635 = vunpack.c.l.b16 %v5595
        %v5636 = vunpack.c.h.b16 %v5595
        %v5637 = vunpack.c.l.b16 %v5596
        %v5638 = vunpack.c.h.b16 %v5596
        %v5639 = vunpack.c.l.b16 %v5597
        %v5640 = vunpack.c.h.b16 %v5597
        %v5641 = vunpack.c.l.b16 %v5598
        %v5642 = vunpack.c.h.b16 %v5598
        %v5643 = vunpack.c.l.b16 %v5599
        %v5644 = vunpack.c.h.b16 %v5599
        %v5645 = vunpack.c.l.b16 %v5600
        %v5646 = vunpack.c.h.b16 %v5600
        %v5647 = vunpack.c.l.b16 %v5601
        %v5648 = vunpack.c.h.b16 %v5601
        %v5649 = vunpack.c.l.b16 %v5602
        %v5650 = vunpack.c.h.b16 %v5602
        %v5651 = vunpack.c.l.b16 %v5603
        %v5652 = vunpack.c.h.b16 %v5603
        %v5653 = vunpack.c.l.b16 %v5604
        %v5654 = vunpack.c.h.b16 %v5604
        %v5655 = vunpack.c.l.b16 %v5605
        %v5656 = vunpack.c.h.b16 %v5605
        %v5657 = vunpack.c.l.b16 %v5606
        %v5658 = vunpack.c.h.b16 %v5606
        %v5659 = vunpack.c.l.b16 %v5607
        %v5660 = vunpack.c.h.b16 %v5607
        %v5661 = vunpack.c.l.b16 %v5608
        %v5662 = vunpack.c.h.b16 %v5608
        %v5663 = vpack.c.b16 %v5633, %v5631
        %v5664 = vpack.c.b16 %v5634, %v5632
        %v5665 = vpack.c.b16 %v5637, %v5635
        %v5666 = vpack.c.b16 %v5638, %v5636
        %v5667 = vpack.c.b16 %v5641, %v5639
        %v5668 = vpack.c.b16 %v5642, %v5640
        %v5669 = vpack.c.b16 %v5645, %v5643
        %v5670 = vpack.c.b16 %v5646, %v5644
        %v5671 = vpack.c.b16 %v5649, %v5647
        %v5672 = vpack.c.b16 %v5650, %v5648
        %v5673 = vpack.c.b16 %v5653, %v5651
        %v5674 = vpack.c.b16 %v5654, %v5652
        %v5675 = vpack.c.b16 %v5657, %v5655
        %v5676 = vpack.c.b16 %v5658, %v5656
        %v5677 = vpack.c.b16 %v5661, %v5659
        %v5678 = vpack.c.b16 %v5662, %v5660
        %5695 = vmatpush.bf16.msra.mxu0 %v5677
        %5696 = vmatpush.bf16.msra.mxu0 %v5675
        %5697 = vmatpush.bf16.msra.mxu0 %v5673
        %5698 = vmatpush.bf16.msra.mxu0 %v5671
        %5699 = vmatpush.bf16.msra.mxu0 %v5669
        %5700 = vmatpush.bf16.msra.mxu0 %v5667
        %5701 = vmatpush.bf16.msra.mxu0 %v5665
        %5702 = vmatpush.bf16.msra.mxu0 %v5663
        %5703 = vmatmul.bf16.gmra.mxu0 %v5577
        %v5704 = vpop.f32.mrf.mxu0
        %v5705 = vadd.f32 %v5611, %v5704
        %v5706 = vpop.f32.mrf.mxu0
        %v5707 = vadd.f32 %v5611, %v5706
        %5708 = vmatmul.bf16.gmra.mxu0 %v5578
        %v5709 = vpop.f32.mrf.mxu0
        %v5710 = vadd.f32 %v5611, %v5709
        %v5711 = vpop.f32.mrf.mxu0
        %v5712 = vadd.f32 %v5611, %v5711
        %5713 = vmatmul.bf16.gmra.mxu0 %v5579
        %v5714 = vpop.f32.mrf.mxu0
        %v5715 = vadd.f32 %v5611, %v5714
        %v5716 = vpop.f32.mrf.mxu0
        %v5717 = vadd.f32 %v5611, %v5716
        %5718 = vmatmul.bf16.gmra.mxu0 %v5580
        %v5719 = vpop.f32.mrf.mxu0
        %v5720 = vadd.f32 %v5611, %v5719
        %v5721 = vpop.f32.mrf.mxu0
        %v5722 = vadd.f32 %v5611, %v5721
        %5723 = vmatmul.bf16.gmra.mxu0 %v5581
        %v5724 = vpop.f32.mrf.mxu0
        %v5725 = vadd.f32 %v5611, %v5724
        %v5726 = vpop.f32.mrf.mxu0
        %v5727 = vadd.f32 %v5611, %v5726
        %5728 = vmatmul.bf16.gmra.mxu0 %v5582
        %v5729 = vpop.f32.mrf.mxu0
        %v5730 = vadd.f32 %v5611, %v5729
        %v5731 = vpop.f32.mrf.mxu0
        %v5732 = vadd.f32 %v5611, %v5731
        %5733 = vmatmul.bf16.gmra.mxu0 %v5583
        %v5734 = vpop.f32.mrf.mxu0
        %v5735 = vadd.f32 %v5611, %v5734
        %v5736 = vpop.f32.mrf.mxu0
        %v5737 = vadd.f32 %v5611, %v5736
        %5738 = vmatmul.bf16.gmra.mxu0 %v5584
        %v5739 = vpop.f32.mrf.mxu0
        %v5740 = vadd.f32 %v5611, %v5739
        %v5741 = vpop.f32.mrf.mxu0
        %v5742 = vadd.f32 %v5611, %v5741
        %5743 = vmatmul.bf16.gmra.mxu0 %v5585
        %v5744 = vpop.f32.mrf.mxu0
        %v5745 = vadd.f32 %v5611, %v5744
        %v5746 = vpop.f32.mrf.mxu0
        %v5747 = vadd.f32 %v5611, %v5746
        %5748 = vmatmul.bf16.gmra.mxu0 %v5586
        %v5749 = vpop.f32.mrf.mxu0
        %v5750 = vadd.f32 %v5611, %v5749
        %v5751 = vpop.f32.mrf.mxu0
        %v5752 = vadd.f32 %v5611, %v5751
        %5753 = vmatmul.bf16.gmra.mxu0 %v5587
        %v5754 = vpop.f32.mrf.mxu0
        %v5755 = vadd.f32 %v5611, %v5754
        %v5756 = vpop.f32.mrf.mxu0
        %v5757 = vadd.f32 %v5611, %v5756
        %5758 = vmatmul.bf16.gmra.mxu0 %v5588
        %v5759 = vpop.f32.mrf.mxu0
        %v5760 = vadd.f32 %v5611, %v5759
        %v5761 = vpop.f32.mrf.mxu0
        %v5762 = vadd.f32 %v5611, %v5761
        %5763 = vmatmul.bf16.gmra.mxu0 %v5589
        %v5764 = vpop.f32.mrf.mxu0
        %v5765 = vadd.f32 %v5611, %v5764
        %v5766 = vpop.f32.mrf.mxu0
        %v5767 = vadd.f32 %v5611, %v5766
        %5768 = vmatmul.bf16.gmra.mxu0 %v5590
        %v5769 = vpop.f32.mrf.mxu0
        %v5770 = vadd.f32 %v5611, %v5769
        %v5771 = vpop.f32.mrf.mxu0
        %v5772 = vadd.f32 %v5611, %v5771
        %5773 = vmatmul.bf16.gmra.mxu0 %v5591
        %v5774 = vpop.f32.mrf.mxu0
        %v5775 = vadd.f32 %v5611, %v5774
        %v5776 = vpop.f32.mrf.mxu0
        %v5777 = vadd.f32 %v5611, %v5776
        %5778 = vmatmul.bf16.gmra.mxu0 %v5592
        %v5779 = vpop.f32.mrf.mxu0
        %v5780 = vadd.f32 %v5611, %v5779
        %v5781 = vpop.f32.mrf.mxu0
        %v5782 = vadd.f32 %v5611, %v5781
        %5783 = vdwg.mxu0
        %5784 = vmatpush.bf16.msra.mxu0 %v5678
        %5785 = vmatpush.bf16.msra.mxu0 %v5676
        %5786 = vmatpush.bf16.msra.mxu0 %v5674
        %5787 = vmatpush.bf16.msra.mxu0 %v5672
        %5788 = vmatpush.bf16.msra.mxu0 %v5670
        %5789 = vmatpush.bf16.msra.mxu0 %v5668
        %5790 = vmatpush.bf16.msra.mxu0 %v5666
        %5791 = vmatpush.bf16.msra.mxu0 %v5664
        %5792 = vmatmul.bf16.gmra.mxu0 %v5577
        %v5793 = vpop.f32.mrf.mxu0
        %v5794 = vadd.f32 %v5612, %v5793
        %v5795 = vpop.f32.mrf.mxu0
        %v5796 = vadd.f32 %v5612, %v5795
        %5797 = vmatmul.bf16.gmra.mxu0 %v5578
        %v5798 = vpop.f32.mrf.mxu0
        %v5799 = vadd.f32 %v5612, %v5798
        %v5800 = vpop.f32.mrf.mxu0
        %v5801 = vadd.f32 %v5612, %v5800
        %5802 = vmatmul.bf16.gmra.mxu0 %v5579
        %v5803 = vpop.f32.mrf.mxu0
        %v5804 = vadd.f32 %v5612, %v5803
        %v5805 = vpop.f32.mrf.mxu0
        %v5806 = vadd.f32 %v5612, %v5805
        %5807 = vmatmul.bf16.gmra.mxu0 %v5580
        %v5808 = vpop.f32.mrf.mxu0
        %v5809 = vadd.f32 %v5612, %v5808
        %v5810 = vpop.f32.mrf.mxu0
        %v5811 = vadd.f32 %v5612, %v5810
        %5812 = vmatmul.bf16.gmra.mxu0 %v5581
        %v5813 = vpop.f32.mrf.mxu0
        %v5814 = vadd.f32 %v5612, %v5813
        %v5815 = vpop.f32.mrf.mxu0
        %v5816 = vadd.f32 %v5612, %v5815
        %5817 = vmatmul.bf16.gmra.mxu0 %v5582
        %v5818 = vpop.f32.mrf.mxu0
        %v5819 = vadd.f32 %v5612, %v5818
        %v5820 = vpop.f32.mrf.mxu0
        %v5821 = vadd.f32 %v5612, %v5820
        %5822 = vmatmul.bf16.gmra.mxu0 %v5583
        %v5823 = vpop.f32.mrf.mxu0
        %v5824 = vadd.f32 %v5612, %v5823
        %v5825 = vpop.f32.mrf.mxu0
        %v5826 = vadd.f32 %v5612, %v5825
        %5827 = vmatmul.bf16.gmra.mxu0 %v5584
        %v5828 = vpop.f32.mrf.mxu0
        %v5829 = vadd.f32 %v5612, %v5828
        %v5830 = vpop.f32.mrf.mxu0
        %v5831 = vadd.f32 %v5612, %v5830
        %5832 = vmatmul.bf16.gmra.mxu0 %v5585
        %v5833 = vpop.f32.mrf.mxu0
        %v5834 = vadd.f32 %v5612, %v5833
        %v5835 = vpop.f32.mrf.mxu0
        %v5836 = vadd.f32 %v5612, %v5835
        %5837 = vmatmul.bf16.gmra.mxu0 %v5586
        %v5838 = vpop.f32.mrf.mxu0
        %v5839 = vadd.f32 %v5612, %v5838
        %v5840 = vpop.f32.mrf.mxu0
        %v5841 = vadd.f32 %v5612, %v5840
        %5842 = vmatmul.bf16.gmra.mxu0 %v5587
        %v5843 = vpop.f32.mrf.mxu0
        %v5844 = vadd.f32 %v5612, %v5843
        %v5845 = vpop.f32.mrf.mxu0
        %v5846 = vadd.f32 %v5612, %v5845
        %5847 = vmatmul.bf16.gmra.mxu0 %v5588
        %v5848 = vpop.f32.mrf.mxu0
        %v5849 = vadd.f32 %v5612, %v5848
        %v5850 = vpop.f32.mrf.mxu0
        %v5851 = vadd.f32 %v5612, %v5850
        %5852 = vmatmul.bf16.gmra.mxu0 %v5589
        %v5853 = vpop.f32.mrf.mxu0
        %v5854 = vadd.f32 %v5612, %v5853
        %v5855 = vpop.f32.mrf.mxu0
        %v5856 = vadd.f32 %v5612, %v5855
        %5857 = vmatmul.bf16.gmra.mxu0 %v5590
        %v5858 = vpop.f32.mrf.mxu0
        %v5859 = vadd.f32 %v5612, %v5858
        %v5860 = vpop.f32.mrf.mxu0
        %v5861 = vadd.f32 %v5612, %v5860
        %5862 = vmatmul.bf16.gmra.mxu0 %v5591
        %v5863 = vpop.f32.mrf.mxu0
        %v5864 = vadd.f32 %v5612, %v5863
        %v5865 = vpop.f32.mrf.mxu0
        %v5866 = vadd.f32 %v5612, %v5865
        %5867 = vmatmul.bf16.gmra.mxu0 %v5592
        %v5868 = vpop.f32.mrf.mxu0
        %v5869 = vadd.f32 %v5612, %v5868
        %v5870 = vpop.f32.mrf.mxu0
        %v5871 = vadd.f32 %v5612, %v5870
        %5872 = vdwg.mxu0
        %v5873 = vmul.f32 %v5705, 0.5
        %v5874 = vmul.f32 %v5794, 0.5
        %v5875 = vmul.f32 %v5707, 0.5
        %v5876 = vmul.f32 %v5796, 0.5
        %v5877 = vmul.f32 %v5710, 0.5
        %v5878 = vmul.f32 %v5799, 0.5
        %v5879 = vmul.f32 %v5712, 0.5
        %v5880 = vmul.f32 %v5801, 0.5
        %v5881 = vmul.f32 %v5715, 0.5
        %v5882 = vmul.f32 %v5804, 0.5
        %v5883 = vmul.f32 %v5717, 0.5
        %v5884 = vmul.f32 %v5806, 0.5
        %v5885 = vmul.f32 %v5720, 0.5
        %v5886 = vmul.f32 %v5809, 0.5
        %v5887 = vmul.f32 %v5722, 0.5
        %v5888 = vmul.f32 %v5811, 0.5
        %v5889 = vmul.f32 %v5725, 0.5
        %v5890 = vmul.f32 %v5814, 0.5
        %v5891 = vmul.f32 %v5727, 0.5
        %v5892 = vmul.f32 %v5816, 0.5
        %v5893 = vmul.f32 %v5730, 0.5
        %v5894 = vmul.f32 %v5819, 0.5
        %v5895 = vmul.f32 %v5732, 0.5
        %v5896 = vmul.f32 %v5821, 0.5
        %v5897 = vmul.f32 %v5735, 0.5
        %v5898 = vmul.f32 %v5824, 0.5
        %v5899 = vmul.f32 %v5737, 0.5
        %v5900 = vmul.f32 %v5826, 0.5
        %v5901 = vmul.f32 %v5740, 0.5
        %v5902 = vmul.f32 %v5829, 0.5
        %v5903 = vmul.f32 %v5742, 0.5
        %v5904 = vmul.f32 %v5831, 0.5
        %v5905 = vmul.f32 %v5745, 0.5
        %v5906 = vmul.f32 %v5834, 0.5
        %v5907 = vmul.f32 %v5747, 0.5
        %v5908 = vmul.f32 %v5836, 0.5
        %v5909 = vmul.f32 %v5750, 0.5
        %v5910 = vmul.f32 %v5839, 0.5
        %v5911 = vmul.f32 %v5752, 0.5
        %v5912 = vmul.f32 %v5841, 0.5
        %v5913 = vmul.f32 %v5755, 0.5
        %v5914 = vmul.f32 %v5844, 0.5
        %v5915 = vmul.f32 %v5757, 0.5
        %v5916 = vmul.f32 %v5846, 0.5
        %v5917 = vmul.f32 %v5760, 0.5
        %v5918 = vmul.f32 %v5849, 0.5
        %v5919 = vmul.f32 %v5762, 0.5
        %v5920 = vmul.f32 %v5851, 0.5
        %v5921 = vmul.f32 %v5765, 0.5
        %v5922 = vmul.f32 %v5854, 0.5
        %v5923 = vmul.f32 %v5767, 0.5
        %v5924 = vmul.f32 %v5856, 0.5
        %v5925 = vmul.f32 %v5770, 0.5
        %v5926 = vmul.f32 %v5859, 0.5
        %v5927 = vmul.f32 %v5772, 0.5
        %v5928 = vmul.f32 %v5861, 0.5
        %v5929 = vmul.f32 %v5775, 0.5
        %v5930 = vmul.f32 %v5864, 0.5
        %v5931 = vmul.f32 %v5777, 0.5
        %v5932 = vmul.f32 %v5866, 0.5
        %v5933 = vmul.f32 %v5780, 0.5
        %v5934 = vmul.f32 %v5869, 0.5
        %v5935 = vmul.f32 %v5782, 0.5
        %v5936 = vmul.f32 %v5871, 0.5
        %v5937 = vmul.f32 %v5705, 0.044715
        %v5938 = vmul.f32 %v5794, 0.044715
        %v5939 = vmul.f32 %v5707, 0.044715
        %v5940 = vmul.f32 %v5796, 0.044715
        %v5941 = vmul.f32 %v5710, 0.044715
        %v5942 = vmul.f32 %v5799, 0.044715
        %v5943 = vmul.f32 %v5712, 0.044715
        %v5944 = vmul.f32 %v5801, 0.044715
        %v5945 = vmul.f32 %v5715, 0.044715
        %v5946 = vmul.f32 %v5804, 0.044715
        %v5947 = vmul.f32 %v5717, 0.044715
        %v5948 = vmul.f32 %v5806, 0.044715
        %v5949 = vmul.f32 %v5720, 0.044715
        %v5950 = vmul.f32 %v5809, 0.044715
        %v5951 = vmul.f32 %v5722, 0.044715
        %v5952 = vmul.f32 %v5811, 0.044715
        %v5953 = vmul.f32 %v5725, 0.044715
        %v5954 = vmul.f32 %v5814, 0.044715
        %v5955 = vmul.f32 %v5727, 0.044715
        %v5956 = vmul.f32 %v5816, 0.044715
        %v5957 = vmul.f32 %v5730, 0.044715
        %v5958 = vmul.f32 %v5819, 0.044715
        %v5959 = vmul.f32 %v5732, 0.044715
        %v5960 = vmul.f32 %v5821, 0.044715
        %v5961 = vmul.f32 %v5735, 0.044715
        %v5962 = vmul.f32 %v5824, 0.044715
        %v5963 = vmul.f32 %v5737, 0.044715
        %v5964 = vmul.f32 %v5826, 0.044715
        %v5965 = vmul.f32 %v5740, 0.044715
        %v5966 = vmul.f32 %v5829, 0.044715
        %v5967 = vmul.f32 %v5742, 0.044715
        %v5968 = vmul.f32 %v5831, 0.044715
        %v5969 = vmul.f32 %v5745, 0.044715
        %v5970 = vmul.f32 %v5834, 0.044715
        %v5971 = vmul.f32 %v5747, 0.044715
        %v5972 = vmul.f32 %v5836, 0.044715
        %v5973 = vmul.f32 %v5750, 0.044715
        %v5974 = vmul.f32 %v5839, 0.044715
        %v5975 = vmul.f32 %v5752, 0.044715
        %v5976 = vmul.f32 %v5841, 0.044715
        %v5977 = vmul.f32 %v5755, 0.044715
        %v5978 = vmul.f32 %v5844, 0.044715
        %v5979 = vmul.f32 %v5757, 0.044715
        %v5980 = vmul.f32 %v5846, 0.044715
        %v5981 = vmul.f32 %v5760, 0.044715
        %v5982 = vmul.f32 %v5849, 0.044715
        %v5983 = vmul.f32 %v5762, 0.044715
        %v5984 = vmul.f32 %v5851, 0.044715
        %v5985 = vmul.f32 %v5765, 0.044715
        %v5986 = vmul.f32 %v5854, 0.044715
        %v5987 = vmul.f32 %v5767, 0.044715
        %v5988 = vmul.f32 %v5856, 0.044715
        %v5989 = vmul.f32 %v5770, 0.044715
        %v5990 = vmul.f32 %v5859, 0.044715
        %v5991 = vmul.f32 %v5772, 0.044715
        %v5992 = vmul.f32 %v5861, 0.044715
        %v5993 = vmul.f32 %v5775, 0.044715
        %v5994 = vmul.f32 %v5864, 0.044715
        %v5995 = vmul.f32 %v5777, 0.044715
        %v5996 = vmul.f32 %v5866, 0.044715
        %v5997 = vmul.f32 %v5780, 0.044715
        %v5998 = vmul.f32 %v5869, 0.044715
        %v5999 = vmul.f32 %v5782, 0.044715
        %v6000 = vmul.f32 %v5871, 0.044715
        %v6001 = vmul.f32 %v5937, %v5705
        %v6002 = vmul.f32 %v5938, %v5794
        %v6003 = vmul.f32 %v5939, %v5707
        %v6004 = vmul.f32 %v5940, %v5796
        %v6005 = vmul.f32 %v5941, %v5710
        %v6006 = vmul.f32 %v5942, %v5799
        %v6007 = vmul.f32 %v5943, %v5712
        %v6008 = vmul.f32 %v5944, %v5801
        %v6009 = vmul.f32 %v5945, %v5715
        %v6010 = vmul.f32 %v5946, %v5804
        %v6011 = vmul.f32 %v5947, %v5717
        %v6012 = vmul.f32 %v5948, %v5806
        %v6013 = vmul.f32 %v5949, %v5720
        %v6014 = vmul.f32 %v5950, %v5809
        %v6015 = vmul.f32 %v5951, %v5722
        %v6016 = vmul.f32 %v5952, %v5811
        %v6017 = vmul.f32 %v5953, %v5725
        %v6018 = vmul.f32 %v5954, %v5814
        %v6019 = vmul.f32 %v5955, %v5727
        %v6020 = vmul.f32 %v5956, %v5816
        %v6021 = vmul.f32 %v5957, %v5730
        %v6022 = vmul.f32 %v5958, %v5819
        %v6023 = vmul.f32 %v5959, %v5732
        %v6024 = vmul.f32 %v5960, %v5821
        %v6025 = vmul.f32 %v5961, %v5735
        %v6026 = vmul.f32 %v5962, %v5824
        %v6027 = vmul.f32 %v5963, %v5737
        %v6028 = vmul.f32 %v5964, %v5826
        %v6029 = vmul.f32 %v5965, %v5740
        %v6030 = vmul.f32 %v5966, %v5829
        %v6031 = vmul.f32 %v5967, %v5742
        %v6032 = vmul.f32 %v5968, %v5831
        %v6033 = vmul.f32 %v5969, %v5745
        %v6034 = vmul.f32 %v5970, %v5834
        %v6035 = vmul.f32 %v5971, %v5747
        %v6036 = vmul.f32 %v5972, %v5836
        %v6037 = vmul.f32 %v5973, %v5750
        %v6038 = vmul.f32 %v5974, %v5839
        %v6039 = vmul.f32 %v5975, %v5752
        %v6040 = vmul.f32 %v5976, %v5841
        %v6041 = vmul.f32 %v5977, %v5755
        %v6042 = vmul.f32 %v5978, %v5844
        %v6043 = vmul.f32 %v5979, %v5757
        %v6044 = vmul.f32 %v5980, %v5846
        %v6045 = vmul.f32 %v5981, %v5760
        %v6046 = vmul.f32 %v5982, %v5849
        %v6047 = vmul.f32 %v5983, %v5762
        %v6048 = vmul.f32 %v5984, %v5851
        %v6049 = vmul.f32 %v5985, %v5765
        %v6050 = vmul.f32 %v5986, %v5854
        %v6051 = vmul.f32 %v5987, %v5767
        %v6052 = vmul.f32 %v5988, %v5856
        %v6053 = vmul.f32 %v5989, %v5770
        %v6054 = vmul.f32 %v5990, %v5859
        %v6055 = vmul.f32 %v5991, %v5772
        %v6056 = vmul.f32 %v5992, %v5861
        %v6057 = vmul.f32 %v5993, %v5775
        %v6058 = vmul.f32 %v5994, %v5864
        %v6059 = vmul.f32 %v5995, %v5777
        %v6060 = vmul.f32 %v5996, %v5866
        %v6061 = vmul.f32 %v5997, %v5780
        %v6062 = vmul.f32 %v5998, %v5869
        %v6063 = vmul.f32 %v5999, %v5782
        %v6064 = vmul.f32 %v6000, %v5871
        %v6065 = vmul.f32 %v6001, %v5705
        %v6066 = vmul.f32 %v6002, %v5794
        %v6067 = vmul.f32 %v6003, %v5707
        %v6068 = vmul.f32 %v6004, %v5796
        %v6069 = vmul.f32 %v6005, %v5710
        %v6070 = vmul.f32 %v6006, %v5799
        %v6071 = vmul.f32 %v6007, %v5712
        %v6072 = vmul.f32 %v6008, %v5801
        %v6073 = vmul.f32 %v6009, %v5715
        %v6074 = vmul.f32 %v6010, %v5804
        %v6075 = vmul.f32 %v6011, %v5717
        %v6076 = vmul.f32 %v6012, %v5806
        %v6077 = vmul.f32 %v6013, %v5720
        %v6078 = vmul.f32 %v6014, %v5809
        %v6079 = vmul.f32 %v6015, %v5722
        %v6080 = vmul.f32 %v6016, %v5811
        %v6081 = vmul.f32 %v6017, %v5725
        %v6082 = vmul.f32 %v6018, %v5814
        %v6083 = vmul.f32 %v6019, %v5727
        %v6084 = vmul.f32 %v6020, %v5816
        %v6085 = vmul.f32 %v6021, %v5730
        %v6086 = vmul.f32 %v6022, %v5819
        %v6087 = vmul.f32 %v6023, %v5732
        %v6088 = vmul.f32 %v6024, %v5821
        %v6089 = vmul.f32 %v6025, %v5735
        %v6090 = vmul.f32 %v6026, %v5824
        %v6091 = vmul.f32 %v6027, %v5737
        %v6092 = vmul.f32 %v6028, %v5826
        %v6093 = vmul.f32 %v6029, %v5740
        %v6094 = vmul.f32 %v6030, %v5829
        %v6095 = vmul.f32 %v6031, %v5742
        %v6096 = vmul.f32 %v6032, %v5831
        %v6097 = vmul.f32 %v6033, %v5745
        %v6098 = vmul.f32 %v6034, %v5834
        %v6099 = vmul.f32 %v6035, %v5747
        %v6100 = vmul.f32 %v6036, %v5836
        %v6101 = vmul.f32 %v6037, %v5750
        %v6102 = vmul.f32 %v6038, %v5839
        %v6103 = vmul.f32 %v6039, %v5752
        %v6104 = vmul.f32 %v6040, %v5841
        %v6105 = vmul.f32 %v6041, %v5755
        %v6106 = vmul.f32 %v6042, %v5844
        %v6107 = vmul.f32 %v6043, %v5757
        %v6108 = vmul.f32 %v6044, %v5846
        %v6109 = vmul.f32 %v6045, %v5760
        %v6110 = vmul.f32 %v6046, %v5849
        %v6111 = vmul.f32 %v6047, %v5762
        %v6112 = vmul.f32 %v6048, %v5851
        %v6113 = vmul.f32 %v6049, %v5765
        %v6114 = vmul.f32 %v6050, %v5854
        %v6115 = vmul.f32 %v6051, %v5767
        %v6116 = vmul.f32 %v6052, %v5856
        %v6117 = vmul.f32 %v6053, %v5770
        %v6118 = vmul.f32 %v6054, %v5859
        %v6119 = vmul.f32 %v6055, %v5772
        %v6120 = vmul.f32 %v6056, %v5861
        %v6121 = vmul.f32 %v6057, %v5775
        %v6122 = vmul.f32 %v6058, %v5864
        %v6123 = vmul.f32 %v6059, %v5777
        %v6124 = vmul.f32 %v6060, %v5866
        %v6125 = vmul.f32 %v6061, %v5780
        %v6126 = vmul.f32 %v6062, %v5869
        %v6127 = vmul.f32 %v6063, %v5782
        %v6128 = vmul.f32 %v6064, %v5871
        %v6129 = vadd.f32 %v5705, %v6065
        %v6130 = vadd.f32 %v5794, %v6066
        %v6131 = vadd.f32 %v5707, %v6067
        %v6132 = vadd.f32 %v5796, %v6068
        %v6133 = vadd.f32 %v5710, %v6069
        %v6134 = vadd.f32 %v5799, %v6070
        %v6135 = vadd.f32 %v5712, %v6071
        %v6136 = vadd.f32 %v5801, %v6072
        %v6137 = vadd.f32 %v5715, %v6073
        %v6138 = vadd.f32 %v5804, %v6074
        %v6139 = vadd.f32 %v5717, %v6075
        %v6140 = vadd.f32 %v5806, %v6076
        %v6141 = vadd.f32 %v5720, %v6077
        %v6142 = vadd.f32 %v5809, %v6078
        %v6143 = vadd.f32 %v5722, %v6079
        %v6144 = vadd.f32 %v5811, %v6080
        %v6145 = vadd.f32 %v5725, %v6081
        %v6146 = vadd.f32 %v5814, %v6082
        %v6147 = vadd.f32 %v5727, %v6083
        %v6148 = vadd.f32 %v5816, %v6084
        %v6149 = vadd.f32 %v5730, %v6085
        %v6150 = vadd.f32 %v5819, %v6086
        %v6151 = vadd.f32 %v5732, %v6087
        %v6152 = vadd.f32 %v5821, %v6088
        %v6153 = vadd.f32 %v5735, %v6089
        %v6154 = vadd.f32 %v5824, %v6090
        %v6155 = vadd.f32 %v5737, %v6091
        %v6156 = vadd.f32 %v5826, %v6092
        %v6157 = vadd.f32 %v5740, %v6093
        %v6158 = vadd.f32 %v5829, %v6094
        %v6159 = vadd.f32 %v5742, %v6095
        %v6160 = vadd.f32 %v5831, %v6096
        %v6161 = vadd.f32 %v5745, %v6097
        %v6162 = vadd.f32 %v5834, %v6098
        %v6163 = vadd.f32 %v5747, %v6099
        %v6164 = vadd.f32 %v5836, %v6100
        %v6165 = vadd.f32 %v5750, %v6101
        %v6166 = vadd.f32 %v5839, %v6102
        %v6167 = vadd.f32 %v5752, %v6103
        %v6168 = vadd.f32 %v5841, %v6104
        %v6169 = vadd.f32 %v5755, %v6105
        %v6170 = vadd.f32 %v5844, %v6106
        %v6171 = vadd.f32 %v5757, %v6107
        %v6172 = vadd.f32 %v5846, %v6108
        %v6173 = vadd.f32 %v5760, %v6109
        %v6174 = vadd.f32 %v5849, %v6110
        %v6175 = vadd.f32 %v5762, %v6111
        %v6176 = vadd.f32 %v5851, %v6112
        %v6177 = vadd.f32 %v5765, %v6113
        %v6178 = vadd.f32 %v5854, %v6114
        %v6179 = vadd.f32 %v5767, %v6115
        %v6180 = vadd.f32 %v5856, %v6116
        %v6181 = vadd.f32 %v5770, %v6117
        %v6182 = vadd.f32 %v5859, %v6118
        %v6183 = vadd.f32 %v5772, %v6119
        %v6184 = vadd.f32 %v5861, %v6120
        %v6185 = vadd.f32 %v5775, %v6121
        %v6186 = vadd.f32 %v5864, %v6122
        %v6187 = vadd.f32 %v5777, %v6123
        %v6188 = vadd.f32 %v5866, %v6124
        %v6189 = vadd.f32 %v5780, %v6125
        %v6190 = vadd.f32 %v5869, %v6126
        %v6191 = vadd.f32 %v5782, %v6127
        %v6192 = vadd.f32 %v5871, %v6128
        %v6193 = vmul.f32 %v6129, 0.7978846
        %v6194 = vmul.f32 %v6130, 0.7978846
        %v6195 = vmul.f32 %v6131, 0.7978846
        %v6196 = vmul.f32 %v6132, 0.7978846
        %v6197 = vmul.f32 %v6133, 0.7978846
        %v6198 = vmul.f32 %v6134, 0.7978846
        %v6199 = vmul.f32 %v6135, 0.7978846
        %v6200 = vmul.f32 %v6136, 0.7978846
        %v6201 = vmul.f32 %v6137, 0.7978846
        %v6202 = vmul.f32 %v6138, 0.7978846
        %v6203 = vmul.f32 %v6139, 0.7978846
        %v6204 = vmul.f32 %v6140, 0.7978846
        %v6205 = vmul.f32 %v6141, 0.7978846
        %v6206 = vmul.f32 %v6142, 0.7978846
        %v6207 = vmul.f32 %v6143, 0.7978846
        %v6208 = vmul.f32 %v6144, 0.7978846
        %v6209 = vmul.f32 %v6145, 0.7978846
        %v6210 = vmul.f32 %v6146, 0.7978846
        %v6211 = vmul.f32 %v6147, 0.7978846
        %v6212 = vmul.f32 %v6148, 0.7978846
        %v6213 = vmul.f32 %v6149, 0.7978846
        %v6214 = vmul.f32 %v6150, 0.7978846
        %v6215 = vmul.f32 %v6151, 0.7978846
        %v6216 = vmul.f32 %v6152, 0.7978846
        %v6217 = vmul.f32 %v6153, 0.7978846
        %v6218 = vmul.f32 %v6154, 0.7978846
        %v6219 = vmul.f32 %v6155, 0.7978846
        %v6220 = vmul.f32 %v6156, 0.7978846
        %v6221 = vmul.f32 %v6157, 0.7978846
        %v6222 = vmul.f32 %v6158, 0.7978846
        %v6223 = vmul.f32 %v6159, 0.7978846
        %v6224 = vmul.f32 %v6160, 0.7978846
        %v6225 = vmul.f32 %v6161, 0.7978846
        %v6226 = vmul.f32 %v6162, 0.7978846
        %v6227 = vmul.f32 %v6163, 0.7978846
        %v6228 = vmul.f32 %v6164, 0.7978846
        %v6229 = vmul.f32 %v6165, 0.7978846
        %v6230 = vmul.f32 %v6166, 0.7978846
        %v6231 = vmul.f32 %v6167, 0.7978846
        %v6232 = vmul.f32 %v6168, 0.7978846
        %v6233 = vmul.f32 %v6169, 0.7978846
        %v6234 = vmul.f32 %v6170, 0.7978846
        %v6235 = vmul.f32 %v6171, 0.7978846
        %v6236 = vmul.f32 %v6172, 0.7978846
        %v6237 = vmul.f32 %v6173, 0.7978846
        %v6238 = vmul.f32 %v6174, 0.7978846
        %v6239 = vmul.f32 %v6175, 0.7978846
        %v6240 = vmul.f32 %v6176, 0.7978846
        %v6241 = vmul.f32 %v6177, 0.7978846
        %v6242 = vmul.f32 %v6178, 0.7978846
        %v6243 = vmul.f32 %v6179, 0.7978846
        %v6244 = vmul.f32 %v6180, 0.7978846
        %v6245 = vmul.f32 %v6181, 0.7978846
        %v6246 = vmul.f32 %v6182, 0.7978846
        %v6247 = vmul.f32 %v6183, 0.7978846
        %v6248 = vmul.f32 %v6184, 0.7978846
        %v6249 = vmul.f32 %v6185, 0.7978846
        %v6250 = vmul.f32 %v6186, 0.7978846
        %v6251 = vmul.f32 %v6187, 0.7978846
        %v6252 = vmul.f32 %v6188, 0.7978846
        %v6253 = vmul.f32 %v6189, 0.7978846
        %v6254 = vmul.f32 %v6190, 0.7978846
        %v6255 = vmul.f32 %v6191, 0.7978846
        %v6256 = vmul.f32 %v6192, 0.7978846
        %v6257 = vtanh.pop %v6193
        %v6258 = vtanh.pop %v6194
        %v6259 = vtanh.pop %v6195
        %v6260 = vtanh.pop %v6196
        %v6261 = vtanh.pop %v6197
        %v6262 = vtanh.pop %v6198
        %v6263 = vtanh.pop %v6199
        %v6264 = vtanh.pop %v6200
        %v6265 = vtanh.pop %v6201
        %v6266 = vtanh.pop %v6202
        %v6267 = vtanh.pop %v6203
        %v6268 = vtanh.pop %v6204
        %v6269 = vtanh.pop %v6205
        %v6270 = vtanh.pop %v6206
        %v6271 = vtanh.pop %v6207
        %v6272 = vtanh.pop %v6208
        %v6273 = vtanh.pop %v6209
        %v6274 = vtanh.pop %v6210
        %v6275 = vtanh.pop %v6211
        %v6276 = vtanh.pop %v6212
        %v6277 = vtanh.pop %v6213
        %v6278 = vtanh.pop %v6214
        %v6279 = vtanh.pop %v6215
        %v6280 = vtanh.pop %v6216
        %v6281 = vtanh.pop %v6217
        %v6282 = vtanh.pop %v6218
        %v6283 = vtanh.pop %v6219
        %v6284 = vtanh.pop %v6220
        %v6285 = vtanh.pop %v6221
        %v6286 = vtanh.pop %v6222
        %v6287 = vtanh.pop %v6223
        %v6288 = vtanh.pop %v6224
        %v6289 = vtanh.pop %v6225
        %v6290 = vtanh.pop %v6226
        %v6291 = vtanh.pop %v6227
        %v6292 = vtanh.pop %v6228
        %v6293 = vtanh.pop %v6229
        %v6294 = vtanh.pop %v6230
        %v6295 = vtanh.pop %v6231
        %v6296 = vtanh.pop %v6232
        %v6297 = vtanh.pop %v6233
        %v6298 = vtanh.pop %v6234
        %v6299 = vtanh.pop %v6235
        %v6300 = vtanh.pop %v6236
        %v6301 = vtanh.pop %v6237
        %v6302 = vtanh.pop %v6238
        %v6303 = vtanh.pop %v6239
        %v6304 = vtanh.pop %v6240
        %v6305 = vtanh.pop %v6241
        %v6306 = vtanh.pop %v6242
        %v6307 = vtanh.pop %v6243
        %v6308 = vtanh.pop %v6244
        %v6309 = vtanh.pop %v6245
        %v6310 = vtanh.pop %v6246
        %v6311 = vtanh.pop %v6247
        %v6312 = vtanh.pop %v6248
        %v6313 = vtanh.pop %v6249
        %v6314 = vtanh.pop %v6250
        %v6315 = vtanh.pop %v6251
        %v6316 = vtanh.pop %v6252
        %v6317 = vtanh.pop %v6253
        %v6318 = vtanh.pop %v6254
        %v6319 = vtanh.pop %v6255
        %v6320 = vtanh.pop %v6256
        %v6321 = vadd.f32 %v6257, 1.0
        %v6322 = vadd.f32 %v6258, 1.0
        %v6323 = vadd.f32 %v6259, 1.0
        %v6324 = vadd.f32 %v6260, 1.0
        %v6325 = vadd.f32 %v6261, 1.0
        %v6326 = vadd.f32 %v6262, 1.0
        %v6327 = vadd.f32 %v6263, 1.0
        %v6328 = vadd.f32 %v6264, 1.0
        %v6329 = vadd.f32 %v6265, 1.0
        %v6330 = vadd.f32 %v6266, 1.0
        %v6331 = vadd.f32 %v6267, 1.0
        %v6332 = vadd.f32 %v6268, 1.0
        %v6333 = vadd.f32 %v6269, 1.0
        %v6334 = vadd.f32 %v6270, 1.0
        %v6335 = vadd.f32 %v6271, 1.0
        %v6336 = vadd.f32 %v6272, 1.0
        %v6337 = vadd.f32 %v6273, 1.0
        %v6338 = vadd.f32 %v6274, 1.0
        %v6339 = vadd.f32 %v6275, 1.0
        %v6340 = vadd.f32 %v6276, 1.0
        %v6341 = vadd.f32 %v6277, 1.0
        %v6342 = vadd.f32 %v6278, 1.0
        %v6343 = vadd.f32 %v6279, 1.0
        %v6344 = vadd.f32 %v6280, 1.0
        %v6345 = vadd.f32 %v6281, 1.0
        %v6346 = vadd.f32 %v6282, 1.0
        %v6347 = vadd.f32 %v6283, 1.0
        %v6348 = vadd.f32 %v6284, 1.0
        %v6349 = vadd.f32 %v6285, 1.0
        %v6350 = vadd.f32 %v6286, 1.0
        %v6351 = vadd.f32 %v6287, 1.0
        %v6352 = vadd.f32 %v6288, 1.0
        %v6353 = vadd.f32 %v6289, 1.0
        %v6354 = vadd.f32 %v6290, 1.0
        %v6355 = vadd.f32 %v6291, 1.0
        %v6356 = vadd.f32 %v6292, 1.0
        %v6357 = vadd.f32 %v6293, 1.0
        %v6358 = vadd.f32 %v6294, 1.0
        %v6359 = vadd.f32 %v6295, 1.0
        %v6360 = vadd.f32 %v6296, 1.0
        %v6361 = vadd.f32 %v6297, 1.0
        %v6362 = vadd.f32 %v6298, 1.0
        %v6363 = vadd.f32 %v6299, 1.0
        %v6364 = vadd.f32 %v6300, 1.0
        %v6365 = vadd.f32 %v6301, 1.0
        %v6366 = vadd.f32 %v6302, 1.0
        %v6367 = vadd.f32 %v6303, 1.0
        %v6368 = vadd.f32 %v6304, 1.0
        %v6369 = vadd.f32 %v6305, 1.0
        %v6370 = vadd.f32 %v6306, 1.0
        %v6371 = vadd.f32 %v6307, 1.0
        %v6372 = vadd.f32 %v6308, 1.0
        %v6373 = vadd.f32 %v6309, 1.0
        %v6374 = vadd.f32 %v6310, 1.0
        %v6375 = vadd.f32 %v6311, 1.0
        %v6376 = vadd.f32 %v6312, 1.0
        %v6377 = vadd.f32 %v6313, 1.0
        %v6378 = vadd.f32 %v6314, 1.0
        %v6379 = vadd.f32 %v6315, 1.0
        %v6380 = vadd.f32 %v6316, 1.0
        %v6381 = vadd.f32 %v6317, 1.0
        %v6382 = vadd.f32 %v6318, 1.0
        %v6383 = vadd.f32 %v6319, 1.0
        %v6384 = vadd.f32 %v6320, 1.0
        %v6385 = vmul.f32 %v5873, %v6321
        %v6386 = vmul.f32 %v5874, %v6322
        %v6387 = vmul.f32 %v5875, %v6323
        %v6388 = vmul.f32 %v5876, %v6324
        %v6389 = vmul.f32 %v5877, %v6325
        %v6390 = vmul.f32 %v5878, %v6326
        %v6391 = vmul.f32 %v5879, %v6327
        %v6392 = vmul.f32 %v5880, %v6328
        %v6393 = vmul.f32 %v5881, %v6329
        %v6394 = vmul.f32 %v5882, %v6330
        %v6395 = vmul.f32 %v5883, %v6331
        %v6396 = vmul.f32 %v5884, %v6332
        %v6397 = vmul.f32 %v5885, %v6333
        %v6398 = vmul.f32 %v5886, %v6334
        %v6399 = vmul.f32 %v5887, %v6335
        %v6400 = vmul.f32 %v5888, %v6336
        %v6401 = vmul.f32 %v5889, %v6337
        %v6402 = vmul.f32 %v5890, %v6338
        %v6403 = vmul.f32 %v5891, %v6339
        %v6404 = vmul.f32 %v5892, %v6340
        %v6405 = vmul.f32 %v5893, %v6341
        %v6406 = vmul.f32 %v5894, %v6342
        %v6407 = vmul.f32 %v5895, %v6343
        %v6408 = vmul.f32 %v5896, %v6344
        %v6409 = vmul.f32 %v5897, %v6345
        %v6410 = vmul.f32 %v5898, %v6346
        %v6411 = vmul.f32 %v5899, %v6347
        %v6412 = vmul.f32 %v5900, %v6348
        %v6413 = vmul.f32 %v5901, %v6349
        %v6414 = vmul.f32 %v5902, %v6350
        %v6415 = vmul.f32 %v5903, %v6351
        %v6416 = vmul.f32 %v5904, %v6352
        %v6417 = vmul.f32 %v5905, %v6353
        %v6418 = vmul.f32 %v5906, %v6354
        %v6419 = vmul.f32 %v5907, %v6355
        %v6420 = vmul.f32 %v5908, %v6356
        %v6421 = vmul.f32 %v5909, %v6357
        %v6422 = vmul.f32 %v5910, %v6358
        %v6423 = vmul.f32 %v5911, %v6359
        %v6424 = vmul.f32 %v5912, %v6360
        %v6425 = vmul.f32 %v5913, %v6361
        %v6426 = vmul.f32 %v5914, %v6362
        %v6427 = vmul.f32 %v5915, %v6363
        %v6428 = vmul.f32 %v5916, %v6364
        %v6429 = vmul.f32 %v5917, %v6365
        %v6430 = vmul.f32 %v5918, %v6366
        %v6431 = vmul.f32 %v5919, %v6367
        %v6432 = vmul.f32 %v5920, %v6368
        %v6433 = vmul.f32 %v5921, %v6369
        %v6434 = vmul.f32 %v5922, %v6370
        %v6435 = vmul.f32 %v5923, %v6371
        %v6436 = vmul.f32 %v5924, %v6372
        %v6437 = vmul.f32 %v5925, %v6373
        %v6438 = vmul.f32 %v5926, %v6374
        %v6439 = vmul.f32 %v5927, %v6375
        %v6440 = vmul.f32 %v5928, %v6376
        %v6441 = vmul.f32 %v5929, %v6377
        %v6442 = vmul.f32 %v5930, %v6378
        %v6443 = vmul.f32 %v5931, %v6379
        %v6444 = vmul.f32 %v5932, %v6380
        %v6445 = vmul.f32 %v5933, %v6381
        %v6446 = vmul.f32 %v5934, %v6382
        %v6447 = vmul.f32 %v5935, %v6383
        %v6448 = vmul.f32 %v5936, %v6384
        %v6449 = vpack.c.bf16 %v6387, %v6385
        %v6450 = vpack.c.bf16 %v6388, %v6386
        %v6451 = vpack.c.bf16 %v6391, %v6389
        %v6452 = vpack.c.bf16 %v6392, %v6390
        %v6453 = vpack.c.bf16 %v6395, %v6393
        %v6454 = vpack.c.bf16 %v6396, %v6394
        %v6455 = vpack.c.bf16 %v6399, %v6397
        %v6456 = vpack.c.bf16 %v6400, %v6398
        %v6457 = vpack.c.bf16 %v6403, %v6401
        %v6458 = vpack.c.bf16 %v6404, %v6402
        %v6459 = vpack.c.bf16 %v6407, %v6405
        %v6460 = vpack.c.bf16 %v6408, %v6406
        %v6461 = vpack.c.bf16 %v6411, %v6409
        %v6462 = vpack.c.bf16 %v6412, %v6410
        %v6463 = vpack.c.bf16 %v6415, %v6413
        %v6464 = vpack.c.bf16 %v6416, %v6414
        %v6465 = vpack.c.bf16 %v6419, %v6417
        %v6466 = vpack.c.bf16 %v6420, %v6418
        %v6467 = vpack.c.bf16 %v6423, %v6421
        %v6468 = vpack.c.bf16 %v6424, %v6422
        %v6469 = vpack.c.bf16 %v6427, %v6425
        %v6470 = vpack.c.bf16 %v6428, %v6426
        %v6471 = vpack.c.bf16 %v6431, %v6429
        %v6472 = vpack.c.bf16 %v6432, %v6430
        %v6473 = vpack.c.bf16 %v6435, %v6433
        %v6474 = vpack.c.bf16 %v6436, %v6434
        %v6475 = vpack.c.bf16 %v6439, %v6437
        %v6476 = vpack.c.bf16 %v6440, %v6438
        %v6477 = vpack.c.bf16 %v6443, %v6441
        %v6478 = vpack.c.bf16 %v6444, %v6442
        %v6479 = vpack.c.bf16 %v6447, %v6445
        %v6480 = vpack.c.bf16 %v6448, %v6446
        %v6481 = vld [vmem:[%s592] sm:$0xf]
        %v6482 = vld [vmem:[%s592 + $0x4] sm:$0xf]
        %v6483 = vld [vmem:[%s592 + $0x8] sm:$0xf]
        %v6484 = vld [vmem:[%s592 + $0xc] sm:$0xf]
        %v6485 = vld [vmem:[%s592 + $0x10] sm:$0xf]
        %v6486 = vld [vmem:[%s592 + $0x14] sm:$0xf]
        %v6487 = vld [vmem:[%s592 + $0x18] sm:$0xf]
        %v6488 = vld [vmem:[%s592 + $0x1c] sm:$0xf]
        %v6489 = vld [vmem:[%s592 + $0x20] sm:$0xf]
        %v6490 = vld [vmem:[%s592 + $0x24] sm:$0xf]
        %v6491 = vld [vmem:[%s592 + $0x28] sm:$0xf]
        %v6492 = vld [vmem:[%s592 + $0x2c] sm:$0xf]
        %v6493 = vld [vmem:[%s592 + $0x30] sm:$0xf]
        %v6494 = vld [vmem:[%s592 + $0x34] sm:$0xf]
        %v6495 = vld [vmem:[%s592 + $0x38] sm:$0xf]
        %v6496 = vld [vmem:[%s592 + $0x3c] sm:$0xf]
        %v6497 = vld [vmem:[%s592 + $0x40] sm:$0xf]
        %v6498 = vld [vmem:[%s592 + $0x44] sm:$0xf]
        %v6499 = vld [vmem:[%s592 + $0x48] sm:$0xf]
        %v6500 = vld [vmem:[%s592 + $0x4c] sm:$0xf]
        %v6501 = vld [vmem:[%s592 + $0x50] sm:$0xf]
        %v6502 = vld [vmem:[%s592 + $0x54] sm:$0xf]
        %v6503 = vld [vmem:[%s592 + $0x58] sm:$0xf]
        %v6504 = vld [vmem:[%s592 + $0x5c] sm:$0xf]
        %v6505 = vld [vmem:[%s592 + $0x60] sm:$0xf]
        %v6506 = vld [vmem:[%s592 + $0x64] sm:$0xf]
        %v6507 = vld [vmem:[%s592 + $0x68] sm:$0xf]
        %v6508 = vld [vmem:[%s592 + $0x6c] sm:$0xf]
        %v6509 = vld [vmem:[%s592 + $0x70] sm:$0xf]
        %v6510 = vld [vmem:[%s592 + $0x74] sm:$0xf]
        %v6511 = vld [vmem:[%s592 + $0x78] sm:$0xf]
        %v6512 = vld [vmem:[%s592 + $0x7c] sm:$0xf]
        %v6513 = vld [vmem:[%s595] sm:$0x1]
        %v6515 = vperm.slane %v6513, 0
        %v6549 = vunpack.c.l.b16 %v6481
        %v6550 = vunpack.c.l.b16 %v6482
        %v6551 = vunpack.c.l.b16 %v6483
        %v6552 = vunpack.c.l.b16 %v6484
        %v6553 = vunpack.c.l.b16 %v6485
        %v6554 = vunpack.c.l.b16 %v6486
        %v6555 = vunpack.c.l.b16 %v6487
        %v6556 = vunpack.c.l.b16 %v6488
        %v6557 = vunpack.c.l.b16 %v6489
        %v6558 = vunpack.c.l.b16 %v6490
        %v6559 = vunpack.c.l.b16 %v6491
        %v6560 = vunpack.c.l.b16 %v6492
        %v6561 = vunpack.c.l.b16 %v6493
        %v6562 = vunpack.c.l.b16 %v6494
        %v6563 = vunpack.c.l.b16 %v6495
        %v6564 = vunpack.c.l.b16 %v6496
        %v6565 = vunpack.c.l.b16 %v6497
        %v6566 = vunpack.c.l.b16 %v6498
        %v6567 = vunpack.c.l.b16 %v6499
        %v6568 = vunpack.c.l.b16 %v6500
        %v6569 = vunpack.c.l.b16 %v6501
        %v6570 = vunpack.c.l.b16 %v6502
        %v6571 = vunpack.c.l.b16 %v6503
        %v6572 = vunpack.c.l.b16 %v6504
        %v6573 = vunpack.c.l.b16 %v6505
        %v6574 = vunpack.c.l.b16 %v6506
        %v6575 = vunpack.c.l.b16 %v6507
        %v6576 = vunpack.c.l.b16 %v6508
        %v6577 = vunpack.c.l.b16 %v6509
        %v6578 = vunpack.c.l.b16 %v6510
        %v6579 = vunpack.c.l.b16 %v6511
        %v6580 = vunpack.c.l.b16 %v6512
        %v6581 = vpack.c.b16 %v6550, %v6549
        %v6582 = vpack.c.b16 %v6552, %v6551
        %v6583 = vpack.c.b16 %v6554, %v6553
        %v6584 = vpack.c.b16 %v6556, %v6555
        %v6585 = vpack.c.b16 %v6558, %v6557
        %v6586 = vpack.c.b16 %v6560, %v6559
        %v6587 = vpack.c.b16 %v6562, %v6561
        %v6588 = vpack.c.b16 %v6564, %v6563
        %v6589 = vpack.c.b16 %v6566, %v6565
        %v6590 = vpack.c.b16 %v6568, %v6567
        %v6591 = vpack.c.b16 %v6570, %v6569
        %v6592 = vpack.c.b16 %v6572, %v6571
        %v6593 = vpack.c.b16 %v6574, %v6573
        %v6594 = vpack.c.b16 %v6576, %v6575
        %v6595 = vpack.c.b16 %v6578, %v6577
        %v6596 = vpack.c.b16 %v6580, %v6579
        %6613 = vmatpush.bf16.msra.mxu0 %v6588
        %6614 = vmatpush.bf16.msra.mxu0 %v6587
        %6615 = vmatpush.bf16.msra.mxu0 %v6586
        %6616 = vmatpush.bf16.msra.mxu0 %v6585
        %6617 = vmatpush.bf16.msra.mxu0 %v6584
        %6618 = vmatpush.bf16.msra.mxu0 %v6583
        %6619 = vmatpush.bf16.msra.mxu0 %v6582
        %6620 = vmatpush.bf16.msra.mxu0 %v6581
        %6621 = vmatmul.bf16.gmra.mxu0 %v6449
        %v6622 = vpop.f32.mrf.mxu0
        %v6623 = vadd.f32 %v6515, %v6622
        %v6624 = vpop.f32.mrf.mxu0
        %v6625 = vadd.f32 %v6515, %v6624
        %6626 = vmatmul.bf16.gmra.mxu0 %v6451
        %v6627 = vpop.f32.mrf.mxu0
        %v6628 = vadd.f32 %v6515, %v6627
        %v6629 = vpop.f32.mrf.mxu0
        %v6630 = vadd.f32 %v6515, %v6629
        %6631 = vmatmul.bf16.gmra.mxu0 %v6453
        %v6632 = vpop.f32.mrf.mxu0
        %v6633 = vadd.f32 %v6515, %v6632
        %v6634 = vpop.f32.mrf.mxu0
        %v6635 = vadd.f32 %v6515, %v6634
        %6636 = vmatmul.bf16.gmra.mxu0 %v6455
        %v6637 = vpop.f32.mrf.mxu0
        %v6638 = vadd.f32 %v6515, %v6637
        %v6639 = vpop.f32.mrf.mxu0
        %v6640 = vadd.f32 %v6515, %v6639
        %6641 = vmatmul.bf16.gmra.mxu0 %v6457
        %v6642 = vpop.f32.mrf.mxu0
        %v6643 = vadd.f32 %v6515, %v6642
        %v6644 = vpop.f32.mrf.mxu0
        %v6645 = vadd.f32 %v6515, %v6644
        %6646 = vmatmul.bf16.gmra.mxu0 %v6459
        %v6647 = vpop.f32.mrf.mxu0
        %v6648 = vadd.f32 %v6515, %v6647
        %v6649 = vpop.f32.mrf.mxu0
        %v6650 = vadd.f32 %v6515, %v6649
        %6651 = vmatmul.bf16.gmra.mxu0 %v6461
        %v6652 = vpop.f32.mrf.mxu0
        %v6653 = vadd.f32 %v6515, %v6652
        %v6654 = vpop.f32.mrf.mxu0
        %v6655 = vadd.f32 %v6515, %v6654
        %6656 = vmatmul.bf16.gmra.mxu0 %v6463
        %v6657 = vpop.f32.mrf.mxu0
        %v6658 = vadd.f32 %v6515, %v6657
        %v6659 = vpop.f32.mrf.mxu0
        %v6660 = vadd.f32 %v6515, %v6659
        %6661 = vmatmul.bf16.gmra.mxu0 %v6465
        %v6662 = vpop.f32.mrf.mxu0
        %v6663 = vadd.f32 %v6515, %v6662
        %v6664 = vpop.f32.mrf.mxu0
        %v6665 = vadd.f32 %v6515, %v6664
        %6666 = vmatmul.bf16.gmra.mxu0 %v6467
        %v6667 = vpop.f32.mrf.mxu0
        %v6668 = vadd.f32 %v6515, %v6667
        %v6669 = vpop.f32.mrf.mxu0
        %v6670 = vadd.f32 %v6515, %v6669
        %6671 = vmatmul.bf16.gmra.mxu0 %v6469
        %v6672 = vpop.f32.mrf.mxu0
        %v6673 = vadd.f32 %v6515, %v6672
        %v6674 = vpop.f32.mrf.mxu0
        %v6675 = vadd.f32 %v6515, %v6674
        %6676 = vmatmul.bf16.gmra.mxu0 %v6471
        %v6677 = vpop.f32.mrf.mxu0
        %v6678 = vadd.f32 %v6515, %v6677
        %v6679 = vpop.f32.mrf.mxu0
        %v6680 = vadd.f32 %v6515, %v6679
        %6681 = vmatmul.bf16.gmra.mxu0 %v6473
        %v6682 = vpop.f32.mrf.mxu0
        %v6683 = vadd.f32 %v6515, %v6682
        %v6684 = vpop.f32.mrf.mxu0
        %v6685 = vadd.f32 %v6515, %v6684
        %6686 = vmatmul.bf16.gmra.mxu0 %v6475
        %v6687 = vpop.f32.mrf.mxu0
        %v6688 = vadd.f32 %v6515, %v6687
        %v6689 = vpop.f32.mrf.mxu0
        %v6690 = vadd.f32 %v6515, %v6689
        %6691 = vmatmul.bf16.gmra.mxu0 %v6477
        %v6692 = vpop.f32.mrf.mxu0
        %v6693 = vadd.f32 %v6515, %v6692
        %v6694 = vpop.f32.mrf.mxu0
        %v6695 = vadd.f32 %v6515, %v6694
        %6696 = vmatmul.bf16.gmra.mxu0 %v6479
        %v6697 = vpop.f32.mrf.mxu0
        %v6698 = vadd.f32 %v6515, %v6697
        %v6699 = vpop.f32.mrf.mxu0
        %v6700 = vadd.f32 %v6515, %v6699
        %6701 = vdwg.mxu0
        %6702 = vmatpush.bf16.msra.mxu0 %v6596
        %6703 = vmatpush.bf16.msra.mxu0 %v6595
        %6704 = vmatpush.bf16.msra.mxu0 %v6594
        %6705 = vmatpush.bf16.msra.mxu0 %v6593
        %6706 = vmatpush.bf16.msra.mxu0 %v6592
        %6707 = vmatpush.bf16.msra.mxu0 %v6591
        %6708 = vmatpush.bf16.msra.mxu0 %v6590
        %6709 = vmatpush.bf16.msra.mxu0 %v6589
        %6710 = vmatmul.bf16.gmra.mxu0 %v6450
        %v6711 = vpop.f32.mrf.mxu0
        %v6712 = vadd.f32 %v6623, %v6711
        %v6713 = vpop.f32.mrf.mxu0
        %v6714 = vadd.f32 %v6625, %v6713
        %6715 = vmatmul.bf16.gmra.mxu0 %v6452
        %v6716 = vpop.f32.mrf.mxu0
        %v6717 = vadd.f32 %v6628, %v6716
        %v6718 = vpop.f32.mrf.mxu0
        %v6719 = vadd.f32 %v6630, %v6718
        %6720 = vmatmul.bf16.gmra.mxu0 %v6454
        %v6721 = vpop.f32.mrf.mxu0
        %v6722 = vadd.f32 %v6633, %v6721
        %v6723 = vpop.f32.mrf.mxu0
        %v6724 = vadd.f32 %v6635, %v6723
        %6725 = vmatmul.bf16.gmra.mxu0 %v6456
        %v6726 = vpop.f32.mrf.mxu0
        %v6727 = vadd.f32 %v6638, %v6726
        %v6728 = vpop.f32.mrf.mxu0
        %v6729 = vadd.f32 %v6640, %v6728
        %6730 = vmatmul.bf16.gmra.mxu0 %v6458
        %v6731 = vpop.f32.mrf.mxu0
        %v6732 = vadd.f32 %v6643, %v6731
        %v6733 = vpop.f32.mrf.mxu0
        %v6734 = vadd.f32 %v6645, %v6733
        %6735 = vmatmul.bf16.gmra.mxu0 %v6460
        %v6736 = vpop.f32.mrf.mxu0
        %v6737 = vadd.f32 %v6648, %v6736
        %v6738 = vpop.f32.mrf.mxu0
        %v6739 = vadd.f32 %v6650, %v6738
        %6740 = vmatmul.bf16.gmra.mxu0 %v6462
        %v6741 = vpop.f32.mrf.mxu0
        %v6742 = vadd.f32 %v6653, %v6741
        %v6743 = vpop.f32.mrf.mxu0
        %v6744 = vadd.f32 %v6655, %v6743
        %6745 = vmatmul.bf16.gmra.mxu0 %v6464
        %v6746 = vpop.f32.mrf.mxu0
        %v6747 = vadd.f32 %v6658, %v6746
        %v6748 = vpop.f32.mrf.mxu0
        %v6749 = vadd.f32 %v6660, %v6748
        %6750 = vmatmul.bf16.gmra.mxu0 %v6466
        %v6751 = vpop.f32.mrf.mxu0
        %v6752 = vadd.f32 %v6663, %v6751
        %v6753 = vpop.f32.mrf.mxu0
        %v6754 = vadd.f32 %v6665, %v6753
        %6755 = vmatmul.bf16.gmra.mxu0 %v6468
        %v6756 = vpop.f32.mrf.mxu0
        %v6757 = vadd.f32 %v6668, %v6756
        %v6758 = vpop.f32.mrf.mxu0
        %v6759 = vadd.f32 %v6670, %v6758
        %6760 = vmatmul.bf16.gmra.mxu0 %v6470
        %v6761 = vpop.f32.mrf.mxu0
        %v6762 = vadd.f32 %v6673, %v6761
        %v6763 = vpop.f32.mrf.mxu0
        %v6764 = vadd.f32 %v6675, %v6763
        %6765 = vmatmul.bf16.gmra.mxu0 %v6472
        %v6766 = vpop.f32.mrf.mxu0
        %v6767 = vadd.f32 %v6678, %v6766
        %v6768 = vpop.f32.mrf.mxu0
        %v6769 = vadd.f32 %v6680, %v6768
        %6770 = vmatmul.bf16.gmra.mxu0 %v6474
        %v6771 = vpop.f32.mrf.mxu0
        %v6772 = vadd.f32 %v6683, %v6771
        %v6773 = vpop.f32.mrf.mxu0
        %v6774 = vadd.f32 %v6685, %v6773
        %6775 = vmatmul.bf16.gmra.mxu0 %v6476
        %v6776 = vpop.f32.mrf.mxu0
        %v6777 = vadd.f32 %v6688, %v6776
        %v6778 = vpop.f32.mrf.mxu0
        %v6779 = vadd.f32 %v6690, %v6778
        %6780 = vmatmul.bf16.gmra.mxu0 %v6478
        %v6781 = vpop.f32.mrf.mxu0
        %v6782 = vadd.f32 %v6693, %v6781
        %v6783 = vpop.f32.mrf.mxu0
        %v6784 = vadd.f32 %v6695, %v6783
        %6785 = vmatmul.bf16.gmra.mxu0 %v6480
        %v6786 = vpop.f32.mrf.mxu0
        %v6787 = vadd.f32 %v6698, %v6786
        %v6788 = vpop.f32.mrf.mxu0
        %v6789 = vadd.f32 %v6700, %v6788
        %6790 = vdwg.mxu0
        %v6791 = vadd.f32 %v6712, %v4833
        %v6792 = vadd.f32 %v6714, %v4834
        %v6793 = vadd.f32 %v6717, %v4835
        %v6794 = vadd.f32 %v6719, %v4836
        %v6795 = vadd.f32 %v6722, %v4837
        %v6796 = vadd.f32 %v6724, %v4838
        %v6797 = vadd.f32 %v6727, %v4839
        %v6798 = vadd.f32 %v6729, %v4840
        %v6799 = vadd.f32 %v6732, %v4841
        %v6800 = vadd.f32 %v6734, %v4842
        %v6801 = vadd.f32 %v6737, %v4843
        %v6802 = vadd.f32 %v6739, %v4844
        %v6803 = vadd.f32 %v6742, %v4845
        %v6804 = vadd.f32 %v6744, %v4846
        %v6805 = vadd.f32 %v6747, %v4847
        %v6806 = vadd.f32 %v6749, %v4848
        %v6807 = vadd.f32 %v6752, %v4849
        %v6808 = vadd.f32 %v6754, %v4850
        %v6809 = vadd.f32 %v6757, %v4851
        %v6810 = vadd.f32 %v6759, %v4852
        %v6811 = vadd.f32 %v6762, %v4853
        %v6812 = vadd.f32 %v6764, %v4854
        %v6813 = vadd.f32 %v6767, %v4855
        %v6814 = vadd.f32 %v6769, %v4856
        %v6815 = vadd.f32 %v6772, %v4857
        %v6816 = vadd.f32 %v6774, %v4858
        %v6817 = vadd.f32 %v6777, %v4859
        %v6818 = vadd.f32 %v6779, %v4860
        %v6819 = vadd.f32 %v6782, %v4861
        %v6820 = vadd.f32 %v6784, %v4862
        %v6821 = vadd.f32 %v6787, %v4863
        %v6822 = vadd.f32 %v6789, %v4864
        %6823 = vst [vmem:[#allocation2] sm:$0xff] %v6791
        %6824 = vst [vmem:[#allocation2 + $0x8] sm:$0xff] %v6792
        %6825 = vst [vmem:[#allocation2 + $0x10] sm:$0xff] %v6793
        %6826 = vst [vmem:[#allocation2 + $0x18] sm:$0xff] %v6794
        %6827 = vst [vmem:[#allocation2 + $0x20] sm:$0xff] %v6795
        %6828 = vst [vmem:[#allocation2 + $0x28] sm:$0xff] %v6796
        %6829 = vst [vmem:[#allocation2 + $0x30] sm:$0xff] %v6797
        %6830 = vst [vmem:[#allocation2 + $0x38] sm:$0xff] %v6798
        %6831 = vst [vmem:[#allocation2 + $0x40] sm:$0xff] %v6799
        %6832 = vst [vmem:[#allocation2 + $0x48] sm:$0xff] %v6800
        %6833 = vst [vmem:[#allocation2 + $0x50] sm:$0xff] %v6801
        %6834 = vst [vmem:[#allocation2 + $0x58] sm:$0xff] %v6802
        %6835 = vst [vmem:[#allocation2 + $0x60] sm:$0xff] %v6803
        %6836 = vst [vmem:[#allocation2 + $0x68] sm:$0xff] %v6804
        %6837 = vst [vmem:[#allocation2 + $0x70] sm:$0xff] %v6805
        %6838 = vst [vmem:[#allocation2 + $0x78] sm:$0xff] %v6806
        %6839 = vst [vmem:[#allocation2 + $0x80] sm:$0xff] %v6807
        %6840 = vst [vmem:[#allocation2 + $0x88] sm:$0xff] %v6808
        %6841 = vst [vmem:[#allocation2 + $0x90] sm:$0xff] %v6809
        %6842 = vst [vmem:[#allocation2 + $0x98] sm:$0xff] %v6810
        %6843 = vst [vmem:[#allocation2 + $0xa0] sm:$0xff] %v6811
        %6844 = vst [vmem:[#allocation2 + $0xa8] sm:$0xff] %v6812
        %6845 = vst [vmem:[#allocation2 + $0xb0] sm:$0xff] %v6813
        %6846 = vst [vmem:[#allocation2 + $0xb8] sm:$0xff] %v6814
        %6847 = vst [vmem:[#allocation2 + $0xc0] sm:$0xff] %v6815
        %6848 = vst [vmem:[#allocation2 + $0xc8] sm:$0xff] %v6816
        %6849 = vst [vmem:[#allocation2 + $0xd0] sm:$0xff] %v6817
        %6850 = vst [vmem:[#allocation2 + $0xd8] sm:$0xff] %v6818
        %6851 = vst [vmem:[#allocation2 + $0xe0] sm:$0xff] %v6819
        %6852 = vst [vmem:[#allocation2 + $0xe8] sm:$0xff] %v6820
        %6853 = vst [vmem:[#allocation2 + $0xf0] sm:$0xff] %v6821
        %6854 = vst [vmem:[#allocation2 + $0xf8] sm:$0xff] %v6822
        %p6855 = scmp.eq.s32.totalorder %s30, 1
        // Predicated region
        $region93: #{transformer_decoder.1} parent=67 // pred_check
          %p6856 = pneg %p6855
        $region94: #{transformer_decoder.1} parent=67 // pred_check_branch
          %6858 = sbr.rel (%p6856) target = $region96
        $region95: #{transformer_decoder.1} parent=67 // pred_region
          %6859 = vst [vmem:[#allocation3] sm:$0xff] %v6791
          %6860 = vst [vmem:[#allocation3 + $0x8] sm:$0xff] %v6792
          %6861 = vst [vmem:[#allocation3 + $0x10] sm:$0xff] %v6793
          %6862 = vst [vmem:[#allocation3 + $0x18] sm:$0xff] %v6794
          %6863 = vst [vmem:[#allocation3 + $0x20] sm:$0xff] %v6795
          %6864 = vst [vmem:[#allocation3 + $0x28] sm:$0xff] %v6796
          %6865 = vst [vmem:[#allocation3 + $0x30] sm:$0xff] %v6797
          %6866 = vst [vmem:[#allocation3 + $0x38] sm:$0xff] %v6798
          %6867 = vst [vmem:[#allocation3 + $0x40] sm:$0xff] %v6799
          %6868 = vst [vmem:[#allocation3 + $0x48] sm:$0xff] %v6800
          %6869 = vst [vmem:[#allocation3 + $0x50] sm:$0xff] %v6801
          %6870 = vst [vmem:[#allocation3 + $0x58] sm:$0xff] %v6802
          %6871 = vst [vmem:[#allocation3 + $0x60] sm:$0xff] %v6803
          %6872 = vst [vmem:[#allocation3 + $0x68] sm:$0xff] %v6804
          %6873 = vst [vmem:[#allocation3 + $0x70] sm:$0xff] %v6805
          %6874 = vst [vmem:[#allocation3 + $0x78] sm:$0xff] %v6806
          %6875 = vst [vmem:[#allocation3 + $0x80] sm:$0xff] %v6807
          %6876 = vst [vmem:[#allocation3 + $0x88] sm:$0xff] %v6808
          %6877 = vst [vmem:[#allocation3 + $0x90] sm:$0xff] %v6809
          %6878 = vst [vmem:[#allocation3 + $0x98] sm:$0xff] %v6810
          %6879 = vst [vmem:[#allocation3 + $0xa0] sm:$0xff] %v6811
          %6880 = vst [vmem:[#allocation3 + $0xa8] sm:$0xff] %v6812
          %6881 = vst [vmem:[#allocation3 + $0xb0] sm:$0xff] %v6813
          %6882 = vst [vmem:[#allocation3 + $0xb8] sm:$0xff] %v6814
          %6883 = vst [vmem:[#allocation3 + $0xc0] sm:$0xff] %v6815
          %6884 = vst [vmem:[#allocation3 + $0xc8] sm:$0xff] %v6816
          %6885 = vst [vmem:[#allocation3 + $0xd0] sm:$0xff] %v6817
          %6886 = vst [vmem:[#allocation3 + $0xd8] sm:$0xff] %v6818
          %6887 = vst [vmem:[#allocation3 + $0xe0] sm:$0xff] %v6819
          %6888 = vst [vmem:[#allocation3 + $0xe8] sm:$0xff] %v6820
          %6889 = vst [vmem:[#allocation3 + $0xf0] sm:$0xff] %v6821
          %6890 = vst [vmem:[#allocation3 + $0xf8] sm:$0xff] %v6822
        $region96: #{transformer_decoder.1} parent=67 // pred_fallthru
          _
        // Predicated region
        $region97: #{transformer_decoder.1} parent=67 // pred_check
          %p6891 = pneg %p367
        $region98: #{transformer_decoder.1} parent=67 // pred_check_branch
          %6893 = sbr.rel (%p6891) target = $region100
        $region99: #{transformer_decoder.1} parent=67 // pred_region
          %s6894 = smul.u32 2, %s29
          %6896 = vsyncadd [#allocation4], 0
          %s6897 = smul.addr %s6894, 16
          %s6898 = smul.addr %s6897, 8
          %s6899 = scalar_lea.hbm %s13, %s6898
          %s6900 = sshll.u32 [#allocation3], 4
          %s6901 = int_to_ptr.vmem [resolvable:$true] %s6900
          %s6902 = sshll.u32 %s6899, 4
          %s6903 = int_to_ptr.hbm [resolvable:$true] %s6902
          %6908 = dma.vmem_to_hbm [thread:$0]  %s6901, 4096, %s6903, [#allocation4], 128, 128, 8
        $region100: #{transformer_decoder.1} parent=67 // pred_fallthru
          _
        // Predicated region
        $region101: #{transformer_decoder.1} parent=67 // pred_check
          %p6909 = pneg %p367
        $region102: #{transformer_decoder.1} parent=67 // pred_check_branch
          %6911 = sbr.rel (%p6909) target = $region104
        $region103: #{transformer_decoder.1} parent=67 // pred_region
          %6913 = dma.done [#allocation4], 4096
        $region104: #{transformer_decoder.1} parent=67 // pred_fallthru
          _
      $region68: #{transformer_decoder.1} parent=5 // pred_fallthru
        _
      %p6914 = scmp.le.s32.totalorder 2, %s20
      // Predicated region
      $region105: #{transformer_decoder.1} parent=5 // pred_check
        %p6915 = pneg %p6914
      $region106: #{transformer_decoder.1} parent=5 // pred_check_branch
        %6917 = sbr.rel (%p6915) target = $region108
      $region107: #{transformer_decoder.1} parent=5 // pred_region
        %s6918 = ssub.s32 %s20, 2
      $region108: #{transformer_decoder.1} parent=5 // pred_fallthru
        _
    $region6: #{transformer_decoder.1} parent=1 // loop_footer
      %s24 = sadd.s32 1, %s20
    $region7: #{transformer_decoder.1} parent=1 // loop_footer_branch
      %19 = sbr.rel target = $region3
    $region8: #{transformer_decoder.1} parent=1 // loop_exit
      _
    %6919 = vsyncpa [#allocation4], 1
    %s6920 = scalar_lea.sflag [#allocation4], 1
    %6921 = vsyncpa %s6920, 1

</llo_original>
